<compile_context>
chip_gen: v7x
topology: tpu7x:2x2x1
jax: 0.10.0
libtpu: 0.0.40
codegen_flags: <defaults>
</compile_context>

<pallas_src>
from functools import partial

import jax
import jax.numpy as jnp
from jax import lax
from jax.experimental import pallas as pl
from jax.experimental.pallas import tpu as pltpu


# ------------------------------------------------------------------
# VMEM budget + tile selection helpers
# ------------------------------------------------------------------
def _vmem_budget_bytes(frac=0.75, fallback=48 * 1024 * 1024):
    """~0.75x of the per-core VMEM capacity (128 MiB v5e/v6e, 64 MiB v7x)."""
    try:
        cap = getattr(pltpu.get_tpu_info(), "vmem_capacity_bytes", None)
        if not cap:
            return fallback
        return max(int(cap * frac), 32 * 1024 * 1024)
    except Exception:
        return fallback


def _divisors_desc(n):
    return [d for d in range(n, 0, -1) if n % d == 0]


def _pick_tile(cands, fits):
    """Largest candidate that fits the VMEM estimate; smallest legal otherwise."""
    for c in cands:
        if fits(c):
            return c
    return cands[-1]          # best effort; compiler gets the final say


def _pass1_tile_bytes(TD, H, W, Cin, K27, C):
    R = TD * H * W
    halo = (TD + 2) * (H + 2) * (W + 2) * Cin * 2     # one buffer of all plane blocks
    wts = K27 * C * 2
    yout = R * C * 4
    stats = 2 * 8 * C * 4
    scratch = R * K27 * 2                             # im2col VMEM scratch
    tmp = R * C * 4 + halo                            # dot result + concat temp
    return 2 * (halo + wts + yout + stats) + scratch + tmp


def _pool_tile_bytes(TDp, H, W, C):
    rin = 2 * TDp * H * W
    rout = TDp * (H // 2) * (W // 2)
    return 2 * (rin * C * 4 + rout * C * 4 + 2 * C * 4) + rin * C * 4


def _bnrelu_tile_bytes(TD2, H, W, C):
    r = TD2 * H * W
    return 2 * (2 * r * C * 4 + 2 * C * 4) + r * C * 4


# ------------------------------------------------------------------
# Pass 1: conv as ONE K=27*Cin matmul per tile (im2col built in VMEM from a
# halo of TD+2 padded depth planes) + fused BN partial statistics.
#   plane refs : TD+2 x (1, 1, H+2, W+2, Cin)  bf16
#   w_ref      : (27*Cin, C)                   bf16
#   y_ref      : (1, TD*H*W, C)                f32   natural (d,h,w)-major rows
#   sum_ref    : (1, 8, C)  f32  revisited accumulator (written back once per n)
#   sq_ref     : (1, 8, C)  f32  revisited accumulator
#   xcol_ref   : (TD*H*W, 27*Cin) bf16 VMEM scratch
# ------------------------------------------------------------------
def _conv_bnstats_kernel(TD, H, W, *refs):
    nplanes = TD + 2
    plane_refs = refs[:nplanes]
    w_ref, y_ref, sum_ref, sq_ref, xcol_ref = refs[nplanes:]
    Cin = plane_refs[0].shape[-1]
    R = TD * H * W
    d = pl.program_id(1)

    @pl.when(d == 0)
    def _():
        sum_ref[...] = jnp.zeros_like(sum_ref)
        sq_ref[...] = jnp.zeros_like(sq_ref)

    # halo slab (TD+2, H+2, W+2, Cin), entirely in VMEM
    xs = jnp.concatenate([r[0] for r in plane_refs], axis=0)

    # im2col into VMEM scratch, tap order (kd, kh, kw, ci) == w2d row order
    t = 0
    for kd in range(3):
        for kh in range(3):
            for kw in range(3):
                blk = xs[kd:kd + TD, kh:kh + H, kw:kw + W, :].reshape(R, Cin)
                xcol_ref[:, t * Cin:(t + 1) * Cin] = blk
                t += 1

    acc = jnp.dot(xcol_ref[...], w_ref[...],
                  preferred_element_type=jnp.float32)            # MXU, K = 27*Cin
    y_ref[0] = acc.astype(y_ref.dtype)

    sum_ref[0, 0:1, :] = sum_ref[0, 0:1, :] + jnp.sum(acc, axis=0, keepdims=True)
    sq_ref[0, 0:1, :] = sq_ref[0, 0:1, :] + jnp.sum(acc * acc, axis=0, keepdims=True)


# ------------------------------------------------------------------
# Pass 2a: fused BatchNorm + ReLU + AvgPool3d(2) on natural-order y rows.
#   y_ref : (1, 2*TDp*H*W, C)   scale/shift : (1, C)   o_ref : (1, TDp*H/2*W/2, C)
# ------------------------------------------------------------------
def _bn_relu_pool_kernel(TDp, H, W, y_ref, scale_ref, shift_ref, o_ref):
    C = o_ref.shape[-1]
    z = jnp.maximum(y_ref[0] * scale_ref[...] + shift_ref[...], 0.0)   # (2*TDp*H*W, C)
    z = z.reshape(TDp, 2, H, W, C).sum(axis=1)                         # pool depth pairs
    z = z.reshape(TDp, H // 2, 2, W, C).sum(axis=2)                    # pool height pairs
    z = z.reshape(TDp, H // 2, W // 2, 2, C).sum(axis=3)               # pool width pairs
    o_ref[0] = (z * 0.125).reshape(TDp * (H // 2) * (W // 2), C).astype(o_ref.dtype)


# ------------------------------------------------------------------
# Pass 2b: fused BatchNorm + ReLU (down=False).
# ------------------------------------------------------------------
def _bn_relu_kernel(y_ref, scale_ref, shift_ref, o_ref):
    o_ref[0] = jnp.maximum(y_ref[0] * scale_ref[...] + shift_ref[...],
                           0.0).astype(o_ref.dtype)


# ------------------------------------------------------------------
# conv_down forward (PyTorch module in training mode: BN uses batch stats).
# ------------------------------------------------------------------
def conv_down_forward(x_ncdhw, params, down=True, pool_kernel=2, eps=1e-5):
    assert pool_kernel == 2, "kernel written for pool_kernel=2"
    w, gamma, beta = params["w"], params["gamma"], params["beta"]
    # conv bias (params["b"]) intentionally not applied: batch-statistic BN
    # immediately follows, so a per-channel constant shift cancels exactly.
    N, Cin, D, H, W = x_ncdhw.shape
    Cout = w.shape[-1]
    if down:
        assert D % 2 == 0 and H % 2 == 0 and W % 2 == 0, "AvgPool3d(2) needs even D/H/W"

    C = 128 if Cout < 128 else Cout            # lane-dense channel padding (small configs)
    K27 = 27 * Cin
    P = D * H * W
    budget = _vmem_budget_bytes()
    fit_budget = int(0.85 * budget)            # headroom for compiler temporaries

    # ---- glue (layout only, no data amplification): NDHWC bf16 + spatial pad ----
    x = jnp.transpose(x_ncdhw, (0, 2, 3, 4, 1)).astype(jnp.bfloat16)     # NDHWC
    xp = jnp.pad(x, ((0, 0), (1, 1), (1, 1), (1, 1), (0, 0)))            # (N,D+2,H+2,W+2,Cin)
    w2d = w.reshape(K27, Cout).astype(jnp.bfloat16)
    if C != Cout:
        w2d = jnp.pad(w2d, ((0, 0), (0, C - Cout)))

    # ---- pass 1: conv (in-kernel im2col) + fused BN partial statistics ----
    cands1 = [t for t in _divisors_desc(D) if (t * H * W) % 8 == 0 or t == D]
    TD = _pick_tile(cands1,
                    lambda t: _pass1_tile_bytes(t, H, W, Cin, K27, C) <= fit_budget)
    R = TD * H * W
    nD = D // TD
    nplanes = TD + 2

    in_specs = [pl.BlockSpec((1, 1, H + 2, W + 2, Cin),
                             (lambda n, d, t=t: (n, d * TD + t, 0, 0, 0)))
                for t in range(nplanes)]
    in_specs.append(pl.BlockSpec((K27, C), lambda n, d: (0, 0)))

    y, psum, psq = pl.pallas_call(
        partial(_conv_bnstats_kernel, TD, H, W),
        out_shape=(jax.ShapeDtypeStruct((N, P, C), jnp.float32),
                   jax.ShapeDtypeStruct((N, 8, C), jnp.float32),
                   jax.ShapeDtypeStruct((N, 8, C), jnp.float32)),
        grid=(N, nD),
        in_specs=in_specs,
        out_specs=(pl.BlockSpec((1, R, C), lambda n, d: (n, d, 0)),
                   pl.BlockSpec((1, 8, C), lambda n, d: (n, 0, 0)),
                   pl.BlockSpec((1, 8, C), lambda n, d: (n, 0, 0))),
        scratch_shapes=[pltpu.VMEM((R, K27), jnp.bfloat16)],
        compiler_params=pltpu.CompilerParams(
            # N is the megacore-parallel axis (needs N>=2 to feed both v7x TCs);
            # d is "arbitrary" because the BN-stat blocks accumulate across it.
            dimension_semantics=("parallel", "arbitrary"),
            vmem_limit_bytes=budget),
    )(*([xp] * nplanes), w2d)

    # ---- tiny glue reduction -> BN scale/shift (per channel) ----
    count = float(N * P)
    mean = jnp.sum(psum, axis=(0, 1)) / count
    var = jnp.maximum(jnp.sum(psq, axis=(0, 1)) / count - mean * mean, 0.0)
    inv = lax.rsqrt(var + eps)
    gamma_p = jnp.pad(gamma, (0, C - Cout)) if C != Cout else gamma
    beta_p = jnp.pad(beta, (0, C - Cout)) if C != Cout else beta
    scale = (gamma_p * inv).reshape(1, C).astype(jnp.float32)
    shift = (beta_p - mean * gamma_p * inv).reshape(1, C).astype(jnp.float32)

    # ---- pass 2: fused BN + ReLU (+ AvgPool3d(2)); tile decoupled from pass 1 ----
    cp2 = pltpu.CompilerParams(dimension_semantics=("parallel", "parallel"),
                               vmem_limit_bytes=budget)
    if down:
        Dh, Hh, Wh = D // 2, H // 2, W // 2
        Ppool = Dh * Hh * Wh
        cands2 = [t for t in _divisors_desc(Dh) if (t * Hh * Wh) % 8 == 0 or t == Dh]
        TDp = _pick_tile(cands2, lambda t: _pool_tile_bytes(t, H, W, C) <= fit_budget)
        rows_in = 2 * TDp * H * W
        rows_out = TDp * Hh * Wh
        pooled = pl.pallas_call(
            partial(_bn_relu_pool_kernel, TDp, H, W),
            out_shape=jax.ShapeDtypeStruct((N, Ppool, C), jnp.float32),
            grid=(N, Dh // TDp),
            in_specs=[pl.BlockSpec((1, rows_in, C), lambda n, d: (n, d, 0)),
                      pl.BlockSpec((1, C), lambda n, d: (0, 0)),
                      pl.BlockSpec((1, C), lambda n, d: (0, 0))],
            out_specs=pl.BlockSpec((1, rows_out, C), lambda n, d: (n, d, 0)),
            compiler_params=cp2,
        )(y, scale, shift)
        out = pooled.reshape(N, Dh, Hh, Wh, C)[..., :Cout]
    else:
        cands2 = [t for t in _divisors_desc(D) if (t * H * W) % 8 == 0 or t == D]
        TD2 = _pick_tile(cands2, lambda t: _bnrelu_tile_bytes(t, H, W, C) <= fit_budget)
        rows = TD2 * H * W
        z = pl.pallas_call(
            _bn_relu_kernel,
            out_shape=jax.ShapeDtypeStruct((N, P, C), jnp.float32),
            grid=(N, D // TD2),
            in_specs=[pl.BlockSpec((1, rows, C), lambda n, d: (n, d, 0)),
                      pl.BlockSpec((1, C), lambda n, d: (0, 0)),
                      pl.BlockSpec((1, C), lambda n, d: (0, 0))],
            out_specs=pl.BlockSpec((1, rows, C), lambda n, d: (n, d, 0)),
            compiler_params=cp2,
        )(y, scale, shift)
        out = z.reshape(N, D, H, W, C)[..., :Cout]

    return jnp.transpose(out, (0, 4, 1, 2, 3))                           # NCDHW


# ------------------------------------------------------------------
# Deterministic parameter init (matches module __init__: Kaiming-normal conv
# weight, zero conv bias, BN gamma=1 / beta=0).
# ------------------------------------------------------------------
def init_params(key, inChan, outChan):
    std = (2.0 / (inChan * 27)) ** 0.5
    w = std * jax.random.normal(key, (3, 3, 3, inChan, outChan), jnp.float32)
    b = jnp.zeros((outChan,), jnp.float32)
    gamma = jnp.ones((outChan,), jnp.float32)
    beta = jnp.zeros((outChan,), jnp.float32)
    return dict(w=w, b=b, gamma=gamma, beta=beta)


# ------------------------------------------------------------------
# Pure-JAX reference (same math, matching bf16 conv inputs / f32 accumulation).
# ------------------------------------------------------------------
def reference_forward(x_ncdhw, params, down=True, eps=1e-5):
    xb = x_ncdhw.astype(jnp.bfloat16)
    wb = jnp.transpose(params["w"], (4, 3, 0, 1, 2)).astype(jnp.bfloat16)  # OIDHW
    y = lax.conv_general_dilated(
        xb, wb, window_strides=(1, 1, 1),
        padding=((1, 1), (1, 1), (1, 1)),
        dimension_numbers=("NCDHW", "OIDHW", "NCDHW"),
        preferred_element_type=jnp.float32)
    y = y + params["b"][None, :, None, None, None]
    mean = jnp.mean(y, axis=(0, 2, 3, 4), keepdims=True)
    var = jnp.var(y, axis=(0, 2, 3, 4), keepdims=True)                    # biased
    g = params["gamma"][None, :, None, None, None]
    be = params["beta"][None, :, None, None, None]
    z = jnp.maximum((y - mean) * lax.rsqrt(var + eps) * g + be, 0.0)
    if down:
        n, c, d, h, w = z.shape
        z = z.reshape(n, c, d // 2, 2, h // 2, 2, w // 2, 2).mean(axis=(3, 5, 7))
    return z


if __name__ == "__main__":
    key = jax.random.PRNGKey(0)
    k_x, k_w = jax.random.split(key)
    N, Cin, Cout, D, H, W = 2, 4, 8, 8, 8, 8

    x = jax.random.normal(k_x, (N, Cin, D, H, W), jnp.float32)   # NCDHW like PyTorch
    params = init_params(k_w, Cin, Cout)

    out = conv_down_forward(x, params, down=True)
    out = jax.block_until_ready(out)
    assert out.shape == (N, Cout, D // 2, H // 2, W // 2), out.shape

    ref = reference_forward(x, params, down=True)
    max_err = float(jnp.max(jnp.abs(out - ref)))
    if not bool(jnp.allclose(out, ref, rtol=2e-3, atol=2e-3)):
        raise AssertionError(f"kernel/reference mismatch, max abs err = {max_err}")
    print("KERNEL_OK")
</pallas_src>

<mosaic_0001>
module attributes {stable_mosaic.version = 11 : i64} {
  func.func @_conv_bnstats_kernel(%arg0: i32, %arg1: i32, %arg2: memref<1x1x10x10x4xbf16, #tpu.memory_space<vmem>>, %arg3: memref<1x1x10x10x4xbf16, #tpu.memory_space<vmem>>, %arg4: memref<1x1x10x10x4xbf16, #tpu.memory_space<vmem>>, %arg5: memref<1x1x10x10x4xbf16, #tpu.memory_space<vmem>>, %arg6: memref<1x1x10x10x4xbf16, #tpu.memory_space<vmem>>, %arg7: memref<1x1x10x10x4xbf16, #tpu.memory_space<vmem>>, %arg8: memref<1x1x10x10x4xbf16, #tpu.memory_space<vmem>>, %arg9: memref<1x1x10x10x4xbf16, #tpu.memory_space<vmem>>, %arg10: memref<1x1x10x10x4xbf16, #tpu.memory_space<vmem>>, %arg11: memref<1x1x10x10x4xbf16, #tpu.memory_space<vmem>>, %arg12: memref<108x128xbf16, #tpu.memory_space<vmem>>, %arg13: memref<1x512x128xf32, #tpu.memory_space<vmem>>, %arg14: memref<1x8x128xf32, #tpu.memory_space<vmem>>, %arg15: memref<1x8x128xf32, #tpu.memory_space<vmem>>, %arg16: memref<512x108xbf16, #tpu.memory_space<vmem>>) attributes {dimension_semantics = [#tpu.dimension_semantics<parallel>, #tpu.dimension_semantics<arbitrary>], iteration_bounds = array<i64: 2, 1>, scalar_prefetch = 0 : i64, scratch_operands = 1 : i64, tpu.core_type = #tpu.core_type<tc>, window_params = [{transform_indices = @transform_0, window_bounds = array<i64: 1, 1, 10, 10, 4>}, {transform_indices = @transform_1, window_bounds = array<i64: 1, 1, 10, 10, 4>}, {transform_indices = @transform_2, window_bounds = array<i64: 1, 1, 10, 10, 4>}, {transform_indices = @transform_3, window_bounds = array<i64: 1, 1, 10, 10, 4>}, {transform_indices = @transform_4, window_bounds = array<i64: 1, 1, 10, 10, 4>}, {transform_indices = @transform_5, window_bounds = array<i64: 1, 1, 10, 10, 4>}, {transform_indices = @transform_6, window_bounds = array<i64: 1, 1, 10, 10, 4>}, {transform_indices = @transform_7, window_bounds = array<i64: 1, 1, 10, 10, 4>}, {transform_indices = @transform_8, window_bounds = array<i64: 1, 1, 10, 10, 4>}, {transform_indices = @transform_9, window_bounds = array<i64: 1, 1, 10, 10, 4>}, {pipeline_mode = #tpu.pipeline_mode<synchronous>, transform_indices = @transform_10, window_bounds = array<i64: 108, 128>}, {transform_indices = @transform_11, window_bounds = array<i64: 1, 512, 128>}, {transform_indices = @transform_12, window_bounds = array<i64: 1, 8, 128>}, {transform_indices = @transform_13, window_bounds = array<i64: 1, 8, 128>}]} {
    %c0_i32 = arith.constant 0 : i32
    %0 = arith.cmpi eq, %arg1, %c0_i32 : i32
    %1 = arith.extui %0 : i1 to i32
    %c0_i32_0 = arith.constant 0 : i32
    %2 = arith.cmpi ne, %1, %c0_i32_0 : i32
    scf.if %2 {
      %cst_99 = arith.constant 0.000000e+00 : f32
      %128 = vector.broadcast %cst_99 : f32 to vector<1x8x128xf32>
      %c0_100 = arith.constant 0 : index
      %c0_101 = arith.constant 0 : index
      %c0_102 = arith.constant 0 : index
      %129 = vector.load %arg14[%c0_100, %c0_101, %c0_102] : memref<1x8x128xf32, #tpu.memory_space<vmem>>, vector<1x8x128xf32>
      tpu.vector_store %arg14[%c0_100, %c0_101, %c0_102], %128 {strides = array<i32>} : memref<1x8x128xf32, #tpu.memory_space<vmem>>, vector<1x8x128xf32>,
      %cst_103 = arith.constant 0.000000e+00 : f32
      %130 = vector.broadcast %cst_103 : f32 to vector<1x8x128xf32>
      %c0_104 = arith.constant 0 : index
      %c0_105 = arith.constant 0 : index
      %c0_106 = arith.constant 0 : index
      %131 = vector.load %arg15[%c0_104, %c0_105, %c0_106] : memref<1x8x128xf32, #tpu.memory_space<vmem>>, vector<1x8x128xf32>
      tpu.vector_store %arg15[%c0_104, %c0_105, %c0_106], %130 {strides = array<i32>} : memref<1x8x128xf32, #tpu.memory_space<vmem>>, vector<1x8x128xf32>,
    } else {
    }
    %c0 = arith.constant 0 : index
    %c0_1 = arith.constant 0 : index
    %c0_2 = arith.constant 0 : index
    %c0_3 = arith.constant 0 : index
    %c0_4 = arith.constant 0 : index
    %3 = vector.load %arg2[%c0, %c0_1, %c0_2, %c0_3, %c0_4] : memref<1x1x10x10x4xbf16, #tpu.memory_space<vmem>>, vector<1x1x10x10x4xbf16>
    %4 = vector.shape_cast %3 : vector<1x1x10x10x4xbf16> to vector<1x10x10x4xbf16>
    %c0_5 = arith.constant 0 : index
    %c0_6 = arith.constant 0 : index
    %c0_7 = arith.constant 0 : index
    %c0_8 = arith.constant 0 : index
    %c0_9 = arith.constant 0 : index
    %5 = vector.load %arg3[%c0_5, %c0_6, %c0_7, %c0_8, %c0_9] : memref<1x1x10x10x4xbf16, #tpu.memory_space<vmem>>, vector<1x1x10x10x4xbf16>
    %6 = vector.shape_cast %5 : vector<1x1x10x10x4xbf16> to vector<1x10x10x4xbf16>
    %c0_10 = arith.constant 0 : index
    %c0_11 = arith.constant 0 : index
    %c0_12 = arith.constant 0 : index
    %c0_13 = arith.constant 0 : index
    %c0_14 = arith.constant 0 : index
    %7 = vector.load %arg4[%c0_10, %c0_11, %c0_12, %c0_13, %c0_14] : memref<1x1x10x10x4xbf16, #tpu.memory_space<vmem>>, vector<1x1x10x10x4xbf16>
    %8 = vector.shape_cast %7 : vector<1x1x10x10x4xbf16> to vector<1x10x10x4xbf16>
    %c0_15 = arith.constant 0 : index
    %c0_16 = arith.constant 0 : index
    %c0_17 = arith.constant 0 : index
    %c0_18 = arith.constant 0 : index
    %c0_19 = arith.constant 0 : index
    %9 = vector.load %arg5[%c0_15, %c0_16, %c0_17, %c0_18, %c0_19] : memref<1x1x10x10x4xbf16, #tpu.memory_space<vmem>>, vector<1x1x10x10x4xbf16>
    %10 = vector.shape_cast %9 : vector<1x1x10x10x4xbf16> to vector<1x10x10x4xbf16>
    %c0_20 = arith.constant 0 : index
    %c0_21 = arith.constant 0 : index
    %c0_22 = arith.constant 0 : index
    %c0_23 = arith.constant 0 : index
    %c0_24 = arith.constant 0 : index
    %11 = vector.load %arg6[%c0_20, %c0_21, %c0_22, %c0_23, %c0_24] : memref<1x1x10x10x4xbf16, #tpu.memory_space<vmem>>, vector<1x1x10x10x4xbf16>
    %12 = vector.shape_cast %11 : vector<1x1x10x10x4xbf16> to vector<1x10x10x4xbf16>
    %c0_25 = arith.constant 0 : index
    %c0_26 = arith.constant 0 : index
    %c0_27 = arith.constant 0 : index
    %c0_28 = arith.constant 0 : index
    %c0_29 = arith.constant 0 : index
    %13 = vector.load %arg7[%c0_25, %c0_26, %c0_27, %c0_28, %c0_29] : memref<1x1x10x10x4xbf16, #tpu.memory_space<vmem>>, vector<1x1x10x10x4xbf16>
    %14 = vector.shape_cast %13 : vector<1x1x10x10x4xbf16> to vector<1x10x10x4xbf16>
    %c0_30 = arith.constant 0 : index
    %c0_31 = arith.constant 0 : index
    %c0_32 = arith.constant 0 : index
    %c0_33 = arith.constant 0 : index
    %c0_34 = arith.constant 0 : index
    %15 = vector.load %arg8[%c0_30, %c0_31, %c0_32, %c0_33, %c0_34] : memref<1x1x10x10x4xbf16, #tpu.memory_space<vmem>>, vector<1x1x10x10x4xbf16>
    %16 = vector.shape_cast %15 : vector<1x1x10x10x4xbf16> to vector<1x10x10x4xbf16>
    %c0_35 = arith.constant 0 : index
    %c0_36 = arith.constant 0 : index
    %c0_37 = arith.constant 0 : index
    %c0_38 = arith.constant 0 : index
    %c0_39 = arith.constant 0 : index
    %17 = vector.load %arg9[%c0_35, %c0_36, %c0_37, %c0_38, %c0_39] : memref<1x1x10x10x4xbf16, #tpu.memory_space<vmem>>, vector<1x1x10x10x4xbf16>
    %18 = vector.shape_cast %17 : vector<1x1x10x10x4xbf16> to vector<1x10x10x4xbf16>
    %c0_40 = arith.constant 0 : index
    %c0_41 = arith.constant 0 : index
    %c0_42 = arith.constant 0 : index
    %c0_43 = arith.constant 0 : index
    %c0_44 = arith.constant 0 : index
    %19 = vector.load %arg10[%c0_40, %c0_41, %c0_42, %c0_43, %c0_44] : memref<1x1x10x10x4xbf16, #tpu.memory_space<vmem>>, vector<1x1x10x10x4xbf16>
    %20 = vector.shape_cast %19 : vector<1x1x10x10x4xbf16> to vector<1x10x10x4xbf16>
    %c0_45 = arith.constant 0 : index
    %c0_46 = arith.constant 0 : index
    %c0_47 = arith.constant 0 : index
    %c0_48 = arith.constant 0 : index
    %c0_49 = arith.constant 0 : index
    %21 = vector.load %arg11[%c0_45, %c0_46, %c0_47, %c0_48, %c0_49] : memref<1x1x10x10x4xbf16, #tpu.memory_space<vmem>>, vector<1x1x10x10x4xbf16>
    %22 = vector.shape_cast %21 : vector<1x1x10x10x4xbf16> to vector<1x10x10x4xbf16>
    %23 = tpu.concatenate %4, %6, %8, %10, %12, %14, %16, %18, %20, %22 in 0 : vector<1x10x10x4xbf16>, vector<1x10x10x4xbf16>, vector<1x10x10x4xbf16>, vector<1x10x10x4xbf16>, vector<1x10x10x4xbf16>, vector<1x10x10x4xbf16>, vector<1x10x10x4xbf16>, vector<1x10x10x4xbf16>, vector<1x10x10x4xbf16>, vector<1x10x10x4xbf16> -> vector<10x10x10x4xbf16>
    %24 = vector.extract_strided_slice %23 {offsets = [0, 0, 0, 0], sizes = [8, 8, 8, 4], strides = [1, 1, 1, 1]} : vector<10x10x10x4xbf16> to vector<8x8x8x4xbf16>
    %25 = vector.shape_cast %24 : vector<8x8x8x4xbf16> to vector<512x4xbf16>
    %c0_50 = arith.constant 0 : index
    %c0_51 = arith.constant 0 : index
    %26 = vector.load %arg16[%c0_50, %c0_51] : memref<512x108xbf16, #tpu.memory_space<vmem>>, vector<512x4xbf16>
    tpu.vector_store %arg16[%c0_50, %c0_51], %25 {strides = array<i32>} : memref<512x108xbf16, #tpu.memory_space<vmem>>, vector<512x4xbf16>,
    %27 = vector.extract_strided_slice %23 {offsets = [0, 0, 1, 0], sizes = [8, 8, 8, 4], strides = [1, 1, 1, 1]} : vector<10x10x10x4xbf16> to vector<8x8x8x4xbf16>
    %28 = vector.shape_cast %27 : vector<8x8x8x4xbf16> to vector<512x4xbf16>
    %c0_52 = arith.constant 0 : index
    %c4 = arith.constant 4 : index
    %29 = vector.load %arg16[%c0_52, %c4] : memref<512x108xbf16, #tpu.memory_space<vmem>>, vector<512x4xbf16>
    tpu.vector_store %arg16[%c0_52, %c4], %28 {strides = array<i32>} : memref<512x108xbf16, #tpu.memory_space<vmem>>, vector<512x4xbf16>,
    %30 = vector.extract_strided_slice %23 {offsets = [0, 0, 2, 0], sizes = [8, 8, 8, 4], strides = [1, 1, 1, 1]} : vector<10x10x10x4xbf16> to vector<8x8x8x4xbf16>
    %31 = vector.shape_cast %30 : vector<8x8x8x4xbf16> to vector<512x4xbf16>
    %c0_53 = arith.constant 0 : index
    %c8 = arith.constant 8 : index
    %32 = vector.load %arg16[%c0_53, %c8] : memref<512x108xbf16, #tpu.memory_space<vmem>>, vector<512x4xbf16>
    tpu.vector_store %arg16[%c0_53, %c8], %31 {strides = array<i32>} : memref<512x108xbf16, #tpu.memory_space<vmem>>, vector<512x4xbf16>,
    %33 = vector.extract_strided_slice %23 {offsets = [0, 1, 0, 0], sizes = [8, 8, 8, 4], strides = [1, 1, 1, 1]} : vector<10x10x10x4xbf16> to vector<8x8x8x4xbf16>
    %34 = vector.shape_cast %33 : vector<8x8x8x4xbf16> to vector<512x4xbf16>
    %c0_54 = arith.constant 0 : index
    %c12 = arith.constant 12 : index
    %35 = vector.load %arg16[%c0_54, %c12] : memref<512x108xbf16, #tpu.memory_space<vmem>>, vector<512x4xbf16>
    tpu.vector_store %arg16[%c0_54, %c12], %34 {strides = array<i32>} : memref<512x108xbf16, #tpu.memory_space<vmem>>, vector<512x4xbf16>,
    %36 = vector.extract_strided_slice %23 {offsets = [0, 1, 1, 0], sizes = [8, 8, 8, 4], strides = [1, 1, 1, 1]} : vector<10x10x10x4xbf16> to vector<8x8x8x4xbf16>
    %37 = vector.shape_cast %36 : vector<8x8x8x4xbf16> to vector<512x4xbf16>
    %c0_55 = arith.constant 0 : index
    %c16 = arith.constant 16 : index
    %38 = vector.load %arg16[%c0_55, %c16] : memref<512x108xbf16, #tpu.memory_space<vmem>>, vector<512x4xbf16>
    tpu.vector_store %arg16[%c0_55, %c16], %37 {strides = array<i32>} : memref<512x108xbf16, #tpu.memory_space<vmem>>, vector<512x4xbf16>,
    %39 = vector.extract_strided_slice %23 {offsets = [0, 1, 2, 0], sizes = [8, 8, 8, 4], strides = [1, 1, 1, 1]} : vector<10x10x10x4xbf16> to vector<8x8x8x4xbf16>
    %40 = vector.shape_cast %39 : vector<8x8x8x4xbf16> to vector<512x4xbf16>
    %c0_56 = arith.constant 0 : index
    %c20 = arith.constant 20 : index
    %41 = vector.load %arg16[%c0_56, %c20] : memref<512x108xbf16, #tpu.memory_space<vmem>>, vector<512x4xbf16>
    tpu.vector_store %arg16[%c0_56, %c20], %40 {strides = array<i32>} : memref<512x108xbf16, #tpu.memory_space<vmem>>, vector<512x4xbf16>,
    %42 = vector.extract_strided_slice %23 {offsets = [0, 2, 0, 0], sizes = [8, 8, 8, 4], strides = [1, 1, 1, 1]} : vector<10x10x10x4xbf16> to vector<8x8x8x4xbf16>
    %43 = vector.shape_cast %42 : vector<8x8x8x4xbf16> to vector<512x4xbf16>
    %c0_57 = arith.constant 0 : index
    %c24 = arith.constant 24 : index
    %44 = vector.load %arg16[%c0_57, %c24] : memref<512x108xbf16, #tpu.memory_space<vmem>>, vector<512x4xbf16>
    tpu.vector_store %arg16[%c0_57, %c24], %43 {strides = array<i32>} : memref<512x108xbf16, #tpu.memory_space<vmem>>, vector<512x4xbf16>,
    %45 = vector.extract_strided_slice %23 {offsets = [0, 2, 1, 0], sizes = [8, 8, 8, 4], strides = [1, 1, 1, 1]} : vector<10x10x10x4xbf16> to vector<8x8x8x4xbf16>
    %46 = vector.shape_cast %45 : vector<8x8x8x4xbf16> to vector<512x4xbf16>
    %c0_58 = arith.constant 0 : index
    %c28 = arith.constant 28 : index
    %47 = vector.load %arg16[%c0_58, %c28] : memref<512x108xbf16, #tpu.memory_space<vmem>>, vector<512x4xbf16>
    tpu.vector_store %arg16[%c0_58, %c28], %46 {strides = array<i32>} : memref<512x108xbf16, #tpu.memory_space<vmem>>, vector<512x4xbf16>,
    %48 = vector.extract_strided_slice %23 {offsets = [0, 2, 2, 0], sizes = [8, 8, 8, 4], strides = [1, 1, 1, 1]} : vector<10x10x10x4xbf16> to vector<8x8x8x4xbf16>
    %49 = vector.shape_cast %48 : vector<8x8x8x4xbf16> to vector<512x4xbf16>
    %c0_59 = arith.constant 0 : index
    %c32 = arith.constant 32 : index
    %50 = vector.load %arg16[%c0_59, %c32] : memref<512x108xbf16, #tpu.memory_space<vmem>>, vector<512x4xbf16>
    tpu.vector_store %arg16[%c0_59, %c32], %49 {strides = array<i32>} : memref<512x108xbf16, #tpu.memory_space<vmem>>, vector<512x4xbf16>,
    %51 = vector.extract_strided_slice %23 {offsets = [1, 0, 0, 0], sizes = [8, 8, 8, 4], strides = [1, 1, 1, 1]} : vector<10x10x10x4xbf16> to vector<8x8x8x4xbf16>
    %52 = vector.shape_cast %51 : vector<8x8x8x4xbf16> to vector<512x4xbf16>
    %c0_60 = arith.constant 0 : index
    %c36 = arith.constant 36 : index
    %53 = vector.load %arg16[%c0_60, %c36] : memref<512x108xbf16, #tpu.memory_space<vmem>>, vector<512x4xbf16>
    tpu.vector_store %arg16[%c0_60, %c36], %52 {strides = array<i32>} : memref<512x108xbf16, #tpu.memory_space<vmem>>, vector<512x4xbf16>,
    %54 = vector.extract_strided_slice %23 {offsets = [1, 0, 1, 0], sizes = [8, 8, 8, 4], strides = [1, 1, 1, 1]} : vector<10x10x10x4xbf16> to vector<8x8x8x4xbf16>
    %55 = vector.shape_cast %54 : vector<8x8x8x4xbf16> to vector<512x4xbf16>
    %c0_61 = arith.constant 0 : index
    %c40 = arith.constant 40 : index
    %56 = vector.load %arg16[%c0_61, %c40] : memref<512x108xbf16, #tpu.memory_space<vmem>>, vector<512x4xbf16>
    tpu.vector_store %arg16[%c0_61, %c40], %55 {strides = array<i32>} : memref<512x108xbf16, #tpu.memory_space<vmem>>, vector<512x4xbf16>,
    %57 = vector.extract_strided_slice %23 {offsets = [1, 0, 2, 0], sizes = [8, 8, 8, 4], strides = [1, 1, 1, 1]} : vector<10x10x10x4xbf16> to vector<8x8x8x4xbf16>
    %58 = vector.shape_cast %57 : vector<8x8x8x4xbf16> to vector<512x4xbf16>
    %c0_62 = arith.constant 0 : index
    %c44 = arith.constant 44 : index
    %59 = vector.load %arg16[%c0_62, %c44] : memref<512x108xbf16, #tpu.memory_space<vmem>>, vector<512x4xbf16>
    tpu.vector_store %arg16[%c0_62, %c44], %58 {strides = array<i32>} : memref<512x108xbf16, #tpu.memory_space<vmem>>, vector<512x4xbf16>,
    %60 = vector.extract_strided_slice %23 {offsets = [1, 1, 0, 0], sizes = [8, 8, 8, 4], strides = [1, 1, 1, 1]} : vector<10x10x10x4xbf16> to vector<8x8x8x4xbf16>
    %61 = vector.shape_cast %60 : vector<8x8x8x4xbf16> to vector<512x4xbf16>
    %c0_63 = arith.constant 0 : index
    %c48 = arith.constant 48 : index
    %62 = vector.load %arg16[%c0_63, %c48] : memref<512x108xbf16, #tpu.memory_space<vmem>>, vector<512x4xbf16>
    tpu.vector_store %arg16[%c0_63, %c48], %61 {strides = array<i32>} : memref<512x108xbf16, #tpu.memory_space<vmem>>, vector<512x4xbf16>,
    %63 = vector.extract_strided_slice %23 {offsets = [1, 1, 1, 0], sizes = [8, 8, 8, 4], strides = [1, 1, 1, 1]} : vector<10x10x10x4xbf16> to vector<8x8x8x4xbf16>
    %64 = vector.shape_cast %63 : vector<8x8x8x4xbf16> to vector<512x4xbf16>
    %c0_64 = arith.constant 0 : index
    %c52 = arith.constant 52 : index
    %65 = vector.load %arg16[%c0_64, %c52] : memref<512x108xbf16, #tpu.memory_space<vmem>>, vector<512x4xbf16>
    tpu.vector_store %arg16[%c0_64, %c52], %64 {strides = array<i32>} : memref<512x108xbf16, #tpu.memory_space<vmem>>, vector<512x4xbf16>,
    %66 = vector.extract_strided_slice %23 {offsets = [1, 1, 2, 0], sizes = [8, 8, 8, 4], strides = [1, 1, 1, 1]} : vector<10x10x10x4xbf16> to vector<8x8x8x4xbf16>
    %67 = vector.shape_cast %66 : vector<8x8x8x4xbf16> to vector<512x4xbf16>
    %c0_65 = arith.constant 0 : index
    %c56 = arith.constant 56 : index
    %68 = vector.load %arg16[%c0_65, %c56] : memref<512x108xbf16, #tpu.memory_space<vmem>>, vector<512x4xbf16>
    tpu.vector_store %arg16[%c0_65, %c56], %67 {strides = array<i32>} : memref<512x108xbf16, #tpu.memory_space<vmem>>, vector<512x4xbf16>,
    %69 = vector.extract_strided_slice %23 {offsets = [1, 2, 0, 0], sizes = [8, 8, 8, 4], strides = [1, 1, 1, 1]} : vector<10x10x10x4xbf16> to vector<8x8x8x4xbf16>
    %70 = vector.shape_cast %69 : vector<8x8x8x4xbf16> to vector<512x4xbf16>
    %c0_66 = arith.constant 0 : index
    %c60 = arith.constant 60 : index
    %71 = vector.load %arg16[%c0_66, %c60] : memref<512x108xbf16, #tpu.memory_space<vmem>>, vector<512x4xbf16>
    tpu.vector_store %arg16[%c0_66, %c60], %70 {strides = array<i32>} : memref<512x108xbf16, #tpu.memory_space<vmem>>, vector<512x4xbf16>,
    %72 = vector.extract_strided_slice %23 {offsets = [1, 2, 1, 0], sizes = [8, 8, 8, 4], strides = [1, 1, 1, 1]} : vector<10x10x10x4xbf16> to vector<8x8x8x4xbf16>
    %73 = vector.shape_cast %72 : vector<8x8x8x4xbf16> to vector<512x4xbf16>
    %c0_67 = arith.constant 0 : index
    %c64 = arith.constant 64 : index
    %74 = vector.load %arg16[%c0_67, %c64] : memref<512x108xbf16, #tpu.memory_space<vmem>>, vector<512x4xbf16>
    tpu.vector_store %arg16[%c0_67, %c64], %73 {strides = array<i32>} : memref<512x108xbf16, #tpu.memory_space<vmem>>, vector<512x4xbf16>,
    %75 = vector.extract_strided_slice %23 {offsets = [1, 2, 2, 0], sizes = [8, 8, 8, 4], strides = [1, 1, 1, 1]} : vector<10x10x10x4xbf16> to vector<8x8x8x4xbf16>
    %76 = vector.shape_cast %75 : vector<8x8x8x4xbf16> to vector<512x4xbf16>
    %c0_68 = arith.constant 0 : index
    %c68 = arith.constant 68 : index
    %77 = vector.load %arg16[%c0_68, %c68] : memref<512x108xbf16, #tpu.memory_space<vmem>>, vector<512x4xbf16>
    tpu.vector_store %arg16[%c0_68, %c68], %76 {strides = array<i32>} : memref<512x108xbf16, #tpu.memory_space<vmem>>, vector<512x4xbf16>,
    %78 = vector.extract_strided_slice %23 {offsets = [2, 0, 0, 0], sizes = [8, 8, 8, 4], strides = [1, 1, 1, 1]} : vector<10x10x10x4xbf16> to vector<8x8x8x4xbf16>
    %79 = vector.shape_cast %78 : vector<8x8x8x4xbf16> to vector<512x4xbf16>
    %c0_69 = arith.constant 0 : index
    %c72 = arith.constant 72 : index
    %80 = vector.load %arg16[%c0_69, %c72] : memref<512x108xbf16, #tpu.memory_space<vmem>>, vector<512x4xbf16>
    tpu.vector_store %arg16[%c0_69, %c72], %79 {strides = array<i32>} : memref<512x108xbf16, #tpu.memory_space<vmem>>, vector<512x4xbf16>,
    %81 = vector.extract_strided_slice %23 {offsets = [2, 0, 1, 0], sizes = [8, 8, 8, 4], strides = [1, 1, 1, 1]} : vector<10x10x10x4xbf16> to vector<8x8x8x4xbf16>
    %82 = vector.shape_cast %81 : vector<8x8x8x4xbf16> to vector<512x4xbf16>
    %c0_70 = arith.constant 0 : index
    %c76 = arith.constant 76 : index
    %83 = vector.load %arg16[%c0_70, %c76] : memref<512x108xbf16, #tpu.memory_space<vmem>>, vector<512x4xbf16>
    tpu.vector_store %arg16[%c0_70, %c76], %82 {strides = array<i32>} : memref<512x108xbf16, #tpu.memory_space<vmem>>, vector<512x4xbf16>,
    %84 = vector.extract_strided_slice %23 {offsets = [2, 0, 2, 0], sizes = [8, 8, 8, 4], strides = [1, 1, 1, 1]} : vector<10x10x10x4xbf16> to vector<8x8x8x4xbf16>
    %85 = vector.shape_cast %84 : vector<8x8x8x4xbf16> to vector<512x4xbf16>
    %c0_71 = arith.constant 0 : index
    %c80 = arith.constant 80 : index
    %86 = vector.load %arg16[%c0_71, %c80] : memref<512x108xbf16, #tpu.memory_space<vmem>>, vector<512x4xbf16>
    tpu.vector_store %arg16[%c0_71, %c80], %85 {strides = array<i32>} : memref<512x108xbf16, #tpu.memory_space<vmem>>, vector<512x4xbf16>,
    %87 = vector.extract_strided_slice %23 {offsets = [2, 1, 0, 0], sizes = [8, 8, 8, 4], strides = [1, 1, 1, 1]} : vector<10x10x10x4xbf16> to vector<8x8x8x4xbf16>
    %88 = vector.shape_cast %87 : vector<8x8x8x4xbf16> to vector<512x4xbf16>
    %c0_72 = arith.constant 0 : index
    %c84 = arith.constant 84 : index
    %89 = vector.load %arg16[%c0_72, %c84] : memref<512x108xbf16, #tpu.memory_space<vmem>>, vector<512x4xbf16>
    tpu.vector_store %arg16[%c0_72, %c84], %88 {strides = array<i32>} : memref<512x108xbf16, #tpu.memory_space<vmem>>, vector<512x4xbf16>,
    %90 = vector.extract_strided_slice %23 {offsets = [2, 1, 1, 0], sizes = [8, 8, 8, 4], strides = [1, 1, 1, 1]} : vector<10x10x10x4xbf16> to vector<8x8x8x4xbf16>
    %91 = vector.shape_cast %90 : vector<8x8x8x4xbf16> to vector<512x4xbf16>
    %c0_73 = arith.constant 0 : index
    %c88 = arith.constant 88 : index
    %92 = vector.load %arg16[%c0_73, %c88] : memref<512x108xbf16, #tpu.memory_space<vmem>>, vector<512x4xbf16>
    tpu.vector_store %arg16[%c0_73, %c88], %91 {strides = array<i32>} : memref<512x108xbf16, #tpu.memory_space<vmem>>, vector<512x4xbf16>,
    %93 = vector.extract_strided_slice %23 {offsets = [2, 1, 2, 0], sizes = [8, 8, 8, 4], strides = [1, 1, 1, 1]} : vector<10x10x10x4xbf16> to vector<8x8x8x4xbf16>
    %94 = vector.shape_cast %93 : vector<8x8x8x4xbf16> to vector<512x4xbf16>
    %c0_74 = arith.constant 0 : index
    %c92 = arith.constant 92 : index
    %95 = vector.load %arg16[%c0_74, %c92] : memref<512x108xbf16, #tpu.memory_space<vmem>>, vector<512x4xbf16>
    tpu.vector_store %arg16[%c0_74, %c92], %94 {strides = array<i32>} : memref<512x108xbf16, #tpu.memory_space<vmem>>, vector<512x4xbf16>,
    %96 = vector.extract_strided_slice %23 {offsets = [2, 2, 0, 0], sizes = [8, 8, 8, 4], strides = [1, 1, 1, 1]} : vector<10x10x10x4xbf16> to vector<8x8x8x4xbf16>
    %97 = vector.shape_cast %96 : vector<8x8x8x4xbf16> to vector<512x4xbf16>
    %c0_75 = arith.constant 0 : index
    %c96 = arith.constant 96 : index
    %98 = vector.load %arg16[%c0_75, %c96] : memref<512x108xbf16, #tpu.memory_space<vmem>>, vector<512x4xbf16>
    tpu.vector_store %arg16[%c0_75, %c96], %97 {strides = array<i32>} : memref<512x108xbf16, #tpu.memory_space<vmem>>, vector<512x4xbf16>,
    %99 = vector.extract_strided_slice %23 {offsets = [2, 2, 1, 0], sizes = [8, 8, 8, 4], strides = [1, 1, 1, 1]} : vector<10x10x10x4xbf16> to vector<8x8x8x4xbf16>
    %100 = vector.shape_cast %99 : vector<8x8x8x4xbf16> to vector<512x4xbf16>
    %c0_76 = arith.constant 0 : index
    %c100 = arith.constant 100 : index
    %101 = vector.load %arg16[%c0_76, %c100] : memref<512x108xbf16, #tpu.memory_space<vmem>>, vector<512x4xbf16>
    tpu.vector_store %arg16[%c0_76, %c100], %100 {strides = array<i32>} : memref<512x108xbf16, #tpu.memory_space<vmem>>, vector<512x4xbf16>,
    %102 = vector.extract_strided_slice %23 {offsets = [2, 2, 2, 0], sizes = [8, 8, 8, 4], strides = [1, 1, 1, 1]} : vector<10x10x10x4xbf16> to vector<8x8x8x4xbf16>
    %103 = vector.shape_cast %102 : vector<8x8x8x4xbf16> to vector<512x4xbf16>
    %c0_77 = arith.constant 0 : index
    %c104 = arith.constant 104 : index
    %104 = vector.load %arg16[%c0_77, %c104] : memref<512x108xbf16, #tpu.memory_space<vmem>>, vector<512x4xbf16>
    tpu.vector_store %arg16[%c0_77, %c104], %103 {strides = array<i32>} : memref<512x108xbf16, #tpu.memory_space<vmem>>, vector<512x4xbf16>,
    %c0_78 = arith.constant 0 : index
    %c0_79 = arith.constant 0 : index
    %105 = vector.load %arg16[%c0_78, %c0_79] : memref<512x108xbf16, #tpu.memory_space<vmem>>, vector<512x108xbf16>
    %c0_80 = arith.constant 0 : index
    %c0_81 = arith.constant 0 : index
    %106 = vector.load %arg12[%c0_80, %c0_81] : memref<108x128xbf16, #tpu.memory_space<vmem>>, vector<108x128xbf16>
    %cst = arith.constant dense<0.000000e+00> : vector<512x128xf32>
    %107 = tpu.matmul %105, %106, %cst {dimension_numbers = #tpu.dot_dimension_numbers<[1], [0], [0], [1], [0, 0, 1, 1], [], []>} : vector<512x108xbf16>, vector<108x128xbf16>, vector<512x128xf32> -> vector<512x128xf32>
    %c0_82 = arith.constant 0 : index
    %c0_83 = arith.constant 0 : index
    %c0_84 = arith.constant 0 : index
    %108 = vector.load %arg13[%c0_82, %c0_83, %c0_84] : memref<1x512x128xf32, #tpu.memory_space<vmem>>, vector<1x512x128xf32>
    %109 = vector.shape_cast %108 : vector<1x512x128xf32> to vector<512x128xf32>
    %110 = vector.shape_cast %107 : vector<512x128xf32> to vector<1x512x128xf32>
    tpu.vector_store %arg13[%c0_82, %c0_83, %c0_84], %110 {strides = array<i32>} : memref<1x512x128xf32, #tpu.memory_space<vmem>>, vector<1x512x128xf32>,
    %c0_85 = arith.constant 0 : index
    %c0_86 = arith.constant 0 : index
    %c0_87 = arith.constant 0 : index
    %111 = vector.load %arg14[%c0_85, %c0_86, %c0_87] : memref<1x8x128xf32, #tpu.memory_space<vmem>>, vector<1x1x128xf32>
    %112 = vector.shape_cast %111 : vector<1x1x128xf32> to vector<1x128xf32>
    %cst_88 = arith.constant dense<0.000000e+00> : vector<128xf32>
    %113 = vector.multi_reduction <add>, %107, %cst_88 [0] : vector<512x128xf32> to vector<128xf32>
    %114 = vector.shape_cast %113 : vector<128xf32> to vector<1x128xf32>
    %115 = arith.addf %112, %114 : vector<1x128xf32>
    %c0_89 = arith.constant 0 : index
    %c0_90 = arith.constant 0 : index
    %c0_91 = arith.constant 0 : index
    %116 = vector.load %arg14[%c0_89, %c0_90, %c0_91] : memref<1x8x128xf32, #tpu.memory_space<vmem>>, vector<1x1x128xf32>
    %117 = vector.shape_cast %116 : vector<1x1x128xf32> to vector<1x128xf32>
    %118 = vector.shape_cast %115 : vector<1x128xf32> to vector<1x1x128xf32>
    tpu.vector_store %arg14[%c0_89, %c0_90, %c0_91], %118 {strides = array<i32>} : memref<1x8x128xf32, #tpu.memory_space<vmem>>, vector<1x1x128xf32>,
    %c0_92 = arith.constant 0 : index
    %c0_93 = arith.constant 0 : index
    %c0_94 = arith.constant 0 : index
    %119 = vector.load %arg15[%c0_92, %c0_93, %c0_94] : memref<1x8x128xf32, #tpu.memory_space<vmem>>, vector<1x1x128xf32>
    %120 = vector.shape_cast %119 : vector<1x1x128xf32> to vector<1x128xf32>
    %121 = arith.mulf %107, %107 : vector<512x128xf32>
    %cst_95 = arith.constant dense<0.000000e+00> : vector<128xf32>
    %122 = vector.multi_reduction <add>, %121, %cst_95 [0] : vector<512x128xf32> to vector<128xf32>
    %123 = vector.shape_cast %122 : vector<128xf32> to vector<1x128xf32>
    %124 = arith.addf %120, %123 : vector<1x128xf32>
    %c0_96 = arith.constant 0 : index
    %c0_97 = arith.constant 0 : index
    %c0_98 = arith.constant 0 : index
    %125 = vector.load %arg15[%c0_96, %c0_97, %c0_98] : memref<1x8x128xf32, #tpu.memory_space<vmem>>, vector<1x1x128xf32>
    %126 = vector.shape_cast %125 : vector<1x1x128xf32> to vector<1x128xf32>
    %127 = vector.shape_cast %124 : vector<1x128xf32> to vector<1x1x128xf32>
    tpu.vector_store %arg15[%c0_96, %c0_97, %c0_98], %127 {strides = array<i32>} : memref<1x8x128xf32, #tpu.memory_space<vmem>>, vector<1x1x128xf32>,
    return
  }
  func.func @transform_0(%arg0: i32, %arg1: i32) -> (i32, i32, i32, i32, i32) {
    %c8_i32 = arith.constant 8 : i32
    %0 = arith.muli %arg1, %c8_i32 : i32
    %c0_i32 = arith.constant 0 : i32
    %1 = arith.addi %0, %c0_i32 : i32
    %c0_i32_0 = arith.constant 0 : i32
    %c0_i32_1 = arith.constant 0 : i32
    %c0_i32_2 = arith.constant 0 : i32
    %c0_i32_3 = arith.constant 0 : i32
    return %arg0, %1, %c0_i32_0, %c0_i32_1, %c0_i32_2 : i32, i32, i32, i32, i32
  }
  func.func @transform_1(%arg0: i32, %arg1: i32) -> (i32, i32, i32, i32, i32) {
    %c8_i32 = arith.constant 8 : i32
    %0 = arith.muli %arg1, %c8_i32 : i32
    %c1_i32 = arith.constant 1 : i32
    %1 = arith.addi %0, %c1_i32 : i32
    %c0_i32 = arith.constant 0 : i32
    %c0_i32_0 = arith.constant 0 : i32
    %c0_i32_1 = arith.constant 0 : i32
    %c0_i32_2 = arith.constant 0 : i32
    return %arg0, %1, %c0_i32, %c0_i32_0, %c0_i32_1 : i32, i32, i32, i32, i32
  }
  func.func @transform_2(%arg0: i32, %arg1: i32) -> (i32, i32, i32, i32, i32) {
    %c8_i32 = arith.constant 8 : i32
    %0 = arith.muli %arg1, %c8_i32 : i32
    %c2_i32 = arith.constant 2 : i32
    %1 = arith.addi %0, %c2_i32 : i32
    %c0_i32 = arith.constant 0 : i32
    %c0_i32_0 = arith.constant 0 : i32
    %c0_i32_1 = arith.constant 0 : i32
    %c0_i32_2 = arith.constant 0 : i32
    return %arg0, %1, %c0_i32, %c0_i32_0, %c0_i32_1 : i32, i32, i32, i32, i32
  }
  func.func @transform_3(%arg0: i32, %arg1: i32) -> (i32, i32, i32, i32, i32) {
    %c8_i32 = arith.constant 8 : i32
    %0 = arith.muli %arg1, %c8_i32 : i32
    %c3_i32 = arith.constant 3 : i32
    %1 = arith.addi %0, %c3_i32 : i32
    %c0_i32 = arith.constant 0 : i32
    %c0_i32_0 = arith.constant 0 : i32
    %c0_i32_1 = arith.constant 0 : i32
    %c0_i32_2 = arith.constant 0 : i32
    return %arg0, %1, %c0_i32, %c0_i32_0, %c0_i32_1 : i32, i32, i32, i32, i32
  }
  func.func @transform_4(%arg0: i32, %arg1: i32) -> (i32, i32, i32, i32, i32) {
    %c8_i32 = arith.constant 8 : i32
    %0 = arith.muli %arg1, %c8_i32 : i32
    %c4_i32 = arith.constant 4 : i32
    %1 = arith.addi %0, %c4_i32 : i32
    %c0_i32 = arith.constant 0 : i32
    %c0_i32_0 = arith.constant 0 : i32
    %c0_i32_1 = arith.constant 0 : i32
    %c0_i32_2 = arith.constant 0 : i32
    return %arg0, %1, %c0_i32, %c0_i32_0, %c0_i32_1 : i32, i32, i32, i32, i32
  }
  func.func @transform_5(%arg0: i32, %arg1: i32) -> (i32, i32, i32, i32, i32) {
    %c8_i32 = arith.constant 8 : i32
    %0 = arith.muli %arg1, %c8_i32 : i32
    %c5_i32 = arith.constant 5 : i32
    %1 = arith.addi %0, %c5_i32 : i32
    %c0_i32 = arith.constant 0 : i32
    %c0_i32_0 = arith.constant 0 : i32
    %c0_i32_1 = arith.constant 0 : i32
    %c0_i32_2 = arith.constant 0 : i32
    return %arg0, %1, %c0_i32, %c0_i32_0, %c0_i32_1 : i32, i32, i32, i32, i32
  }
  func.func @transform_6(%arg0: i32, %arg1: i32) -> (i32, i32, i32, i32, i32) {
    %c8_i32 = arith.constant 8 : i32
    %0 = arith.muli %arg1, %c8_i32 : i32
    %c6_i32 = arith.constant 6 : i32
    %1 = arith.addi %0, %c6_i32 : i32
    %c0_i32 = arith.constant 0 : i32
    %c0_i32_0 = arith.constant 0 : i32
    %c0_i32_1 = arith.constant 0 : i32
    %c0_i32_2 = arith.constant 0 : i32
    return %arg0, %1, %c0_i32, %c0_i32_0, %c0_i32_1 : i32, i32, i32, i32, i32
  }
  func.func @transform_7(%arg0: i32, %arg1: i32) -> (i32, i32, i32, i32, i32) {
    %c8_i32 = arith.constant 8 : i32
    %0 = arith.muli %arg1, %c8_i32 : i32
    %c7_i32 = arith.constant 7 : i32
    %1 = arith.addi %0, %c7_i32 : i32
    %c0_i32 = arith.constant 0 : i32
    %c0_i32_0 = arith.constant 0 : i32
    %c0_i32_1 = arith.constant 0 : i32
    %c0_i32_2 = arith.constant 0 : i32
    return %arg0, %1, %c0_i32, %c0_i32_0, %c0_i32_1 : i32, i32, i32, i32, i32
  }
  func.func @transform_8(%arg0: i32, %arg1: i32) -> (i32, i32, i32, i32, i32) {
    %c8_i32 = arith.constant 8 : i32
    %0 = arith.muli %arg1, %c8_i32 : i32
    %c8_i32_0 = arith.constant 8 : i32
    %1 = arith.addi %0, %c8_i32_0 : i32
    %c0_i32 = arith.constant 0 : i32
    %c0_i32_1 = arith.constant 0 : i32
    %c0_i32_2 = arith.constant 0 : i32
    %c0_i32_3 = arith.constant 0 : i32
    return %arg0, %1, %c0_i32, %c0_i32_1, %c0_i32_2 : i32, i32, i32, i32, i32
  }
  func.func @transform_9(%arg0: i32, %arg1: i32) -> (i32, i32, i32, i32, i32) {
    %c8_i32 = arith.constant 8 : i32
    %0 = arith.muli %arg1, %c8_i32 : i32
    %c9_i32 = arith.constant 9 : i32
    %1 = arith.addi %0, %c9_i32 : i32
    %c0_i32 = arith.constant 0 : i32
    %c0_i32_0 = arith.constant 0 : i32
    %c0_i32_1 = arith.constant 0 : i32
    %c0_i32_2 = arith.constant 0 : i32
    return %arg0, %1, %c0_i32, %c0_i32_0, %c0_i32_1 : i32, i32, i32, i32, i32
  }
  func.func @transform_10(%arg0: i32, %arg1: i32) -> (i32, i32) {
    %c0_i32 = arith.constant 0 : i32
    %c0_i32_0 = arith.constant 0 : i32
    %c0_i32_1 = arith.constant 0 : i32
    return %c0_i32, %c0_i32_0 : i32, i32
  }
  func.func @transform_11(%arg0: i32, %arg1: i32) -> (i32, i32, i32) {
    %c0_i32 = arith.constant 0 : i32
    %c0_i32_0 = arith.constant 0 : i32
    return %arg0, %arg1, %c0_i32 : i32, i32, i32
  }
  func.func @transform_12(%arg0: i32, %arg1: i32) -> (i32, i32, i32) {
    %c0_i32 = arith.constant 0 : i32
    %c0_i32_0 = arith.constant 0 : i32
    %c0_i32_1 = arith.constant 0 : i32
    return %arg0, %c0_i32, %c0_i32_0 : i32, i32, i32
  }
  func.func @transform_13(%arg0: i32, %arg1: i32) -> (i32, i32, i32) {
    %c0_i32 = arith.constant 0 : i32
    %c0_i32_0 = arith.constant 0 : i32
    %c0_i32_1 = arith.constant 0 : i32
    return %arg0, %c0_i32, %c0_i32_0 : i32, i32, i32
  }
}

</mosaic_0001>

<llo_original>
// kernel: tpu_custom_call.1
$region0: #{tpu_custom_call.1}
  #allocation0 [shape = 'u32[]', space=smem, size = 0x4, offset = 0x4, fixed_abs, tag = 'smem constant byte address 0x4 - core index']
  #allocation1 [shape = 'u32[144,128]{1,0:T(1,128)}', space=vmem, size = 0x12000, scoped, tag = 'internal scratch']
  #allocation2 [shape = 'bf16[512,108]{1,0:T(16,128)(2,1)}', space=vmem, size = 0x20000, scoped, tag = 'scratch operand']
  %s0 = inlined_call_operand.vmem [shape: bf16[2,10,10,10,4], index: 0, kind: input, shape index: {}]
  %s1 = inlined_call_operand.vmem [shape: bf16[2,10,10,10,4], index: 1, kind: input, shape index: {}]
  %s2 = inlined_call_operand.vmem [shape: bf16[2,10,10,10,4], index: 2, kind: input, shape index: {}]
  %s3 = inlined_call_operand.vmem [shape: bf16[2,10,10,10,4], index: 3, kind: input, shape index: {}]
  %s4 = inlined_call_operand.vmem [shape: bf16[2,10,10,10,4], index: 4, kind: input, shape index: {}]
  %s5 = inlined_call_operand.vmem [shape: bf16[2,10,10,10,4], index: 5, kind: input, shape index: {}]
  %s6 = inlined_call_operand.vmem [shape: bf16[2,10,10,10,4], index: 6, kind: input, shape index: {}]
  %s7 = inlined_call_operand.vmem [shape: bf16[2,10,10,10,4], index: 7, kind: input, shape index: {}]
  %s8 = inlined_call_operand.vmem [shape: bf16[2,10,10,10,4], index: 8, kind: input, shape index: {}]
  %s9 = inlined_call_operand.vmem [shape: bf16[2,10,10,10,4], index: 9, kind: input, shape index: {}]
  %s10 = inlined_call_operand.vmem [shape: bf16[108,128], index: 10, kind: input, shape index: {}]
  %s11 = inlined_call_operand.hbm [shape: f32[2,512,128], index: 11, kind: output, shape index: {0}]
  %s12 = inlined_call_operand.hbm [shape: f32[2,8,128], index: 12, kind: output, shape index: {1}]
  %s13 = inlined_call_operand.hbm [shape: f32[2,8,128], index: 13, kind: output, shape index: {2}]
  %14 = xla_tuple %s11, %s12, %s13
  %s15 = sld [smem:[#allocation0]]
  $region97: #{tpu_custom_call.1} parent=0
    _
  %s17 = ssub.s32 1, %s15
  %s18 = scalar_select 0, %s17, %s15
  $region1: #{tpu_custom_call.1} parent=0
    #allocation3 [shape = 'u8[524288]{0}', space=vmem, size = 0x80000, scoped, tag = 'output window, operand 0']
    #allocation4 [shape = 's32[2]{0}', space=sflag, size = 0x8, scoped, tag = 'scoped memory for tpu_custom_call.1']
    #allocation5 [shape = 'u8[8192]{0}', space=vmem, size = 0x2000, scoped, tag = 'output window, operand 1']
    #allocation6 [shape = 's32[2]{0}', space=sflag, size = 0x8, scoped, tag = 'scoped memory for tpu_custom_call.1']
    #allocation7 [shape = 'u8[8192]{0}', space=vmem, size = 0x2000, scoped, tag = 'output window, operand 2']
    %19 = vsyncpa [#allocation4], 0
    %s20 = scalar_lea.sflag [#allocation4], 1
    %21 = vsyncpa %s20, 0
    %22 = vsyncpa [#allocation6], 0
    %s23 = scalar_lea.sflag [#allocation6], 1
    %24 = vsyncpa %s23, 0
    loop: start=0, step=1, limit=4
    $region2: #{tpu_custom_call.1} parent=1 // loop_pre_header
      _
    $region3: #{tpu_custom_call.1} parent=1 // loop_header
      %s26 = sphi 0, %s30
      %p27 = scmp.ge.s32.totalorder %s26, 4
      %s33 = sphi 0, %s45
      %s34 = sphi 0, %s41
      %s35 = sphi 0, %s33
      %s36 = sphi 0, %s34
      %s37 = sphi 0, %s35
      %s38 = sphi 0, %s36
      %s52 = sphi 0, %s54
      %s55 = sphi 0, %s52
      %s56 = sphi 0, %s55
      %s72 = sphi 0, %s56
      %s84 = sphi 0, %s86
      %s87 = sphi 0, %s84
      %s88 = sphi 0, %s87
      %s104 = sphi 0, %s88
      %s116 = sphi 0, %s118
      %s119 = sphi 0, %s116
      %s120 = sphi 0, %s119
      %s136 = sphi 0, %s120
      %s148 = sphi 0, %s150
      %s151 = sphi 0, %s148
      %s152 = sphi 0, %s151
      %s168 = sphi 0, %s152
      %s180 = sphi 0, %s182
      %s183 = sphi 0, %s180
      %s184 = sphi 0, %s183
      %s200 = sphi 0, %s184
      %s212 = sphi 0, %s214
      %s215 = sphi 0, %s212
      %s216 = sphi 0, %s215
      %s232 = sphi 0, %s216
      %s244 = sphi 0, %s246
      %s247 = sphi 0, %s244
      %s248 = sphi 0, %s247
      %s264 = sphi 0, %s248
      %s276 = sphi 0, %s278
      %s279 = sphi 0, %s276
      %s280 = sphi 0, %s279
      %s296 = sphi 0, %s280
      %s308 = sphi 0, %s310
      %s311 = sphi 0, %s308
      %s312 = sphi 0, %s311
      %s328 = sphi 0, %s312
      %s340 = sphi 0, %s342
      %s343 = sphi 0, %s340
      %s344 = sphi 0, %s343
      %s360 = sphi 0, %s344
      %s364 = sphi 0, %s364
      %s366 = sphi 0, %s364
      %s367 = sphi 0, %s366
      %s381 = sphi 0, %s367
      %s389 = sphi 0, %s391
      %s392 = sphi 0, %s389
      %s393 = sphi 0, %s392
      %s409 = sphi 0, %s393
      %s415 = sphi 0, %s417
      %s418 = sphi 0, %s415
      %s419 = sphi 0, %s418
      %s435 = sphi 0, %s419
      %s441 = sphi 0, %s443
      %s444 = sphi 0, %s441
      %s445 = sphi 0, %s444
      %s461 = sphi 0, %s445
    $region4: #{tpu_custom_call.1} parent=1 // loop_header_branch
      %29 = sbr.rel (%p27) target = $region8
    $region5: #{tpu_custom_call.1} parent=1 // loop_body
      %s31 = ssub.s32 %s26, 1
      %s32 = ssub.s32 %s26, 2
      %s39 = sadd.s32 1, %s34
      %p40 = scmp.ge.s32.totalorder %s39, 1
      %s41 = scalar_select %p40, 0, %s39
      %s42 = sadd.s32 1, %s33
      %s43 = scalar_select %p40, %s42, %s33
      %p44 = scmp.ge.s32.totalorder %s43, 2
      %s45 = scalar_select %p44, 0, %s43
      %s46 = smul.u32 %s34, 8
      %s47 = smul.u32 %s41, 8
      %s48 = ssub.s32 %s33, %s45
      %s49 = ssub.s32 %s46, %s47
      %s50 = sor.u32 %s48, %s49
      %p51 = scmp.eq.s32.totalorder %s50, 0
      %s53 = sadd.s32 %s52, 1
      %s54 = scalar_select %p51, %s52, %s53
      %p57 = pneg %p51
      %p58 = scmp.eq.s32.totalorder %s26, 1
      %p59 = por %p57, %p58
      %p60 = scmp.ne.s32.totalorder %s52, %s55
      %p61 = scmp.eq.s32.totalorder %s26, 0
      %p62 = por %p60, %p61
      %p63 = scmp.ne.s32.totalorder %s52, %s55
      %p64 = scmp.eq.s32.totalorder %s31, 1
      %p65 = por %p63, %p64
      %p66 = scmp.ne.s32.totalorder %s55, %s56
      %p67 = scmp.eq.s32.totalorder %s31, 0
      %p68 = por %p66, %p67
      %p69 = scmp.ne.s32.totalorder %s55, %s56
      %p70 = scmp.eq.s32.totalorder %s32, 1
      %p71 = por %p69, %p70
      %p73 = scmp.ne.s32.totalorder %s56, %s72
      %p74 = scmp.eq.s32.totalorder %s32, 0
      %p75 = por %p73, %p74
      %s76 = smul.u32 %s34, 8
      %s77 = sadd.s32 %s76, 1
      %s78 = smul.u32 %s41, 8
      %s79 = sadd.s32 %s78, 1
      %s80 = ssub.s32 %s33, %s45
      %s81 = ssub.s32 %s77, %s79
      %s82 = sor.u32 %s80, %s81
      %p83 = scmp.eq.s32.totalorder %s82, 0
      %s85 = sadd.s32 %s84, 1
      %s86 = scalar_select %p83, %s84, %s85
      %p89 = pneg %p83
      %p90 = scmp.eq.s32.totalorder %s26, 1
      %p91 = por %p89, %p90
      %p92 = scmp.ne.s32.totalorder %s84, %s87
      %p93 = scmp.eq.s32.totalorder %s26, 0
      %p94 = por %p92, %p93
      %p95 = scmp.ne.s32.totalorder %s84, %s87
      %p96 = scmp.eq.s32.totalorder %s31, 1
      %p97 = por %p95, %p96
      %p98 = scmp.ne.s32.totalorder %s87, %s88
      %p99 = scmp.eq.s32.totalorder %s31, 0
      %p100 = por %p98, %p99
      %p101 = scmp.ne.s32.totalorder %s87, %s88
      %p102 = scmp.eq.s32.totalorder %s32, 1
      %p103 = por %p101, %p102
      %p105 = scmp.ne.s32.totalorder %s88, %s104
      %p106 = scmp.eq.s32.totalorder %s32, 0
      %p107 = por %p105, %p106
      %s108 = smul.u32 %s34, 8
      %s109 = sadd.s32 %s108, 2
      %s110 = smul.u32 %s41, 8
      %s111 = sadd.s32 %s110, 2
      %s112 = ssub.s32 %s33, %s45
      %s113 = ssub.s32 %s109, %s111
      %s114 = sor.u32 %s112, %s113
      %p115 = scmp.eq.s32.totalorder %s114, 0
      %s117 = sadd.s32 %s116, 1
      %s118 = scalar_select %p115, %s116, %s117
      %p121 = pneg %p115
      %p122 = scmp.eq.s32.totalorder %s26, 1
      %p123 = por %p121, %p122
      %p124 = scmp.ne.s32.totalorder %s116, %s119
      %p125 = scmp.eq.s32.totalorder %s26, 0
      %p126 = por %p124, %p125
      %p127 = scmp.ne.s32.totalorder %s116, %s119
      %p128 = scmp.eq.s32.totalorder %s31, 1
      %p129 = por %p127, %p128
      %p130 = scmp.ne.s32.totalorder %s119, %s120
      %p131 = scmp.eq.s32.totalorder %s31, 0
      %p132 = por %p130, %p131
      %p133 = scmp.ne.s32.totalorder %s119, %s120
      %p134 = scmp.eq.s32.totalorder %s32, 1
      %p135 = por %p133, %p134
      %p137 = scmp.ne.s32.totalorder %s120, %s136
      %p138 = scmp.eq.s32.totalorder %s32, 0
      %p139 = por %p137, %p138
      %s140 = smul.u32 %s34, 8
      %s141 = sadd.s32 %s140, 3
      %s142 = smul.u32 %s41, 8
      %s143 = sadd.s32 %s142, 3
      %s144 = ssub.s32 %s33, %s45
      %s145 = ssub.s32 %s141, %s143
      %s146 = sor.u32 %s144, %s145
      %p147 = scmp.eq.s32.totalorder %s146, 0
      %s149 = sadd.s32 %s148, 1
      %s150 = scalar_select %p147, %s148, %s149
      %p153 = pneg %p147
      %p154 = scmp.eq.s32.totalorder %s26, 1
      %p155 = por %p153, %p154
      %p156 = scmp.ne.s32.totalorder %s148, %s151
      %p157 = scmp.eq.s32.totalorder %s26, 0
      %p158 = por %p156, %p157
      %p159 = scmp.ne.s32.totalorder %s148, %s151
      %p160 = scmp.eq.s32.totalorder %s31, 1
      %p161 = por %p159, %p160
      %p162 = scmp.ne.s32.totalorder %s151, %s152
      %p163 = scmp.eq.s32.totalorder %s31, 0
      %p164 = por %p162, %p163
      %p165 = scmp.ne.s32.totalorder %s151, %s152
      %p166 = scmp.eq.s32.totalorder %s32, 1
      %p167 = por %p165, %p166
      %p169 = scmp.ne.s32.totalorder %s152, %s168
      %p170 = scmp.eq.s32.totalorder %s32, 0
      %p171 = por %p169, %p170
      %s172 = smul.u32 %s34, 8
      %s173 = sadd.s32 %s172, 4
      %s174 = smul.u32 %s41, 8
      %s175 = sadd.s32 %s174, 4
      %s176 = ssub.s32 %s33, %s45
      %s177 = ssub.s32 %s173, %s175
      %s178 = sor.u32 %s176, %s177
      %p179 = scmp.eq.s32.totalorder %s178, 0
      %s181 = sadd.s32 %s180, 1
      %s182 = scalar_select %p179, %s180, %s181
      %p185 = pneg %p179
      %p186 = scmp.eq.s32.totalorder %s26, 1
      %p187 = por %p185, %p186
      %p188 = scmp.ne.s32.totalorder %s180, %s183
      %p189 = scmp.eq.s32.totalorder %s26, 0
      %p190 = por %p188, %p189
      %p191 = scmp.ne.s32.totalorder %s180, %s183
      %p192 = scmp.eq.s32.totalorder %s31, 1
      %p193 = por %p191, %p192
      %p194 = scmp.ne.s32.totalorder %s183, %s184
      %p195 = scmp.eq.s32.totalorder %s31, 0
      %p196 = por %p194, %p195
      %p197 = scmp.ne.s32.totalorder %s183, %s184
      %p198 = scmp.eq.s32.totalorder %s32, 1
      %p199 = por %p197, %p198
      %p201 = scmp.ne.s32.totalorder %s184, %s200
      %p202 = scmp.eq.s32.totalorder %s32, 0
      %p203 = por %p201, %p202
      %s204 = smul.u32 %s34, 8
      %s205 = sadd.s32 %s204, 5
      %s206 = smul.u32 %s41, 8
      %s207 = sadd.s32 %s206, 5
      %s208 = ssub.s32 %s33, %s45
      %s209 = ssub.s32 %s205, %s207
      %s210 = sor.u32 %s208, %s209
      %p211 = scmp.eq.s32.totalorder %s210, 0
      %s213 = sadd.s32 %s212, 1
      %s214 = scalar_select %p211, %s212, %s213
      %p217 = pneg %p211
      %p218 = scmp.eq.s32.totalorder %s26, 1
      %p219 = por %p217, %p218
      %p220 = scmp.ne.s32.totalorder %s212, %s215
      %p221 = scmp.eq.s32.totalorder %s26, 0
      %p222 = por %p220, %p221
      %p223 = scmp.ne.s32.totalorder %s212, %s215
      %p224 = scmp.eq.s32.totalorder %s31, 1
      %p225 = por %p223, %p224
      %p226 = scmp.ne.s32.totalorder %s215, %s216
      %p227 = scmp.eq.s32.totalorder %s31, 0
      %p228 = por %p226, %p227
      %p229 = scmp.ne.s32.totalorder %s215, %s216
      %p230 = scmp.eq.s32.totalorder %s32, 1
      %p231 = por %p229, %p230
      %p233 = scmp.ne.s32.totalorder %s216, %s232
      %p234 = scmp.eq.s32.totalorder %s32, 0
      %p235 = por %p233, %p234
      %s236 = smul.u32 %s34, 8
      %s237 = sadd.s32 %s236, 6
      %s238 = smul.u32 %s41, 8
      %s239 = sadd.s32 %s238, 6
      %s240 = ssub.s32 %s33, %s45
      %s241 = ssub.s32 %s237, %s239
      %s242 = sor.u32 %s240, %s241
      %p243 = scmp.eq.s32.totalorder %s242, 0
      %s245 = sadd.s32 %s244, 1
      %s246 = scalar_select %p243, %s244, %s245
      %p249 = pneg %p243
      %p250 = scmp.eq.s32.totalorder %s26, 1
      %p251 = por %p249, %p250
      %p252 = scmp.ne.s32.totalorder %s244, %s247
      %p253 = scmp.eq.s32.totalorder %s26, 0
      %p254 = por %p252, %p253
      %p255 = scmp.ne.s32.totalorder %s244, %s247
      %p256 = scmp.eq.s32.totalorder %s31, 1
      %p257 = por %p255, %p256
      %p258 = scmp.ne.s32.totalorder %s247, %s248
      %p259 = scmp.eq.s32.totalorder %s31, 0
      %p260 = por %p258, %p259
      %p261 = scmp.ne.s32.totalorder %s247, %s248
      %p262 = scmp.eq.s32.totalorder %s32, 1
      %p263 = por %p261, %p262
      %p265 = scmp.ne.s32.totalorder %s248, %s264
      %p266 = scmp.eq.s32.totalorder %s32, 0
      %p267 = por %p265, %p266
      %s268 = smul.u32 %s34, 8
      %s269 = sadd.s32 %s268, 7
      %s270 = smul.u32 %s41, 8
      %s271 = sadd.s32 %s270, 7
      %s272 = ssub.s32 %s33, %s45
      %s273 = ssub.s32 %s269, %s271
      %s274 = sor.u32 %s272, %s273
      %p275 = scmp.eq.s32.totalorder %s274, 0
      %s277 = sadd.s32 %s276, 1
      %s278 = scalar_select %p275, %s276, %s277
      %p281 = pneg %p275
      %p282 = scmp.eq.s32.totalorder %s26, 1
      %p283 = por %p281, %p282
      %p284 = scmp.ne.s32.totalorder %s276, %s279
      %p285 = scmp.eq.s32.totalorder %s26, 0
      %p286 = por %p284, %p285
      %p287 = scmp.ne.s32.totalorder %s276, %s279
      %p288 = scmp.eq.s32.totalorder %s31, 1
      %p289 = por %p287, %p288
      %p290 = scmp.ne.s32.totalorder %s279, %s280
      %p291 = scmp.eq.s32.totalorder %s31, 0
      %p292 = por %p290, %p291
      %p293 = scmp.ne.s32.totalorder %s279, %s280
      %p294 = scmp.eq.s32.totalorder %s32, 1
      %p295 = por %p293, %p294
      %p297 = scmp.ne.s32.totalorder %s280, %s296
      %p298 = scmp.eq.s32.totalorder %s32, 0
      %p299 = por %p297, %p298
      %s300 = smul.u32 %s34, 8
      %s301 = sadd.s32 %s300, 8
      %s302 = smul.u32 %s41, 8
      %s303 = sadd.s32 %s302, 8
      %s304 = ssub.s32 %s33, %s45
      %s305 = ssub.s32 %s301, %s303
      %s306 = sor.u32 %s304, %s305
      %p307 = scmp.eq.s32.totalorder %s306, 0
      %s309 = sadd.s32 %s308, 1
      %s310 = scalar_select %p307, %s308, %s309
      %p313 = pneg %p307
      %p314 = scmp.eq.s32.totalorder %s26, 1
      %p315 = por %p313, %p314
      %p316 = scmp.ne.s32.totalorder %s308, %s311
      %p317 = scmp.eq.s32.totalorder %s26, 0
      %p318 = por %p316, %p317
      %p319 = scmp.ne.s32.totalorder %s308, %s311
      %p320 = scmp.eq.s32.totalorder %s31, 1
      %p321 = por %p319, %p320
      %p322 = scmp.ne.s32.totalorder %s311, %s312
      %p323 = scmp.eq.s32.totalorder %s31, 0
      %p324 = por %p322, %p323
      %p325 = scmp.ne.s32.totalorder %s311, %s312
      %p326 = scmp.eq.s32.totalorder %s32, 1
      %p327 = por %p325, %p326
      %p329 = scmp.ne.s32.totalorder %s312, %s328
      %p330 = scmp.eq.s32.totalorder %s32, 0
      %p331 = por %p329, %p330
      %s332 = smul.u32 %s34, 8
      %s333 = sadd.s32 %s332, 9
      %s334 = smul.u32 %s41, 8
      %s335 = sadd.s32 %s334, 9
      %s336 = ssub.s32 %s33, %s45
      %s337 = ssub.s32 %s333, %s335
      %s338 = sor.u32 %s336, %s337
      %p339 = scmp.eq.s32.totalorder %s338, 0
      %s341 = sadd.s32 %s340, 1
      %s342 = scalar_select %p339, %s340, %s341
      %p345 = pneg %p339
      %p346 = scmp.eq.s32.totalorder %s26, 1
      %p347 = por %p345, %p346
      %p348 = scmp.ne.s32.totalorder %s340, %s343
      %p349 = scmp.eq.s32.totalorder %s26, 0
      %p350 = por %p348, %p349
      %p351 = scmp.ne.s32.totalorder %s340, %s343
      %p352 = scmp.eq.s32.totalorder %s31, 1
      %p353 = por %p351, %p352
      %p354 = scmp.ne.s32.totalorder %s343, %s344
      %p355 = scmp.eq.s32.totalorder %s31, 0
      %p356 = por %p354, %p355
      %p357 = scmp.ne.s32.totalorder %s343, %s344
      %p358 = scmp.eq.s32.totalorder %s32, 1
      %p359 = por %p357, %p358
      %p361 = scmp.ne.s32.totalorder %s344, %s360
      %p362 = scmp.eq.s32.totalorder %s32, 0
      %p363 = por %p361, %p362
      %s365 = sadd.s32 %s364, 1
      %p368 = scmp.eq.s32.totalorder %s26, 1
      %p369 = scmp.ne.s32.totalorder %s364, %s366
      %p370 = scmp.eq.s32.totalorder %s26, 0
      %p371 = por %p369, %p370
      %p372 = scmp.ne.s32.totalorder %s364, %s366
      %p373 = scmp.eq.s32.totalorder %s31, 1
      %p374 = por %p372, %p373
      %p375 = scmp.ne.s32.totalorder %s366, %s367
      %p376 = scmp.eq.s32.totalorder %s31, 0
      %p377 = por %p375, %p376
      %p378 = scmp.ne.s32.totalorder %s366, %s367
      %p379 = scmp.eq.s32.totalorder %s32, 1
      %p380 = por %p378, %p379
      %p382 = scmp.ne.s32.totalorder %s367, %s381
      %p383 = scmp.eq.s32.totalorder %s32, 0
      %p384 = por %p382, %p383
      %s385 = ssub.s32 %s33, %s45
      %s386 = ssub.s32 %s34, %s41
      %s387 = sor.u32 %s385, %s386
      %p388 = scmp.eq.s32.totalorder %s387, 0
      %s390 = sadd.s32 %s389, 1
      %s391 = scalar_select %p388, %s389, %s390
      %p394 = pneg %p388
      %p395 = scmp.eq.s32.totalorder %s26, 1
      %p396 = por %p394, %p395
      %p397 = scmp.ne.s32.totalorder %s389, %s392
      %p398 = scmp.eq.s32.totalorder %s26, 0
      %p399 = por %p397, %p398
      %p400 = scmp.ne.s32.totalorder %s389, %s392
      %p401 = scmp.eq.s32.totalorder %s31, 1
      %p402 = por %p400, %p401
      %p403 = scmp.ne.s32.totalorder %s392, %s393
      %p404 = scmp.eq.s32.totalorder %s31, 0
      %p405 = por %p403, %p404
      %p406 = scmp.ne.s32.totalorder %s392, %s393
      %p407 = scmp.eq.s32.totalorder %s32, 1
      %p408 = por %p406, %p407
      %p410 = scmp.ne.s32.totalorder %s393, %s409
      %p411 = scmp.eq.s32.totalorder %s32, 0
      %p412 = por %p410, %p411
      %s413 = ssub.s32 %s33, %s45
      %p414 = scmp.eq.s32.totalorder %s413, 0
      %s416 = sadd.s32 %s415, 1
      %s417 = scalar_select %p414, %s415, %s416
      %p420 = pneg %p414
      %p421 = scmp.eq.s32.totalorder %s26, 1
      %p422 = por %p420, %p421
      %p423 = scmp.ne.s32.totalorder %s415, %s418
      %p424 = scmp.eq.s32.totalorder %s26, 0
      %p425 = por %p423, %p424
      %p426 = scmp.ne.s32.totalorder %s415, %s418
      %p427 = scmp.eq.s32.totalorder %s31, 1
      %p428 = por %p426, %p427
      %p429 = scmp.ne.s32.totalorder %s418, %s419
      %p430 = scmp.eq.s32.totalorder %s31, 0
      %p431 = por %p429, %p430
      %p432 = scmp.ne.s32.totalorder %s418, %s419
      %p433 = scmp.eq.s32.totalorder %s32, 1
      %p434 = por %p432, %p433
      %p436 = scmp.ne.s32.totalorder %s419, %s435
      %p437 = scmp.eq.s32.totalorder %s32, 0
      %p438 = por %p436, %p437
      %s439 = ssub.s32 %s33, %s45
      %p440 = scmp.eq.s32.totalorder %s439, 0
      %s442 = sadd.s32 %s441, 1
      %s443 = scalar_select %p440, %s441, %s442
      %p446 = pneg %p440
      %p447 = scmp.eq.s32.totalorder %s26, 1
      %p448 = por %p446, %p447
      %p449 = scmp.ne.s32.totalorder %s441, %s444
      %p450 = scmp.eq.s32.totalorder %s26, 0
      %p451 = por %p449, %p450
      %p452 = scmp.ne.s32.totalorder %s441, %s444
      %p453 = scmp.eq.s32.totalorder %s31, 1
      %p454 = por %p452, %p453
      %p455 = scmp.ne.s32.totalorder %s444, %s445
      %p456 = scmp.eq.s32.totalorder %s31, 0
      %p457 = por %p455, %p456
      %p458 = scmp.ne.s32.totalorder %s444, %s445
      %p459 = scmp.eq.s32.totalorder %s32, 1
      %p460 = por %p458, %p459
      %p462 = scmp.ne.s32.totalorder %s445, %s461
      %p463 = scmp.eq.s32.totalorder %s32, 0
      %p464 = por %p462, %p463
      %p465 = scmp.le.s32.totalorder 1, %s26
      %p466 = scmp.lt.s32.totalorder %s26, 3
      %p467 = pnand %p465, %p466
      %p468 = pneg %p467
      // Predicated region
      $region9: #{tpu_custom_call.1} parent=5 // pred_check
        _
      $region10: #{tpu_custom_call.1} parent=5 // pred_check_branch
        %470 = sbr.rel (%p467) target = $region12
      $region11: #{tpu_custom_call.1} parent=5 // pred_region
        %s471 = ssub.s32 %s26, 1
        // Predicated region
        $region13: #{tpu_custom_call.1} parent=11 // pred_check
          %p472 = pneg %p377
        $region14: #{tpu_custom_call.1} parent=11 // pred_check_branch
          %474 = sbr.rel (%p472) target = $region16
        $region15: #{tpu_custom_call.1} parent=11 // pred_region
          _
        $region16: #{tpu_custom_call.1} parent=11 // pred_fallthru
          _
      $region12: #{tpu_custom_call.1} parent=5 // pred_fallthru
        _
      %p475 = scmp.lt.s32.totalorder %s26, 2
      // Predicated region
      $region17: #{tpu_custom_call.1} parent=5 // pred_check
        %p476 = pneg %p475
      $region18: #{tpu_custom_call.1} parent=5 // pred_check_branch
        %478 = sbr.rel (%p476) target = $region20
      $region19: #{tpu_custom_call.1} parent=5 // pred_region
        // Predicated region
        $region21: #{tpu_custom_call.1} parent=19 // pred_check
          %p479 = pneg %p62
        $region22: #{tpu_custom_call.1} parent=19 // pred_check_branch
          %481 = sbr.rel (%p479) target = $region24
        $region23: #{tpu_custom_call.1} parent=19 // pred_region
          %s482 = smul.u32 %s34, 8
          %p483 = scmp.lt.s32.totalorder %s33, 1
          %s484 = scalar_select %p483, %s33, 1
          %p485 = scmp.lt.s32.totalorder %s482, 9
          %s486 = scalar_select %p485, %s482, 9
          %s487 = smul.addr %s486, 20
          %s488 = smul.addr %s484, 200
          %s489 = sadd.s32 %s487, %s488
          %s490 = smul.addr %s489, 4
          %s491 = scalar_lea.vmem %s0, %s490
          %s492 = smul.u32 %s34, 8
        $region24: #{tpu_custom_call.1} parent=19 // pred_fallthru
          _
        // Predicated region
        $region25: #{tpu_custom_call.1} parent=19 // pred_check
          %p493 = pneg %p94
        $region26: #{tpu_custom_call.1} parent=19 // pred_check_branch
          %495 = sbr.rel (%p493) target = $region28
        $region27: #{tpu_custom_call.1} parent=19 // pred_region
          %s496 = smul.u32 %s34, 8
          %s497 = sadd.s32 %s496, 1
          %p498 = scmp.lt.s32.totalorder %s33, 1
          %s499 = scalar_select %p498, %s33, 1
          %p500 = scmp.lt.s32.totalorder %s497, 9
          %s501 = scalar_select %p500, %s497, 9
          %s502 = smul.addr %s501, 20
          %s503 = smul.addr %s499, 200
          %s504 = sadd.s32 %s502, %s503
          %s505 = smul.addr %s504, 4
          %s506 = scalar_lea.vmem %s1, %s505
          %s507 = smul.u32 %s34, 8
          %s508 = sadd.s32 %s507, 1
        $region28: #{tpu_custom_call.1} parent=19 // pred_fallthru
          _
        // Predicated region
        $region29: #{tpu_custom_call.1} parent=19 // pred_check
          %p509 = pneg %p126
        $region30: #{tpu_custom_call.1} parent=19 // pred_check_branch
          %511 = sbr.rel (%p509) target = $region32
        $region31: #{tpu_custom_call.1} parent=19 // pred_region
          %s512 = smul.u32 %s34, 8
          %s513 = sadd.s32 %s512, 2
          %p514 = scmp.lt.s32.totalorder %s33, 1
          %s515 = scalar_select %p514, %s33, 1
          %p516 = scmp.lt.s32.totalorder %s513, 9
          %s517 = scalar_select %p516, %s513, 9
          %s518 = smul.addr %s517, 20
          %s519 = smul.addr %s515, 200
          %s520 = sadd.s32 %s518, %s519
          %s521 = smul.addr %s520, 4
          %s522 = scalar_lea.vmem %s2, %s521
          %s523 = smul.u32 %s34, 8
          %s524 = sadd.s32 %s523, 2
        $region32: #{tpu_custom_call.1} parent=19 // pred_fallthru
          _
        // Predicated region
        $region33: #{tpu_custom_call.1} parent=19 // pred_check
          %p525 = pneg %p158
        $region34: #{tpu_custom_call.1} parent=19 // pred_check_branch
          %527 = sbr.rel (%p525) target = $region36
        $region35: #{tpu_custom_call.1} parent=19 // pred_region
          %s528 = smul.u32 %s34, 8
          %s529 = sadd.s32 %s528, 3
          %p530 = scmp.lt.s32.totalorder %s33, 1
          %s531 = scalar_select %p530, %s33, 1
          %p532 = scmp.lt.s32.totalorder %s529, 9
          %s533 = scalar_select %p532, %s529, 9
          %s534 = smul.addr %s533, 20
          %s535 = smul.addr %s531, 200
          %s536 = sadd.s32 %s534, %s535
          %s537 = smul.addr %s536, 4
          %s538 = scalar_lea.vmem %s3, %s537
          %s539 = smul.u32 %s34, 8
          %s540 = sadd.s32 %s539, 3
        $region36: #{tpu_custom_call.1} parent=19 // pred_fallthru
          _
        // Predicated region
        $region37: #{tpu_custom_call.1} parent=19 // pred_check
          %p541 = pneg %p190
        $region38: #{tpu_custom_call.1} parent=19 // pred_check_branch
          %543 = sbr.rel (%p541) target = $region40
        $region39: #{tpu_custom_call.1} parent=19 // pred_region
          %s544 = smul.u32 %s34, 8
          %s545 = sadd.s32 %s544, 4
          %p546 = scmp.lt.s32.totalorder %s33, 1
          %s547 = scalar_select %p546, %s33, 1
          %p548 = scmp.lt.s32.totalorder %s545, 9
          %s549 = scalar_select %p548, %s545, 9
          %s550 = smul.addr %s549, 20
          %s551 = smul.addr %s547, 200
          %s552 = sadd.s32 %s550, %s551
          %s553 = smul.addr %s552, 4
          %s554 = scalar_lea.vmem %s4, %s553
          %s555 = smul.u32 %s34, 8
          %s556 = sadd.s32 %s555, 4
        $region40: #{tpu_custom_call.1} parent=19 // pred_fallthru
          _
        // Predicated region
        $region41: #{tpu_custom_call.1} parent=19 // pred_check
          %p557 = pneg %p222
        $region42: #{tpu_custom_call.1} parent=19 // pred_check_branch
          %559 = sbr.rel (%p557) target = $region44
        $region43: #{tpu_custom_call.1} parent=19 // pred_region
          %s560 = smul.u32 %s34, 8
          %s561 = sadd.s32 %s560, 5
          %p562 = scmp.lt.s32.totalorder %s33, 1
          %s563 = scalar_select %p562, %s33, 1
          %p564 = scmp.lt.s32.totalorder %s561, 9
          %s565 = scalar_select %p564, %s561, 9
          %s566 = smul.addr %s565, 20
          %s567 = smul.addr %s563, 200
          %s568 = sadd.s32 %s566, %s567
          %s569 = smul.addr %s568, 4
          %s570 = scalar_lea.vmem %s5, %s569
          %s571 = smul.u32 %s34, 8
          %s572 = sadd.s32 %s571, 5
        $region44: #{tpu_custom_call.1} parent=19 // pred_fallthru
          _
        // Predicated region
        $region45: #{tpu_custom_call.1} parent=19 // pred_check
          %p573 = pneg %p254
        $region46: #{tpu_custom_call.1} parent=19 // pred_check_branch
          %575 = sbr.rel (%p573) target = $region48
        $region47: #{tpu_custom_call.1} parent=19 // pred_region
          %s576 = smul.u32 %s34, 8
          %s577 = sadd.s32 %s576, 6
          %p578 = scmp.lt.s32.totalorder %s33, 1
          %s579 = scalar_select %p578, %s33, 1
          %p580 = scmp.lt.s32.totalorder %s577, 9
          %s581 = scalar_select %p580, %s577, 9
          %s582 = smul.addr %s581, 20
          %s583 = smul.addr %s579, 200
          %s584 = sadd.s32 %s582, %s583
          %s585 = smul.addr %s584, 4
          %s586 = scalar_lea.vmem %s6, %s585
          %s587 = smul.u32 %s34, 8
          %s588 = sadd.s32 %s587, 6
        $region48: #{tpu_custom_call.1} parent=19 // pred_fallthru
          _
        // Predicated region
        $region49: #{tpu_custom_call.1} parent=19 // pred_check
          %p589 = pneg %p286
        $region50: #{tpu_custom_call.1} parent=19 // pred_check_branch
          %591 = sbr.rel (%p589) target = $region52
        $region51: #{tpu_custom_call.1} parent=19 // pred_region
          %s592 = smul.u32 %s34, 8
          %s593 = sadd.s32 %s592, 7
          %p594 = scmp.lt.s32.totalorder %s33, 1
          %s595 = scalar_select %p594, %s33, 1
          %p596 = scmp.lt.s32.totalorder %s593, 9
          %s597 = scalar_select %p596, %s593, 9
          %s598 = smul.addr %s597, 20
          %s599 = smul.addr %s595, 200
          %s600 = sadd.s32 %s598, %s599
          %s601 = smul.addr %s600, 4
          %s602 = scalar_lea.vmem %s7, %s601
          %s603 = smul.u32 %s34, 8
          %s604 = sadd.s32 %s603, 7
        $region52: #{tpu_custom_call.1} parent=19 // pred_fallthru
          _
        // Predicated region
        $region53: #{tpu_custom_call.1} parent=19 // pred_check
          %p605 = pneg %p318
        $region54: #{tpu_custom_call.1} parent=19 // pred_check_branch
          %607 = sbr.rel (%p605) target = $region56
        $region55: #{tpu_custom_call.1} parent=19 // pred_region
          %s608 = smul.u32 %s34, 8
          %s609 = sadd.s32 %s608, 8
          %p610 = scmp.lt.s32.totalorder %s33, 1
          %s611 = scalar_select %p610, %s33, 1
          %p612 = scmp.lt.s32.totalorder %s609, 9
          %s613 = scalar_select %p612, %s609, 9
          %s614 = smul.addr %s613, 20
          %s615 = smul.addr %s611, 200
          %s616 = sadd.s32 %s614, %s615
          %s617 = smul.addr %s616, 4
          %s618 = scalar_lea.vmem %s8, %s617
          %s619 = smul.u32 %s34, 8
          %s620 = sadd.s32 %s619, 8
        $region56: #{tpu_custom_call.1} parent=19 // pred_fallthru
          _
        // Predicated region
        $region57: #{tpu_custom_call.1} parent=19 // pred_check
          %p621 = pneg %p350
        $region58: #{tpu_custom_call.1} parent=19 // pred_check_branch
          %623 = sbr.rel (%p621) target = $region60
        $region59: #{tpu_custom_call.1} parent=19 // pred_region
          %s624 = smul.u32 %s34, 8
          %s625 = sadd.s32 %s624, 9
          %p626 = scmp.lt.s32.totalorder %s33, 1
          %s627 = scalar_select %p626, %s33, 1
          %p628 = scmp.lt.s32.totalorder %s625, 9
          %s629 = scalar_select %p628, %s625, 9
          %s630 = smul.addr %s629, 20
          %s631 = smul.addr %s627, 200
          %s632 = sadd.s32 %s630, %s631
          %s633 = smul.addr %s632, 4
          %s634 = scalar_lea.vmem %s9, %s633
          %s635 = smul.u32 %s34, 8
          %s636 = sadd.s32 %s635, 9
        $region60: #{tpu_custom_call.1} parent=19 // pred_fallthru
          _
      $region20: #{tpu_custom_call.1} parent=5 // pred_fallthru
        _
      %p637 = scmp.le.s32.totalorder 1, %s26
      %p638 = scmp.lt.s32.totalorder %s26, 3
      %p639 = pnand %p637, %p638
      %p640 = pneg %p639
      // Predicated region
      $region61: #{tpu_custom_call.1} parent=5 // pred_check
        _
      $region62: #{tpu_custom_call.1} parent=5 // pred_check_branch
        %642 = sbr.rel (%p639) target = $region64
      $region63: #{tpu_custom_call.1} parent=5 // pred_region
        %s643 = ssub.s32 %s26, 1
        %s644 = smul.u32 %s36, 8
        %p645 = scmp.lt.s32.totalorder %s35, 1
        %s646 = scalar_select %p645, %s35, 1
        %p647 = scmp.lt.s32.totalorder %s644, 9
        %s648 = scalar_select %p647, %s644, 9
        %s649 = smul.addr %s648, 20
        %s650 = smul.addr %s646, 200
        %s651 = sadd.s32 %s649, %s650
        %s652 = smul.addr %s651, 4
        %s653 = scalar_lea.vmem %s0, %s652
        %p654 = pneg %p68
        %p655 = pneg %p65
        %s656 = smul.u32 %s36, 8
        %s657 = sadd.s32 %s656, 1
        %p658 = scmp.lt.s32.totalorder %s35, 1
        %s659 = scalar_select %p658, %s35, 1
        %p660 = scmp.lt.s32.totalorder %s657, 9
        %s661 = scalar_select %p660, %s657, 9
        %s662 = smul.addr %s661, 20
        %s663 = smul.addr %s659, 200
        %s664 = sadd.s32 %s662, %s663
        %s665 = smul.addr %s664, 4
        %s666 = scalar_lea.vmem %s1, %s665
        %p667 = pneg %p100
        %p668 = pneg %p97
        %s669 = smul.u32 %s36, 8
        %s670 = sadd.s32 %s669, 2
        %p671 = scmp.lt.s32.totalorder %s35, 1
        %s672 = scalar_select %p671, %s35, 1
        %p673 = scmp.lt.s32.totalorder %s670, 9
        %s674 = scalar_select %p673, %s670, 9
        %s675 = smul.addr %s674, 20
        %s676 = smul.addr %s672, 200
        %s677 = sadd.s32 %s675, %s676
        %s678 = smul.addr %s677, 4
        %s679 = scalar_lea.vmem %s2, %s678
        %p680 = pneg %p132
        %p681 = pneg %p129
        %s682 = smul.u32 %s36, 8
        %s683 = sadd.s32 %s682, 3
        %p684 = scmp.lt.s32.totalorder %s35, 1
        %s685 = scalar_select %p684, %s35, 1
        %p686 = scmp.lt.s32.totalorder %s683, 9
        %s687 = scalar_select %p686, %s683, 9
        %s688 = smul.addr %s687, 20
        %s689 = smul.addr %s685, 200
        %s690 = sadd.s32 %s688, %s689
        %s691 = smul.addr %s690, 4
        %s692 = scalar_lea.vmem %s3, %s691
        %p693 = pneg %p164
        %p694 = pneg %p161
        %s695 = smul.u32 %s36, 8
        %s696 = sadd.s32 %s695, 4
        %p697 = scmp.lt.s32.totalorder %s35, 1
        %s698 = scalar_select %p697, %s35, 1
        %p699 = scmp.lt.s32.totalorder %s696, 9
        %s700 = scalar_select %p699, %s696, 9
        %s701 = smul.addr %s700, 20
        %s702 = smul.addr %s698, 200
        %s703 = sadd.s32 %s701, %s702
        %s704 = smul.addr %s703, 4
        %s705 = scalar_lea.vmem %s4, %s704
        %p706 = pneg %p196
        %p707 = pneg %p193
        %s708 = smul.u32 %s36, 8
        %s709 = sadd.s32 %s708, 5
        %p710 = scmp.lt.s32.totalorder %s35, 1
        %s711 = scalar_select %p710, %s35, 1
        %p712 = scmp.lt.s32.totalorder %s709, 9
        %s713 = scalar_select %p712, %s709, 9
        %s714 = smul.addr %s713, 20
        %s715 = smul.addr %s711, 200
        %s716 = sadd.s32 %s714, %s715
        %s717 = smul.addr %s716, 4
        %s718 = scalar_lea.vmem %s5, %s717
        %p719 = pneg %p228
        %p720 = pneg %p225
        %s721 = smul.u32 %s36, 8
        %s722 = sadd.s32 %s721, 6
        %p723 = scmp.lt.s32.totalorder %s35, 1
        %s724 = scalar_select %p723, %s35, 1
        %p725 = scmp.lt.s32.totalorder %s722, 9
        %s726 = scalar_select %p725, %s722, 9
        %s727 = smul.addr %s726, 20
        %s728 = smul.addr %s724, 200
        %s729 = sadd.s32 %s727, %s728
        %s730 = smul.addr %s729, 4
        %s731 = scalar_lea.vmem %s6, %s730
        %p732 = pneg %p260
        %p733 = pneg %p257
        %s734 = smul.u32 %s36, 8
        %s735 = sadd.s32 %s734, 7
        %p736 = scmp.lt.s32.totalorder %s35, 1
        %s737 = scalar_select %p736, %s35, 1
        %p738 = scmp.lt.s32.totalorder %s735, 9
        %s739 = scalar_select %p738, %s735, 9
        %s740 = smul.addr %s739, 20
        %s741 = smul.addr %s737, 200
        %s742 = sadd.s32 %s740, %s741
        %s743 = smul.addr %s742, 4
        %s744 = scalar_lea.vmem %s7, %s743
        %p745 = pneg %p292
        %p746 = pneg %p289
        %s747 = smul.u32 %s36, 8
        %s748 = sadd.s32 %s747, 8
        %p749 = scmp.lt.s32.totalorder %s35, 1
        %s750 = scalar_select %p749, %s35, 1
        %p751 = scmp.lt.s32.totalorder %s748, 9
        %s752 = scalar_select %p751, %s748, 9
        %s753 = smul.addr %s752, 20
        %s754 = smul.addr %s750, 200
        %s755 = sadd.s32 %s753, %s754
        %s756 = smul.addr %s755, 4
        %s757 = scalar_lea.vmem %s8, %s756
        %p758 = pneg %p324
        %p759 = pneg %p321
        %s760 = smul.u32 %s36, 8
        %s761 = sadd.s32 %s760, 9
        %p762 = scmp.lt.s32.totalorder %s35, 1
        %s763 = scalar_select %p762, %s35, 1
        %p764 = scmp.lt.s32.totalorder %s761, 9
        %s765 = scalar_select %p764, %s761, 9
        %s766 = smul.addr %s765, 20
        %s767 = smul.addr %s763, 200
        %s768 = sadd.s32 %s766, %s767
        %s769 = smul.addr %s768, 4
        %s770 = scalar_lea.vmem %s9, %s769
        %p771 = pneg %p356
        %p772 = pneg %p353
        %p773 = pneg %p377
        %p774 = pneg %p374
        %p775 = pneg %p405
        %p776 = pneg %p402
        %s777 = sand.u32 %s392, 1
        %s778 = scalar_lea.sflag [#allocation4], %s777
        %s779 = sand.u32 %s392, 1
        %s780 = smul.addr %s779, 512
        %s781 = scalar_lea.vmem [#allocation3], %s780
        %p782 = pneg %p431
        %p783 = pneg %p428
        %s784 = sand.u32 %s31, 1
        %s785 = scalar_lea.sflag [#allocation6], %s784
        %s786 = sand.u32 %s418, 1
        %s787 = smul.addr %s786, 8
        %s788 = scalar_lea.vmem [#allocation5], %s787
        %p789 = pneg %p457
        %p790 = pneg %p454
        %s791 = sand.u32 %s31, 1
        %s792 = scalar_lea.sflag [#allocation6], %s791
        %s793 = sand.u32 %s444, 1
        %s794 = smul.addr %s793, 8
        %s795 = scalar_lea.vmem [#allocation7], %s794
        %s796 = smul.u32 %s36, 8
        %p797 = scmp.lt.s32.totalorder %s35, 1
        %s798 = scalar_select %p797, %s35, 1
        %p799 = scmp.lt.s32.totalorder %s796, 9
        %s800 = scalar_select %p799, %s796, 9
        %s801 = smul.addr %s800, 20
        %s802 = smul.addr %s798, 200
        %s803 = sadd.s32 %s801, %s802
        %s804 = smul.addr %s803, 4
        %s805 = scalar_lea.vmem %s0, %s804
        %s806 = smul.u32 %s36, 8
        %s807 = smul.u32 %s36, 8
        %s808 = sadd.s32 %s807, 1
        %p809 = scmp.lt.s32.totalorder %s35, 1
        %s810 = scalar_select %p809, %s35, 1
        %p811 = scmp.lt.s32.totalorder %s808, 9
        %s812 = scalar_select %p811, %s808, 9
        %s813 = smul.addr %s812, 20
        %s814 = smul.addr %s810, 200
        %s815 = sadd.s32 %s813, %s814
        %s816 = smul.addr %s815, 4
        %s817 = scalar_lea.vmem %s1, %s816
        %s818 = smul.u32 %s36, 8
        %s819 = sadd.s32 %s818, 1
        %s820 = smul.u32 %s36, 8
        %s821 = sadd.s32 %s820, 2
        %p822 = scmp.lt.s32.totalorder %s35, 1
        %s823 = scalar_select %p822, %s35, 1
        %p824 = scmp.lt.s32.totalorder %s821, 9
        %s825 = scalar_select %p824, %s821, 9
        %s826 = smul.addr %s825, 20
        %s827 = smul.addr %s823, 200
        %s828 = sadd.s32 %s826, %s827
        %s829 = smul.addr %s828, 4
        %s830 = scalar_lea.vmem %s2, %s829
        %s831 = smul.u32 %s36, 8
        %s832 = sadd.s32 %s831, 2
        %s833 = smul.u32 %s36, 8
        %s834 = sadd.s32 %s833, 3
        %p835 = scmp.lt.s32.totalorder %s35, 1
        %s836 = scalar_select %p835, %s35, 1
        %p837 = scmp.lt.s32.totalorder %s834, 9
        %s838 = scalar_select %p837, %s834, 9
        %s839 = smul.addr %s838, 20
        %s840 = smul.addr %s836, 200
        %s841 = sadd.s32 %s839, %s840
        %s842 = smul.addr %s841, 4
        %s843 = scalar_lea.vmem %s3, %s842
        %s844 = smul.u32 %s36, 8
        %s845 = sadd.s32 %s844, 3
        %s846 = smul.u32 %s36, 8
        %s847 = sadd.s32 %s846, 4
        %p848 = scmp.lt.s32.totalorder %s35, 1
        %s849 = scalar_select %p848, %s35, 1
        %p850 = scmp.lt.s32.totalorder %s847, 9
        %s851 = scalar_select %p850, %s847, 9
        %s852 = smul.addr %s851, 20
        %s853 = smul.addr %s849, 200
        %s854 = sadd.s32 %s852, %s853
        %s855 = smul.addr %s854, 4
        %s856 = scalar_lea.vmem %s4, %s855
        %s857 = smul.u32 %s36, 8
        %s858 = sadd.s32 %s857, 4
        %s859 = smul.u32 %s36, 8
        %s860 = sadd.s32 %s859, 5
        %p861 = scmp.lt.s32.totalorder %s35, 1
        %s862 = scalar_select %p861, %s35, 1
        %p863 = scmp.lt.s32.totalorder %s860, 9
        %s864 = scalar_select %p863, %s860, 9
        %s865 = smul.addr %s864, 20
        %s866 = smul.addr %s862, 200
        %s867 = sadd.s32 %s865, %s866
        %s868 = smul.addr %s867, 4
        %s869 = scalar_lea.vmem %s5, %s868
        %s870 = smul.u32 %s36, 8
        %s871 = sadd.s32 %s870, 5
        %s872 = smul.u32 %s36, 8
        %s873 = sadd.s32 %s872, 6
        %p874 = scmp.lt.s32.totalorder %s35, 1
        %s875 = scalar_select %p874, %s35, 1
        %p876 = scmp.lt.s32.totalorder %s873, 9
        %s877 = scalar_select %p876, %s873, 9
        %s878 = smul.addr %s877, 20
        %s879 = smul.addr %s875, 200
        %s880 = sadd.s32 %s878, %s879
        %s881 = smul.addr %s880, 4
        %s882 = scalar_lea.vmem %s6, %s881
        %s883 = smul.u32 %s36, 8
        %s884 = sadd.s32 %s883, 6
        %s885 = smul.u32 %s36, 8
        %s886 = sadd.s32 %s885, 7
        %p887 = scmp.lt.s32.totalorder %s35, 1
        %s888 = scalar_select %p887, %s35, 1
        %p889 = scmp.lt.s32.totalorder %s886, 9
        %s890 = scalar_select %p889, %s886, 9
        %s891 = smul.addr %s890, 20
        %s892 = smul.addr %s888, 200
        %s893 = sadd.s32 %s891, %s892
        %s894 = smul.addr %s893, 4
        %s895 = scalar_lea.vmem %s7, %s894
        %s896 = smul.u32 %s36, 8
        %s897 = sadd.s32 %s896, 7
        %s898 = smul.u32 %s36, 8
        %s899 = sadd.s32 %s898, 8
        %p900 = scmp.lt.s32.totalorder %s35, 1
        %s901 = scalar_select %p900, %s35, 1
        %p902 = scmp.lt.s32.totalorder %s899, 9
        %s903 = scalar_select %p902, %s899, 9
        %s904 = smul.addr %s903, 20
        %s905 = smul.addr %s901, 200
        %s906 = sadd.s32 %s904, %s905
        %s907 = smul.addr %s906, 4
        %s908 = scalar_lea.vmem %s8, %s907
        %s909 = smul.u32 %s36, 8
        %s910 = sadd.s32 %s909, 8
        %s911 = smul.u32 %s36, 8
        %s912 = sadd.s32 %s911, 9
        %p913 = scmp.lt.s32.totalorder %s35, 1
        %s914 = scalar_select %p913, %s35, 1
        %p915 = scmp.lt.s32.totalorder %s912, 9
        %s916 = scalar_select %p915, %s912, 9
        %s917 = smul.addr %s916, 20
        %s918 = smul.addr %s914, 200
        %s919 = sadd.s32 %s917, %s918
        %s920 = smul.addr %s919, 4
        %s921 = scalar_lea.vmem %s9, %s920
        %s922 = smul.u32 %s36, 8
        %s923 = sadd.s32 %s922, 9
        %s924 = smul.u32 64, %s36
        %p926 = scmp.eq.s32.totalorder %s36, 0
        // Predicated region
        $region65: #{tpu_custom_call.1} parent=63 // pred_check
          %p927 = pneg %p926
        $region66: #{tpu_custom_call.1} parent=63 // pred_check_branch
          %929 = sbr.rel (%p927) target = $region68
        $region67: #{tpu_custom_call.1} parent=63 // pred_region
          %930 = vst [vmem:[%s788] sm:$0xff] 0.0
          %931 = vst [vmem:[%s795] sm:$0xff] 0.0
        $region68: #{tpu_custom_call.1} parent=63 // pred_fallthru
          _
        %v932 = vld [vmem:[%s805] sm:$0xf]
        %v933 = vld [vmem:[%s805 + $0x4] sm:$0x1]
        %v934 = vld [vmem:[%s805 + $0x8] sm:$0xf]
        %v935 = vld [vmem:[%s805 + $0xc] sm:$0x1]
        %v936 = vld [vmem:[%s805 + $0x10] sm:$0xf]
        %v937 = vld [vmem:[%s805 + $0x14] sm:$0x1]
        %v938 = vld [vmem:[%s805 + $0x18] sm:$0xf]
        %v939 = vld [vmem:[%s805 + $0x1c] sm:$0x1]
        %v940 = vld [vmem:[%s805 + $0x20] sm:$0xf]
        %v941 = vld [vmem:[%s805 + $0x24] sm:$0x1]
        %v942 = vld [vmem:[%s805 + $0x28] sm:$0xf]
        %v943 = vld [vmem:[%s805 + $0x2c] sm:$0x1]
        %v944 = vld [vmem:[%s805 + $0x30] sm:$0xf]
        %v945 = vld [vmem:[%s805 + $0x34] sm:$0x1]
        %v946 = vld [vmem:[%s805 + $0x38] sm:$0xf]
        %v947 = vld [vmem:[%s805 + $0x3c] sm:$0x1]
        %v948 = vld [vmem:[%s805 + $0x40] sm:$0xf]
        %v949 = vld [vmem:[%s805 + $0x44] sm:$0x1]
        %v950 = vld [vmem:[%s805 + $0x48] sm:$0xf]
        %v951 = vld [vmem:[%s805 + $0x4c] sm:$0x1]
        %v952 = vld [vmem:[%s817] sm:$0xf]
        %v953 = vld [vmem:[%s817 + $0x4] sm:$0x1]
        %v954 = vld [vmem:[%s817 + $0x8] sm:$0xf]
        %v955 = vld [vmem:[%s817 + $0xc] sm:$0x1]
        %v956 = vld [vmem:[%s817 + $0x10] sm:$0xf]
        %v957 = vld [vmem:[%s817 + $0x14] sm:$0x1]
        %v958 = vld [vmem:[%s817 + $0x18] sm:$0xf]
        %v959 = vld [vmem:[%s817 + $0x1c] sm:$0x1]
        %v960 = vld [vmem:[%s817 + $0x20] sm:$0xf]
        %v961 = vld [vmem:[%s817 + $0x24] sm:$0x1]
        %v962 = vld [vmem:[%s817 + $0x28] sm:$0xf]
        %v963 = vld [vmem:[%s817 + $0x2c] sm:$0x1]
        %v964 = vld [vmem:[%s817 + $0x30] sm:$0xf]
        %v965 = vld [vmem:[%s817 + $0x34] sm:$0x1]
        %v966 = vld [vmem:[%s817 + $0x38] sm:$0xf]
        %v967 = vld [vmem:[%s817 + $0x3c] sm:$0x1]
        %v968 = vld [vmem:[%s817 + $0x40] sm:$0xf]
        %v969 = vld [vmem:[%s817 + $0x44] sm:$0x1]
        %v970 = vld [vmem:[%s817 + $0x48] sm:$0xf]
        %v971 = vld [vmem:[%s817 + $0x4c] sm:$0x1]
        %v972 = vld [vmem:[%s830] sm:$0xf]
        %v973 = vld [vmem:[%s830 + $0x4] sm:$0x1]
        %v974 = vld [vmem:[%s830 + $0x8] sm:$0xf]
        %v975 = vld [vmem:[%s830 + $0xc] sm:$0x1]
        %v976 = vld [vmem:[%s830 + $0x10] sm:$0xf]
        %v977 = vld [vmem:[%s830 + $0x14] sm:$0x1]
        %v978 = vld [vmem:[%s830 + $0x18] sm:$0xf]
        %v979 = vld [vmem:[%s830 + $0x1c] sm:$0x1]
        %v980 = vld [vmem:[%s830 + $0x20] sm:$0xf]
        %v981 = vld [vmem:[%s830 + $0x24] sm:$0x1]
        %v982 = vld [vmem:[%s830 + $0x28] sm:$0xf]
        %v983 = vld [vmem:[%s830 + $0x2c] sm:$0x1]
        %v984 = vld [vmem:[%s830 + $0x30] sm:$0xf]
        %v985 = vld [vmem:[%s830 + $0x34] sm:$0x1]
        %v986 = vld [vmem:[%s830 + $0x38] sm:$0xf]
        %v987 = vld [vmem:[%s830 + $0x3c] sm:$0x1]
        %v988 = vld [vmem:[%s830 + $0x40] sm:$0xf]
        %v989 = vld [vmem:[%s830 + $0x44] sm:$0x1]
        %v990 = vld [vmem:[%s830 + $0x48] sm:$0xf]
        %v991 = vld [vmem:[%s830 + $0x4c] sm:$0x1]
        %v992 = vld [vmem:[%s843] sm:$0xf]
        %v993 = vld [vmem:[%s843 + $0x4] sm:$0x1]
        %v994 = vld [vmem:[%s843 + $0x8] sm:$0xf]
        %v995 = vld [vmem:[%s843 + $0xc] sm:$0x1]
        %v996 = vld [vmem:[%s843 + $0x10] sm:$0xf]
        %v997 = vld [vmem:[%s843 + $0x14] sm:$0x1]
        %v998 = vld [vmem:[%s843 + $0x18] sm:$0xf]
        %v999 = vld [vmem:[%s843 + $0x1c] sm:$0x1]
        %v1000 = vld [vmem:[%s843 + $0x20] sm:$0xf]
        %v1001 = vld [vmem:[%s843 + $0x24] sm:$0x1]
        %v1002 = vld [vmem:[%s843 + $0x28] sm:$0xf]
        %v1003 = vld [vmem:[%s843 + $0x2c] sm:$0x1]
        %v1004 = vld [vmem:[%s843 + $0x30] sm:$0xf]
        %v1005 = vld [vmem:[%s843 + $0x34] sm:$0x1]
        %v1006 = vld [vmem:[%s843 + $0x38] sm:$0xf]
        %v1007 = vld [vmem:[%s843 + $0x3c] sm:$0x1]
        %v1008 = vld [vmem:[%s843 + $0x40] sm:$0xf]
        %v1009 = vld [vmem:[%s843 + $0x44] sm:$0x1]
        %v1010 = vld [vmem:[%s843 + $0x48] sm:$0xf]
        %v1011 = vld [vmem:[%s843 + $0x4c] sm:$0x1]
        %v1012 = vld [vmem:[%s856] sm:$0xf]
        %v1013 = vld [vmem:[%s856 + $0x4] sm:$0x1]
        %v1014 = vld [vmem:[%s856 + $0x8] sm:$0xf]
        %v1015 = vld [vmem:[%s856 + $0xc] sm:$0x1]
        %v1016 = vld [vmem:[%s856 + $0x10] sm:$0xf]
        %v1017 = vld [vmem:[%s856 + $0x14] sm:$0x1]
        %v1018 = vld [vmem:[%s856 + $0x18] sm:$0xf]
        %v1019 = vld [vmem:[%s856 + $0x1c] sm:$0x1]
        %v1020 = vld [vmem:[%s856 + $0x20] sm:$0xf]
        %v1021 = vld [vmem:[%s856 + $0x24] sm:$0x1]
        %v1022 = vld [vmem:[%s856 + $0x28] sm:$0xf]
        %v1023 = vld [vmem:[%s856 + $0x2c] sm:$0x1]
        %v1024 = vld [vmem:[%s856 + $0x30] sm:$0xf]
        %v1025 = vld [vmem:[%s856 + $0x34] sm:$0x1]
        %v1026 = vld [vmem:[%s856 + $0x38] sm:$0xf]
        %v1027 = vld [vmem:[%s856 + $0x3c] sm:$0x1]
        %v1028 = vld [vmem:[%s856 + $0x40] sm:$0xf]
        %v1029 = vld [vmem:[%s856 + $0x44] sm:$0x1]
        %v1030 = vld [vmem:[%s856 + $0x48] sm:$0xf]
        %v1031 = vld [vmem:[%s856 + $0x4c] sm:$0x1]
        %v1032 = vld [vmem:[%s869] sm:$0xf]
        %v1033 = vld [vmem:[%s869 + $0x4] sm:$0x1]
        %v1034 = vld [vmem:[%s869 + $0x8] sm:$0xf]
        %v1035 = vld [vmem:[%s869 + $0xc] sm:$0x1]
        %v1036 = vld [vmem:[%s869 + $0x10] sm:$0xf]
        %v1037 = vld [vmem:[%s869 + $0x14] sm:$0x1]
        %v1038 = vld [vmem:[%s869 + $0x18] sm:$0xf]
        %v1039 = vld [vmem:[%s869 + $0x1c] sm:$0x1]
        %v1040 = vld [vmem:[%s869 + $0x20] sm:$0xf]
        %v1041 = vld [vmem:[%s869 + $0x24] sm:$0x1]
        %v1042 = vld [vmem:[%s869 + $0x28] sm:$0xf]
        %v1043 = vld [vmem:[%s869 + $0x2c] sm:$0x1]
        %v1044 = vld [vmem:[%s869 + $0x30] sm:$0xf]
        %v1045 = vld [vmem:[%s869 + $0x34] sm:$0x1]
        %v1046 = vld [vmem:[%s869 + $0x38] sm:$0xf]
        %v1047 = vld [vmem:[%s869 + $0x3c] sm:$0x1]
        %v1048 = vld [vmem:[%s869 + $0x40] sm:$0xf]
        %v1049 = vld [vmem:[%s869 + $0x44] sm:$0x1]
        %v1050 = vld [vmem:[%s869 + $0x48] sm:$0xf]
        %v1051 = vld [vmem:[%s869 + $0x4c] sm:$0x1]
        %v1052 = vld [vmem:[%s882] sm:$0xf]
        %v1053 = vld [vmem:[%s882 + $0x4] sm:$0x1]
        %v1054 = vld [vmem:[%s882 + $0x8] sm:$0xf]
        %v1055 = vld [vmem:[%s882 + $0xc] sm:$0x1]
        %v1056 = vld [vmem:[%s882 + $0x10] sm:$0xf]
        %v1057 = vld [vmem:[%s882 + $0x14] sm:$0x1]
        %v1058 = vld [vmem:[%s882 + $0x18] sm:$0xf]
        %v1059 = vld [vmem:[%s882 + $0x1c] sm:$0x1]
        %v1060 = vld [vmem:[%s882 + $0x20] sm:$0xf]
        %v1061 = vld [vmem:[%s882 + $0x24] sm:$0x1]
        %v1062 = vld [vmem:[%s882 + $0x28] sm:$0xf]
        %v1063 = vld [vmem:[%s882 + $0x2c] sm:$0x1]
        %v1064 = vld [vmem:[%s882 + $0x30] sm:$0xf]
        %v1065 = vld [vmem:[%s882 + $0x34] sm:$0x1]
        %v1066 = vld [vmem:[%s882 + $0x38] sm:$0xf]
        %v1067 = vld [vmem:[%s882 + $0x3c] sm:$0x1]
        %v1068 = vld [vmem:[%s882 + $0x40] sm:$0xf]
        %v1069 = vld [vmem:[%s882 + $0x44] sm:$0x1]
        %v1070 = vld [vmem:[%s882 + $0x48] sm:$0xf]
        %v1071 = vld [vmem:[%s882 + $0x4c] sm:$0x1]
        %v1072 = vld [vmem:[%s895] sm:$0xf]
        %v1073 = vld [vmem:[%s895 + $0x4] sm:$0x1]
        %v1074 = vld [vmem:[%s895 + $0x8] sm:$0xf]
        %v1075 = vld [vmem:[%s895 + $0xc] sm:$0x1]
        %v1076 = vld [vmem:[%s895 + $0x10] sm:$0xf]
        %v1077 = vld [vmem:[%s895 + $0x14] sm:$0x1]
        %v1078 = vld [vmem:[%s895 + $0x18] sm:$0xf]
        %v1079 = vld [vmem:[%s895 + $0x1c] sm:$0x1]
        %v1080 = vld [vmem:[%s895 + $0x20] sm:$0xf]
        %v1081 = vld [vmem:[%s895 + $0x24] sm:$0x1]
        %v1082 = vld [vmem:[%s895 + $0x28] sm:$0xf]
        %v1083 = vld [vmem:[%s895 + $0x2c] sm:$0x1]
        %v1084 = vld [vmem:[%s895 + $0x30] sm:$0xf]
        %v1085 = vld [vmem:[%s895 + $0x34] sm:$0x1]
        %v1086 = vld [vmem:[%s895 + $0x38] sm:$0xf]
        %v1087 = vld [vmem:[%s895 + $0x3c] sm:$0x1]
        %v1088 = vld [vmem:[%s895 + $0x40] sm:$0xf]
        %v1089 = vld [vmem:[%s895 + $0x44] sm:$0x1]
        %v1090 = vld [vmem:[%s895 + $0x48] sm:$0xf]
        %v1091 = vld [vmem:[%s895 + $0x4c] sm:$0x1]
        %v1092 = vld [vmem:[%s908] sm:$0xf]
        %v1093 = vld [vmem:[%s908 + $0x4] sm:$0x1]
        %v1094 = vld [vmem:[%s908 + $0x8] sm:$0xf]
        %v1095 = vld [vmem:[%s908 + $0xc] sm:$0x1]
        %v1096 = vld [vmem:[%s908 + $0x10] sm:$0xf]
        %v1097 = vld [vmem:[%s908 + $0x14] sm:$0x1]
        %v1098 = vld [vmem:[%s908 + $0x18] sm:$0xf]
        %v1099 = vld [vmem:[%s908 + $0x1c] sm:$0x1]
        %v1100 = vld [vmem:[%s908 + $0x20] sm:$0xf]
        %v1101 = vld [vmem:[%s908 + $0x24] sm:$0x1]
        %v1102 = vld [vmem:[%s908 + $0x28] sm:$0xf]
        %v1103 = vld [vmem:[%s908 + $0x2c] sm:$0x1]
        %v1104 = vld [vmem:[%s908 + $0x30] sm:$0xf]
        %v1105 = vld [vmem:[%s908 + $0x34] sm:$0x1]
        %v1106 = vld [vmem:[%s908 + $0x38] sm:$0xf]
        %v1107 = vld [vmem:[%s908 + $0x3c] sm:$0x1]
        %v1108 = vld [vmem:[%s908 + $0x40] sm:$0xf]
        %v1109 = vld [vmem:[%s908 + $0x44] sm:$0x1]
        %v1110 = vld [vmem:[%s908 + $0x48] sm:$0xf]
        %v1111 = vld [vmem:[%s908 + $0x4c] sm:$0x1]
        %v1112 = vld [vmem:[%s921] sm:$0xf]
        %v1113 = vld [vmem:[%s921 + $0x4] sm:$0x1]
        %v1114 = vld [vmem:[%s921 + $0x8] sm:$0xf]
        %v1115 = vld [vmem:[%s921 + $0xc] sm:$0x1]
        %v1116 = vld [vmem:[%s921 + $0x10] sm:$0xf]
        %v1117 = vld [vmem:[%s921 + $0x14] sm:$0x1]
        %v1118 = vld [vmem:[%s921 + $0x18] sm:$0xf]
        %v1119 = vld [vmem:[%s921 + $0x1c] sm:$0x1]
        %v1120 = vld [vmem:[%s921 + $0x20] sm:$0xf]
        %v1121 = vld [vmem:[%s921 + $0x24] sm:$0x1]
        %v1122 = vld [vmem:[%s921 + $0x28] sm:$0xf]
        %v1123 = vld [vmem:[%s921 + $0x2c] sm:$0x1]
        %v1124 = vld [vmem:[%s921 + $0x30] sm:$0xf]
        %v1125 = vld [vmem:[%s921 + $0x34] sm:$0x1]
        %v1126 = vld [vmem:[%s921 + $0x38] sm:$0xf]
        %v1127 = vld [vmem:[%s921 + $0x3c] sm:$0x1]
        %v1128 = vld [vmem:[%s921 + $0x40] sm:$0xf]
        %v1129 = vld [vmem:[%s921 + $0x44] sm:$0x1]
        %v1130 = vld [vmem:[%s921 + $0x48] sm:$0xf]
        %v1131 = vld [vmem:[%s921 + $0x4c] sm:$0x1]
        %v1196 = vunpack.c.l.b16 %v932
        %v1197 = vunpack.c.l.b16 %v934
        %v1198 = vunpack.c.l.b16 %v936
        %v1199 = vunpack.c.l.b16 %v938
        %v1200 = vunpack.c.l.b16 %v940
        %v1201 = vunpack.c.l.b16 %v942
        %v1202 = vunpack.c.l.b16 %v944
        %v1203 = vunpack.c.l.b16 %v946
        %v1204 = vunpack.c.l.b16 %v952
        %v1205 = vunpack.c.l.b16 %v954
        %v1206 = vunpack.c.l.b16 %v956
        %v1207 = vunpack.c.l.b16 %v958
        %v1208 = vunpack.c.l.b16 %v960
        %v1209 = vunpack.c.l.b16 %v962
        %v1210 = vunpack.c.l.b16 %v964
        %v1211 = vunpack.c.l.b16 %v966
        %v1212 = vunpack.c.l.b16 %v972
        %v1213 = vunpack.c.l.b16 %v974
        %v1214 = vunpack.c.l.b16 %v976
        %v1215 = vunpack.c.l.b16 %v978
        %v1216 = vunpack.c.l.b16 %v980
        %v1217 = vunpack.c.l.b16 %v982
        %v1218 = vunpack.c.l.b16 %v984
        %v1219 = vunpack.c.l.b16 %v986
        %v1220 = vunpack.c.l.b16 %v992
        %v1221 = vunpack.c.l.b16 %v994
        %v1222 = vunpack.c.l.b16 %v996
        %v1223 = vunpack.c.l.b16 %v998
        %v1224 = vunpack.c.l.b16 %v1000
        %v1225 = vunpack.c.l.b16 %v1002
        %v1226 = vunpack.c.l.b16 %v1004
        %v1227 = vunpack.c.l.b16 %v1006
        %v1228 = vunpack.c.l.b16 %v1012
        %v1229 = vunpack.c.l.b16 %v1014
        %v1230 = vunpack.c.l.b16 %v1016
        %v1231 = vunpack.c.l.b16 %v1018
        %v1232 = vunpack.c.l.b16 %v1020
        %v1233 = vunpack.c.l.b16 %v1022
        %v1234 = vunpack.c.l.b16 %v1024
        %v1235 = vunpack.c.l.b16 %v1026
        %v1236 = vunpack.c.l.b16 %v1032
        %v1237 = vunpack.c.l.b16 %v1034
        %v1238 = vunpack.c.l.b16 %v1036
        %v1239 = vunpack.c.l.b16 %v1038
        %v1240 = vunpack.c.l.b16 %v1040
        %v1241 = vunpack.c.l.b16 %v1042
        %v1242 = vunpack.c.l.b16 %v1044
        %v1243 = vunpack.c.l.b16 %v1046
        %v1244 = vunpack.c.l.b16 %v1052
        %v1245 = vunpack.c.l.b16 %v1054
        %v1246 = vunpack.c.l.b16 %v1056
        %v1247 = vunpack.c.l.b16 %v1058
        %v1248 = vunpack.c.l.b16 %v1060
        %v1249 = vunpack.c.l.b16 %v1062
        %v1250 = vunpack.c.l.b16 %v1064
        %v1251 = vunpack.c.l.b16 %v1066
        %v1252 = vunpack.c.l.b16 %v1072
        %v1253 = vunpack.c.l.b16 %v1074
        %v1254 = vunpack.c.l.b16 %v1076
        %v1255 = vunpack.c.l.b16 %v1078
        %v1256 = vunpack.c.l.b16 %v1080
        %v1257 = vunpack.c.l.b16 %v1082
        %v1258 = vunpack.c.l.b16 %v1084
        %v1259 = vunpack.c.l.b16 %v1086
        %v1260 = vpack.c.b16 %v1197, %v1196
        %v1261 = vpack.c.b16 %v1199, %v1198
        %v1262 = vpack.c.b16 %v1201, %v1200
        %v1263 = vpack.c.b16 %v1203, %v1202
        %v1264 = vpack.c.b16 %v1205, %v1204
        %v1265 = vpack.c.b16 %v1207, %v1206
        %v1266 = vpack.c.b16 %v1209, %v1208
        %v1267 = vpack.c.b16 %v1211, %v1210
        %v1268 = vpack.c.b16 %v1213, %v1212
        %v1269 = vpack.c.b16 %v1215, %v1214
        %v1270 = vpack.c.b16 %v1217, %v1216
        %v1271 = vpack.c.b16 %v1219, %v1218
        %v1272 = vpack.c.b16 %v1221, %v1220
        %v1273 = vpack.c.b16 %v1223, %v1222
        %v1274 = vpack.c.b16 %v1225, %v1224
        %v1275 = vpack.c.b16 %v1227, %v1226
        %v1276 = vpack.c.b16 %v1229, %v1228
        %v1277 = vpack.c.b16 %v1231, %v1230
        %v1278 = vpack.c.b16 %v1233, %v1232
        %v1279 = vpack.c.b16 %v1235, %v1234
        %v1280 = vpack.c.b16 %v1237, %v1236
        %v1281 = vpack.c.b16 %v1239, %v1238
        %v1282 = vpack.c.b16 %v1241, %v1240
        %v1283 = vpack.c.b16 %v1243, %v1242
        %v1284 = vpack.c.b16 %v1245, %v1244
        %v1285 = vpack.c.b16 %v1247, %v1246
        %v1286 = vpack.c.b16 %v1249, %v1248
        %v1287 = vpack.c.b16 %v1251, %v1250
        %v1288 = vpack.c.b16 %v1253, %v1252
        %v1289 = vpack.c.b16 %v1255, %v1254
        %v1290 = vpack.c.b16 %v1257, %v1256
        %v1291 = vpack.c.b16 %v1259, %v1258
        %vm1324 = vcmask 31744
        %1325 = vst.msk [vmem:[#allocation2] sm:$0xff] %vm1324, %v1260
        %1326 = vst.msk [vmem:[#allocation2 + $0x8] sm:$0xff] %vm1324, %v1261
        %1327 = vst.msk [vmem:[#allocation2 + $0x10] sm:$0xff] %vm1324, %v1262
        %1328 = vst.msk [vmem:[#allocation2 + $0x18] sm:$0xff] %vm1324, %v1263
        %1329 = vst.msk [vmem:[#allocation2 + $0x20] sm:$0xff] %vm1324, %v1264
        %1330 = vst.msk [vmem:[#allocation2 + $0x28] sm:$0xff] %vm1324, %v1265
        %1331 = vst.msk [vmem:[#allocation2 + $0x30] sm:$0xff] %vm1324, %v1266
        %1332 = vst.msk [vmem:[#allocation2 + $0x38] sm:$0xff] %vm1324, %v1267
        %1333 = vst.msk [vmem:[#allocation2 + $0x40] sm:$0xff] %vm1324, %v1268
        %1334 = vst.msk [vmem:[#allocation2 + $0x48] sm:$0xff] %vm1324, %v1269
        %1335 = vst.msk [vmem:[#allocation2 + $0x50] sm:$0xff] %vm1324, %v1270
        %1336 = vst.msk [vmem:[#allocation2 + $0x58] sm:$0xff] %vm1324, %v1271
        %1337 = vst.msk [vmem:[#allocation2 + $0x60] sm:$0xff] %vm1324, %v1272
        %1338 = vst.msk [vmem:[#allocation2 + $0x68] sm:$0xff] %vm1324, %v1273
        %1339 = vst.msk [vmem:[#allocation2 + $0x70] sm:$0xff] %vm1324, %v1274
        %1340 = vst.msk [vmem:[#allocation2 + $0x78] sm:$0xff] %vm1324, %v1275
        %1341 = vst.msk [vmem:[#allocation2 + $0x80] sm:$0xff] %vm1324, %v1276
        %1342 = vst.msk [vmem:[#allocation2 + $0x88] sm:$0xff] %vm1324, %v1277
        %1343 = vst.msk [vmem:[#allocation2 + $0x90] sm:$0xff] %vm1324, %v1278
        %1344 = vst.msk [vmem:[#allocation2 + $0x98] sm:$0xff] %vm1324, %v1279
        %1345 = vst.msk [vmem:[#allocation2 + $0xa0] sm:$0xff] %vm1324, %v1280
        %1346 = vst.msk [vmem:[#allocation2 + $0xa8] sm:$0xff] %vm1324, %v1281
        %1347 = vst.msk [vmem:[#allocation2 + $0xb0] sm:$0xff] %vm1324, %v1282
        %1348 = vst.msk [vmem:[#allocation2 + $0xb8] sm:$0xff] %vm1324, %v1283
        %1349 = vst.msk [vmem:[#allocation2 + $0xc0] sm:$0xff] %vm1324, %v1284
        %1350 = vst.msk [vmem:[#allocation2 + $0xc8] sm:$0xff] %vm1324, %v1285
        %1351 = vst.msk [vmem:[#allocation2 + $0xd0] sm:$0xff] %vm1324, %v1286
        %1352 = vst.msk [vmem:[#allocation2 + $0xd8] sm:$0xff] %vm1324, %v1287
        %1353 = vst.msk [vmem:[#allocation2 + $0xe0] sm:$0xff] %vm1324, %v1288
        %1354 = vst.msk [vmem:[#allocation2 + $0xe8] sm:$0xff] %vm1324, %v1289
        %1355 = vst.msk [vmem:[#allocation2 + $0xf0] sm:$0xff] %vm1324, %v1290
        %1356 = vst.msk [vmem:[#allocation2 + $0xf8] sm:$0xff] %vm1324, %v1291
        %vm1357 = vsmask.f32 3328
        %vm1358 = vsmask.f32 7440
        %vm1359 = vmor %vm1357, %vm1358
        %v1361 = vshrl.u32 %v932, 16
        %v1363 = vrot.slane %v1361, 4
        %v1364 = vshll.u32 %v932, 16
        %v1366 = vrot.slane %v1364, 5
        %v1367 = vor.u32 %v1363, %v1366
        %v1368 = vrot.slane %v1367, 4
        %v1370 = vshll.u32 %v933, 16
        %v1372 = vrot.slane %v1370, 5
        %v1373 = vsel %vm1359, %v1368, %v1372
        %v1375 = vshrl.u32 %v934, 16
        %v1377 = vrot.slane %v1375, 4
        %v1378 = vshll.u32 %v934, 16
        %v1380 = vrot.slane %v1378, 5
        %v1381 = vor.u32 %v1377, %v1380
        %v1382 = vrot.slane %v1381, 4
        %v1384 = vshll.u32 %v935, 16
        %v1386 = vrot.slane %v1384, 5
        %v1387 = vsel %vm1359, %v1382, %v1386
        %v1389 = vshrl.u32 %v936, 16
        %v1391 = vrot.slane %v1389, 4
        %v1392 = vshll.u32 %v936, 16
        %v1394 = vrot.slane %v1392, 5
        %v1395 = vor.u32 %v1391, %v1394
        %v1396 = vrot.slane %v1395, 4
        %v1398 = vshll.u32 %v937, 16
        %v1400 = vrot.slane %v1398, 5
        %v1401 = vsel %vm1359, %v1396, %v1400
        %v1403 = vshrl.u32 %v938, 16
        %v1405 = vrot.slane %v1403, 4
        %v1406 = vshll.u32 %v938, 16
        %v1408 = vrot.slane %v1406, 5
        %v1409 = vor.u32 %v1405, %v1408
        %v1410 = vrot.slane %v1409, 4
        %v1412 = vshll.u32 %v939, 16
        %v1414 = vrot.slane %v1412, 5
        %v1415 = vsel %vm1359, %v1410, %v1414
        %v1417 = vshrl.u32 %v940, 16
        %v1419 = vrot.slane %v1417, 4
        %v1420 = vshll.u32 %v940, 16
        %v1422 = vrot.slane %v1420, 5
        %v1423 = vor.u32 %v1419, %v1422
        %v1424 = vrot.slane %v1423, 4
        %v1426 = vshll.u32 %v941, 16
        %v1428 = vrot.slane %v1426, 5
        %v1429 = vsel %vm1359, %v1424, %v1428
        %v1431 = vshrl.u32 %v942, 16
        %v1433 = vrot.slane %v1431, 4
        %v1434 = vshll.u32 %v942, 16
        %v1436 = vrot.slane %v1434, 5
        %v1437 = vor.u32 %v1433, %v1436
        %v1438 = vrot.slane %v1437, 4
        %v1440 = vshll.u32 %v943, 16
        %v1442 = vrot.slane %v1440, 5
        %v1443 = vsel %vm1359, %v1438, %v1442
        %v1445 = vshrl.u32 %v944, 16
        %v1447 = vrot.slane %v1445, 4
        %v1448 = vshll.u32 %v944, 16
        %v1450 = vrot.slane %v1448, 5
        %v1451 = vor.u32 %v1447, %v1450
        %v1452 = vrot.slane %v1451, 4
        %v1454 = vshll.u32 %v945, 16
        %v1456 = vrot.slane %v1454, 5
        %v1457 = vsel %vm1359, %v1452, %v1456
        %v1459 = vshrl.u32 %v946, 16
        %v1461 = vrot.slane %v1459, 4
        %v1462 = vshll.u32 %v946, 16
        %v1464 = vrot.slane %v1462, 5
        %v1465 = vor.u32 %v1461, %v1464
        %v1466 = vrot.slane %v1465, 4
        %v1468 = vshll.u32 %v947, 16
        %v1470 = vrot.slane %v1468, 5
        %v1471 = vsel %vm1359, %v1466, %v1470
        %v1473 = vshrl.u32 %v952, 16
        %v1475 = vrot.slane %v1473, 4
        %v1476 = vshll.u32 %v952, 16
        %v1478 = vrot.slane %v1476, 5
        %v1479 = vor.u32 %v1475, %v1478
        %v1480 = vrot.slane %v1479, 4
        %v1482 = vshll.u32 %v953, 16
        %v1484 = vrot.slane %v1482, 5
        %v1485 = vsel %vm1359, %v1480, %v1484
        %v1487 = vshrl.u32 %v954, 16
        %v1489 = vrot.slane %v1487, 4
        %v1490 = vshll.u32 %v954, 16
        %v1492 = vrot.slane %v1490, 5
        %v1493 = vor.u32 %v1489, %v1492
        %v1494 = vrot.slane %v1493, 4
        %v1496 = vshll.u32 %v955, 16
        %v1498 = vrot.slane %v1496, 5
        %v1499 = vsel %vm1359, %v1494, %v1498
        %v1501 = vshrl.u32 %v956, 16
        %v1503 = vrot.slane %v1501, 4
        %v1504 = vshll.u32 %v956, 16
        %v1506 = vrot.slane %v1504, 5
        %v1507 = vor.u32 %v1503, %v1506
        %v1508 = vrot.slane %v1507, 4
        %v1510 = vshll.u32 %v957, 16
        %v1512 = vrot.slane %v1510, 5
        %v1513 = vsel %vm1359, %v1508, %v1512
        %v1515 = vshrl.u32 %v958, 16
        %v1517 = vrot.slane %v1515, 4
        %v1518 = vshll.u32 %v958, 16
        %v1520 = vrot.slane %v1518, 5
        %v1521 = vor.u32 %v1517, %v1520
        %v1522 = vrot.slane %v1521, 4
        %v1524 = vshll.u32 %v959, 16
        %v1526 = vrot.slane %v1524, 5
        %v1527 = vsel %vm1359, %v1522, %v1526
        %v1529 = vshrl.u32 %v960, 16
        %v1531 = vrot.slane %v1529, 4
        %v1532 = vshll.u32 %v960, 16
        %v1534 = vrot.slane %v1532, 5
        %v1535 = vor.u32 %v1531, %v1534
        %v1536 = vrot.slane %v1535, 4
        %v1538 = vshll.u32 %v961, 16
        %v1540 = vrot.slane %v1538, 5
        %v1541 = vsel %vm1359, %v1536, %v1540
        %v1543 = vshrl.u32 %v962, 16
        %v1545 = vrot.slane %v1543, 4
        %v1546 = vshll.u32 %v962, 16
        %v1548 = vrot.slane %v1546, 5
        %v1549 = vor.u32 %v1545, %v1548
        %v1550 = vrot.slane %v1549, 4
        %v1552 = vshll.u32 %v963, 16
        %v1554 = vrot.slane %v1552, 5
        %v1555 = vsel %vm1359, %v1550, %v1554
        %v1557 = vshrl.u32 %v964, 16
        %v1559 = vrot.slane %v1557, 4
        %v1560 = vshll.u32 %v964, 16
        %v1562 = vrot.slane %v1560, 5
        %v1563 = vor.u32 %v1559, %v1562
        %v1564 = vrot.slane %v1563, 4
        %v1566 = vshll.u32 %v965, 16
        %v1568 = vrot.slane %v1566, 5
        %v1569 = vsel %vm1359, %v1564, %v1568
        %v1571 = vshrl.u32 %v966, 16
        %v1573 = vrot.slane %v1571, 4
        %v1574 = vshll.u32 %v966, 16
        %v1576 = vrot.slane %v1574, 5
        %v1577 = vor.u32 %v1573, %v1576
        %v1578 = vrot.slane %v1577, 4
        %v1580 = vshll.u32 %v967, 16
        %v1582 = vrot.slane %v1580, 5
        %v1583 = vsel %vm1359, %v1578, %v1582
        %v1585 = vshrl.u32 %v972, 16
        %v1587 = vrot.slane %v1585, 4
        %v1588 = vshll.u32 %v972, 16
        %v1590 = vrot.slane %v1588, 5
        %v1591 = vor.u32 %v1587, %v1590
        %v1592 = vrot.slane %v1591, 4
        %v1594 = vshll.u32 %v973, 16
        %v1596 = vrot.slane %v1594, 5
        %v1597 = vsel %vm1359, %v1592, %v1596
        %v1599 = vshrl.u32 %v974, 16
        %v1601 = vrot.slane %v1599, 4
        %v1602 = vshll.u32 %v974, 16
        %v1604 = vrot.slane %v1602, 5
        %v1605 = vor.u32 %v1601, %v1604
        %v1606 = vrot.slane %v1605, 4
        %v1608 = vshll.u32 %v975, 16
        %v1610 = vrot.slane %v1608, 5
        %v1611 = vsel %vm1359, %v1606, %v1610
        %v1613 = vshrl.u32 %v976, 16
        %v1615 = vrot.slane %v1613, 4
        %v1616 = vshll.u32 %v976, 16
        %v1618 = vrot.slane %v1616, 5
        %v1619 = vor.u32 %v1615, %v1618
        %v1620 = vrot.slane %v1619, 4
        %v1622 = vshll.u32 %v977, 16
        %v1624 = vrot.slane %v1622, 5
        %v1625 = vsel %vm1359, %v1620, %v1624
        %v1627 = vshrl.u32 %v978, 16
        %v1629 = vrot.slane %v1627, 4
        %v1630 = vshll.u32 %v978, 16
        %v1632 = vrot.slane %v1630, 5
        %v1633 = vor.u32 %v1629, %v1632
        %v1634 = vrot.slane %v1633, 4
        %v1636 = vshll.u32 %v979, 16
        %v1638 = vrot.slane %v1636, 5
        %v1639 = vsel %vm1359, %v1634, %v1638
        %v1641 = vshrl.u32 %v980, 16
        %v1643 = vrot.slane %v1641, 4
        %v1644 = vshll.u32 %v980, 16
        %v1646 = vrot.slane %v1644, 5
        %v1647 = vor.u32 %v1643, %v1646
        %v1648 = vrot.slane %v1647, 4
        %v1650 = vshll.u32 %v981, 16
        %v1652 = vrot.slane %v1650, 5
        %v1653 = vsel %vm1359, %v1648, %v1652
        %v1655 = vshrl.u32 %v982, 16
        %v1657 = vrot.slane %v1655, 4
        %v1658 = vshll.u32 %v982, 16
        %v1660 = vrot.slane %v1658, 5
        %v1661 = vor.u32 %v1657, %v1660
        %v1662 = vrot.slane %v1661, 4
        %v1664 = vshll.u32 %v983, 16
        %v1666 = vrot.slane %v1664, 5
        %v1667 = vsel %vm1359, %v1662, %v1666
        %v1669 = vshrl.u32 %v984, 16
        %v1671 = vrot.slane %v1669, 4
        %v1672 = vshll.u32 %v984, 16
        %v1674 = vrot.slane %v1672, 5
        %v1675 = vor.u32 %v1671, %v1674
        %v1676 = vrot.slane %v1675, 4
        %v1678 = vshll.u32 %v985, 16
        %v1680 = vrot.slane %v1678, 5
        %v1681 = vsel %vm1359, %v1676, %v1680
        %v1683 = vshrl.u32 %v986, 16
        %v1685 = vrot.slane %v1683, 4
        %v1686 = vshll.u32 %v986, 16
        %v1688 = vrot.slane %v1686, 5
        %v1689 = vor.u32 %v1685, %v1688
        %v1690 = vrot.slane %v1689, 4
        %v1692 = vshll.u32 %v987, 16
        %v1694 = vrot.slane %v1692, 5
        %v1695 = vsel %vm1359, %v1690, %v1694
        %v1697 = vshrl.u32 %v992, 16
        %v1699 = vrot.slane %v1697, 4
        %v1700 = vshll.u32 %v992, 16
        %v1702 = vrot.slane %v1700, 5
        %v1703 = vor.u32 %v1699, %v1702
        %v1704 = vrot.slane %v1703, 4
        %v1706 = vshll.u32 %v993, 16
        %v1708 = vrot.slane %v1706, 5
        %v1709 = vsel %vm1359, %v1704, %v1708
        %v1711 = vshrl.u32 %v994, 16
        %v1713 = vrot.slane %v1711, 4
        %v1714 = vshll.u32 %v994, 16
        %v1716 = vrot.slane %v1714, 5
        %v1717 = vor.u32 %v1713, %v1716
        %v1718 = vrot.slane %v1717, 4
        %v1720 = vshll.u32 %v995, 16
        %v1722 = vrot.slane %v1720, 5
        %v1723 = vsel %vm1359, %v1718, %v1722
        %v1725 = vshrl.u32 %v996, 16
        %v1727 = vrot.slane %v1725, 4
        %v1728 = vshll.u32 %v996, 16
        %v1730 = vrot.slane %v1728, 5
        %v1731 = vor.u32 %v1727, %v1730
        %v1732 = vrot.slane %v1731, 4
        %v1734 = vshll.u32 %v997, 16
        %v1736 = vrot.slane %v1734, 5
        %v1737 = vsel %vm1359, %v1732, %v1736
        %v1739 = vshrl.u32 %v998, 16
        %v1741 = vrot.slane %v1739, 4
        %v1742 = vshll.u32 %v998, 16
        %v1744 = vrot.slane %v1742, 5
        %v1745 = vor.u32 %v1741, %v1744
        %v1746 = vrot.slane %v1745, 4
        %v1748 = vshll.u32 %v999, 16
        %v1750 = vrot.slane %v1748, 5
        %v1751 = vsel %vm1359, %v1746, %v1750
        %v1753 = vshrl.u32 %v1000, 16
        %v1755 = vrot.slane %v1753, 4
        %v1756 = vshll.u32 %v1000, 16
        %v1758 = vrot.slane %v1756, 5
        %v1759 = vor.u32 %v1755, %v1758
        %v1760 = vrot.slane %v1759, 4
        %v1762 = vshll.u32 %v1001, 16
        %v1764 = vrot.slane %v1762, 5
        %v1765 = vsel %vm1359, %v1760, %v1764
        %v1767 = vshrl.u32 %v1002, 16
        %v1769 = vrot.slane %v1767, 4
        %v1770 = vshll.u32 %v1002, 16
        %v1772 = vrot.slane %v1770, 5
        %v1773 = vor.u32 %v1769, %v1772
        %v1774 = vrot.slane %v1773, 4
        %v1776 = vshll.u32 %v1003, 16
        %v1778 = vrot.slane %v1776, 5
        %v1779 = vsel %vm1359, %v1774, %v1778
        %v1781 = vshrl.u32 %v1004, 16
        %v1783 = vrot.slane %v1781, 4
        %v1784 = vshll.u32 %v1004, 16
        %v1786 = vrot.slane %v1784, 5
        %v1787 = vor.u32 %v1783, %v1786
        %v1788 = vrot.slane %v1787, 4
        %v1790 = vshll.u32 %v1005, 16
        %v1792 = vrot.slane %v1790, 5
        %v1793 = vsel %vm1359, %v1788, %v1792
        %v1795 = vshrl.u32 %v1006, 16
        %v1797 = vrot.slane %v1795, 4
        %v1798 = vshll.u32 %v1006, 16
        %v1800 = vrot.slane %v1798, 5
        %v1801 = vor.u32 %v1797, %v1800
        %v1802 = vrot.slane %v1801, 4
        %v1804 = vshll.u32 %v1007, 16
        %v1806 = vrot.slane %v1804, 5
        %v1807 = vsel %vm1359, %v1802, %v1806
        %v1809 = vshrl.u32 %v1012, 16
        %v1811 = vrot.slane %v1809, 4
        %v1812 = vshll.u32 %v1012, 16
        %v1814 = vrot.slane %v1812, 5
        %v1815 = vor.u32 %v1811, %v1814
        %v1816 = vrot.slane %v1815, 4
        %v1818 = vshll.u32 %v1013, 16
        %v1820 = vrot.slane %v1818, 5
        %v1821 = vsel %vm1359, %v1816, %v1820
        %v1823 = vshrl.u32 %v1014, 16
        %v1825 = vrot.slane %v1823, 4
        %v1826 = vshll.u32 %v1014, 16
        %v1828 = vrot.slane %v1826, 5
        %v1829 = vor.u32 %v1825, %v1828
        %v1830 = vrot.slane %v1829, 4
        %v1832 = vshll.u32 %v1015, 16
        %v1834 = vrot.slane %v1832, 5
        %v1835 = vsel %vm1359, %v1830, %v1834
        %v1837 = vshrl.u32 %v1016, 16
        %v1839 = vrot.slane %v1837, 4
        %v1840 = vshll.u32 %v1016, 16
        %v1842 = vrot.slane %v1840, 5
        %v1843 = vor.u32 %v1839, %v1842
        %v1844 = vrot.slane %v1843, 4
        %v1846 = vshll.u32 %v1017, 16
        %v1848 = vrot.slane %v1846, 5
        %v1849 = vsel %vm1359, %v1844, %v1848
        %v1851 = vshrl.u32 %v1018, 16
        %v1853 = vrot.slane %v1851, 4
        %v1854 = vshll.u32 %v1018, 16
        %v1856 = vrot.slane %v1854, 5
        %v1857 = vor.u32 %v1853, %v1856
        %v1858 = vrot.slane %v1857, 4
        %v1860 = vshll.u32 %v1019, 16
        %v1862 = vrot.slane %v1860, 5
        %v1863 = vsel %vm1359, %v1858, %v1862
        %v1865 = vshrl.u32 %v1020, 16
        %v1867 = vrot.slane %v1865, 4
        %v1868 = vshll.u32 %v1020, 16
        %v1870 = vrot.slane %v1868, 5
        %v1871 = vor.u32 %v1867, %v1870
        %v1872 = vrot.slane %v1871, 4
        %v1874 = vshll.u32 %v1021, 16
        %v1876 = vrot.slane %v1874, 5
        %v1877 = vsel %vm1359, %v1872, %v1876
        %v1879 = vshrl.u32 %v1022, 16
        %v1881 = vrot.slane %v1879, 4
        %v1882 = vshll.u32 %v1022, 16
        %v1884 = vrot.slane %v1882, 5
        %v1885 = vor.u32 %v1881, %v1884
        %v1886 = vrot.slane %v1885, 4
        %v1888 = vshll.u32 %v1023, 16
        %v1890 = vrot.slane %v1888, 5
        %v1891 = vsel %vm1359, %v1886, %v1890
        %v1893 = vshrl.u32 %v1024, 16
        %v1895 = vrot.slane %v1893, 4
        %v1896 = vshll.u32 %v1024, 16
        %v1898 = vrot.slane %v1896, 5
        %v1899 = vor.u32 %v1895, %v1898
        %v1900 = vrot.slane %v1899, 4
        %v1902 = vshll.u32 %v1025, 16
        %v1904 = vrot.slane %v1902, 5
        %v1905 = vsel %vm1359, %v1900, %v1904
        %v1907 = vshrl.u32 %v1026, 16
        %v1909 = vrot.slane %v1907, 4
        %v1910 = vshll.u32 %v1026, 16
        %v1912 = vrot.slane %v1910, 5
        %v1913 = vor.u32 %v1909, %v1912
        %v1914 = vrot.slane %v1913, 4
        %v1916 = vshll.u32 %v1027, 16
        %v1918 = vrot.slane %v1916, 5
        %v1919 = vsel %vm1359, %v1914, %v1918
        %v1921 = vshrl.u32 %v1032, 16
        %v1923 = vrot.slane %v1921, 4
        %v1924 = vshll.u32 %v1032, 16
        %v1926 = vrot.slane %v1924, 5
        %v1927 = vor.u32 %v1923, %v1926
        %v1928 = vrot.slane %v1927, 4
        %v1930 = vshll.u32 %v1033, 16
        %v1932 = vrot.slane %v1930, 5
        %v1933 = vsel %vm1359, %v1928, %v1932
        %v1935 = vshrl.u32 %v1034, 16
        %v1937 = vrot.slane %v1935, 4
        %v1938 = vshll.u32 %v1034, 16
        %v1940 = vrot.slane %v1938, 5
        %v1941 = vor.u32 %v1937, %v1940
        %v1942 = vrot.slane %v1941, 4
        %v1944 = vshll.u32 %v1035, 16
        %v1946 = vrot.slane %v1944, 5
        %v1947 = vsel %vm1359, %v1942, %v1946
        %v1949 = vshrl.u32 %v1036, 16
        %v1951 = vrot.slane %v1949, 4
        %v1952 = vshll.u32 %v1036, 16
        %v1954 = vrot.slane %v1952, 5
        %v1955 = vor.u32 %v1951, %v1954
        %v1956 = vrot.slane %v1955, 4
        %v1958 = vshll.u32 %v1037, 16
        %v1960 = vrot.slane %v1958, 5
        %v1961 = vsel %vm1359, %v1956, %v1960
        %v1963 = vshrl.u32 %v1038, 16
        %v1965 = vrot.slane %v1963, 4
        %v1966 = vshll.u32 %v1038, 16
        %v1968 = vrot.slane %v1966, 5
        %v1969 = vor.u32 %v1965, %v1968
        %v1970 = vrot.slane %v1969, 4
        %v1972 = vshll.u32 %v1039, 16
        %v1974 = vrot.slane %v1972, 5
        %v1975 = vsel %vm1359, %v1970, %v1974
        %v1977 = vshrl.u32 %v1040, 16
        %v1979 = vrot.slane %v1977, 4
        %v1980 = vshll.u32 %v1040, 16
        %v1982 = vrot.slane %v1980, 5
        %v1983 = vor.u32 %v1979, %v1982
        %v1984 = vrot.slane %v1983, 4
        %v1986 = vshll.u32 %v1041, 16
        %v1988 = vrot.slane %v1986, 5
        %v1989 = vsel %vm1359, %v1984, %v1988
        %v1991 = vshrl.u32 %v1042, 16
        %v1993 = vrot.slane %v1991, 4
        %v1994 = vshll.u32 %v1042, 16
        %v1996 = vrot.slane %v1994, 5
        %v1997 = vor.u32 %v1993, %v1996
        %v1998 = vrot.slane %v1997, 4
        %v2000 = vshll.u32 %v1043, 16
        %v2002 = vrot.slane %v2000, 5
        %v2003 = vsel %vm1359, %v1998, %v2002
        %v2005 = vshrl.u32 %v1044, 16
        %v2007 = vrot.slane %v2005, 4
        %v2008 = vshll.u32 %v1044, 16
        %v2010 = vrot.slane %v2008, 5
        %v2011 = vor.u32 %v2007, %v2010
        %v2012 = vrot.slane %v2011, 4
        %v2014 = vshll.u32 %v1045, 16
        %v2016 = vrot.slane %v2014, 5
        %v2017 = vsel %vm1359, %v2012, %v2016
        %v2019 = vshrl.u32 %v1046, 16
        %v2021 = vrot.slane %v2019, 4
        %v2022 = vshll.u32 %v1046, 16
        %v2024 = vrot.slane %v2022, 5
        %v2025 = vor.u32 %v2021, %v2024
        %v2026 = vrot.slane %v2025, 4
        %v2028 = vshll.u32 %v1047, 16
        %v2030 = vrot.slane %v2028, 5
        %v2031 = vsel %vm1359, %v2026, %v2030
        %v2033 = vshrl.u32 %v1052, 16
        %v2035 = vrot.slane %v2033, 4
        %v2036 = vshll.u32 %v1052, 16
        %v2038 = vrot.slane %v2036, 5
        %v2039 = vor.u32 %v2035, %v2038
        %v2040 = vrot.slane %v2039, 4
        %v2042 = vshll.u32 %v1053, 16
        %v2044 = vrot.slane %v2042, 5
        %v2045 = vsel %vm1359, %v2040, %v2044
        %v2047 = vshrl.u32 %v1054, 16
        %v2049 = vrot.slane %v2047, 4
        %v2050 = vshll.u32 %v1054, 16
        %v2052 = vrot.slane %v2050, 5
        %v2053 = vor.u32 %v2049, %v2052
        %v2054 = vrot.slane %v2053, 4
        %v2056 = vshll.u32 %v1055, 16
        %v2058 = vrot.slane %v2056, 5
        %v2059 = vsel %vm1359, %v2054, %v2058
        %v2061 = vshrl.u32 %v1056, 16
        %v2063 = vrot.slane %v2061, 4
        %v2064 = vshll.u32 %v1056, 16
        %v2066 = vrot.slane %v2064, 5
        %v2067 = vor.u32 %v2063, %v2066
        %v2068 = vrot.slane %v2067, 4
        %v2070 = vshll.u32 %v1057, 16
        %v2072 = vrot.slane %v2070, 5
        %v2073 = vsel %vm1359, %v2068, %v2072
        %v2075 = vshrl.u32 %v1058, 16
        %v2077 = vrot.slane %v2075, 4
        %v2078 = vshll.u32 %v1058, 16
        %v2080 = vrot.slane %v2078, 5
        %v2081 = vor.u32 %v2077, %v2080
        %v2082 = vrot.slane %v2081, 4
        %v2084 = vshll.u32 %v1059, 16
        %v2086 = vrot.slane %v2084, 5
        %v2087 = vsel %vm1359, %v2082, %v2086
        %v2089 = vshrl.u32 %v1060, 16
        %v2091 = vrot.slane %v2089, 4
        %v2092 = vshll.u32 %v1060, 16
        %v2094 = vrot.slane %v2092, 5
        %v2095 = vor.u32 %v2091, %v2094
        %v2096 = vrot.slane %v2095, 4
        %v2098 = vshll.u32 %v1061, 16
        %v2100 = vrot.slane %v2098, 5
        %v2101 = vsel %vm1359, %v2096, %v2100
        %v2103 = vshrl.u32 %v1062, 16
        %v2105 = vrot.slane %v2103, 4
        %v2106 = vshll.u32 %v1062, 16
        %v2108 = vrot.slane %v2106, 5
        %v2109 = vor.u32 %v2105, %v2108
        %v2110 = vrot.slane %v2109, 4
        %v2112 = vshll.u32 %v1063, 16
        %v2114 = vrot.slane %v2112, 5
        %v2115 = vsel %vm1359, %v2110, %v2114
        %v2117 = vshrl.u32 %v1064, 16
        %v2119 = vrot.slane %v2117, 4
        %v2120 = vshll.u32 %v1064, 16
        %v2122 = vrot.slane %v2120, 5
        %v2123 = vor.u32 %v2119, %v2122
        %v2124 = vrot.slane %v2123, 4
        %v2126 = vshll.u32 %v1065, 16
        %v2128 = vrot.slane %v2126, 5
        %v2129 = vsel %vm1359, %v2124, %v2128
        %v2131 = vshrl.u32 %v1066, 16
        %v2133 = vrot.slane %v2131, 4
        %v2134 = vshll.u32 %v1066, 16
        %v2136 = vrot.slane %v2134, 5
        %v2137 = vor.u32 %v2133, %v2136
        %v2138 = vrot.slane %v2137, 4
        %v2140 = vshll.u32 %v1067, 16
        %v2142 = vrot.slane %v2140, 5
        %v2143 = vsel %vm1359, %v2138, %v2142
        %v2145 = vshrl.u32 %v1072, 16
        %v2147 = vrot.slane %v2145, 4
        %v2148 = vshll.u32 %v1072, 16
        %v2150 = vrot.slane %v2148, 5
        %v2151 = vor.u32 %v2147, %v2150
        %v2152 = vrot.slane %v2151, 4
        %v2154 = vshll.u32 %v1073, 16
        %v2156 = vrot.slane %v2154, 5
        %v2157 = vsel %vm1359, %v2152, %v2156
        %v2159 = vshrl.u32 %v1074, 16
        %v2161 = vrot.slane %v2159, 4
        %v2162 = vshll.u32 %v1074, 16
        %v2164 = vrot.slane %v2162, 5
        %v2165 = vor.u32 %v2161, %v2164
        %v2166 = vrot.slane %v2165, 4
        %v2168 = vshll.u32 %v1075, 16
        %v2170 = vrot.slane %v2168, 5
        %v2171 = vsel %vm1359, %v2166, %v2170
        %v2173 = vshrl.u32 %v1076, 16
        %v2175 = vrot.slane %v2173, 4
        %v2176 = vshll.u32 %v1076, 16
        %v2178 = vrot.slane %v2176, 5
        %v2179 = vor.u32 %v2175, %v2178
        %v2180 = vrot.slane %v2179, 4
        %v2182 = vshll.u32 %v1077, 16
        %v2184 = vrot.slane %v2182, 5
        %v2185 = vsel %vm1359, %v2180, %v2184
        %v2187 = vshrl.u32 %v1078, 16
        %v2189 = vrot.slane %v2187, 4
        %v2190 = vshll.u32 %v1078, 16
        %v2192 = vrot.slane %v2190, 5
        %v2193 = vor.u32 %v2189, %v2192
        %v2194 = vrot.slane %v2193, 4
        %v2196 = vshll.u32 %v1079, 16
        %v2198 = vrot.slane %v2196, 5
        %v2199 = vsel %vm1359, %v2194, %v2198
        %v2201 = vshrl.u32 %v1080, 16
        %v2203 = vrot.slane %v2201, 4
        %v2204 = vshll.u32 %v1080, 16
        %v2206 = vrot.slane %v2204, 5
        %v2207 = vor.u32 %v2203, %v2206
        %v2208 = vrot.slane %v2207, 4
        %v2210 = vshll.u32 %v1081, 16
        %v2212 = vrot.slane %v2210, 5
        %v2213 = vsel %vm1359, %v2208, %v2212
        %v2215 = vshrl.u32 %v1082, 16
        %v2217 = vrot.slane %v2215, 4
        %v2218 = vshll.u32 %v1082, 16
        %v2220 = vrot.slane %v2218, 5
        %v2221 = vor.u32 %v2217, %v2220
        %v2222 = vrot.slane %v2221, 4
        %v2224 = vshll.u32 %v1083, 16
        %v2226 = vrot.slane %v2224, 5
        %v2227 = vsel %vm1359, %v2222, %v2226
        %v2229 = vshrl.u32 %v1084, 16
        %v2231 = vrot.slane %v2229, 4
        %v2232 = vshll.u32 %v1084, 16
        %v2234 = vrot.slane %v2232, 5
        %v2235 = vor.u32 %v2231, %v2234
        %v2236 = vrot.slane %v2235, 4
        %v2238 = vshll.u32 %v1085, 16
        %v2240 = vrot.slane %v2238, 5
        %v2241 = vsel %vm1359, %v2236, %v2240
        %v2243 = vshrl.u32 %v1086, 16
        %v2245 = vrot.slane %v2243, 4
        %v2246 = vshll.u32 %v1086, 16
        %v2248 = vrot.slane %v2246, 5
        %v2249 = vor.u32 %v2245, %v2248
        %v2250 = vrot.slane %v2249, 4
        %v2252 = vshll.u32 %v1087, 16
        %v2254 = vrot.slane %v2252, 5
        %v2255 = vsel %vm1359, %v2250, %v2254
        %v2256 = vunpack.c.l.b16 %v1373
        %v2257 = vunpack.c.l.b16 %v1387
        %v2258 = vunpack.c.l.b16 %v1401
        %v2259 = vunpack.c.l.b16 %v1415
        %v2260 = vunpack.c.l.b16 %v1429
        %v2261 = vunpack.c.l.b16 %v1443
        %v2262 = vunpack.c.l.b16 %v1457
        %v2263 = vunpack.c.l.b16 %v1471
        %v2264 = vunpack.c.l.b16 %v1485
        %v2265 = vunpack.c.l.b16 %v1499
        %v2266 = vunpack.c.l.b16 %v1513
        %v2267 = vunpack.c.l.b16 %v1527
        %v2268 = vunpack.c.l.b16 %v1541
        %v2269 = vunpack.c.l.b16 %v1555
        %v2270 = vunpack.c.l.b16 %v1569
        %v2271 = vunpack.c.l.b16 %v1583
        %v2272 = vunpack.c.l.b16 %v1597
        %v2273 = vunpack.c.l.b16 %v1611
        %v2274 = vunpack.c.l.b16 %v1625
        %v2275 = vunpack.c.l.b16 %v1639
        %v2276 = vunpack.c.l.b16 %v1653
        %v2277 = vunpack.c.l.b16 %v1667
        %v2278 = vunpack.c.l.b16 %v1681
        %v2279 = vunpack.c.l.b16 %v1695
        %v2280 = vunpack.c.l.b16 %v1709
        %v2281 = vunpack.c.l.b16 %v1723
        %v2282 = vunpack.c.l.b16 %v1737
        %v2283 = vunpack.c.l.b16 %v1751
        %v2284 = vunpack.c.l.b16 %v1765
        %v2285 = vunpack.c.l.b16 %v1779
        %v2286 = vunpack.c.l.b16 %v1793
        %v2287 = vunpack.c.l.b16 %v1807
        %v2288 = vunpack.c.l.b16 %v1821
        %v2289 = vunpack.c.l.b16 %v1835
        %v2290 = vunpack.c.l.b16 %v1849
        %v2291 = vunpack.c.l.b16 %v1863
        %v2292 = vunpack.c.l.b16 %v1877
        %v2293 = vunpack.c.l.b16 %v1891
        %v2294 = vunpack.c.l.b16 %v1905
        %v2295 = vunpack.c.l.b16 %v1919
        %v2296 = vunpack.c.l.b16 %v1933
        %v2297 = vunpack.c.l.b16 %v1947
        %v2298 = vunpack.c.l.b16 %v1961
        %v2299 = vunpack.c.l.b16 %v1975
        %v2300 = vunpack.c.l.b16 %v1989
        %v2301 = vunpack.c.l.b16 %v2003
        %v2302 = vunpack.c.l.b16 %v2017
        %v2303 = vunpack.c.l.b16 %v2031
        %v2304 = vunpack.c.l.b16 %v2045
        %v2305 = vunpack.c.l.b16 %v2059
        %v2306 = vunpack.c.l.b16 %v2073
        %v2307 = vunpack.c.l.b16 %v2087
        %v2308 = vunpack.c.l.b16 %v2101
        %v2309 = vunpack.c.l.b16 %v2115
        %v2310 = vunpack.c.l.b16 %v2129
        %v2311 = vunpack.c.l.b16 %v2143
        %v2312 = vunpack.c.l.b16 %v2157
        %v2313 = vunpack.c.l.b16 %v2171
        %v2314 = vunpack.c.l.b16 %v2185
        %v2315 = vunpack.c.l.b16 %v2199
        %v2316 = vunpack.c.l.b16 %v2213
        %v2317 = vunpack.c.l.b16 %v2227
        %v2318 = vunpack.c.l.b16 %v2241
        %v2319 = vunpack.c.l.b16 %v2255
        %v2320 = vpack.c.b16 %v2257, %v2256
        %v2321 = vpack.c.b16 %v2259, %v2258
        %v2322 = vpack.c.b16 %v2261, %v2260
        %v2323 = vpack.c.b16 %v2263, %v2262
        %v2324 = vpack.c.b16 %v2265, %v2264
        %v2325 = vpack.c.b16 %v2267, %v2266
        %v2326 = vpack.c.b16 %v2269, %v2268
        %v2327 = vpack.c.b16 %v2271, %v2270
        %v2328 = vpack.c.b16 %v2273, %v2272
        %v2329 = vpack.c.b16 %v2275, %v2274
        %v2330 = vpack.c.b16 %v2277, %v2276
        %v2331 = vpack.c.b16 %v2279, %v2278
        %v2332 = vpack.c.b16 %v2281, %v2280
        %v2333 = vpack.c.b16 %v2283, %v2282
        %v2334 = vpack.c.b16 %v2285, %v2284
        %v2335 = vpack.c.b16 %v2287, %v2286
        %v2336 = vpack.c.b16 %v2289, %v2288
        %v2337 = vpack.c.b16 %v2291, %v2290
        %v2338 = vpack.c.b16 %v2293, %v2292
        %v2339 = vpack.c.b16 %v2295, %v2294
        %v2340 = vpack.c.b16 %v2297, %v2296
        %v2341 = vpack.c.b16 %v2299, %v2298
        %v2342 = vpack.c.b16 %v2301, %v2300
        %v2343 = vpack.c.b16 %v2303, %v2302
        %v2344 = vpack.c.b16 %v2305, %v2304
        %v2345 = vpack.c.b16 %v2307, %v2306
        %v2346 = vpack.c.b16 %v2309, %v2308
        %v2347 = vpack.c.b16 %v2311, %v2310
        %v2348 = vpack.c.b16 %v2313, %v2312
        %v2349 = vpack.c.b16 %v2315, %v2314
        %v2350 = vpack.c.b16 %v2317, %v2316
        %v2351 = vpack.c.b16 %v2319, %v2318
        %2352 = vrot.lane.b32.xlu0 %v2320, 4
        %v2353 = vpop.permute.xlu0 %2352
        %2354 = vrot.lane.b32.xlu0 %v2321, 4
        %v2355 = vpop.permute.xlu0 %2354
        %2356 = vrot.lane.b32.xlu0 %v2322, 4
        %v2357 = vpop.permute.xlu0 %2356
        %2358 = vrot.lane.b32.xlu0 %v2323, 4
        %v2359 = vpop.permute.xlu0 %2358
        %2360 = vrot.lane.b32.xlu0 %v2324, 4
        %v2361 = vpop.permute.xlu0 %2360
        %2362 = vrot.lane.b32.xlu0 %v2325, 4
        %v2363 = vpop.permute.xlu0 %2362
        %2364 = vrot.lane.b32.xlu0 %v2326, 4
        %v2365 = vpop.permute.xlu0 %2364
        %2366 = vrot.lane.b32.xlu0 %v2327, 4
        %v2367 = vpop.permute.xlu0 %2366
        %2368 = vrot.lane.b32.xlu0 %v2328, 4
        %v2369 = vpop.permute.xlu0 %2368
        %2370 = vrot.lane.b32.xlu0 %v2329, 4
        %v2371 = vpop.permute.xlu0 %2370
        %2372 = vrot.lane.b32.xlu0 %v2330, 4
        %v2373 = vpop.permute.xlu0 %2372
        %2374 = vrot.lane.b32.xlu0 %v2331, 4
        %v2375 = vpop.permute.xlu0 %2374
        %2376 = vrot.lane.b32.xlu0 %v2332, 4
        %v2377 = vpop.permute.xlu0 %2376
        %2378 = vrot.lane.b32.xlu0 %v2333, 4
        %v2379 = vpop.permute.xlu0 %2378
        %2380 = vrot.lane.b32.xlu0 %v2334, 4
        %v2381 = vpop.permute.xlu0 %2380
        %2382 = vrot.lane.b32.xlu0 %v2335, 4
        %v2383 = vpop.permute.xlu0 %2382
        %2384 = vrot.lane.b32.xlu0 %v2336, 4
        %v2385 = vpop.permute.xlu0 %2384
        %2386 = vrot.lane.b32.xlu0 %v2337, 4
        %v2387 = vpop.permute.xlu0 %2386
        %2388 = vrot.lane.b32.xlu0 %v2338, 4
        %v2389 = vpop.permute.xlu0 %2388
        %2390 = vrot.lane.b32.xlu0 %v2339, 4
        %v2391 = vpop.permute.xlu0 %2390
        %2392 = vrot.lane.b32.xlu0 %v2340, 4
        %v2393 = vpop.permute.xlu0 %2392
        %2394 = vrot.lane.b32.xlu0 %v2341, 4
        %v2395 = vpop.permute.xlu0 %2394
        %2396 = vrot.lane.b32.xlu0 %v2342, 4
        %v2397 = vpop.permute.xlu0 %2396
        %2398 = vrot.lane.b32.xlu0 %v2343, 4
        %v2399 = vpop.permute.xlu0 %2398
        %2400 = vrot.lane.b32.xlu0 %v2344, 4
        %v2401 = vpop.permute.xlu0 %2400
        %2402 = vrot.lane.b32.xlu0 %v2345, 4
        %v2403 = vpop.permute.xlu0 %2402
        %2404 = vrot.lane.b32.xlu0 %v2346, 4
        %v2405 = vpop.permute.xlu0 %2404
        %2406 = vrot.lane.b32.xlu0 %v2347, 4
        %v2407 = vpop.permute.xlu0 %2406
        %2408 = vrot.lane.b32.xlu0 %v2348, 4
        %v2409 = vpop.permute.xlu0 %2408
        %2410 = vrot.lane.b32.xlu0 %v2349, 4
        %v2411 = vpop.permute.xlu0 %2410
        %2412 = vrot.lane.b32.xlu0 %v2350, 4
        %v2413 = vpop.permute.xlu0 %2412
        %2414 = vrot.lane.b32.xlu0 %v2351, 4
        %v2415 = vpop.permute.xlu0 %2414
        %vm2448 = vcmask 64544
        %2449 = vst.msk [vmem:[#allocation2] sm:$0xff] %vm2448, %v2353
        %2450 = vst.msk [vmem:[#allocation2 + $0x8] sm:$0xff] %vm2448, %v2355
        %2451 = vst.msk [vmem:[#allocation2 + $0x10] sm:$0xff] %vm2448, %v2357
        %2452 = vst.msk [vmem:[#allocation2 + $0x18] sm:$0xff] %vm2448, %v2359
        %2453 = vst.msk [vmem:[#allocation2 + $0x20] sm:$0xff] %vm2448, %v2361
        %2454 = vst.msk [vmem:[#allocation2 + $0x28] sm:$0xff] %vm2448, %v2363
        %2455 = vst.msk [vmem:[#allocation2 + $0x30] sm:$0xff] %vm2448, %v2365
        %2456 = vst.msk [vmem:[#allocation2 + $0x38] sm:$0xff] %vm2448, %v2367
        %2457 = vst.msk [vmem:[#allocation2 + $0x40] sm:$0xff] %vm2448, %v2369
        %2458 = vst.msk [vmem:[#allocation2 + $0x48] sm:$0xff] %vm2448, %v2371
        %2459 = vst.msk [vmem:[#allocation2 + $0x50] sm:$0xff] %vm2448, %v2373
        %2460 = vst.msk [vmem:[#allocation2 + $0x58] sm:$0xff] %vm2448, %v2375
        %2461 = vst.msk [vmem:[#allocation2 + $0x60] sm:$0xff] %vm2448, %v2377
        %2462 = vst.msk [vmem:[#allocation2 + $0x68] sm:$0xff] %vm2448, %v2379
        %2463 = vst.msk [vmem:[#allocation2 + $0x70] sm:$0xff] %vm2448, %v2381
        %2464 = vst.msk [vmem:[#allocation2 + $0x78] sm:$0xff] %vm2448, %v2383
        %2465 = vst.msk [vmem:[#allocation2 + $0x80] sm:$0xff] %vm2448, %v2385
        %2466 = vst.msk [vmem:[#allocation2 + $0x88] sm:$0xff] %vm2448, %v2387
        %2467 = vst.msk [vmem:[#allocation2 + $0x90] sm:$0xff] %vm2448, %v2389
        %2468 = vst.msk [vmem:[#allocation2 + $0x98] sm:$0xff] %vm2448, %v2391
        %2469 = vst.msk [vmem:[#allocation2 + $0xa0] sm:$0xff] %vm2448, %v2393
        %2470 = vst.msk [vmem:[#allocation2 + $0xa8] sm:$0xff] %vm2448, %v2395
        %2471 = vst.msk [vmem:[#allocation2 + $0xb0] sm:$0xff] %vm2448, %v2397
        %2472 = vst.msk [vmem:[#allocation2 + $0xb8] sm:$0xff] %vm2448, %v2399
        %2473 = vst.msk [vmem:[#allocation2 + $0xc0] sm:$0xff] %vm2448, %v2401
        %2474 = vst.msk [vmem:[#allocation2 + $0xc8] sm:$0xff] %vm2448, %v2403
        %2475 = vst.msk [vmem:[#allocation2 + $0xd0] sm:$0xff] %vm2448, %v2405
        %2476 = vst.msk [vmem:[#allocation2 + $0xd8] sm:$0xff] %vm2448, %v2407
        %2477 = vst.msk [vmem:[#allocation2 + $0xe0] sm:$0xff] %vm2448, %v2409
        %2478 = vst.msk [vmem:[#allocation2 + $0xe8] sm:$0xff] %vm2448, %v2411
        %2479 = vst.msk [vmem:[#allocation2 + $0xf0] sm:$0xff] %vm2448, %v2413
        %2480 = vst.msk [vmem:[#allocation2 + $0xf8] sm:$0xff] %vm2448, %v2415
        %vm2545 = vcmask 1042432
        %vm2546 = vcmask 1046532
        %vm2547 = vmor %vm2545, %vm2546
        %v2548 = vrot.slane %v932, 5
        %v2549 = vrot.slane %v2548, 4
        %v2550 = vrot.slane %v933, 5
        %v2551 = vsel %vm2547, %v2549, %v2550
        %v2552 = vrot.slane %v934, 5
        %v2553 = vrot.slane %v2552, 4
        %v2554 = vrot.slane %v935, 5
        %v2555 = vsel %vm2547, %v2553, %v2554
        %v2556 = vrot.slane %v936, 5
        %v2557 = vrot.slane %v2556, 4
        %v2558 = vrot.slane %v937, 5
        %v2559 = vsel %vm2547, %v2557, %v2558
        %v2560 = vrot.slane %v938, 5
        %v2561 = vrot.slane %v2560, 4
        %v2562 = vrot.slane %v939, 5
        %v2563 = vsel %vm2547, %v2561, %v2562
        %v2564 = vrot.slane %v940, 5
        %v2565 = vrot.slane %v2564, 4
        %v2566 = vrot.slane %v941, 5
        %v2567 = vsel %vm2547, %v2565, %v2566
        %v2568 = vrot.slane %v942, 5
        %v2569 = vrot.slane %v2568, 4
        %v2570 = vrot.slane %v943, 5
        %v2571 = vsel %vm2547, %v2569, %v2570
        %v2572 = vrot.slane %v944, 5
        %v2573 = vrot.slane %v2572, 4
        %v2574 = vrot.slane %v945, 5
        %v2575 = vsel %vm2547, %v2573, %v2574
        %v2576 = vrot.slane %v946, 5
        %v2577 = vrot.slane %v2576, 4
        %v2578 = vrot.slane %v947, 5
        %v2579 = vsel %vm2547, %v2577, %v2578
        %v2580 = vrot.slane %v952, 5
        %v2581 = vrot.slane %v2580, 4
        %v2582 = vrot.slane %v953, 5
        %v2583 = vsel %vm2547, %v2581, %v2582
        %v2584 = vrot.slane %v954, 5
        %v2585 = vrot.slane %v2584, 4
        %v2586 = vrot.slane %v955, 5
        %v2587 = vsel %vm2547, %v2585, %v2586
        %v2588 = vrot.slane %v956, 5
        %v2589 = vrot.slane %v2588, 4
        %v2590 = vrot.slane %v957, 5
        %v2591 = vsel %vm2547, %v2589, %v2590
        %v2592 = vrot.slane %v958, 5
        %v2593 = vrot.slane %v2592, 4
        %v2594 = vrot.slane %v959, 5
        %v2595 = vsel %vm2547, %v2593, %v2594
        %v2596 = vrot.slane %v960, 5
        %v2597 = vrot.slane %v2596, 4
        %v2598 = vrot.slane %v961, 5
        %v2599 = vsel %vm2547, %v2597, %v2598
        %v2600 = vrot.slane %v962, 5
        %v2601 = vrot.slane %v2600, 4
        %v2602 = vrot.slane %v963, 5
        %v2603 = vsel %vm2547, %v2601, %v2602
        %v2604 = vrot.slane %v964, 5
        %v2605 = vrot.slane %v2604, 4
        %v2606 = vrot.slane %v965, 5
        %v2607 = vsel %vm2547, %v2605, %v2606
        %v2608 = vrot.slane %v966, 5
        %v2609 = vrot.slane %v2608, 4
        %v2610 = vrot.slane %v967, 5
        %v2611 = vsel %vm2547, %v2609, %v2610
        %v2612 = vrot.slane %v972, 5
        %v2613 = vrot.slane %v2612, 4
        %v2614 = vrot.slane %v973, 5
        %v2615 = vsel %vm2547, %v2613, %v2614
        %v2616 = vrot.slane %v974, 5
        %v2617 = vrot.slane %v2616, 4
        %v2618 = vrot.slane %v975, 5
        %v2619 = vsel %vm2547, %v2617, %v2618
        %v2620 = vrot.slane %v976, 5
        %v2621 = vrot.slane %v2620, 4
        %v2622 = vrot.slane %v977, 5
        %v2623 = vsel %vm2547, %v2621, %v2622
        %v2624 = vrot.slane %v978, 5
        %v2625 = vrot.slane %v2624, 4
        %v2626 = vrot.slane %v979, 5
        %v2627 = vsel %vm2547, %v2625, %v2626
        %v2628 = vrot.slane %v980, 5
        %v2629 = vrot.slane %v2628, 4
        %v2630 = vrot.slane %v981, 5
        %v2631 = vsel %vm2547, %v2629, %v2630
        %v2632 = vrot.slane %v982, 5
        %v2633 = vrot.slane %v2632, 4
        %v2634 = vrot.slane %v983, 5
        %v2635 = vsel %vm2547, %v2633, %v2634
        %v2636 = vrot.slane %v984, 5
        %v2637 = vrot.slane %v2636, 4
        %v2638 = vrot.slane %v985, 5
        %v2639 = vsel %vm2547, %v2637, %v2638
        %v2640 = vrot.slane %v986, 5
        %v2641 = vrot.slane %v2640, 4
        %v2642 = vrot.slane %v987, 5
        %v2643 = vsel %vm2547, %v2641, %v2642
        %v2644 = vrot.slane %v992, 5
        %v2645 = vrot.slane %v2644, 4
        %v2646 = vrot.slane %v993, 5
        %v2647 = vsel %vm2547, %v2645, %v2646
        %v2648 = vrot.slane %v994, 5
        %v2649 = vrot.slane %v2648, 4
        %v2650 = vrot.slane %v995, 5
        %v2651 = vsel %vm2547, %v2649, %v2650
        %v2652 = vrot.slane %v996, 5
        %v2653 = vrot.slane %v2652, 4
        %v2654 = vrot.slane %v997, 5
        %v2655 = vsel %vm2547, %v2653, %v2654
        %v2656 = vrot.slane %v998, 5
        %v2657 = vrot.slane %v2656, 4
        %v2658 = vrot.slane %v999, 5
        %v2659 = vsel %vm2547, %v2657, %v2658
        %v2660 = vrot.slane %v1000, 5
        %v2661 = vrot.slane %v2660, 4
        %v2662 = vrot.slane %v1001, 5
        %v2663 = vsel %vm2547, %v2661, %v2662
        %v2664 = vrot.slane %v1002, 5
        %v2665 = vrot.slane %v2664, 4
        %v2666 = vrot.slane %v1003, 5
        %v2667 = vsel %vm2547, %v2665, %v2666
        %v2668 = vrot.slane %v1004, 5
        %v2669 = vrot.slane %v2668, 4
        %v2670 = vrot.slane %v1005, 5
        %v2671 = vsel %vm2547, %v2669, %v2670
        %v2672 = vrot.slane %v1006, 5
        %v2673 = vrot.slane %v2672, 4
        %v2674 = vrot.slane %v1007, 5
        %v2675 = vsel %vm2547, %v2673, %v2674
        %v2676 = vrot.slane %v1012, 5
        %v2677 = vrot.slane %v2676, 4
        %v2678 = vrot.slane %v1013, 5
        %v2679 = vsel %vm2547, %v2677, %v2678
        %v2680 = vrot.slane %v1014, 5
        %v2681 = vrot.slane %v2680, 4
        %v2682 = vrot.slane %v1015, 5
        %v2683 = vsel %vm2547, %v2681, %v2682
        %v2684 = vrot.slane %v1016, 5
        %v2685 = vrot.slane %v2684, 4
        %v2686 = vrot.slane %v1017, 5
        %v2687 = vsel %vm2547, %v2685, %v2686
        %v2688 = vrot.slane %v1018, 5
        %v2689 = vrot.slane %v2688, 4
        %v2690 = vrot.slane %v1019, 5
        %v2691 = vsel %vm2547, %v2689, %v2690
        %v2692 = vrot.slane %v1020, 5
        %v2693 = vrot.slane %v2692, 4
        %v2694 = vrot.slane %v1021, 5
        %v2695 = vsel %vm2547, %v2693, %v2694
        %v2696 = vrot.slane %v1022, 5
        %v2697 = vrot.slane %v2696, 4
        %v2698 = vrot.slane %v1023, 5
        %v2699 = vsel %vm2547, %v2697, %v2698
        %v2700 = vrot.slane %v1024, 5
        %v2701 = vrot.slane %v2700, 4
        %v2702 = vrot.slane %v1025, 5
        %v2703 = vsel %vm2547, %v2701, %v2702
        %v2704 = vrot.slane %v1026, 5
        %v2705 = vrot.slane %v2704, 4
        %v2706 = vrot.slane %v1027, 5
        %v2707 = vsel %vm2547, %v2705, %v2706
        %v2708 = vrot.slane %v1032, 5
        %v2709 = vrot.slane %v2708, 4
        %v2710 = vrot.slane %v1033, 5
        %v2711 = vsel %vm2547, %v2709, %v2710
        %v2712 = vrot.slane %v1034, 5
        %v2713 = vrot.slane %v2712, 4
        %v2714 = vrot.slane %v1035, 5
        %v2715 = vsel %vm2547, %v2713, %v2714
        %v2716 = vrot.slane %v1036, 5
        %v2717 = vrot.slane %v2716, 4
        %v2718 = vrot.slane %v1037, 5
        %v2719 = vsel %vm2547, %v2717, %v2718
        %v2720 = vrot.slane %v1038, 5
        %v2721 = vrot.slane %v2720, 4
        %v2722 = vrot.slane %v1039, 5
        %v2723 = vsel %vm2547, %v2721, %v2722
        %v2724 = vrot.slane %v1040, 5
        %v2725 = vrot.slane %v2724, 4
        %v2726 = vrot.slane %v1041, 5
        %v2727 = vsel %vm2547, %v2725, %v2726
        %v2728 = vrot.slane %v1042, 5
        %v2729 = vrot.slane %v2728, 4
        %v2730 = vrot.slane %v1043, 5
        %v2731 = vsel %vm2547, %v2729, %v2730
        %v2732 = vrot.slane %v1044, 5
        %v2733 = vrot.slane %v2732, 4
        %v2734 = vrot.slane %v1045, 5
        %v2735 = vsel %vm2547, %v2733, %v2734
        %v2736 = vrot.slane %v1046, 5
        %v2737 = vrot.slane %v2736, 4
        %v2738 = vrot.slane %v1047, 5
        %v2739 = vsel %vm2547, %v2737, %v2738
        %v2740 = vrot.slane %v1052, 5
        %v2741 = vrot.slane %v2740, 4
        %v2742 = vrot.slane %v1053, 5
        %v2743 = vsel %vm2547, %v2741, %v2742
        %v2744 = vrot.slane %v1054, 5
        %v2745 = vrot.slane %v2744, 4
        %v2746 = vrot.slane %v1055, 5
        %v2747 = vsel %vm2547, %v2745, %v2746
        %v2748 = vrot.slane %v1056, 5
        %v2749 = vrot.slane %v2748, 4
        %v2750 = vrot.slane %v1057, 5
        %v2751 = vsel %vm2547, %v2749, %v2750
        %v2752 = vrot.slane %v1058, 5
        %v2753 = vrot.slane %v2752, 4
        %v2754 = vrot.slane %v1059, 5
        %v2755 = vsel %vm2547, %v2753, %v2754
        %v2756 = vrot.slane %v1060, 5
        %v2757 = vrot.slane %v2756, 4
        %v2758 = vrot.slane %v1061, 5
        %v2759 = vsel %vm2547, %v2757, %v2758
        %v2760 = vrot.slane %v1062, 5
        %v2761 = vrot.slane %v2760, 4
        %v2762 = vrot.slane %v1063, 5
        %v2763 = vsel %vm2547, %v2761, %v2762
        %v2764 = vrot.slane %v1064, 5
        %v2765 = vrot.slane %v2764, 4
        %v2766 = vrot.slane %v1065, 5
        %v2767 = vsel %vm2547, %v2765, %v2766
        %v2768 = vrot.slane %v1066, 5
        %v2769 = vrot.slane %v2768, 4
        %v2770 = vrot.slane %v1067, 5
        %v2771 = vsel %vm2547, %v2769, %v2770
        %v2772 = vrot.slane %v1072, 5
        %v2773 = vrot.slane %v2772, 4
        %v2774 = vrot.slane %v1073, 5
        %v2775 = vsel %vm2547, %v2773, %v2774
        %v2776 = vrot.slane %v1074, 5
        %v2777 = vrot.slane %v2776, 4
        %v2778 = vrot.slane %v1075, 5
        %v2779 = vsel %vm2547, %v2777, %v2778
        %v2780 = vrot.slane %v1076, 5
        %v2781 = vrot.slane %v2780, 4
        %v2782 = vrot.slane %v1077, 5
        %v2783 = vsel %vm2547, %v2781, %v2782
        %v2784 = vrot.slane %v1078, 5
        %v2785 = vrot.slane %v2784, 4
        %v2786 = vrot.slane %v1079, 5
        %v2787 = vsel %vm2547, %v2785, %v2786
        %v2788 = vrot.slane %v1080, 5
        %v2789 = vrot.slane %v2788, 4
        %v2790 = vrot.slane %v1081, 5
        %v2791 = vsel %vm2547, %v2789, %v2790
        %v2792 = vrot.slane %v1082, 5
        %v2793 = vrot.slane %v2792, 4
        %v2794 = vrot.slane %v1083, 5
        %v2795 = vsel %vm2547, %v2793, %v2794
        %v2796 = vrot.slane %v1084, 5
        %v2797 = vrot.slane %v2796, 4
        %v2798 = vrot.slane %v1085, 5
        %v2799 = vsel %vm2547, %v2797, %v2798
        %v2800 = vrot.slane %v1086, 5
        %v2801 = vrot.slane %v2800, 4
        %v2802 = vrot.slane %v1087, 5
        %v2803 = vsel %vm2547, %v2801, %v2802
        %v2804 = vunpack.c.l.b16 %v2551
        %v2805 = vunpack.c.l.b16 %v2555
        %v2806 = vunpack.c.l.b16 %v2559
        %v2807 = vunpack.c.l.b16 %v2563
        %v2808 = vunpack.c.l.b16 %v2567
        %v2809 = vunpack.c.l.b16 %v2571
        %v2810 = vunpack.c.l.b16 %v2575
        %v2811 = vunpack.c.l.b16 %v2579
        %v2812 = vunpack.c.l.b16 %v2583
        %v2813 = vunpack.c.l.b16 %v2587
        %v2814 = vunpack.c.l.b16 %v2591
        %v2815 = vunpack.c.l.b16 %v2595
        %v2816 = vunpack.c.l.b16 %v2599
        %v2817 = vunpack.c.l.b16 %v2603
        %v2818 = vunpack.c.l.b16 %v2607
        %v2819 = vunpack.c.l.b16 %v2611
        %v2820 = vunpack.c.l.b16 %v2615
        %v2821 = vunpack.c.l.b16 %v2619
        %v2822 = vunpack.c.l.b16 %v2623
        %v2823 = vunpack.c.l.b16 %v2627
        %v2824 = vunpack.c.l.b16 %v2631
        %v2825 = vunpack.c.l.b16 %v2635
        %v2826 = vunpack.c.l.b16 %v2639
        %v2827 = vunpack.c.l.b16 %v2643
        %v2828 = vunpack.c.l.b16 %v2647
        %v2829 = vunpack.c.l.b16 %v2651
        %v2830 = vunpack.c.l.b16 %v2655
        %v2831 = vunpack.c.l.b16 %v2659
        %v2832 = vunpack.c.l.b16 %v2663
        %v2833 = vunpack.c.l.b16 %v2667
        %v2834 = vunpack.c.l.b16 %v2671
        %v2835 = vunpack.c.l.b16 %v2675
        %v2836 = vunpack.c.l.b16 %v2679
        %v2837 = vunpack.c.l.b16 %v2683
        %v2838 = vunpack.c.l.b16 %v2687
        %v2839 = vunpack.c.l.b16 %v2691
        %v2840 = vunpack.c.l.b16 %v2695
        %v2841 = vunpack.c.l.b16 %v2699
        %v2842 = vunpack.c.l.b16 %v2703
        %v2843 = vunpack.c.l.b16 %v2707
        %v2844 = vunpack.c.l.b16 %v2711
        %v2845 = vunpack.c.l.b16 %v2715
        %v2846 = vunpack.c.l.b16 %v2719
        %v2847 = vunpack.c.l.b16 %v2723
        %v2848 = vunpack.c.l.b16 %v2727
        %v2849 = vunpack.c.l.b16 %v2731
        %v2850 = vunpack.c.l.b16 %v2735
        %v2851 = vunpack.c.l.b16 %v2739
        %v2852 = vunpack.c.l.b16 %v2743
        %v2853 = vunpack.c.l.b16 %v2747
        %v2854 = vunpack.c.l.b16 %v2751
        %v2855 = vunpack.c.l.b16 %v2755
        %v2856 = vunpack.c.l.b16 %v2759
        %v2857 = vunpack.c.l.b16 %v2763
        %v2858 = vunpack.c.l.b16 %v2767
        %v2859 = vunpack.c.l.b16 %v2771
        %v2860 = vunpack.c.l.b16 %v2775
        %v2861 = vunpack.c.l.b16 %v2779
        %v2862 = vunpack.c.l.b16 %v2783
        %v2863 = vunpack.c.l.b16 %v2787
        %v2864 = vunpack.c.l.b16 %v2791
        %v2865 = vunpack.c.l.b16 %v2795
        %v2866 = vunpack.c.l.b16 %v2799
        %v2867 = vunpack.c.l.b16 %v2803
        %v2868 = vpack.c.b16 %v2805, %v2804
        %v2869 = vpack.c.b16 %v2807, %v2806
        %v2870 = vpack.c.b16 %v2809, %v2808
        %v2871 = vpack.c.b16 %v2811, %v2810
        %v2872 = vpack.c.b16 %v2813, %v2812
        %v2873 = vpack.c.b16 %v2815, %v2814
        %v2874 = vpack.c.b16 %v2817, %v2816
        %v2875 = vpack.c.b16 %v2819, %v2818
        %v2876 = vpack.c.b16 %v2821, %v2820
        %v2877 = vpack.c.b16 %v2823, %v2822
        %v2878 = vpack.c.b16 %v2825, %v2824
        %v2879 = vpack.c.b16 %v2827, %v2826
        %v2880 = vpack.c.b16 %v2829, %v2828
        %v2881 = vpack.c.b16 %v2831, %v2830
        %v2882 = vpack.c.b16 %v2833, %v2832
        %v2883 = vpack.c.b16 %v2835, %v2834
        %v2884 = vpack.c.b16 %v2837, %v2836
        %v2885 = vpack.c.b16 %v2839, %v2838
        %v2886 = vpack.c.b16 %v2841, %v2840
        %v2887 = vpack.c.b16 %v2843, %v2842
        %v2888 = vpack.c.b16 %v2845, %v2844
        %v2889 = vpack.c.b16 %v2847, %v2846
        %v2890 = vpack.c.b16 %v2849, %v2848
        %v2891 = vpack.c.b16 %v2851, %v2850
        %v2892 = vpack.c.b16 %v2853, %v2852
        %v2893 = vpack.c.b16 %v2855, %v2854
        %v2894 = vpack.c.b16 %v2857, %v2856
        %v2895 = vpack.c.b16 %v2859, %v2858
        %v2896 = vpack.c.b16 %v2861, %v2860
        %v2897 = vpack.c.b16 %v2863, %v2862
        %v2898 = vpack.c.b16 %v2865, %v2864
        %v2899 = vpack.c.b16 %v2867, %v2866
        %2900 = vrot.lane.b32.xlu0 %v2868, 8
        %v2901 = vpop.permute.xlu0 %2900
        %2902 = vrot.lane.b32.xlu0 %v2869, 8
        %v2903 = vpop.permute.xlu0 %2902
        %2904 = vrot.lane.b32.xlu0 %v2870, 8
        %v2905 = vpop.permute.xlu0 %2904
        %2906 = vrot.lane.b32.xlu0 %v2871, 8
        %v2907 = vpop.permute.xlu0 %2906
        %2908 = vrot.lane.b32.xlu0 %v2872, 8
        %v2909 = vpop.permute.xlu0 %2908
        %2910 = vrot.lane.b32.xlu0 %v2873, 8
        %v2911 = vpop.permute.xlu0 %2910
        %2912 = vrot.lane.b32.xlu0 %v2874, 8
        %v2913 = vpop.permute.xlu0 %2912
        %2914 = vrot.lane.b32.xlu0 %v2875, 8
        %v2915 = vpop.permute.xlu0 %2914
        %2916 = vrot.lane.b32.xlu0 %v2876, 8
        %v2917 = vpop.permute.xlu0 %2916
        %2918 = vrot.lane.b32.xlu0 %v2877, 8
        %v2919 = vpop.permute.xlu0 %2918
        %2920 = vrot.lane.b32.xlu0 %v2878, 8
        %v2921 = vpop.permute.xlu0 %2920
        %2922 = vrot.lane.b32.xlu0 %v2879, 8
        %v2923 = vpop.permute.xlu0 %2922
        %2924 = vrot.lane.b32.xlu0 %v2880, 8
        %v2925 = vpop.permute.xlu0 %2924
        %2926 = vrot.lane.b32.xlu0 %v2881, 8
        %v2927 = vpop.permute.xlu0 %2926
        %2928 = vrot.lane.b32.xlu0 %v2882, 8
        %v2929 = vpop.permute.xlu0 %2928
        %2930 = vrot.lane.b32.xlu0 %v2883, 8
        %v2931 = vpop.permute.xlu0 %2930
        %2932 = vrot.lane.b32.xlu0 %v2884, 8
        %v2933 = vpop.permute.xlu0 %2932
        %2934 = vrot.lane.b32.xlu0 %v2885, 8
        %v2935 = vpop.permute.xlu0 %2934
        %2936 = vrot.lane.b32.xlu0 %v2886, 8
        %v2937 = vpop.permute.xlu0 %2936
        %2938 = vrot.lane.b32.xlu0 %v2887, 8
        %v2939 = vpop.permute.xlu0 %2938
        %2940 = vrot.lane.b32.xlu0 %v2888, 8
        %v2941 = vpop.permute.xlu0 %2940
        %2942 = vrot.lane.b32.xlu0 %v2889, 8
        %v2943 = vpop.permute.xlu0 %2942
        %2944 = vrot.lane.b32.xlu0 %v2890, 8
        %v2945 = vpop.permute.xlu0 %2944
        %2946 = vrot.lane.b32.xlu0 %v2891, 8
        %v2947 = vpop.permute.xlu0 %2946
        %2948 = vrot.lane.b32.xlu0 %v2892, 8
        %v2949 = vpop.permute.xlu0 %2948
        %2950 = vrot.lane.b32.xlu0 %v2893, 8
        %v2951 = vpop.permute.xlu0 %2950
        %2952 = vrot.lane.b32.xlu0 %v2894, 8
        %v2953 = vpop.permute.xlu0 %2952
        %2954 = vrot.lane.b32.xlu0 %v2895, 8
        %v2955 = vpop.permute.xlu0 %2954
        %2956 = vrot.lane.b32.xlu0 %v2896, 8
        %v2957 = vpop.permute.xlu0 %2956
        %2958 = vrot.lane.b32.xlu0 %v2897, 8
        %v2959 = vpop.permute.xlu0 %2958
        %2960 = vrot.lane.b32.xlu0 %v2898, 8
        %v2961 = vpop.permute.xlu0 %2960
        %2962 = vrot.lane.b32.xlu0 %v2899, 8
        %v2963 = vpop.permute.xlu0 %2962
        %vm2996 = vcmask 97344
        %2997 = vst.msk [vmem:[#allocation2] sm:$0xff] %vm2996, %v2901
        %2998 = vst.msk [vmem:[#allocation2 + $0x8] sm:$0xff] %vm2996, %v2903
        %2999 = vst.msk [vmem:[#allocation2 + $0x10] sm:$0xff] %vm2996, %v2905
        %3000 = vst.msk [vmem:[#allocation2 + $0x18] sm:$0xff] %vm2996, %v2907
        %3001 = vst.msk [vmem:[#allocation2 + $0x20] sm:$0xff] %vm2996, %v2909
        %3002 = vst.msk [vmem:[#allocation2 + $0x28] sm:$0xff] %vm2996, %v2911
        %3003 = vst.msk [vmem:[#allocation2 + $0x30] sm:$0xff] %vm2996, %v2913
        %3004 = vst.msk [vmem:[#allocation2 + $0x38] sm:$0xff] %vm2996, %v2915
        %3005 = vst.msk [vmem:[#allocation2 + $0x40] sm:$0xff] %vm2996, %v2917
        %3006 = vst.msk [vmem:[#allocation2 + $0x48] sm:$0xff] %vm2996, %v2919
        %3007 = vst.msk [vmem:[#allocation2 + $0x50] sm:$0xff] %vm2996, %v2921
        %3008 = vst.msk [vmem:[#allocation2 + $0x58] sm:$0xff] %vm2996, %v2923
        %3009 = vst.msk [vmem:[#allocation2 + $0x60] sm:$0xff] %vm2996, %v2925
        %3010 = vst.msk [vmem:[#allocation2 + $0x68] sm:$0xff] %vm2996, %v2927
        %3011 = vst.msk [vmem:[#allocation2 + $0x70] sm:$0xff] %vm2996, %v2929
        %3012 = vst.msk [vmem:[#allocation2 + $0x78] sm:$0xff] %vm2996, %v2931
        %3013 = vst.msk [vmem:[#allocation2 + $0x80] sm:$0xff] %vm2996, %v2933
        %3014 = vst.msk [vmem:[#allocation2 + $0x88] sm:$0xff] %vm2996, %v2935
        %3015 = vst.msk [vmem:[#allocation2 + $0x90] sm:$0xff] %vm2996, %v2937
        %3016 = vst.msk [vmem:[#allocation2 + $0x98] sm:$0xff] %vm2996, %v2939
        %3017 = vst.msk [vmem:[#allocation2 + $0xa0] sm:$0xff] %vm2996, %v2941
        %3018 = vst.msk [vmem:[#allocation2 + $0xa8] sm:$0xff] %vm2996, %v2943
        %3019 = vst.msk [vmem:[#allocation2 + $0xb0] sm:$0xff] %vm2996, %v2945
        %3020 = vst.msk [vmem:[#allocation2 + $0xb8] sm:$0xff] %vm2996, %v2947
        %3021 = vst.msk [vmem:[#allocation2 + $0xc0] sm:$0xff] %vm2996, %v2949
        %3022 = vst.msk [vmem:[#allocation2 + $0xc8] sm:$0xff] %vm2996, %v2951
        %3023 = vst.msk [vmem:[#allocation2 + $0xd0] sm:$0xff] %vm2996, %v2953
        %3024 = vst.msk [vmem:[#allocation2 + $0xd8] sm:$0xff] %vm2996, %v2955
        %3025 = vst.msk [vmem:[#allocation2 + $0xe0] sm:$0xff] %vm2996, %v2957
        %3026 = vst.msk [vmem:[#allocation2 + $0xe8] sm:$0xff] %vm2996, %v2959
        %3027 = vst.msk [vmem:[#allocation2 + $0xf0] sm:$0xff] %vm2996, %v2961
        %3028 = vst.msk [vmem:[#allocation2 + $0xf8] sm:$0xff] %vm2996, %v2963
        %v3037 = vunpack.c.l.b16 %v948
        %v3038 = vunpack.c.l.b16 %v968
        %v3039 = vunpack.c.l.b16 %v988
        %v3040 = vunpack.c.l.b16 %v1008
        %v3041 = vunpack.c.l.b16 %v1028
        %v3042 = vunpack.c.l.b16 %v1048
        %v3043 = vunpack.c.l.b16 %v1068
        %v3044 = vunpack.c.l.b16 %v1088
        %v3045 = vpack.c.b16 %v1198, %v1197
        %v3046 = vpack.c.b16 %v1200, %v1199
        %v3047 = vpack.c.b16 %v1202, %v1201
        %v3048 = vpack.c.b16 %v3037, %v1203
        %v3049 = vpack.c.b16 %v1206, %v1205
        %v3050 = vpack.c.b16 %v1208, %v1207
        %v3051 = vpack.c.b16 %v1210, %v1209
        %v3052 = vpack.c.b16 %v3038, %v1211
        %v3053 = vpack.c.b16 %v1214, %v1213
        %v3054 = vpack.c.b16 %v1216, %v1215
        %v3055 = vpack.c.b16 %v1218, %v1217
        %v3056 = vpack.c.b16 %v3039, %v1219
        %v3057 = vpack.c.b16 %v1222, %v1221
        %v3058 = vpack.c.b16 %v1224, %v1223
        %v3059 = vpack.c.b16 %v1226, %v1225
        %v3060 = vpack.c.b16 %v3040, %v1227
        %v3061 = vpack.c.b16 %v1230, %v1229
        %v3062 = vpack.c.b16 %v1232, %v1231
        %v3063 = vpack.c.b16 %v1234, %v1233
        %v3064 = vpack.c.b16 %v3041, %v1235
        %v3065 = vpack.c.b16 %v1238, %v1237
        %v3066 = vpack.c.b16 %v1240, %v1239
        %v3067 = vpack.c.b16 %v1242, %v1241
        %v3068 = vpack.c.b16 %v3042, %v1243
        %v3069 = vpack.c.b16 %v1246, %v1245
        %v3070 = vpack.c.b16 %v1248, %v1247
        %v3071 = vpack.c.b16 %v1250, %v1249
        %v3072 = vpack.c.b16 %v3043, %v1251
        %v3073 = vpack.c.b16 %v1254, %v1253
        %v3074 = vpack.c.b16 %v1256, %v1255
        %v3075 = vpack.c.b16 %v1258, %v1257
        %v3076 = vpack.c.b16 %v3044, %v1259
        %3077 = vrot.lane.b32.xlu0 %v3045, 12
        %v3078 = vpop.permute.xlu0 %3077
        %3079 = vrot.lane.b32.xlu0 %v3046, 12
        %v3080 = vpop.permute.xlu0 %3079
        %3081 = vrot.lane.b32.xlu0 %v3047, 12
        %v3082 = vpop.permute.xlu0 %3081
        %3083 = vrot.lane.b32.xlu0 %v3048, 12
        %v3084 = vpop.permute.xlu0 %3083
        %3085 = vrot.lane.b32.xlu0 %v3049, 12
        %v3086 = vpop.permute.xlu0 %3085
        %3087 = vrot.lane.b32.xlu0 %v3050, 12
        %v3088 = vpop.permute.xlu0 %3087
        %3089 = vrot.lane.b32.xlu0 %v3051, 12
        %v3090 = vpop.permute.xlu0 %3089
        %3091 = vrot.lane.b32.xlu0 %v3052, 12
        %v3092 = vpop.permute.xlu0 %3091
        %3093 = vrot.lane.b32.xlu0 %v3053, 12
        %v3094 = vpop.permute.xlu0 %3093
        %3095 = vrot.lane.b32.xlu0 %v3054, 12
        %v3096 = vpop.permute.xlu0 %3095
        %3097 = vrot.lane.b32.xlu0 %v3055, 12
        %v3098 = vpop.permute.xlu0 %3097
        %3099 = vrot.lane.b32.xlu0 %v3056, 12
        %v3100 = vpop.permute.xlu0 %3099
        %3101 = vrot.lane.b32.xlu0 %v3057, 12
        %v3102 = vpop.permute.xlu0 %3101
        %3103 = vrot.lane.b32.xlu0 %v3058, 12
        %v3104 = vpop.permute.xlu0 %3103
        %3105 = vrot.lane.b32.xlu0 %v3059, 12
        %v3106 = vpop.permute.xlu0 %3105
        %3107 = vrot.lane.b32.xlu0 %v3060, 12
        %v3108 = vpop.permute.xlu0 %3107
        %3109 = vrot.lane.b32.xlu0 %v3061, 12
        %v3110 = vpop.permute.xlu0 %3109
        %3111 = vrot.lane.b32.xlu0 %v3062, 12
        %v3112 = vpop.permute.xlu0 %3111
        %3113 = vrot.lane.b32.xlu0 %v3063, 12
        %v3114 = vpop.permute.xlu0 %3113
        %3115 = vrot.lane.b32.xlu0 %v3064, 12
        %v3116 = vpop.permute.xlu0 %3115
        %3117 = vrot.lane.b32.xlu0 %v3065, 12
        %v3118 = vpop.permute.xlu0 %3117
        %3119 = vrot.lane.b32.xlu0 %v3066, 12
        %v3120 = vpop.permute.xlu0 %3119
        %3121 = vrot.lane.b32.xlu0 %v3067, 12
        %v3122 = vpop.permute.xlu0 %3121
        %3123 = vrot.lane.b32.xlu0 %v3068, 12
        %v3124 = vpop.permute.xlu0 %3123
        %3125 = vrot.lane.b32.xlu0 %v3069, 12
        %v3126 = vpop.permute.xlu0 %3125
        %3127 = vrot.lane.b32.xlu0 %v3070, 12
        %v3128 = vpop.permute.xlu0 %3127
        %3129 = vrot.lane.b32.xlu0 %v3071, 12
        %v3130 = vpop.permute.xlu0 %3129
        %3131 = vrot.lane.b32.xlu0 %v3072, 12
        %v3132 = vpop.permute.xlu0 %3131
        %3133 = vrot.lane.b32.xlu0 %v3073, 12
        %v3134 = vpop.permute.xlu0 %3133
        %3135 = vrot.lane.b32.xlu0 %v3074, 12
        %v3136 = vpop.permute.xlu0 %3135
        %3137 = vrot.lane.b32.xlu0 %v3075, 12
        %v3138 = vpop.permute.xlu0 %3137
        %3139 = vrot.lane.b32.xlu0 %v3076, 12
        %v3140 = vpop.permute.xlu0 %3139
        %vm3173 = vcmask 130144
        %3174 = vst.msk [vmem:[#allocation2] sm:$0xff] %vm3173, %v3078
        %3175 = vst.msk [vmem:[#allocation2 + $0x8] sm:$0xff] %vm3173, %v3080
        %3176 = vst.msk [vmem:[#allocation2 + $0x10] sm:$0xff] %vm3173, %v3082
        %3177 = vst.msk [vmem:[#allocation2 + $0x18] sm:$0xff] %vm3173, %v3084
        %3178 = vst.msk [vmem:[#allocation2 + $0x20] sm:$0xff] %vm3173, %v3086
        %3179 = vst.msk [vmem:[#allocation2 + $0x28] sm:$0xff] %vm3173, %v3088
        %3180 = vst.msk [vmem:[#allocation2 + $0x30] sm:$0xff] %vm3173, %v3090
        %3181 = vst.msk [vmem:[#allocation2 + $0x38] sm:$0xff] %vm3173, %v3092
        %3182 = vst.msk [vmem:[#allocation2 + $0x40] sm:$0xff] %vm3173, %v3094
        %3183 = vst.msk [vmem:[#allocation2 + $0x48] sm:$0xff] %vm3173, %v3096
        %3184 = vst.msk [vmem:[#allocation2 + $0x50] sm:$0xff] %vm3173, %v3098
        %3185 = vst.msk [vmem:[#allocation2 + $0x58] sm:$0xff] %vm3173, %v3100
        %3186 = vst.msk [vmem:[#allocation2 + $0x60] sm:$0xff] %vm3173, %v3102
        %3187 = vst.msk [vmem:[#allocation2 + $0x68] sm:$0xff] %vm3173, %v3104
        %3188 = vst.msk [vmem:[#allocation2 + $0x70] sm:$0xff] %vm3173, %v3106
        %3189 = vst.msk [vmem:[#allocation2 + $0x78] sm:$0xff] %vm3173, %v3108
        %3190 = vst.msk [vmem:[#allocation2 + $0x80] sm:$0xff] %vm3173, %v3110
        %3191 = vst.msk [vmem:[#allocation2 + $0x88] sm:$0xff] %vm3173, %v3112
        %3192 = vst.msk [vmem:[#allocation2 + $0x90] sm:$0xff] %vm3173, %v3114
        %3193 = vst.msk [vmem:[#allocation2 + $0x98] sm:$0xff] %vm3173, %v3116
        %3194 = vst.msk [vmem:[#allocation2 + $0xa0] sm:$0xff] %vm3173, %v3118
        %3195 = vst.msk [vmem:[#allocation2 + $0xa8] sm:$0xff] %vm3173, %v3120
        %3196 = vst.msk [vmem:[#allocation2 + $0xb0] sm:$0xff] %vm3173, %v3122
        %3197 = vst.msk [vmem:[#allocation2 + $0xb8] sm:$0xff] %vm3173, %v3124
        %3198 = vst.msk [vmem:[#allocation2 + $0xc0] sm:$0xff] %vm3173, %v3126
        %3199 = vst.msk [vmem:[#allocation2 + $0xc8] sm:$0xff] %vm3173, %v3128
        %3200 = vst.msk [vmem:[#allocation2 + $0xd0] sm:$0xff] %vm3173, %v3130
        %3201 = vst.msk [vmem:[#allocation2 + $0xd8] sm:$0xff] %vm3173, %v3132
        %3202 = vst.msk [vmem:[#allocation2 + $0xe0] sm:$0xff] %vm3173, %v3134
        %3203 = vst.msk [vmem:[#allocation2 + $0xe8] sm:$0xff] %vm3173, %v3136
        %3204 = vst.msk [vmem:[#allocation2 + $0xf0] sm:$0xff] %vm3173, %v3138
        %3205 = vst.msk [vmem:[#allocation2 + $0xf8] sm:$0xff] %vm3173, %v3140
        %v3207 = vshrl.u32 %v948, 16
        %v3209 = vrot.slane %v3207, 4
        %v3210 = vshll.u32 %v948, 16
        %v3212 = vrot.slane %v3210, 5
        %v3213 = vor.u32 %v3209, %v3212
        %v3214 = vrot.slane %v3213, 4
        %v3216 = vshll.u32 %v949, 16
        %v3218 = vrot.slane %v3216, 5
        %v3219 = vsel %vm1359, %v3214, %v3218
        %v3221 = vshrl.u32 %v968, 16
        %v3223 = vrot.slane %v3221, 4
        %v3224 = vshll.u32 %v968, 16
        %v3226 = vrot.slane %v3224, 5
        %v3227 = vor.u32 %v3223, %v3226
        %v3228 = vrot.slane %v3227, 4
        %v3230 = vshll.u32 %v969, 16
        %v3232 = vrot.slane %v3230, 5
        %v3233 = vsel %vm1359, %v3228, %v3232
        %v3235 = vshrl.u32 %v988, 16
        %v3237 = vrot.slane %v3235, 4
        %v3238 = vshll.u32 %v988, 16
        %v3240 = vrot.slane %v3238, 5
        %v3241 = vor.u32 %v3237, %v3240
        %v3242 = vrot.slane %v3241, 4
        %v3244 = vshll.u32 %v989, 16
        %v3246 = vrot.slane %v3244, 5
        %v3247 = vsel %vm1359, %v3242, %v3246
        %v3249 = vshrl.u32 %v1008, 16
        %v3251 = vrot.slane %v3249, 4
        %v3252 = vshll.u32 %v1008, 16
        %v3254 = vrot.slane %v3252, 5
        %v3255 = vor.u32 %v3251, %v3254
        %v3256 = vrot.slane %v3255, 4
        %v3258 = vshll.u32 %v1009, 16
        %v3260 = vrot.slane %v3258, 5
        %v3261 = vsel %vm1359, %v3256, %v3260
        %v3263 = vshrl.u32 %v1028, 16
        %v3265 = vrot.slane %v3263, 4
        %v3266 = vshll.u32 %v1028, 16
        %v3268 = vrot.slane %v3266, 5
        %v3269 = vor.u32 %v3265, %v3268
        %v3270 = vrot.slane %v3269, 4
        %v3272 = vshll.u32 %v1029, 16
        %v3274 = vrot.slane %v3272, 5
        %v3275 = vsel %vm1359, %v3270, %v3274
        %v3277 = vshrl.u32 %v1048, 16
        %v3279 = vrot.slane %v3277, 4
        %v3280 = vshll.u32 %v1048, 16
        %v3282 = vrot.slane %v3280, 5
        %v3283 = vor.u32 %v3279, %v3282
        %v3284 = vrot.slane %v3283, 4
        %v3286 = vshll.u32 %v1049, 16
        %v3288 = vrot.slane %v3286, 5
        %v3289 = vsel %vm1359, %v3284, %v3288
        %v3291 = vshrl.u32 %v1068, 16
        %v3293 = vrot.slane %v3291, 4
        %v3294 = vshll.u32 %v1068, 16
        %v3296 = vrot.slane %v3294, 5
        %v3297 = vor.u32 %v3293, %v3296
        %v3298 = vrot.slane %v3297, 4
        %v3300 = vshll.u32 %v1069, 16
        %v3302 = vrot.slane %v3300, 5
        %v3303 = vsel %vm1359, %v3298, %v3302
        %v3305 = vshrl.u32 %v1088, 16
        %v3307 = vrot.slane %v3305, 4
        %v3308 = vshll.u32 %v1088, 16
        %v3310 = vrot.slane %v3308, 5
        %v3311 = vor.u32 %v3307, %v3310
        %v3312 = vrot.slane %v3311, 4
        %v3314 = vshll.u32 %v1089, 16
        %v3316 = vrot.slane %v3314, 5
        %v3317 = vsel %vm1359, %v3312, %v3316
        %v3318 = vunpack.c.l.b16 %v3219
        %v3319 = vunpack.c.l.b16 %v3233
        %v3320 = vunpack.c.l.b16 %v3247
        %v3321 = vunpack.c.l.b16 %v3261
        %v3322 = vunpack.c.l.b16 %v3275
        %v3323 = vunpack.c.l.b16 %v3289
        %v3324 = vunpack.c.l.b16 %v3303
        %v3325 = vunpack.c.l.b16 %v3317
        %v3326 = vpack.c.b16 %v2258, %v2257
        %v3327 = vpack.c.b16 %v2260, %v2259
        %v3328 = vpack.c.b16 %v2262, %v2261
        %v3329 = vpack.c.b16 %v3318, %v2263
        %v3330 = vpack.c.b16 %v2266, %v2265
        %v3331 = vpack.c.b16 %v2268, %v2267
        %v3332 = vpack.c.b16 %v2270, %v2269
        %v3333 = vpack.c.b16 %v3319, %v2271
        %v3334 = vpack.c.b16 %v2274, %v2273
        %v3335 = vpack.c.b16 %v2276, %v2275
        %v3336 = vpack.c.b16 %v2278, %v2277
        %v3337 = vpack.c.b16 %v3320, %v2279
        %v3338 = vpack.c.b16 %v2282, %v2281
        %v3339 = vpack.c.b16 %v2284, %v2283
        %v3340 = vpack.c.b16 %v2286, %v2285
        %v3341 = vpack.c.b16 %v3321, %v2287
        %v3342 = vpack.c.b16 %v2290, %v2289
        %v3343 = vpack.c.b16 %v2292, %v2291
        %v3344 = vpack.c.b16 %v2294, %v2293
        %v3345 = vpack.c.b16 %v3322, %v2295
        %v3346 = vpack.c.b16 %v2298, %v2297
        %v3347 = vpack.c.b16 %v2300, %v2299
        %v3348 = vpack.c.b16 %v2302, %v2301
        %v3349 = vpack.c.b16 %v3323, %v2303
        %v3350 = vpack.c.b16 %v2306, %v2305
        %v3351 = vpack.c.b16 %v2308, %v2307
        %v3352 = vpack.c.b16 %v2310, %v2309
        %v3353 = vpack.c.b16 %v3324, %v2311
        %v3354 = vpack.c.b16 %v2314, %v2313
        %v3355 = vpack.c.b16 %v2316, %v2315
        %v3356 = vpack.c.b16 %v2318, %v2317
        %v3357 = vpack.c.b16 %v3325, %v2319
        %3358 = vrot.lane.b32.xlu0 %v3326, 16
        %v3359 = vpop.permute.xlu0 %3358
        %3360 = vrot.lane.b32.xlu0 %v3327, 16
        %v3361 = vpop.permute.xlu0 %3360
        %3362 = vrot.lane.b32.xlu0 %v3328, 16
        %v3363 = vpop.permute.xlu0 %3362
        %3364 = vrot.lane.b32.xlu0 %v3329, 16
        %v3365 = vpop.permute.xlu0 %3364
        %3366 = vrot.lane.b32.xlu0 %v3330, 16
        %v3367 = vpop.permute.xlu0 %3366
        %3368 = vrot.lane.b32.xlu0 %v3331, 16
        %v3369 = vpop.permute.xlu0 %3368
        %3370 = vrot.lane.b32.xlu0 %v3332, 16
        %v3371 = vpop.permute.xlu0 %3370
        %3372 = vrot.lane.b32.xlu0 %v3333, 16
        %v3373 = vpop.permute.xlu0 %3372
        %3374 = vrot.lane.b32.xlu0 %v3334, 16
        %v3375 = vpop.permute.xlu0 %3374
        %3376 = vrot.lane.b32.xlu0 %v3335, 16
        %v3377 = vpop.permute.xlu0 %3376
        %3378 = vrot.lane.b32.xlu0 %v3336, 16
        %v3379 = vpop.permute.xlu0 %3378
        %3380 = vrot.lane.b32.xlu0 %v3337, 16
        %v3381 = vpop.permute.xlu0 %3380
        %3382 = vrot.lane.b32.xlu0 %v3338, 16
        %v3383 = vpop.permute.xlu0 %3382
        %3384 = vrot.lane.b32.xlu0 %v3339, 16
        %v3385 = vpop.permute.xlu0 %3384
        %3386 = vrot.lane.b32.xlu0 %v3340, 16
        %v3387 = vpop.permute.xlu0 %3386
        %3388 = vrot.lane.b32.xlu0 %v3341, 16
        %v3389 = vpop.permute.xlu0 %3388
        %3390 = vrot.lane.b32.xlu0 %v3342, 16
        %v3391 = vpop.permute.xlu0 %3390
        %3392 = vrot.lane.b32.xlu0 %v3343, 16
        %v3393 = vpop.permute.xlu0 %3392
        %3394 = vrot.lane.b32.xlu0 %v3344, 16
        %v3395 = vpop.permute.xlu0 %3394
        %3396 = vrot.lane.b32.xlu0 %v3345, 16
        %v3397 = vpop.permute.xlu0 %3396
        %3398 = vrot.lane.b32.xlu0 %v3346, 16
        %v3399 = vpop.permute.xlu0 %3398
        %3400 = vrot.lane.b32.xlu0 %v3347, 16
        %v3401 = vpop.permute.xlu0 %3400
        %3402 = vrot.lane.b32.xlu0 %v3348, 16
        %v3403 = vpop.permute.xlu0 %3402
        %3404 = vrot.lane.b32.xlu0 %v3349, 16
        %v3405 = vpop.permute.xlu0 %3404
        %3406 = vrot.lane.b32.xlu0 %v3350, 16
        %v3407 = vpop.permute.xlu0 %3406
        %3408 = vrot.lane.b32.xlu0 %v3351, 16
        %v3409 = vpop.permute.xlu0 %3408
        %3410 = vrot.lane.b32.xlu0 %v3352, 16
        %v3411 = vpop.permute.xlu0 %3410
        %3412 = vrot.lane.b32.xlu0 %v3353, 16
        %v3413 = vpop.permute.xlu0 %3412
        %3414 = vrot.lane.b32.xlu0 %v3354, 16
        %v3415 = vpop.permute.xlu0 %3414
        %3416 = vrot.lane.b32.xlu0 %v3355, 16
        %v3417 = vpop.permute.xlu0 %3416
        %3418 = vrot.lane.b32.xlu0 %v3356, 16
        %v3419 = vpop.permute.xlu0 %3418
        %3420 = vrot.lane.b32.xlu0 %v3357, 16
        %v3421 = vpop.permute.xlu0 %3420
        %vm3454 = vcmask 162944
        %3455 = vst.msk [vmem:[#allocation2] sm:$0xff] %vm3454, %v3359
        %3456 = vst.msk [vmem:[#allocation2 + $0x8] sm:$0xff] %vm3454, %v3361
        %3457 = vst.msk [vmem:[#allocation2 + $0x10] sm:$0xff] %vm3454, %v3363
        %3458 = vst.msk [vmem:[#allocation2 + $0x18] sm:$0xff] %vm3454, %v3365
        %3459 = vst.msk [vmem:[#allocation2 + $0x20] sm:$0xff] %vm3454, %v3367
        %3460 = vst.msk [vmem:[#allocation2 + $0x28] sm:$0xff] %vm3454, %v3369
        %3461 = vst.msk [vmem:[#allocation2 + $0x30] sm:$0xff] %vm3454, %v3371
        %3462 = vst.msk [vmem:[#allocation2 + $0x38] sm:$0xff] %vm3454, %v3373
        %3463 = vst.msk [vmem:[#allocation2 + $0x40] sm:$0xff] %vm3454, %v3375
        %3464 = vst.msk [vmem:[#allocation2 + $0x48] sm:$0xff] %vm3454, %v3377
        %3465 = vst.msk [vmem:[#allocation2 + $0x50] sm:$0xff] %vm3454, %v3379
        %3466 = vst.msk [vmem:[#allocation2 + $0x58] sm:$0xff] %vm3454, %v3381
        %3467 = vst.msk [vmem:[#allocation2 + $0x60] sm:$0xff] %vm3454, %v3383
        %3468 = vst.msk [vmem:[#allocation2 + $0x68] sm:$0xff] %vm3454, %v3385
        %3469 = vst.msk [vmem:[#allocation2 + $0x70] sm:$0xff] %vm3454, %v3387
        %3470 = vst.msk [vmem:[#allocation2 + $0x78] sm:$0xff] %vm3454, %v3389
        %3471 = vst.msk [vmem:[#allocation2 + $0x80] sm:$0xff] %vm3454, %v3391
        %3472 = vst.msk [vmem:[#allocation2 + $0x88] sm:$0xff] %vm3454, %v3393
        %3473 = vst.msk [vmem:[#allocation2 + $0x90] sm:$0xff] %vm3454, %v3395
        %3474 = vst.msk [vmem:[#allocation2 + $0x98] sm:$0xff] %vm3454, %v3397
        %3475 = vst.msk [vmem:[#allocation2 + $0xa0] sm:$0xff] %vm3454, %v3399
        %3476 = vst.msk [vmem:[#allocation2 + $0xa8] sm:$0xff] %vm3454, %v3401
        %3477 = vst.msk [vmem:[#allocation2 + $0xb0] sm:$0xff] %vm3454, %v3403
        %3478 = vst.msk [vmem:[#allocation2 + $0xb8] sm:$0xff] %vm3454, %v3405
        %3479 = vst.msk [vmem:[#allocation2 + $0xc0] sm:$0xff] %vm3454, %v3407
        %3480 = vst.msk [vmem:[#allocation2 + $0xc8] sm:$0xff] %vm3454, %v3409
        %3481 = vst.msk [vmem:[#allocation2 + $0xd0] sm:$0xff] %vm3454, %v3411
        %3482 = vst.msk [vmem:[#allocation2 + $0xd8] sm:$0xff] %vm3454, %v3413
        %3483 = vst.msk [vmem:[#allocation2 + $0xe0] sm:$0xff] %vm3454, %v3415
        %3484 = vst.msk [vmem:[#allocation2 + $0xe8] sm:$0xff] %vm3454, %v3417
        %3485 = vst.msk [vmem:[#allocation2 + $0xf0] sm:$0xff] %vm3454, %v3419
        %3486 = vst.msk [vmem:[#allocation2 + $0xf8] sm:$0xff] %vm3454, %v3421
        %v3495 = vrot.slane %v948, 5
        %v3496 = vrot.slane %v3495, 4
        %v3497 = vrot.slane %v949, 5
        %v3498 = vsel %vm2547, %v3496, %v3497
        %v3499 = vrot.slane %v968, 5
        %v3500 = vrot.slane %v3499, 4
        %v3501 = vrot.slane %v969, 5
        %v3502 = vsel %vm2547, %v3500, %v3501
        %v3503 = vrot.slane %v988, 5
        %v3504 = vrot.slane %v3503, 4
        %v3505 = vrot.slane %v989, 5
        %v3506 = vsel %vm2547, %v3504, %v3505
        %v3507 = vrot.slane %v1008, 5
        %v3508 = vrot.slane %v3507, 4
        %v3509 = vrot.slane %v1009, 5
        %v3510 = vsel %vm2547, %v3508, %v3509
        %v3511 = vrot.slane %v1028, 5
        %v3512 = vrot.slane %v3511, 4
        %v3513 = vrot.slane %v1029, 5
        %v3514 = vsel %vm2547, %v3512, %v3513
        %v3515 = vrot.slane %v1048, 5
        %v3516 = vrot.slane %v3515, 4
        %v3517 = vrot.slane %v1049, 5
        %v3518 = vsel %vm2547, %v3516, %v3517
        %v3519 = vrot.slane %v1068, 5
        %v3520 = vrot.slane %v3519, 4
        %v3521 = vrot.slane %v1069, 5
        %v3522 = vsel %vm2547, %v3520, %v3521
        %v3523 = vrot.slane %v1088, 5
        %v3524 = vrot.slane %v3523, 4
        %v3525 = vrot.slane %v1089, 5
        %v3526 = vsel %vm2547, %v3524, %v3525
        %v3527 = vunpack.c.l.b16 %v3498
        %v3528 = vunpack.c.l.b16 %v3502
        %v3529 = vunpack.c.l.b16 %v3506
        %v3530 = vunpack.c.l.b16 %v3510
        %v3531 = vunpack.c.l.b16 %v3514
        %v3532 = vunpack.c.l.b16 %v3518
        %v3533 = vunpack.c.l.b16 %v3522
        %v3534 = vunpack.c.l.b16 %v3526
        %v3535 = vpack.c.b16 %v2806, %v2805
        %v3536 = vpack.c.b16 %v2808, %v2807
        %v3537 = vpack.c.b16 %v2810, %v2809
        %v3538 = vpack.c.b16 %v3527, %v2811
        %v3539 = vpack.c.b16 %v2814, %v2813
        %v3540 = vpack.c.b16 %v2816, %v2815
        %v3541 = vpack.c.b16 %v2818, %v2817
        %v3542 = vpack.c.b16 %v3528, %v2819
        %v3543 = vpack.c.b16 %v2822, %v2821
        %v3544 = vpack.c.b16 %v2824, %v2823
        %v3545 = vpack.c.b16 %v2826, %v2825
        %v3546 = vpack.c.b16 %v3529, %v2827
        %v3547 = vpack.c.b16 %v2830, %v2829
        %v3548 = vpack.c.b16 %v2832, %v2831
        %v3549 = vpack.c.b16 %v2834, %v2833
        %v3550 = vpack.c.b16 %v3530, %v2835
        %v3551 = vpack.c.b16 %v2838, %v2837
        %v3552 = vpack.c.b16 %v2840, %v2839
        %v3553 = vpack.c.b16 %v2842, %v2841
        %v3554 = vpack.c.b16 %v3531, %v2843
        %v3555 = vpack.c.b16 %v2846, %v2845
        %v3556 = vpack.c.b16 %v2848, %v2847
        %v3557 = vpack.c.b16 %v2850, %v2849
        %v3558 = vpack.c.b16 %v3532, %v2851
        %v3559 = vpack.c.b16 %v2854, %v2853
        %v3560 = vpack.c.b16 %v2856, %v2855
        %v3561 = vpack.c.b16 %v2858, %v2857
        %v3562 = vpack.c.b16 %v3533, %v2859
        %v3563 = vpack.c.b16 %v2862, %v2861
        %v3564 = vpack.c.b16 %v2864, %v2863
        %v3565 = vpack.c.b16 %v2866, %v2865
        %v3566 = vpack.c.b16 %v3534, %v2867
        %3567 = vrot.lane.b32.xlu0 %v3535, 20
        %v3568 = vpop.permute.xlu0 %3567
        %3569 = vrot.lane.b32.xlu0 %v3536, 20
        %v3570 = vpop.permute.xlu0 %3569
        %3571 = vrot.lane.b32.xlu0 %v3537, 20
        %v3572 = vpop.permute.xlu0 %3571
        %3573 = vrot.lane.b32.xlu0 %v3538, 20
        %v3574 = vpop.permute.xlu0 %3573
        %3575 = vrot.lane.b32.xlu0 %v3539, 20
        %v3576 = vpop.permute.xlu0 %3575
        %3577 = vrot.lane.b32.xlu0 %v3540, 20
        %v3578 = vpop.permute.xlu0 %3577
        %3579 = vrot.lane.b32.xlu0 %v3541, 20
        %v3580 = vpop.permute.xlu0 %3579
        %3581 = vrot.lane.b32.xlu0 %v3542, 20
        %v3582 = vpop.permute.xlu0 %3581
        %3583 = vrot.lane.b32.xlu0 %v3543, 20
        %v3584 = vpop.permute.xlu0 %3583
        %3585 = vrot.lane.b32.xlu0 %v3544, 20
        %v3586 = vpop.permute.xlu0 %3585
        %3587 = vrot.lane.b32.xlu0 %v3545, 20
        %v3588 = vpop.permute.xlu0 %3587
        %3589 = vrot.lane.b32.xlu0 %v3546, 20
        %v3590 = vpop.permute.xlu0 %3589
        %3591 = vrot.lane.b32.xlu0 %v3547, 20
        %v3592 = vpop.permute.xlu0 %3591
        %3593 = vrot.lane.b32.xlu0 %v3548, 20
        %v3594 = vpop.permute.xlu0 %3593
        %3595 = vrot.lane.b32.xlu0 %v3549, 20
        %v3596 = vpop.permute.xlu0 %3595
        %3597 = vrot.lane.b32.xlu0 %v3550, 20
        %v3598 = vpop.permute.xlu0 %3597
        %3599 = vrot.lane.b32.xlu0 %v3551, 20
        %v3600 = vpop.permute.xlu0 %3599
        %3601 = vrot.lane.b32.xlu0 %v3552, 20
        %v3602 = vpop.permute.xlu0 %3601
        %3603 = vrot.lane.b32.xlu0 %v3553, 20
        %v3604 = vpop.permute.xlu0 %3603
        %3605 = vrot.lane.b32.xlu0 %v3554, 20
        %v3606 = vpop.permute.xlu0 %3605
        %3607 = vrot.lane.b32.xlu0 %v3555, 20
        %v3608 = vpop.permute.xlu0 %3607
        %3609 = vrot.lane.b32.xlu0 %v3556, 20
        %v3610 = vpop.permute.xlu0 %3609
        %3611 = vrot.lane.b32.xlu0 %v3557, 20
        %v3612 = vpop.permute.xlu0 %3611
        %3613 = vrot.lane.b32.xlu0 %v3558, 20
        %v3614 = vpop.permute.xlu0 %3613
        %3615 = vrot.lane.b32.xlu0 %v3559, 20
        %v3616 = vpop.permute.xlu0 %3615
        %3617 = vrot.lane.b32.xlu0 %v3560, 20
        %v3618 = vpop.permute.xlu0 %3617
        %3619 = vrot.lane.b32.xlu0 %v3561, 20
        %v3620 = vpop.permute.xlu0 %3619
        %3621 = vrot.lane.b32.xlu0 %v3562, 20
        %v3622 = vpop.permute.xlu0 %3621
        %3623 = vrot.lane.b32.xlu0 %v3563, 20
        %v3624 = vpop.permute.xlu0 %3623
        %3625 = vrot.lane.b32.xlu0 %v3564, 20
        %v3626 = vpop.permute.xlu0 %3625
        %3627 = vrot.lane.b32.xlu0 %v3565, 20
        %v3628 = vpop.permute.xlu0 %3627
        %3629 = vrot.lane.b32.xlu0 %v3566, 20
        %v3630 = vpop.permute.xlu0 %3629
        %vm3663 = vcmask 195744
        %3664 = vst.msk [vmem:[#allocation2] sm:$0xff] %vm3663, %v3568
        %3665 = vst.msk [vmem:[#allocation2 + $0x8] sm:$0xff] %vm3663, %v3570
        %3666 = vst.msk [vmem:[#allocation2 + $0x10] sm:$0xff] %vm3663, %v3572
        %3667 = vst.msk [vmem:[#allocation2 + $0x18] sm:$0xff] %vm3663, %v3574
        %3668 = vst.msk [vmem:[#allocation2 + $0x20] sm:$0xff] %vm3663, %v3576
        %3669 = vst.msk [vmem:[#allocation2 + $0x28] sm:$0xff] %vm3663, %v3578
        %3670 = vst.msk [vmem:[#allocation2 + $0x30] sm:$0xff] %vm3663, %v3580
        %3671 = vst.msk [vmem:[#allocation2 + $0x38] sm:$0xff] %vm3663, %v3582
        %3672 = vst.msk [vmem:[#allocation2 + $0x40] sm:$0xff] %vm3663, %v3584
        %3673 = vst.msk [vmem:[#allocation2 + $0x48] sm:$0xff] %vm3663, %v3586
        %3674 = vst.msk [vmem:[#allocation2 + $0x50] sm:$0xff] %vm3663, %v3588
        %3675 = vst.msk [vmem:[#allocation2 + $0x58] sm:$0xff] %vm3663, %v3590
        %3676 = vst.msk [vmem:[#allocation2 + $0x60] sm:$0xff] %vm3663, %v3592
        %3677 = vst.msk [vmem:[#allocation2 + $0x68] sm:$0xff] %vm3663, %v3594
        %3678 = vst.msk [vmem:[#allocation2 + $0x70] sm:$0xff] %vm3663, %v3596
        %3679 = vst.msk [vmem:[#allocation2 + $0x78] sm:$0xff] %vm3663, %v3598
        %3680 = vst.msk [vmem:[#allocation2 + $0x80] sm:$0xff] %vm3663, %v3600
        %3681 = vst.msk [vmem:[#allocation2 + $0x88] sm:$0xff] %vm3663, %v3602
        %3682 = vst.msk [vmem:[#allocation2 + $0x90] sm:$0xff] %vm3663, %v3604
        %3683 = vst.msk [vmem:[#allocation2 + $0x98] sm:$0xff] %vm3663, %v3606
        %3684 = vst.msk [vmem:[#allocation2 + $0xa0] sm:$0xff] %vm3663, %v3608
        %3685 = vst.msk [vmem:[#allocation2 + $0xa8] sm:$0xff] %vm3663, %v3610
        %3686 = vst.msk [vmem:[#allocation2 + $0xb0] sm:$0xff] %vm3663, %v3612
        %3687 = vst.msk [vmem:[#allocation2 + $0xb8] sm:$0xff] %vm3663, %v3614
        %3688 = vst.msk [vmem:[#allocation2 + $0xc0] sm:$0xff] %vm3663, %v3616
        %3689 = vst.msk [vmem:[#allocation2 + $0xc8] sm:$0xff] %vm3663, %v3618
        %3690 = vst.msk [vmem:[#allocation2 + $0xd0] sm:$0xff] %vm3663, %v3620
        %3691 = vst.msk [vmem:[#allocation2 + $0xd8] sm:$0xff] %vm3663, %v3622
        %3692 = vst.msk [vmem:[#allocation2 + $0xe0] sm:$0xff] %vm3663, %v3624
        %3693 = vst.msk [vmem:[#allocation2 + $0xe8] sm:$0xff] %vm3663, %v3626
        %3694 = vst.msk [vmem:[#allocation2 + $0xf0] sm:$0xff] %vm3663, %v3628
        %3695 = vst.msk [vmem:[#allocation2 + $0xf8] sm:$0xff] %vm3663, %v3630
        %v3704 = vunpack.c.l.b16 %v950
        %v3705 = vunpack.c.l.b16 %v970
        %v3706 = vunpack.c.l.b16 %v990
        %v3707 = vunpack.c.l.b16 %v1010
        %v3708 = vunpack.c.l.b16 %v1030
        %v3709 = vunpack.c.l.b16 %v1050
        %v3710 = vunpack.c.l.b16 %v1070
        %v3711 = vunpack.c.l.b16 %v1090
        %v3712 = vpack.c.b16 %v3704, %v3037
        %v3713 = vpack.c.b16 %v3705, %v3038
        %v3714 = vpack.c.b16 %v3706, %v3039
        %v3715 = vpack.c.b16 %v3707, %v3040
        %v3716 = vpack.c.b16 %v3708, %v3041
        %v3717 = vpack.c.b16 %v3709, %v3042
        %v3718 = vpack.c.b16 %v3710, %v3043
        %v3719 = vpack.c.b16 %v3711, %v3044
        %3720 = vrot.lane.b32.xlu0 %v1261, 24
        %v3721 = vpop.permute.xlu0 %3720
        %3722 = vrot.lane.b32.xlu0 %v1262, 24
        %v3723 = vpop.permute.xlu0 %3722
        %3724 = vrot.lane.b32.xlu0 %v1263, 24
        %v3725 = vpop.permute.xlu0 %3724
        %3726 = vrot.lane.b32.xlu0 %v3712, 24
        %v3727 = vpop.permute.xlu0 %3726
        %3728 = vrot.lane.b32.xlu0 %v1265, 24
        %v3729 = vpop.permute.xlu0 %3728
        %3730 = vrot.lane.b32.xlu0 %v1266, 24
        %v3731 = vpop.permute.xlu0 %3730
        %3732 = vrot.lane.b32.xlu0 %v1267, 24
        %v3733 = vpop.permute.xlu0 %3732
        %3734 = vrot.lane.b32.xlu0 %v3713, 24
        %v3735 = vpop.permute.xlu0 %3734
        %3736 = vrot.lane.b32.xlu0 %v1269, 24
        %v3737 = vpop.permute.xlu0 %3736
        %3738 = vrot.lane.b32.xlu0 %v1270, 24
        %v3739 = vpop.permute.xlu0 %3738
        %3740 = vrot.lane.b32.xlu0 %v1271, 24
        %v3741 = vpop.permute.xlu0 %3740
        %3742 = vrot.lane.b32.xlu0 %v3714, 24
        %v3743 = vpop.permute.xlu0 %3742
        %3744 = vrot.lane.b32.xlu0 %v1273, 24
        %v3745 = vpop.permute.xlu0 %3744
        %3746 = vrot.lane.b32.xlu0 %v1274, 24
        %v3747 = vpop.permute.xlu0 %3746
        %3748 = vrot.lane.b32.xlu0 %v1275, 24
        %v3749 = vpop.permute.xlu0 %3748
        %3750 = vrot.lane.b32.xlu0 %v3715, 24
        %v3751 = vpop.permute.xlu0 %3750
        %3752 = vrot.lane.b32.xlu0 %v1277, 24
        %v3753 = vpop.permute.xlu0 %3752
        %3754 = vrot.lane.b32.xlu0 %v1278, 24
        %v3755 = vpop.permute.xlu0 %3754
        %3756 = vrot.lane.b32.xlu0 %v1279, 24
        %v3757 = vpop.permute.xlu0 %3756
        %3758 = vrot.lane.b32.xlu0 %v3716, 24
        %v3759 = vpop.permute.xlu0 %3758
        %3760 = vrot.lane.b32.xlu0 %v1281, 24
        %v3761 = vpop.permute.xlu0 %3760
        %3762 = vrot.lane.b32.xlu0 %v1282, 24
        %v3763 = vpop.permute.xlu0 %3762
        %3764 = vrot.lane.b32.xlu0 %v1283, 24
        %v3765 = vpop.permute.xlu0 %3764
        %3766 = vrot.lane.b32.xlu0 %v3717, 24
        %v3767 = vpop.permute.xlu0 %3766
        %3768 = vrot.lane.b32.xlu0 %v1285, 24
        %v3769 = vpop.permute.xlu0 %3768
        %3770 = vrot.lane.b32.xlu0 %v1286, 24
        %v3771 = vpop.permute.xlu0 %3770
        %3772 = vrot.lane.b32.xlu0 %v1287, 24
        %v3773 = vpop.permute.xlu0 %3772
        %3774 = vrot.lane.b32.xlu0 %v3718, 24
        %v3775 = vpop.permute.xlu0 %3774
        %3776 = vrot.lane.b32.xlu0 %v1289, 24
        %v3777 = vpop.permute.xlu0 %3776
        %3778 = vrot.lane.b32.xlu0 %v1290, 24
        %v3779 = vpop.permute.xlu0 %3778
        %3780 = vrot.lane.b32.xlu0 %v1291, 24
        %v3781 = vpop.permute.xlu0 %3780
        %3782 = vrot.lane.b32.xlu0 %v3719, 24
        %v3783 = vpop.permute.xlu0 %3782
        %vm3816 = vcmask 228544
        %3817 = vst.msk [vmem:[#allocation2] sm:$0xff] %vm3816, %v3721
        %3818 = vst.msk [vmem:[#allocation2 + $0x8] sm:$0xff] %vm3816, %v3723
        %3819 = vst.msk [vmem:[#allocation2 + $0x10] sm:$0xff] %vm3816, %v3725
        %3820 = vst.msk [vmem:[#allocation2 + $0x18] sm:$0xff] %vm3816, %v3727
        %3821 = vst.msk [vmem:[#allocation2 + $0x20] sm:$0xff] %vm3816, %v3729
        %3822 = vst.msk [vmem:[#allocation2 + $0x28] sm:$0xff] %vm3816, %v3731
        %3823 = vst.msk [vmem:[#allocation2 + $0x30] sm:$0xff] %vm3816, %v3733
        %3824 = vst.msk [vmem:[#allocation2 + $0x38] sm:$0xff] %vm3816, %v3735
        %3825 = vst.msk [vmem:[#allocation2 + $0x40] sm:$0xff] %vm3816, %v3737
        %3826 = vst.msk [vmem:[#allocation2 + $0x48] sm:$0xff] %vm3816, %v3739
        %3827 = vst.msk [vmem:[#allocation2 + $0x50] sm:$0xff] %vm3816, %v3741
        %3828 = vst.msk [vmem:[#allocation2 + $0x58] sm:$0xff] %vm3816, %v3743
        %3829 = vst.msk [vmem:[#allocation2 + $0x60] sm:$0xff] %vm3816, %v3745
        %3830 = vst.msk [vmem:[#allocation2 + $0x68] sm:$0xff] %vm3816, %v3747
        %3831 = vst.msk [vmem:[#allocation2 + $0x70] sm:$0xff] %vm3816, %v3749
        %3832 = vst.msk [vmem:[#allocation2 + $0x78] sm:$0xff] %vm3816, %v3751
        %3833 = vst.msk [vmem:[#allocation2 + $0x80] sm:$0xff] %vm3816, %v3753
        %3834 = vst.msk [vmem:[#allocation2 + $0x88] sm:$0xff] %vm3816, %v3755
        %3835 = vst.msk [vmem:[#allocation2 + $0x90] sm:$0xff] %vm3816, %v3757
        %3836 = vst.msk [vmem:[#allocation2 + $0x98] sm:$0xff] %vm3816, %v3759
        %3837 = vst.msk [vmem:[#allocation2 + $0xa0] sm:$0xff] %vm3816, %v3761
        %3838 = vst.msk [vmem:[#allocation2 + $0xa8] sm:$0xff] %vm3816, %v3763
        %3839 = vst.msk [vmem:[#allocation2 + $0xb0] sm:$0xff] %vm3816, %v3765
        %3840 = vst.msk [vmem:[#allocation2 + $0xb8] sm:$0xff] %vm3816, %v3767
        %3841 = vst.msk [vmem:[#allocation2 + $0xc0] sm:$0xff] %vm3816, %v3769
        %3842 = vst.msk [vmem:[#allocation2 + $0xc8] sm:$0xff] %vm3816, %v3771
        %3843 = vst.msk [vmem:[#allocation2 + $0xd0] sm:$0xff] %vm3816, %v3773
        %3844 = vst.msk [vmem:[#allocation2 + $0xd8] sm:$0xff] %vm3816, %v3775
        %3845 = vst.msk [vmem:[#allocation2 + $0xe0] sm:$0xff] %vm3816, %v3777
        %3846 = vst.msk [vmem:[#allocation2 + $0xe8] sm:$0xff] %vm3816, %v3779
        %3847 = vst.msk [vmem:[#allocation2 + $0xf0] sm:$0xff] %vm3816, %v3781
        %3848 = vst.msk [vmem:[#allocation2 + $0xf8] sm:$0xff] %vm3816, %v3783
        %v3850 = vshrl.u32 %v950, 16
        %v3852 = vrot.slane %v3850, 4
        %v3853 = vshll.u32 %v950, 16
        %v3855 = vrot.slane %v3853, 5
        %v3856 = vor.u32 %v3852, %v3855
        %v3857 = vrot.slane %v3856, 4
        %v3859 = vshll.u32 %v951, 16
        %v3861 = vrot.slane %v3859, 5
        %v3862 = vsel %vm1359, %v3857, %v3861
        %v3864 = vshrl.u32 %v970, 16
        %v3866 = vrot.slane %v3864, 4
        %v3867 = vshll.u32 %v970, 16
        %v3869 = vrot.slane %v3867, 5
        %v3870 = vor.u32 %v3866, %v3869
        %v3871 = vrot.slane %v3870, 4
        %v3873 = vshll.u32 %v971, 16
        %v3875 = vrot.slane %v3873, 5
        %v3876 = vsel %vm1359, %v3871, %v3875
        %v3878 = vshrl.u32 %v990, 16
        %v3880 = vrot.slane %v3878, 4
        %v3881 = vshll.u32 %v990, 16
        %v3883 = vrot.slane %v3881, 5
        %v3884 = vor.u32 %v3880, %v3883
        %v3885 = vrot.slane %v3884, 4
        %v3887 = vshll.u32 %v991, 16
        %v3889 = vrot.slane %v3887, 5
        %v3890 = vsel %vm1359, %v3885, %v3889
        %v3892 = vshrl.u32 %v1010, 16
        %v3894 = vrot.slane %v3892, 4
        %v3895 = vshll.u32 %v1010, 16
        %v3897 = vrot.slane %v3895, 5
        %v3898 = vor.u32 %v3894, %v3897
        %v3899 = vrot.slane %v3898, 4
        %v3901 = vshll.u32 %v1011, 16
        %v3903 = vrot.slane %v3901, 5
        %v3904 = vsel %vm1359, %v3899, %v3903
        %v3906 = vshrl.u32 %v1030, 16
        %v3908 = vrot.slane %v3906, 4
        %v3909 = vshll.u32 %v1030, 16
        %v3911 = vrot.slane %v3909, 5
        %v3912 = vor.u32 %v3908, %v3911
        %v3913 = vrot.slane %v3912, 4
        %v3915 = vshll.u32 %v1031, 16
        %v3917 = vrot.slane %v3915, 5
        %v3918 = vsel %vm1359, %v3913, %v3917
        %v3920 = vshrl.u32 %v1050, 16
        %v3922 = vrot.slane %v3920, 4
        %v3923 = vshll.u32 %v1050, 16
        %v3925 = vrot.slane %v3923, 5
        %v3926 = vor.u32 %v3922, %v3925
        %v3927 = vrot.slane %v3926, 4
        %v3929 = vshll.u32 %v1051, 16
        %v3931 = vrot.slane %v3929, 5
        %v3932 = vsel %vm1359, %v3927, %v3931
        %v3934 = vshrl.u32 %v1070, 16
        %v3936 = vrot.slane %v3934, 4
        %v3937 = vshll.u32 %v1070, 16
        %v3939 = vrot.slane %v3937, 5
        %v3940 = vor.u32 %v3936, %v3939
        %v3941 = vrot.slane %v3940, 4
        %v3943 = vshll.u32 %v1071, 16
        %v3945 = vrot.slane %v3943, 5
        %v3946 = vsel %vm1359, %v3941, %v3945
        %v3948 = vshrl.u32 %v1090, 16
        %v3950 = vrot.slane %v3948, 4
        %v3951 = vshll.u32 %v1090, 16
        %v3953 = vrot.slane %v3951, 5
        %v3954 = vor.u32 %v3950, %v3953
        %v3955 = vrot.slane %v3954, 4
        %v3957 = vshll.u32 %v1091, 16
        %v3959 = vrot.slane %v3957, 5
        %v3960 = vsel %vm1359, %v3955, %v3959
        %v3961 = vunpack.c.l.b16 %v3862
        %v3962 = vunpack.c.l.b16 %v3876
        %v3963 = vunpack.c.l.b16 %v3890
        %v3964 = vunpack.c.l.b16 %v3904
        %v3965 = vunpack.c.l.b16 %v3918
        %v3966 = vunpack.c.l.b16 %v3932
        %v3967 = vunpack.c.l.b16 %v3946
        %v3968 = vunpack.c.l.b16 %v3960
        %v3969 = vpack.c.b16 %v3961, %v3318
        %v3970 = vpack.c.b16 %v3962, %v3319
        %v3971 = vpack.c.b16 %v3963, %v3320
        %v3972 = vpack.c.b16 %v3964, %v3321
        %v3973 = vpack.c.b16 %v3965, %v3322
        %v3974 = vpack.c.b16 %v3966, %v3323
        %v3975 = vpack.c.b16 %v3967, %v3324
        %v3976 = vpack.c.b16 %v3968, %v3325
        %3977 = vrot.lane.b32.xlu0 %v2321, 28
        %v3978 = vpop.permute.xlu0 %3977
        %3979 = vrot.lane.b32.xlu0 %v2322, 28
        %v3980 = vpop.permute.xlu0 %3979
        %3981 = vrot.lane.b32.xlu0 %v2323, 28
        %v3982 = vpop.permute.xlu0 %3981
        %3983 = vrot.lane.b32.xlu0 %v3969, 28
        %v3984 = vpop.permute.xlu0 %3983
        %3985 = vrot.lane.b32.xlu0 %v2325, 28
        %v3986 = vpop.permute.xlu0 %3985
        %3987 = vrot.lane.b32.xlu0 %v2326, 28
        %v3988 = vpop.permute.xlu0 %3987
        %3989 = vrot.lane.b32.xlu0 %v2327, 28
        %v3990 = vpop.permute.xlu0 %3989
        %3991 = vrot.lane.b32.xlu0 %v3970, 28
        %v3992 = vpop.permute.xlu0 %3991
        %3993 = vrot.lane.b32.xlu0 %v2329, 28
        %v3994 = vpop.permute.xlu0 %3993
        %3995 = vrot.lane.b32.xlu0 %v2330, 28
        %v3996 = vpop.permute.xlu0 %3995
        %3997 = vrot.lane.b32.xlu0 %v2331, 28
        %v3998 = vpop.permute.xlu0 %3997
        %3999 = vrot.lane.b32.xlu0 %v3971, 28
        %v4000 = vpop.permute.xlu0 %3999
        %4001 = vrot.lane.b32.xlu0 %v2333, 28
        %v4002 = vpop.permute.xlu0 %4001
        %4003 = vrot.lane.b32.xlu0 %v2334, 28
        %v4004 = vpop.permute.xlu0 %4003
        %4005 = vrot.lane.b32.xlu0 %v2335, 28
        %v4006 = vpop.permute.xlu0 %4005
        %4007 = vrot.lane.b32.xlu0 %v3972, 28
        %v4008 = vpop.permute.xlu0 %4007
        %4009 = vrot.lane.b32.xlu0 %v2337, 28
        %v4010 = vpop.permute.xlu0 %4009
        %4011 = vrot.lane.b32.xlu0 %v2338, 28
        %v4012 = vpop.permute.xlu0 %4011
        %4013 = vrot.lane.b32.xlu0 %v2339, 28
        %v4014 = vpop.permute.xlu0 %4013
        %4015 = vrot.lane.b32.xlu0 %v3973, 28
        %v4016 = vpop.permute.xlu0 %4015
        %4017 = vrot.lane.b32.xlu0 %v2341, 28
        %v4018 = vpop.permute.xlu0 %4017
        %4019 = vrot.lane.b32.xlu0 %v2342, 28
        %v4020 = vpop.permute.xlu0 %4019
        %4021 = vrot.lane.b32.xlu0 %v2343, 28
        %v4022 = vpop.permute.xlu0 %4021
        %4023 = vrot.lane.b32.xlu0 %v3974, 28
        %v4024 = vpop.permute.xlu0 %4023
        %4025 = vrot.lane.b32.xlu0 %v2345, 28
        %v4026 = vpop.permute.xlu0 %4025
        %4027 = vrot.lane.b32.xlu0 %v2346, 28
        %v4028 = vpop.permute.xlu0 %4027
        %4029 = vrot.lane.b32.xlu0 %v2347, 28
        %v4030 = vpop.permute.xlu0 %4029
        %4031 = vrot.lane.b32.xlu0 %v3975, 28
        %v4032 = vpop.permute.xlu0 %4031
        %4033 = vrot.lane.b32.xlu0 %v2349, 28
        %v4034 = vpop.permute.xlu0 %4033
        %4035 = vrot.lane.b32.xlu0 %v2350, 28
        %v4036 = vpop.permute.xlu0 %4035
        %4037 = vrot.lane.b32.xlu0 %v2351, 28
        %v4038 = vpop.permute.xlu0 %4037
        %4039 = vrot.lane.b32.xlu0 %v3976, 28
        %v4040 = vpop.permute.xlu0 %4039
        %vm4073 = vcmask 261344
        %4074 = vst.msk [vmem:[#allocation2] sm:$0xff] %vm4073, %v3978
        %4075 = vst.msk [vmem:[#allocation2 + $0x8] sm:$0xff] %vm4073, %v3980
        %4076 = vst.msk [vmem:[#allocation2 + $0x10] sm:$0xff] %vm4073, %v3982
        %4077 = vst.msk [vmem:[#allocation2 + $0x18] sm:$0xff] %vm4073, %v3984
        %4078 = vst.msk [vmem:[#allocation2 + $0x20] sm:$0xff] %vm4073, %v3986
        %4079 = vst.msk [vmem:[#allocation2 + $0x28] sm:$0xff] %vm4073, %v3988
        %4080 = vst.msk [vmem:[#allocation2 + $0x30] sm:$0xff] %vm4073, %v3990
        %4081 = vst.msk [vmem:[#allocation2 + $0x38] sm:$0xff] %vm4073, %v3992
        %4082 = vst.msk [vmem:[#allocation2 + $0x40] sm:$0xff] %vm4073, %v3994
        %4083 = vst.msk [vmem:[#allocation2 + $0x48] sm:$0xff] %vm4073, %v3996
        %4084 = vst.msk [vmem:[#allocation2 + $0x50] sm:$0xff] %vm4073, %v3998
        %4085 = vst.msk [vmem:[#allocation2 + $0x58] sm:$0xff] %vm4073, %v4000
        %4086 = vst.msk [vmem:[#allocation2 + $0x60] sm:$0xff] %vm4073, %v4002
        %4087 = vst.msk [vmem:[#allocation2 + $0x68] sm:$0xff] %vm4073, %v4004
        %4088 = vst.msk [vmem:[#allocation2 + $0x70] sm:$0xff] %vm4073, %v4006
        %4089 = vst.msk [vmem:[#allocation2 + $0x78] sm:$0xff] %vm4073, %v4008
        %4090 = vst.msk [vmem:[#allocation2 + $0x80] sm:$0xff] %vm4073, %v4010
        %4091 = vst.msk [vmem:[#allocation2 + $0x88] sm:$0xff] %vm4073, %v4012
        %4092 = vst.msk [vmem:[#allocation2 + $0x90] sm:$0xff] %vm4073, %v4014
        %4093 = vst.msk [vmem:[#allocation2 + $0x98] sm:$0xff] %vm4073, %v4016
        %4094 = vst.msk [vmem:[#allocation2 + $0xa0] sm:$0xff] %vm4073, %v4018
        %4095 = vst.msk [vmem:[#allocation2 + $0xa8] sm:$0xff] %vm4073, %v4020
        %4096 = vst.msk [vmem:[#allocation2 + $0xb0] sm:$0xff] %vm4073, %v4022
        %4097 = vst.msk [vmem:[#allocation2 + $0xb8] sm:$0xff] %vm4073, %v4024
        %4098 = vst.msk [vmem:[#allocation2 + $0xc0] sm:$0xff] %vm4073, %v4026
        %4099 = vst.msk [vmem:[#allocation2 + $0xc8] sm:$0xff] %vm4073, %v4028
        %4100 = vst.msk [vmem:[#allocation2 + $0xd0] sm:$0xff] %vm4073, %v4030
        %4101 = vst.msk [vmem:[#allocation2 + $0xd8] sm:$0xff] %vm4073, %v4032
        %4102 = vst.msk [vmem:[#allocation2 + $0xe0] sm:$0xff] %vm4073, %v4034
        %4103 = vst.msk [vmem:[#allocation2 + $0xe8] sm:$0xff] %vm4073, %v4036
        %4104 = vst.msk [vmem:[#allocation2 + $0xf0] sm:$0xff] %vm4073, %v4038
        %4105 = vst.msk [vmem:[#allocation2 + $0xf8] sm:$0xff] %vm4073, %v4040
        %v4114 = vrot.slane %v950, 5
        %v4115 = vrot.slane %v4114, 4
        %v4116 = vrot.slane %v951, 5
        %v4117 = vsel %vm2547, %v4115, %v4116
        %v4118 = vrot.slane %v970, 5
        %v4119 = vrot.slane %v4118, 4
        %v4120 = vrot.slane %v971, 5
        %v4121 = vsel %vm2547, %v4119, %v4120
        %v4122 = vrot.slane %v990, 5
        %v4123 = vrot.slane %v4122, 4
        %v4124 = vrot.slane %v991, 5
        %v4125 = vsel %vm2547, %v4123, %v4124
        %v4126 = vrot.slane %v1010, 5
        %v4127 = vrot.slane %v4126, 4
        %v4128 = vrot.slane %v1011, 5
        %v4129 = vsel %vm2547, %v4127, %v4128
        %v4130 = vrot.slane %v1030, 5
        %v4131 = vrot.slane %v4130, 4
        %v4132 = vrot.slane %v1031, 5
        %v4133 = vsel %vm2547, %v4131, %v4132
        %v4134 = vrot.slane %v1050, 5
        %v4135 = vrot.slane %v4134, 4
        %v4136 = vrot.slane %v1051, 5
        %v4137 = vsel %vm2547, %v4135, %v4136
        %v4138 = vrot.slane %v1070, 5
        %v4139 = vrot.slane %v4138, 4
        %v4140 = vrot.slane %v1071, 5
        %v4141 = vsel %vm2547, %v4139, %v4140
        %v4142 = vrot.slane %v1090, 5
        %v4143 = vrot.slane %v4142, 4
        %v4144 = vrot.slane %v1091, 5
        %v4145 = vsel %vm2547, %v4143, %v4144
        %v4146 = vunpack.c.l.b16 %v4117
        %v4147 = vunpack.c.l.b16 %v4121
        %v4148 = vunpack.c.l.b16 %v4125
        %v4149 = vunpack.c.l.b16 %v4129
        %v4150 = vunpack.c.l.b16 %v4133
        %v4151 = vunpack.c.l.b16 %v4137
        %v4152 = vunpack.c.l.b16 %v4141
        %v4153 = vunpack.c.l.b16 %v4145
        %v4154 = vpack.c.b16 %v4146, %v3527
        %v4155 = vpack.c.b16 %v4147, %v3528
        %v4156 = vpack.c.b16 %v4148, %v3529
        %v4157 = vpack.c.b16 %v4149, %v3530
        %v4158 = vpack.c.b16 %v4150, %v3531
        %v4159 = vpack.c.b16 %v4151, %v3532
        %v4160 = vpack.c.b16 %v4152, %v3533
        %v4161 = vpack.c.b16 %v4153, %v3534
        %4162 = vrot.lane.b32.xlu0 %v2869, 32
        %v4163 = vpop.permute.xlu0 %4162
        %4164 = vrot.lane.b32.xlu0 %v2870, 32
        %v4165 = vpop.permute.xlu0 %4164
        %4166 = vrot.lane.b32.xlu0 %v2871, 32
        %v4167 = vpop.permute.xlu0 %4166
        %4168 = vrot.lane.b32.xlu0 %v4154, 32
        %v4169 = vpop.permute.xlu0 %4168
        %4170 = vrot.lane.b32.xlu0 %v2873, 32
        %v4171 = vpop.permute.xlu0 %4170
        %4172 = vrot.lane.b32.xlu0 %v2874, 32
        %v4173 = vpop.permute.xlu0 %4172
        %4174 = vrot.lane.b32.xlu0 %v2875, 32
        %v4175 = vpop.permute.xlu0 %4174
        %4176 = vrot.lane.b32.xlu0 %v4155, 32
        %v4177 = vpop.permute.xlu0 %4176
        %4178 = vrot.lane.b32.xlu0 %v2877, 32
        %v4179 = vpop.permute.xlu0 %4178
        %4180 = vrot.lane.b32.xlu0 %v2878, 32
        %v4181 = vpop.permute.xlu0 %4180
        %4182 = vrot.lane.b32.xlu0 %v2879, 32
        %v4183 = vpop.permute.xlu0 %4182
        %4184 = vrot.lane.b32.xlu0 %v4156, 32
        %v4185 = vpop.permute.xlu0 %4184
        %4186 = vrot.lane.b32.xlu0 %v2881, 32
        %v4187 = vpop.permute.xlu0 %4186
        %4188 = vrot.lane.b32.xlu0 %v2882, 32
        %v4189 = vpop.permute.xlu0 %4188
        %4190 = vrot.lane.b32.xlu0 %v2883, 32
        %v4191 = vpop.permute.xlu0 %4190
        %4192 = vrot.lane.b32.xlu0 %v4157, 32
        %v4193 = vpop.permute.xlu0 %4192
        %4194 = vrot.lane.b32.xlu0 %v2885, 32
        %v4195 = vpop.permute.xlu0 %4194
        %4196 = vrot.lane.b32.xlu0 %v2886, 32
        %v4197 = vpop.permute.xlu0 %4196
        %4198 = vrot.lane.b32.xlu0 %v2887, 32
        %v4199 = vpop.permute.xlu0 %4198
        %4200 = vrot.lane.b32.xlu0 %v4158, 32
        %v4201 = vpop.permute.xlu0 %4200
        %4202 = vrot.lane.b32.xlu0 %v2889, 32
        %v4203 = vpop.permute.xlu0 %4202
        %4204 = vrot.lane.b32.xlu0 %v2890, 32
        %v4205 = vpop.permute.xlu0 %4204
        %4206 = vrot.lane.b32.xlu0 %v2891, 32
        %v4207 = vpop.permute.xlu0 %4206
        %4208 = vrot.lane.b32.xlu0 %v4159, 32
        %v4209 = vpop.permute.xlu0 %4208
        %4210 = vrot.lane.b32.xlu0 %v2893, 32
        %v4211 = vpop.permute.xlu0 %4210
        %4212 = vrot.lane.b32.xlu0 %v2894, 32
        %v4213 = vpop.permute.xlu0 %4212
        %4214 = vrot.lane.b32.xlu0 %v2895, 32
        %v4215 = vpop.permute.xlu0 %4214
        %4216 = vrot.lane.b32.xlu0 %v4160, 32
        %v4217 = vpop.permute.xlu0 %4216
        %4218 = vrot.lane.b32.xlu0 %v2897, 32
        %v4219 = vpop.permute.xlu0 %4218
        %4220 = vrot.lane.b32.xlu0 %v2898, 32
        %v4221 = vpop.permute.xlu0 %4220
        %4222 = vrot.lane.b32.xlu0 %v2899, 32
        %v4223 = vpop.permute.xlu0 %4222
        %4224 = vrot.lane.b32.xlu0 %v4161, 32
        %v4225 = vpop.permute.xlu0 %4224
        %vm4258 = vcmask 294144
        %4259 = vst.msk [vmem:[#allocation2] sm:$0xff] %vm4258, %v4163
        %4260 = vst.msk [vmem:[#allocation2 + $0x8] sm:$0xff] %vm4258, %v4165
        %4261 = vst.msk [vmem:[#allocation2 + $0x10] sm:$0xff] %vm4258, %v4167
        %4262 = vst.msk [vmem:[#allocation2 + $0x18] sm:$0xff] %vm4258, %v4169
        %4263 = vst.msk [vmem:[#allocation2 + $0x20] sm:$0xff] %vm4258, %v4171
        %4264 = vst.msk [vmem:[#allocation2 + $0x28] sm:$0xff] %vm4258, %v4173
        %4265 = vst.msk [vmem:[#allocation2 + $0x30] sm:$0xff] %vm4258, %v4175
        %4266 = vst.msk [vmem:[#allocation2 + $0x38] sm:$0xff] %vm4258, %v4177
        %4267 = vst.msk [vmem:[#allocation2 + $0x40] sm:$0xff] %vm4258, %v4179
        %4268 = vst.msk [vmem:[#allocation2 + $0x48] sm:$0xff] %vm4258, %v4181
        %4269 = vst.msk [vmem:[#allocation2 + $0x50] sm:$0xff] %vm4258, %v4183
        %4270 = vst.msk [vmem:[#allocation2 + $0x58] sm:$0xff] %vm4258, %v4185
        %4271 = vst.msk [vmem:[#allocation2 + $0x60] sm:$0xff] %vm4258, %v4187
        %4272 = vst.msk [vmem:[#allocation2 + $0x68] sm:$0xff] %vm4258, %v4189
        %4273 = vst.msk [vmem:[#allocation2 + $0x70] sm:$0xff] %vm4258, %v4191
        %4274 = vst.msk [vmem:[#allocation2 + $0x78] sm:$0xff] %vm4258, %v4193
        %4275 = vst.msk [vmem:[#allocation2 + $0x80] sm:$0xff] %vm4258, %v4195
        %4276 = vst.msk [vmem:[#allocation2 + $0x88] sm:$0xff] %vm4258, %v4197
        %4277 = vst.msk [vmem:[#allocation2 + $0x90] sm:$0xff] %vm4258, %v4199
        %4278 = vst.msk [vmem:[#allocation2 + $0x98] sm:$0xff] %vm4258, %v4201
        %4279 = vst.msk [vmem:[#allocation2 + $0xa0] sm:$0xff] %vm4258, %v4203
        %4280 = vst.msk [vmem:[#allocation2 + $0xa8] sm:$0xff] %vm4258, %v4205
        %4281 = vst.msk [vmem:[#allocation2 + $0xb0] sm:$0xff] %vm4258, %v4207
        %4282 = vst.msk [vmem:[#allocation2 + $0xb8] sm:$0xff] %vm4258, %v4209
        %4283 = vst.msk [vmem:[#allocation2 + $0xc0] sm:$0xff] %vm4258, %v4211
        %4284 = vst.msk [vmem:[#allocation2 + $0xc8] sm:$0xff] %vm4258, %v4213
        %4285 = vst.msk [vmem:[#allocation2 + $0xd0] sm:$0xff] %vm4258, %v4215
        %4286 = vst.msk [vmem:[#allocation2 + $0xd8] sm:$0xff] %vm4258, %v4217
        %4287 = vst.msk [vmem:[#allocation2 + $0xe0] sm:$0xff] %vm4258, %v4219
        %4288 = vst.msk [vmem:[#allocation2 + $0xe8] sm:$0xff] %vm4258, %v4221
        %4289 = vst.msk [vmem:[#allocation2 + $0xf0] sm:$0xff] %vm4258, %v4223
        %4290 = vst.msk [vmem:[#allocation2 + $0xf8] sm:$0xff] %vm4258, %v4225
        %v4299 = vunpack.c.l.b16 %v1092
        %v4300 = vunpack.c.l.b16 %v1094
        %v4301 = vunpack.c.l.b16 %v1096
        %v4302 = vunpack.c.l.b16 %v1098
        %v4303 = vunpack.c.l.b16 %v1100
        %v4304 = vunpack.c.l.b16 %v1102
        %v4305 = vunpack.c.l.b16 %v1104
        %v4306 = vunpack.c.l.b16 %v1106
        %v4307 = vpack.c.b16 %v4300, %v4299
        %v4308 = vpack.c.b16 %v4302, %v4301
        %v4309 = vpack.c.b16 %v4304, %v4303
        %v4310 = vpack.c.b16 %v4306, %v4305
        %4311 = vrot.lane.b32.xlu0 %v1264, 36
        %v4312 = vpop.permute.xlu0 %4311
        %4313 = vrot.lane.b32.xlu0 %v1265, 36
        %v4314 = vpop.permute.xlu0 %4313
        %4315 = vrot.lane.b32.xlu0 %v1266, 36
        %v4316 = vpop.permute.xlu0 %4315
        %4317 = vrot.lane.b32.xlu0 %v1267, 36
        %v4318 = vpop.permute.xlu0 %4317
        %4319 = vrot.lane.b32.xlu0 %v1268, 36
        %v4320 = vpop.permute.xlu0 %4319
        %4321 = vrot.lane.b32.xlu0 %v1269, 36
        %v4322 = vpop.permute.xlu0 %4321
        %4323 = vrot.lane.b32.xlu0 %v1270, 36
        %v4324 = vpop.permute.xlu0 %4323
        %4325 = vrot.lane.b32.xlu0 %v1271, 36
        %v4326 = vpop.permute.xlu0 %4325
        %4327 = vrot.lane.b32.xlu0 %v1272, 36
        %v4328 = vpop.permute.xlu0 %4327
        %4329 = vrot.lane.b32.xlu0 %v1273, 36
        %v4330 = vpop.permute.xlu0 %4329
        %4331 = vrot.lane.b32.xlu0 %v1274, 36
        %v4332 = vpop.permute.xlu0 %4331
        %4333 = vrot.lane.b32.xlu0 %v1275, 36
        %v4334 = vpop.permute.xlu0 %4333
        %4335 = vrot.lane.b32.xlu0 %v1276, 36
        %v4336 = vpop.permute.xlu0 %4335
        %4337 = vrot.lane.b32.xlu0 %v1277, 36
        %v4338 = vpop.permute.xlu0 %4337
        %4339 = vrot.lane.b32.xlu0 %v1278, 36
        %v4340 = vpop.permute.xlu0 %4339
        %4341 = vrot.lane.b32.xlu0 %v1279, 36
        %v4342 = vpop.permute.xlu0 %4341
        %4343 = vrot.lane.b32.xlu0 %v1280, 36
        %v4344 = vpop.permute.xlu0 %4343
        %4345 = vrot.lane.b32.xlu0 %v1281, 36
        %v4346 = vpop.permute.xlu0 %4345
        %4347 = vrot.lane.b32.xlu0 %v1282, 36
        %v4348 = vpop.permute.xlu0 %4347
        %4349 = vrot.lane.b32.xlu0 %v1283, 36
        %v4350 = vpop.permute.xlu0 %4349
        %4351 = vrot.lane.b32.xlu0 %v1284, 36
        %v4352 = vpop.permute.xlu0 %4351
        %4353 = vrot.lane.b32.xlu0 %v1285, 36
        %v4354 = vpop.permute.xlu0 %4353
        %4355 = vrot.lane.b32.xlu0 %v1286, 36
        %v4356 = vpop.permute.xlu0 %4355
        %4357 = vrot.lane.b32.xlu0 %v1287, 36
        %v4358 = vpop.permute.xlu0 %4357
        %4359 = vrot.lane.b32.xlu0 %v1288, 36
        %v4360 = vpop.permute.xlu0 %4359
        %4361 = vrot.lane.b32.xlu0 %v1289, 36
        %v4362 = vpop.permute.xlu0 %4361
        %4363 = vrot.lane.b32.xlu0 %v1290, 36
        %v4364 = vpop.permute.xlu0 %4363
        %4365 = vrot.lane.b32.xlu0 %v1291, 36
        %v4366 = vpop.permute.xlu0 %4365
        %4367 = vrot.lane.b32.xlu0 %v4307, 36
        %v4368 = vpop.permute.xlu0 %4367
        %4369 = vrot.lane.b32.xlu0 %v4308, 36
        %v4370 = vpop.permute.xlu0 %4369
        %4371 = vrot.lane.b32.xlu0 %v4309, 36
        %v4372 = vpop.permute.xlu0 %4371
        %4373 = vrot.lane.b32.xlu0 %v4310, 36
        %v4374 = vpop.permute.xlu0 %4373
        %vm4407 = vcmask 326944
        %4408 = vst.msk [vmem:[#allocation2] sm:$0xff] %vm4407, %v4312
        %4409 = vst.msk [vmem:[#allocation2 + $0x8] sm:$0xff] %vm4407, %v4314
        %4410 = vst.msk [vmem:[#allocation2 + $0x10] sm:$0xff] %vm4407, %v4316
        %4411 = vst.msk [vmem:[#allocation2 + $0x18] sm:$0xff] %vm4407, %v4318
        %4412 = vst.msk [vmem:[#allocation2 + $0x20] sm:$0xff] %vm4407, %v4320
        %4413 = vst.msk [vmem:[#allocation2 + $0x28] sm:$0xff] %vm4407, %v4322
        %4414 = vst.msk [vmem:[#allocation2 + $0x30] sm:$0xff] %vm4407, %v4324
        %4415 = vst.msk [vmem:[#allocation2 + $0x38] sm:$0xff] %vm4407, %v4326
        %4416 = vst.msk [vmem:[#allocation2 + $0x40] sm:$0xff] %vm4407, %v4328
        %4417 = vst.msk [vmem:[#allocation2 + $0x48] sm:$0xff] %vm4407, %v4330
        %4418 = vst.msk [vmem:[#allocation2 + $0x50] sm:$0xff] %vm4407, %v4332
        %4419 = vst.msk [vmem:[#allocation2 + $0x58] sm:$0xff] %vm4407, %v4334
        %4420 = vst.msk [vmem:[#allocation2 + $0x60] sm:$0xff] %vm4407, %v4336
        %4421 = vst.msk [vmem:[#allocation2 + $0x68] sm:$0xff] %vm4407, %v4338
        %4422 = vst.msk [vmem:[#allocation2 + $0x70] sm:$0xff] %vm4407, %v4340
        %4423 = vst.msk [vmem:[#allocation2 + $0x78] sm:$0xff] %vm4407, %v4342
        %4424 = vst.msk [vmem:[#allocation2 + $0x80] sm:$0xff] %vm4407, %v4344
        %4425 = vst.msk [vmem:[#allocation2 + $0x88] sm:$0xff] %vm4407, %v4346
        %4426 = vst.msk [vmem:[#allocation2 + $0x90] sm:$0xff] %vm4407, %v4348
        %4427 = vst.msk [vmem:[#allocation2 + $0x98] sm:$0xff] %vm4407, %v4350
        %4428 = vst.msk [vmem:[#allocation2 + $0xa0] sm:$0xff] %vm4407, %v4352
        %4429 = vst.msk [vmem:[#allocation2 + $0xa8] sm:$0xff] %vm4407, %v4354
        %4430 = vst.msk [vmem:[#allocation2 + $0xb0] sm:$0xff] %vm4407, %v4356
        %4431 = vst.msk [vmem:[#allocation2 + $0xb8] sm:$0xff] %vm4407, %v4358
        %4432 = vst.msk [vmem:[#allocation2 + $0xc0] sm:$0xff] %vm4407, %v4360
        %4433 = vst.msk [vmem:[#allocation2 + $0xc8] sm:$0xff] %vm4407, %v4362
        %4434 = vst.msk [vmem:[#allocation2 + $0xd0] sm:$0xff] %vm4407, %v4364
        %4435 = vst.msk [vmem:[#allocation2 + $0xd8] sm:$0xff] %vm4407, %v4366
        %4436 = vst.msk [vmem:[#allocation2 + $0xe0] sm:$0xff] %vm4407, %v4368
        %4437 = vst.msk [vmem:[#allocation2 + $0xe8] sm:$0xff] %vm4407, %v4370
        %4438 = vst.msk [vmem:[#allocation2 + $0xf0] sm:$0xff] %vm4407, %v4372
        %4439 = vst.msk [vmem:[#allocation2 + $0xf8] sm:$0xff] %vm4407, %v4374
        %v4441 = vshrl.u32 %v1092, 16
        %v4443 = vrot.slane %v4441, 4
        %v4444 = vshll.u32 %v1092, 16
        %v4446 = vrot.slane %v4444, 5
        %v4447 = vor.u32 %v4443, %v4446
        %v4448 = vrot.slane %v4447, 4
        %v4450 = vshll.u32 %v1093, 16
        %v4452 = vrot.slane %v4450, 5
        %v4453 = vsel %vm1359, %v4448, %v4452
        %v4455 = vshrl.u32 %v1094, 16
        %v4457 = vrot.slane %v4455, 4
        %v4458 = vshll.u32 %v1094, 16
        %v4460 = vrot.slane %v4458, 5
        %v4461 = vor.u32 %v4457, %v4460
        %v4462 = vrot.slane %v4461, 4
        %v4464 = vshll.u32 %v1095, 16
        %v4466 = vrot.slane %v4464, 5
        %v4467 = vsel %vm1359, %v4462, %v4466
        %v4469 = vshrl.u32 %v1096, 16
        %v4471 = vrot.slane %v4469, 4
        %v4472 = vshll.u32 %v1096, 16
        %v4474 = vrot.slane %v4472, 5
        %v4475 = vor.u32 %v4471, %v4474
        %v4476 = vrot.slane %v4475, 4
        %v4478 = vshll.u32 %v1097, 16
        %v4480 = vrot.slane %v4478, 5
        %v4481 = vsel %vm1359, %v4476, %v4480
        %v4483 = vshrl.u32 %v1098, 16
        %v4485 = vrot.slane %v4483, 4
        %v4486 = vshll.u32 %v1098, 16
        %v4488 = vrot.slane %v4486, 5
        %v4489 = vor.u32 %v4485, %v4488
        %v4490 = vrot.slane %v4489, 4
        %v4492 = vshll.u32 %v1099, 16
        %v4494 = vrot.slane %v4492, 5
        %v4495 = vsel %vm1359, %v4490, %v4494
        %v4497 = vshrl.u32 %v1100, 16
        %v4499 = vrot.slane %v4497, 4
        %v4500 = vshll.u32 %v1100, 16
        %v4502 = vrot.slane %v4500, 5
        %v4503 = vor.u32 %v4499, %v4502
        %v4504 = vrot.slane %v4503, 4
        %v4506 = vshll.u32 %v1101, 16
        %v4508 = vrot.slane %v4506, 5
        %v4509 = vsel %vm1359, %v4504, %v4508
        %v4511 = vshrl.u32 %v1102, 16
        %v4513 = vrot.slane %v4511, 4
        %v4514 = vshll.u32 %v1102, 16
        %v4516 = vrot.slane %v4514, 5
        %v4517 = vor.u32 %v4513, %v4516
        %v4518 = vrot.slane %v4517, 4
        %v4520 = vshll.u32 %v1103, 16
        %v4522 = vrot.slane %v4520, 5
        %v4523 = vsel %vm1359, %v4518, %v4522
        %v4525 = vshrl.u32 %v1104, 16
        %v4527 = vrot.slane %v4525, 4
        %v4528 = vshll.u32 %v1104, 16
        %v4530 = vrot.slane %v4528, 5
        %v4531 = vor.u32 %v4527, %v4530
        %v4532 = vrot.slane %v4531, 4
        %v4534 = vshll.u32 %v1105, 16
        %v4536 = vrot.slane %v4534, 5
        %v4537 = vsel %vm1359, %v4532, %v4536
        %v4539 = vshrl.u32 %v1106, 16
        %v4541 = vrot.slane %v4539, 4
        %v4542 = vshll.u32 %v1106, 16
        %v4544 = vrot.slane %v4542, 5
        %v4545 = vor.u32 %v4541, %v4544
        %v4546 = vrot.slane %v4545, 4
        %v4548 = vshll.u32 %v1107, 16
        %v4550 = vrot.slane %v4548, 5
        %v4551 = vsel %vm1359, %v4546, %v4550
        %v4552 = vunpack.c.l.b16 %v4453
        %v4553 = vunpack.c.l.b16 %v4467
        %v4554 = vunpack.c.l.b16 %v4481
        %v4555 = vunpack.c.l.b16 %v4495
        %v4556 = vunpack.c.l.b16 %v4509
        %v4557 = vunpack.c.l.b16 %v4523
        %v4558 = vunpack.c.l.b16 %v4537
        %v4559 = vunpack.c.l.b16 %v4551
        %v4560 = vpack.c.b16 %v4553, %v4552
        %v4561 = vpack.c.b16 %v4555, %v4554
        %v4562 = vpack.c.b16 %v4557, %v4556
        %v4563 = vpack.c.b16 %v4559, %v4558
        %4564 = vrot.lane.b32.xlu0 %v2324, 40
        %v4565 = vpop.permute.xlu0 %4564
        %4566 = vrot.lane.b32.xlu0 %v2325, 40
        %v4567 = vpop.permute.xlu0 %4566
        %4568 = vrot.lane.b32.xlu0 %v2326, 40
        %v4569 = vpop.permute.xlu0 %4568
        %4570 = vrot.lane.b32.xlu0 %v2327, 40
        %v4571 = vpop.permute.xlu0 %4570
        %4572 = vrot.lane.b32.xlu0 %v2328, 40
        %v4573 = vpop.permute.xlu0 %4572
        %4574 = vrot.lane.b32.xlu0 %v2329, 40
        %v4575 = vpop.permute.xlu0 %4574
        %4576 = vrot.lane.b32.xlu0 %v2330, 40
        %v4577 = vpop.permute.xlu0 %4576
        %4578 = vrot.lane.b32.xlu0 %v2331, 40
        %v4579 = vpop.permute.xlu0 %4578
        %4580 = vrot.lane.b32.xlu0 %v2332, 40
        %v4581 = vpop.permute.xlu0 %4580
        %4582 = vrot.lane.b32.xlu0 %v2333, 40
        %v4583 = vpop.permute.xlu0 %4582
        %4584 = vrot.lane.b32.xlu0 %v2334, 40
        %v4585 = vpop.permute.xlu0 %4584
        %4586 = vrot.lane.b32.xlu0 %v2335, 40
        %v4587 = vpop.permute.xlu0 %4586
        %4588 = vrot.lane.b32.xlu0 %v2336, 40
        %v4589 = vpop.permute.xlu0 %4588
        %4590 = vrot.lane.b32.xlu0 %v2337, 40
        %v4591 = vpop.permute.xlu0 %4590
        %4592 = vrot.lane.b32.xlu0 %v2338, 40
        %v4593 = vpop.permute.xlu0 %4592
        %4594 = vrot.lane.b32.xlu0 %v2339, 40
        %v4595 = vpop.permute.xlu0 %4594
        %4596 = vrot.lane.b32.xlu0 %v2340, 40
        %v4597 = vpop.permute.xlu0 %4596
        %4598 = vrot.lane.b32.xlu0 %v2341, 40
        %v4599 = vpop.permute.xlu0 %4598
        %4600 = vrot.lane.b32.xlu0 %v2342, 40
        %v4601 = vpop.permute.xlu0 %4600
        %4602 = vrot.lane.b32.xlu0 %v2343, 40
        %v4603 = vpop.permute.xlu0 %4602
        %4604 = vrot.lane.b32.xlu0 %v2344, 40
        %v4605 = vpop.permute.xlu0 %4604
        %4606 = vrot.lane.b32.xlu0 %v2345, 40
        %v4607 = vpop.permute.xlu0 %4606
        %4608 = vrot.lane.b32.xlu0 %v2346, 40
        %v4609 = vpop.permute.xlu0 %4608
        %4610 = vrot.lane.b32.xlu0 %v2347, 40
        %v4611 = vpop.permute.xlu0 %4610
        %4612 = vrot.lane.b32.xlu0 %v2348, 40
        %v4613 = vpop.permute.xlu0 %4612
        %4614 = vrot.lane.b32.xlu0 %v2349, 40
        %v4615 = vpop.permute.xlu0 %4614
        %4616 = vrot.lane.b32.xlu0 %v2350, 40
        %v4617 = vpop.permute.xlu0 %4616
        %4618 = vrot.lane.b32.xlu0 %v2351, 40
        %v4619 = vpop.permute.xlu0 %4618
        %4620 = vrot.lane.b32.xlu0 %v4560, 40
        %v4621 = vpop.permute.xlu0 %4620
        %4622 = vrot.lane.b32.xlu0 %v4561, 40
        %v4623 = vpop.permute.xlu0 %4622
        %4624 = vrot.lane.b32.xlu0 %v4562, 40
        %v4625 = vpop.permute.xlu0 %4624
        %4626 = vrot.lane.b32.xlu0 %v4563, 40
        %v4627 = vpop.permute.xlu0 %4626
        %vm4660 = vcmask 359744
        %4661 = vst.msk [vmem:[#allocation2] sm:$0xff] %vm4660, %v4565
        %4662 = vst.msk [vmem:[#allocation2 + $0x8] sm:$0xff] %vm4660, %v4567
        %4663 = vst.msk [vmem:[#allocation2 + $0x10] sm:$0xff] %vm4660, %v4569
        %4664 = vst.msk [vmem:[#allocation2 + $0x18] sm:$0xff] %vm4660, %v4571
        %4665 = vst.msk [vmem:[#allocation2 + $0x20] sm:$0xff] %vm4660, %v4573
        %4666 = vst.msk [vmem:[#allocation2 + $0x28] sm:$0xff] %vm4660, %v4575
        %4667 = vst.msk [vmem:[#allocation2 + $0x30] sm:$0xff] %vm4660, %v4577
        %4668 = vst.msk [vmem:[#allocation2 + $0x38] sm:$0xff] %vm4660, %v4579
        %4669 = vst.msk [vmem:[#allocation2 + $0x40] sm:$0xff] %vm4660, %v4581
        %4670 = vst.msk [vmem:[#allocation2 + $0x48] sm:$0xff] %vm4660, %v4583
        %4671 = vst.msk [vmem:[#allocation2 + $0x50] sm:$0xff] %vm4660, %v4585
        %4672 = vst.msk [vmem:[#allocation2 + $0x58] sm:$0xff] %vm4660, %v4587
        %4673 = vst.msk [vmem:[#allocation2 + $0x60] sm:$0xff] %vm4660, %v4589
        %4674 = vst.msk [vmem:[#allocation2 + $0x68] sm:$0xff] %vm4660, %v4591
        %4675 = vst.msk [vmem:[#allocation2 + $0x70] sm:$0xff] %vm4660, %v4593
        %4676 = vst.msk [vmem:[#allocation2 + $0x78] sm:$0xff] %vm4660, %v4595
        %4677 = vst.msk [vmem:[#allocation2 + $0x80] sm:$0xff] %vm4660, %v4597
        %4678 = vst.msk [vmem:[#allocation2 + $0x88] sm:$0xff] %vm4660, %v4599
        %4679 = vst.msk [vmem:[#allocation2 + $0x90] sm:$0xff] %vm4660, %v4601
        %4680 = vst.msk [vmem:[#allocation2 + $0x98] sm:$0xff] %vm4660, %v4603
        %4681 = vst.msk [vmem:[#allocation2 + $0xa0] sm:$0xff] %vm4660, %v4605
        %4682 = vst.msk [vmem:[#allocation2 + $0xa8] sm:$0xff] %vm4660, %v4607
        %4683 = vst.msk [vmem:[#allocation2 + $0xb0] sm:$0xff] %vm4660, %v4609
        %4684 = vst.msk [vmem:[#allocation2 + $0xb8] sm:$0xff] %vm4660, %v4611
        %4685 = vst.msk [vmem:[#allocation2 + $0xc0] sm:$0xff] %vm4660, %v4613
        %4686 = vst.msk [vmem:[#allocation2 + $0xc8] sm:$0xff] %vm4660, %v4615
        %4687 = vst.msk [vmem:[#allocation2 + $0xd0] sm:$0xff] %vm4660, %v4617
        %4688 = vst.msk [vmem:[#allocation2 + $0xd8] sm:$0xff] %vm4660, %v4619
        %4689 = vst.msk [vmem:[#allocation2 + $0xe0] sm:$0xff] %vm4660, %v4621
        %4690 = vst.msk [vmem:[#allocation2 + $0xe8] sm:$0xff] %vm4660, %v4623
        %4691 = vst.msk [vmem:[#allocation2 + $0xf0] sm:$0xff] %vm4660, %v4625
        %4692 = vst.msk [vmem:[#allocation2 + $0xf8] sm:$0xff] %vm4660, %v4627
        %v4701 = vrot.slane %v1092, 5
        %v4702 = vrot.slane %v4701, 4
        %v4703 = vrot.slane %v1093, 5
        %v4704 = vsel %vm2547, %v4702, %v4703
        %v4705 = vrot.slane %v1094, 5
        %v4706 = vrot.slane %v4705, 4
        %v4707 = vrot.slane %v1095, 5
        %v4708 = vsel %vm2547, %v4706, %v4707
        %v4709 = vrot.slane %v1096, 5
        %v4710 = vrot.slane %v4709, 4
        %v4711 = vrot.slane %v1097, 5
        %v4712 = vsel %vm2547, %v4710, %v4711
        %v4713 = vrot.slane %v1098, 5
        %v4714 = vrot.slane %v4713, 4
        %v4715 = vrot.slane %v1099, 5
        %v4716 = vsel %vm2547, %v4714, %v4715
        %v4717 = vrot.slane %v1100, 5
        %v4718 = vrot.slane %v4717, 4
        %v4719 = vrot.slane %v1101, 5
        %v4720 = vsel %vm2547, %v4718, %v4719
        %v4721 = vrot.slane %v1102, 5
        %v4722 = vrot.slane %v4721, 4
        %v4723 = vrot.slane %v1103, 5
        %v4724 = vsel %vm2547, %v4722, %v4723
        %v4725 = vrot.slane %v1104, 5
        %v4726 = vrot.slane %v4725, 4
        %v4727 = vrot.slane %v1105, 5
        %v4728 = vsel %vm2547, %v4726, %v4727
        %v4729 = vrot.slane %v1106, 5
        %v4730 = vrot.slane %v4729, 4
        %v4731 = vrot.slane %v1107, 5
        %v4732 = vsel %vm2547, %v4730, %v4731
        %v4733 = vunpack.c.l.b16 %v4704
        %v4734 = vunpack.c.l.b16 %v4708
        %v4735 = vunpack.c.l.b16 %v4712
        %v4736 = vunpack.c.l.b16 %v4716
        %v4737 = vunpack.c.l.b16 %v4720
        %v4738 = vunpack.c.l.b16 %v4724
        %v4739 = vunpack.c.l.b16 %v4728
        %v4740 = vunpack.c.l.b16 %v4732
        %v4741 = vpack.c.b16 %v4734, %v4733
        %v4742 = vpack.c.b16 %v4736, %v4735
        %v4743 = vpack.c.b16 %v4738, %v4737
        %v4744 = vpack.c.b16 %v4740, %v4739
        %4745 = vrot.lane.b32.xlu0 %v2872, 44
        %v4746 = vpop.permute.xlu0 %4745
        %4747 = vrot.lane.b32.xlu0 %v2873, 44
        %v4748 = vpop.permute.xlu0 %4747
        %4749 = vrot.lane.b32.xlu0 %v2874, 44
        %v4750 = vpop.permute.xlu0 %4749
        %4751 = vrot.lane.b32.xlu0 %v2875, 44
        %v4752 = vpop.permute.xlu0 %4751
        %4753 = vrot.lane.b32.xlu0 %v2876, 44
        %v4754 = vpop.permute.xlu0 %4753
        %4755 = vrot.lane.b32.xlu0 %v2877, 44
        %v4756 = vpop.permute.xlu0 %4755
        %4757 = vrot.lane.b32.xlu0 %v2878, 44
        %v4758 = vpop.permute.xlu0 %4757
        %4759 = vrot.lane.b32.xlu0 %v2879, 44
        %v4760 = vpop.permute.xlu0 %4759
        %4761 = vrot.lane.b32.xlu0 %v2880, 44
        %v4762 = vpop.permute.xlu0 %4761
        %4763 = vrot.lane.b32.xlu0 %v2881, 44
        %v4764 = vpop.permute.xlu0 %4763
        %4765 = vrot.lane.b32.xlu0 %v2882, 44
        %v4766 = vpop.permute.xlu0 %4765
        %4767 = vrot.lane.b32.xlu0 %v2883, 44
        %v4768 = vpop.permute.xlu0 %4767
        %4769 = vrot.lane.b32.xlu0 %v2884, 44
        %v4770 = vpop.permute.xlu0 %4769
        %4771 = vrot.lane.b32.xlu0 %v2885, 44
        %v4772 = vpop.permute.xlu0 %4771
        %4773 = vrot.lane.b32.xlu0 %v2886, 44
        %v4774 = vpop.permute.xlu0 %4773
        %4775 = vrot.lane.b32.xlu0 %v2887, 44
        %v4776 = vpop.permute.xlu0 %4775
        %4777 = vrot.lane.b32.xlu0 %v2888, 44
        %v4778 = vpop.permute.xlu0 %4777
        %4779 = vrot.lane.b32.xlu0 %v2889, 44
        %v4780 = vpop.permute.xlu0 %4779
        %4781 = vrot.lane.b32.xlu0 %v2890, 44
        %v4782 = vpop.permute.xlu0 %4781
        %4783 = vrot.lane.b32.xlu0 %v2891, 44
        %v4784 = vpop.permute.xlu0 %4783
        %4785 = vrot.lane.b32.xlu0 %v2892, 44
        %v4786 = vpop.permute.xlu0 %4785
        %4787 = vrot.lane.b32.xlu0 %v2893, 44
        %v4788 = vpop.permute.xlu0 %4787
        %4789 = vrot.lane.b32.xlu0 %v2894, 44
        %v4790 = vpop.permute.xlu0 %4789
        %4791 = vrot.lane.b32.xlu0 %v2895, 44
        %v4792 = vpop.permute.xlu0 %4791
        %4793 = vrot.lane.b32.xlu0 %v2896, 44
        %v4794 = vpop.permute.xlu0 %4793
        %4795 = vrot.lane.b32.xlu0 %v2897, 44
        %v4796 = vpop.permute.xlu0 %4795
        %4797 = vrot.lane.b32.xlu0 %v2898, 44
        %v4798 = vpop.permute.xlu0 %4797
        %4799 = vrot.lane.b32.xlu0 %v2899, 44
        %v4800 = vpop.permute.xlu0 %4799
        %4801 = vrot.lane.b32.xlu0 %v4741, 44
        %v4802 = vpop.permute.xlu0 %4801
        %4803 = vrot.lane.b32.xlu0 %v4742, 44
        %v4804 = vpop.permute.xlu0 %4803
        %4805 = vrot.lane.b32.xlu0 %v4743, 44
        %v4806 = vpop.permute.xlu0 %4805
        %4807 = vrot.lane.b32.xlu0 %v4744, 44
        %v4808 = vpop.permute.xlu0 %4807
        %vm4841 = vcmask 392544
        %4842 = vst.msk [vmem:[#allocation2] sm:$0xff] %vm4841, %v4746
        %4843 = vst.msk [vmem:[#allocation2 + $0x8] sm:$0xff] %vm4841, %v4748
        %4844 = vst.msk [vmem:[#allocation2 + $0x10] sm:$0xff] %vm4841, %v4750
        %4845 = vst.msk [vmem:[#allocation2 + $0x18] sm:$0xff] %vm4841, %v4752
        %4846 = vst.msk [vmem:[#allocation2 + $0x20] sm:$0xff] %vm4841, %v4754
        %4847 = vst.msk [vmem:[#allocation2 + $0x28] sm:$0xff] %vm4841, %v4756
        %4848 = vst.msk [vmem:[#allocation2 + $0x30] sm:$0xff] %vm4841, %v4758
        %4849 = vst.msk [vmem:[#allocation2 + $0x38] sm:$0xff] %vm4841, %v4760
        %4850 = vst.msk [vmem:[#allocation2 + $0x40] sm:$0xff] %vm4841, %v4762
        %4851 = vst.msk [vmem:[#allocation2 + $0x48] sm:$0xff] %vm4841, %v4764
        %4852 = vst.msk [vmem:[#allocation2 + $0x50] sm:$0xff] %vm4841, %v4766
        %4853 = vst.msk [vmem:[#allocation2 + $0x58] sm:$0xff] %vm4841, %v4768
        %4854 = vst.msk [vmem:[#allocation2 + $0x60] sm:$0xff] %vm4841, %v4770
        %4855 = vst.msk [vmem:[#allocation2 + $0x68] sm:$0xff] %vm4841, %v4772
        %4856 = vst.msk [vmem:[#allocation2 + $0x70] sm:$0xff] %vm4841, %v4774
        %4857 = vst.msk [vmem:[#allocation2 + $0x78] sm:$0xff] %vm4841, %v4776
        %4858 = vst.msk [vmem:[#allocation2 + $0x80] sm:$0xff] %vm4841, %v4778
        %4859 = vst.msk [vmem:[#allocation2 + $0x88] sm:$0xff] %vm4841, %v4780
        %4860 = vst.msk [vmem:[#allocation2 + $0x90] sm:$0xff] %vm4841, %v4782
        %4861 = vst.msk [vmem:[#allocation2 + $0x98] sm:$0xff] %vm4841, %v4784
        %4862 = vst.msk [vmem:[#allocation2 + $0xa0] sm:$0xff] %vm4841, %v4786
        %4863 = vst.msk [vmem:[#allocation2 + $0xa8] sm:$0xff] %vm4841, %v4788
        %4864 = vst.msk [vmem:[#allocation2 + $0xb0] sm:$0xff] %vm4841, %v4790
        %4865 = vst.msk [vmem:[#allocation2 + $0xb8] sm:$0xff] %vm4841, %v4792
        %4866 = vst.msk [vmem:[#allocation2 + $0xc0] sm:$0xff] %vm4841, %v4794
        %4867 = vst.msk [vmem:[#allocation2 + $0xc8] sm:$0xff] %vm4841, %v4796
        %4868 = vst.msk [vmem:[#allocation2 + $0xd0] sm:$0xff] %vm4841, %v4798
        %4869 = vst.msk [vmem:[#allocation2 + $0xd8] sm:$0xff] %vm4841, %v4800
        %4870 = vst.msk [vmem:[#allocation2 + $0xe0] sm:$0xff] %vm4841, %v4802
        %4871 = vst.msk [vmem:[#allocation2 + $0xe8] sm:$0xff] %vm4841, %v4804
        %4872 = vst.msk [vmem:[#allocation2 + $0xf0] sm:$0xff] %vm4841, %v4806
        %4873 = vst.msk [vmem:[#allocation2 + $0xf8] sm:$0xff] %vm4841, %v4808
        %v4875 = vunpack.c.l.b16 %v1108
        %v4876 = vpack.c.b16 %v4301, %v4300
        %v4877 = vpack.c.b16 %v4303, %v4302
        %v4878 = vpack.c.b16 %v4305, %v4304
        %v4879 = vpack.c.b16 %v4875, %v4306
        %4880 = vrot.lane.b32.xlu0 %v3049, 48
        %v4881 = vpop.permute.xlu0 %4880
        %4882 = vrot.lane.b32.xlu0 %v3050, 48
        %v4883 = vpop.permute.xlu0 %4882
        %4884 = vrot.lane.b32.xlu0 %v3051, 48
        %v4885 = vpop.permute.xlu0 %4884
        %4886 = vrot.lane.b32.xlu0 %v3052, 48
        %v4887 = vpop.permute.xlu0 %4886
        %4888 = vrot.lane.b32.xlu0 %v3053, 48
        %v4889 = vpop.permute.xlu0 %4888
        %4890 = vrot.lane.b32.xlu0 %v3054, 48
        %v4891 = vpop.permute.xlu0 %4890
        %4892 = vrot.lane.b32.xlu0 %v3055, 48
        %v4893 = vpop.permute.xlu0 %4892
        %4894 = vrot.lane.b32.xlu0 %v3056, 48
        %v4895 = vpop.permute.xlu0 %4894
        %4896 = vrot.lane.b32.xlu0 %v3057, 48
        %v4897 = vpop.permute.xlu0 %4896
        %4898 = vrot.lane.b32.xlu0 %v3058, 48
        %v4899 = vpop.permute.xlu0 %4898
        %4900 = vrot.lane.b32.xlu0 %v3059, 48
        %v4901 = vpop.permute.xlu0 %4900
        %4902 = vrot.lane.b32.xlu0 %v3060, 48
        %v4903 = vpop.permute.xlu0 %4902
        %4904 = vrot.lane.b32.xlu0 %v3061, 48
        %v4905 = vpop.permute.xlu0 %4904
        %4906 = vrot.lane.b32.xlu0 %v3062, 48
        %v4907 = vpop.permute.xlu0 %4906
        %4908 = vrot.lane.b32.xlu0 %v3063, 48
        %v4909 = vpop.permute.xlu0 %4908
        %4910 = vrot.lane.b32.xlu0 %v3064, 48
        %v4911 = vpop.permute.xlu0 %4910
        %4912 = vrot.lane.b32.xlu0 %v3065, 48
        %v4913 = vpop.permute.xlu0 %4912
        %4914 = vrot.lane.b32.xlu0 %v3066, 48
        %v4915 = vpop.permute.xlu0 %4914
        %4916 = vrot.lane.b32.xlu0 %v3067, 48
        %v4917 = vpop.permute.xlu0 %4916
        %4918 = vrot.lane.b32.xlu0 %v3068, 48
        %v4919 = vpop.permute.xlu0 %4918
        %4920 = vrot.lane.b32.xlu0 %v3069, 48
        %v4921 = vpop.permute.xlu0 %4920
        %4922 = vrot.lane.b32.xlu0 %v3070, 48
        %v4923 = vpop.permute.xlu0 %4922
        %4924 = vrot.lane.b32.xlu0 %v3071, 48
        %v4925 = vpop.permute.xlu0 %4924
        %4926 = vrot.lane.b32.xlu0 %v3072, 48
        %v4927 = vpop.permute.xlu0 %4926
        %4928 = vrot.lane.b32.xlu0 %v3073, 48
        %v4929 = vpop.permute.xlu0 %4928
        %4930 = vrot.lane.b32.xlu0 %v3074, 48
        %v4931 = vpop.permute.xlu0 %4930
        %4932 = vrot.lane.b32.xlu0 %v3075, 48
        %v4933 = vpop.permute.xlu0 %4932
        %4934 = vrot.lane.b32.xlu0 %v3076, 48
        %v4935 = vpop.permute.xlu0 %4934
        %4936 = vrot.lane.b32.xlu0 %v4876, 48
        %v4937 = vpop.permute.xlu0 %4936
        %4938 = vrot.lane.b32.xlu0 %v4877, 48
        %v4939 = vpop.permute.xlu0 %4938
        %4940 = vrot.lane.b32.xlu0 %v4878, 48
        %v4941 = vpop.permute.xlu0 %4940
        %4942 = vrot.lane.b32.xlu0 %v4879, 48
        %v4943 = vpop.permute.xlu0 %4942
        %vm4976 = vcmask 425344
        %4977 = vst.msk [vmem:[#allocation2] sm:$0xff] %vm4976, %v4881
        %4978 = vst.msk [vmem:[#allocation2 + $0x8] sm:$0xff] %vm4976, %v4883
        %4979 = vst.msk [vmem:[#allocation2 + $0x10] sm:$0xff] %vm4976, %v4885
        %4980 = vst.msk [vmem:[#allocation2 + $0x18] sm:$0xff] %vm4976, %v4887
        %4981 = vst.msk [vmem:[#allocation2 + $0x20] sm:$0xff] %vm4976, %v4889
        %4982 = vst.msk [vmem:[#allocation2 + $0x28] sm:$0xff] %vm4976, %v4891
        %4983 = vst.msk [vmem:[#allocation2 + $0x30] sm:$0xff] %vm4976, %v4893
        %4984 = vst.msk [vmem:[#allocation2 + $0x38] sm:$0xff] %vm4976, %v4895
        %4985 = vst.msk [vmem:[#allocation2 + $0x40] sm:$0xff] %vm4976, %v4897
        %4986 = vst.msk [vmem:[#allocation2 + $0x48] sm:$0xff] %vm4976, %v4899
        %4987 = vst.msk [vmem:[#allocation2 + $0x50] sm:$0xff] %vm4976, %v4901
        %4988 = vst.msk [vmem:[#allocation2 + $0x58] sm:$0xff] %vm4976, %v4903
        %4989 = vst.msk [vmem:[#allocation2 + $0x60] sm:$0xff] %vm4976, %v4905
        %4990 = vst.msk [vmem:[#allocation2 + $0x68] sm:$0xff] %vm4976, %v4907
        %4991 = vst.msk [vmem:[#allocation2 + $0x70] sm:$0xff] %vm4976, %v4909
        %4992 = vst.msk [vmem:[#allocation2 + $0x78] sm:$0xff] %vm4976, %v4911
        %4993 = vst.msk [vmem:[#allocation2 + $0x80] sm:$0xff] %vm4976, %v4913
        %4994 = vst.msk [vmem:[#allocation2 + $0x88] sm:$0xff] %vm4976, %v4915
        %4995 = vst.msk [vmem:[#allocation2 + $0x90] sm:$0xff] %vm4976, %v4917
        %4996 = vst.msk [vmem:[#allocation2 + $0x98] sm:$0xff] %vm4976, %v4919
        %4997 = vst.msk [vmem:[#allocation2 + $0xa0] sm:$0xff] %vm4976, %v4921
        %4998 = vst.msk [vmem:[#allocation2 + $0xa8] sm:$0xff] %vm4976, %v4923
        %4999 = vst.msk [vmem:[#allocation2 + $0xb0] sm:$0xff] %vm4976, %v4925
        %5000 = vst.msk [vmem:[#allocation2 + $0xb8] sm:$0xff] %vm4976, %v4927
        %5001 = vst.msk [vmem:[#allocation2 + $0xc0] sm:$0xff] %vm4976, %v4929
        %5002 = vst.msk [vmem:[#allocation2 + $0xc8] sm:$0xff] %vm4976, %v4931
        %5003 = vst.msk [vmem:[#allocation2 + $0xd0] sm:$0xff] %vm4976, %v4933
        %5004 = vst.msk [vmem:[#allocation2 + $0xd8] sm:$0xff] %vm4976, %v4935
        %5005 = vst.msk [vmem:[#allocation2 + $0xe0] sm:$0xff] %vm4976, %v4937
        %5006 = vst.msk [vmem:[#allocation2 + $0xe8] sm:$0xff] %vm4976, %v4939
        %5007 = vst.msk [vmem:[#allocation2 + $0xf0] sm:$0xff] %vm4976, %v4941
        %5008 = vst.msk [vmem:[#allocation2 + $0xf8] sm:$0xff] %vm4976, %v4943
        %v5010 = vshrl.u32 %v1108, 16
        %v5012 = vrot.slane %v5010, 4
        %v5013 = vshll.u32 %v1108, 16
        %v5015 = vrot.slane %v5013, 5
        %v5016 = vor.u32 %v5012, %v5015
        %v5017 = vrot.slane %v5016, 4
        %v5019 = vshll.u32 %v1109, 16
        %v5021 = vrot.slane %v5019, 5
        %v5022 = vsel %vm1359, %v5017, %v5021
        %v5023 = vunpack.c.l.b16 %v5022
        %v5024 = vpack.c.b16 %v4554, %v4553
        %v5025 = vpack.c.b16 %v4556, %v4555
        %v5026 = vpack.c.b16 %v4558, %v4557
        %v5027 = vpack.c.b16 %v5023, %v4559
        %5028 = vrot.lane.b32.xlu0 %v3330, 52
        %v5029 = vpop.permute.xlu0 %5028
        %5030 = vrot.lane.b32.xlu0 %v3331, 52
        %v5031 = vpop.permute.xlu0 %5030
        %5032 = vrot.lane.b32.xlu0 %v3332, 52
        %v5033 = vpop.permute.xlu0 %5032
        %5034 = vrot.lane.b32.xlu0 %v3333, 52
        %v5035 = vpop.permute.xlu0 %5034
        %5036 = vrot.lane.b32.xlu0 %v3334, 52
        %v5037 = vpop.permute.xlu0 %5036
        %5038 = vrot.lane.b32.xlu0 %v3335, 52
        %v5039 = vpop.permute.xlu0 %5038
        %5040 = vrot.lane.b32.xlu0 %v3336, 52
        %v5041 = vpop.permute.xlu0 %5040
        %5042 = vrot.lane.b32.xlu0 %v3337, 52
        %v5043 = vpop.permute.xlu0 %5042
        %5044 = vrot.lane.b32.xlu0 %v3338, 52
        %v5045 = vpop.permute.xlu0 %5044
        %5046 = vrot.lane.b32.xlu0 %v3339, 52
        %v5047 = vpop.permute.xlu0 %5046
        %5048 = vrot.lane.b32.xlu0 %v3340, 52
        %v5049 = vpop.permute.xlu0 %5048
        %5050 = vrot.lane.b32.xlu0 %v3341, 52
        %v5051 = vpop.permute.xlu0 %5050
        %5052 = vrot.lane.b32.xlu0 %v3342, 52
        %v5053 = vpop.permute.xlu0 %5052
        %5054 = vrot.lane.b32.xlu0 %v3343, 52
        %v5055 = vpop.permute.xlu0 %5054
        %5056 = vrot.lane.b32.xlu0 %v3344, 52
        %v5057 = vpop.permute.xlu0 %5056
        %5058 = vrot.lane.b32.xlu0 %v3345, 52
        %v5059 = vpop.permute.xlu0 %5058
        %5060 = vrot.lane.b32.xlu0 %v3346, 52
        %v5061 = vpop.permute.xlu0 %5060
        %5062 = vrot.lane.b32.xlu0 %v3347, 52
        %v5063 = vpop.permute.xlu0 %5062
        %5064 = vrot.lane.b32.xlu0 %v3348, 52
        %v5065 = vpop.permute.xlu0 %5064
        %5066 = vrot.lane.b32.xlu0 %v3349, 52
        %v5067 = vpop.permute.xlu0 %5066
        %5068 = vrot.lane.b32.xlu0 %v3350, 52
        %v5069 = vpop.permute.xlu0 %5068
        %5070 = vrot.lane.b32.xlu0 %v3351, 52
        %v5071 = vpop.permute.xlu0 %5070
        %5072 = vrot.lane.b32.xlu0 %v3352, 52
        %v5073 = vpop.permute.xlu0 %5072
        %5074 = vrot.lane.b32.xlu0 %v3353, 52
        %v5075 = vpop.permute.xlu0 %5074
        %5076 = vrot.lane.b32.xlu0 %v3354, 52
        %v5077 = vpop.permute.xlu0 %5076
        %5078 = vrot.lane.b32.xlu0 %v3355, 52
        %v5079 = vpop.permute.xlu0 %5078
        %5080 = vrot.lane.b32.xlu0 %v3356, 52
        %v5081 = vpop.permute.xlu0 %5080
        %5082 = vrot.lane.b32.xlu0 %v3357, 52
        %v5083 = vpop.permute.xlu0 %5082
        %5084 = vrot.lane.b32.xlu0 %v5024, 52
        %v5085 = vpop.permute.xlu0 %5084
        %5086 = vrot.lane.b32.xlu0 %v5025, 52
        %v5087 = vpop.permute.xlu0 %5086
        %5088 = vrot.lane.b32.xlu0 %v5026, 52
        %v5089 = vpop.permute.xlu0 %5088
        %5090 = vrot.lane.b32.xlu0 %v5027, 52
        %v5091 = vpop.permute.xlu0 %5090
        %vm5124 = vcmask 458144
        %5125 = vst.msk [vmem:[#allocation2] sm:$0xff] %vm5124, %v5029
        %5126 = vst.msk [vmem:[#allocation2 + $0x8] sm:$0xff] %vm5124, %v5031
        %5127 = vst.msk [vmem:[#allocation2 + $0x10] sm:$0xff] %vm5124, %v5033
        %5128 = vst.msk [vmem:[#allocation2 + $0x18] sm:$0xff] %vm5124, %v5035
        %5129 = vst.msk [vmem:[#allocation2 + $0x20] sm:$0xff] %vm5124, %v5037
        %5130 = vst.msk [vmem:[#allocation2 + $0x28] sm:$0xff] %vm5124, %v5039
        %5131 = vst.msk [vmem:[#allocation2 + $0x30] sm:$0xff] %vm5124, %v5041
        %5132 = vst.msk [vmem:[#allocation2 + $0x38] sm:$0xff] %vm5124, %v5043
        %5133 = vst.msk [vmem:[#allocation2 + $0x40] sm:$0xff] %vm5124, %v5045
        %5134 = vst.msk [vmem:[#allocation2 + $0x48] sm:$0xff] %vm5124, %v5047
        %5135 = vst.msk [vmem:[#allocation2 + $0x50] sm:$0xff] %vm5124, %v5049
        %5136 = vst.msk [vmem:[#allocation2 + $0x58] sm:$0xff] %vm5124, %v5051
        %5137 = vst.msk [vmem:[#allocation2 + $0x60] sm:$0xff] %vm5124, %v5053
        %5138 = vst.msk [vmem:[#allocation2 + $0x68] sm:$0xff] %vm5124, %v5055
        %5139 = vst.msk [vmem:[#allocation2 + $0x70] sm:$0xff] %vm5124, %v5057
        %5140 = vst.msk [vmem:[#allocation2 + $0x78] sm:$0xff] %vm5124, %v5059
        %5141 = vst.msk [vmem:[#allocation2 + $0x80] sm:$0xff] %vm5124, %v5061
        %5142 = vst.msk [vmem:[#allocation2 + $0x88] sm:$0xff] %vm5124, %v5063
        %5143 = vst.msk [vmem:[#allocation2 + $0x90] sm:$0xff] %vm5124, %v5065
        %5144 = vst.msk [vmem:[#allocation2 + $0x98] sm:$0xff] %vm5124, %v5067
        %5145 = vst.msk [vmem:[#allocation2 + $0xa0] sm:$0xff] %vm5124, %v5069
        %5146 = vst.msk [vmem:[#allocation2 + $0xa8] sm:$0xff] %vm5124, %v5071
        %5147 = vst.msk [vmem:[#allocation2 + $0xb0] sm:$0xff] %vm5124, %v5073
        %5148 = vst.msk [vmem:[#allocation2 + $0xb8] sm:$0xff] %vm5124, %v5075
        %5149 = vst.msk [vmem:[#allocation2 + $0xc0] sm:$0xff] %vm5124, %v5077
        %5150 = vst.msk [vmem:[#allocation2 + $0xc8] sm:$0xff] %vm5124, %v5079
        %5151 = vst.msk [vmem:[#allocation2 + $0xd0] sm:$0xff] %vm5124, %v5081
        %5152 = vst.msk [vmem:[#allocation2 + $0xd8] sm:$0xff] %vm5124, %v5083
        %5153 = vst.msk [vmem:[#allocation2 + $0xe0] sm:$0xff] %vm5124, %v5085
        %5154 = vst.msk [vmem:[#allocation2 + $0xe8] sm:$0xff] %vm5124, %v5087
        %5155 = vst.msk [vmem:[#allocation2 + $0xf0] sm:$0xff] %vm5124, %v5089
        %5156 = vst.msk [vmem:[#allocation2 + $0xf8] sm:$0xff] %vm5124, %v5091
        %v5158 = vrot.slane %v1108, 5
        %v5159 = vrot.slane %v5158, 4
        %v5160 = vrot.slane %v1109, 5
        %v5161 = vsel %vm2547, %v5159, %v5160
        %v5162 = vunpack.c.l.b16 %v5161
        %v5163 = vpack.c.b16 %v4735, %v4734
        %v5164 = vpack.c.b16 %v4737, %v4736
        %v5165 = vpack.c.b16 %v4739, %v4738
        %v5166 = vpack.c.b16 %v5162, %v4740
        %5167 = vrot.lane.b32.xlu0 %v3539, 56
        %v5168 = vpop.permute.xlu0 %5167
        %5169 = vrot.lane.b32.xlu0 %v3540, 56
        %v5170 = vpop.permute.xlu0 %5169
        %5171 = vrot.lane.b32.xlu0 %v3541, 56
        %v5172 = vpop.permute.xlu0 %5171
        %5173 = vrot.lane.b32.xlu0 %v3542, 56
        %v5174 = vpop.permute.xlu0 %5173
        %5175 = vrot.lane.b32.xlu0 %v3543, 56
        %v5176 = vpop.permute.xlu0 %5175
        %5177 = vrot.lane.b32.xlu0 %v3544, 56
        %v5178 = vpop.permute.xlu0 %5177
        %5179 = vrot.lane.b32.xlu0 %v3545, 56
        %v5180 = vpop.permute.xlu0 %5179
        %5181 = vrot.lane.b32.xlu0 %v3546, 56
        %v5182 = vpop.permute.xlu0 %5181
        %5183 = vrot.lane.b32.xlu0 %v3547, 56
        %v5184 = vpop.permute.xlu0 %5183
        %5185 = vrot.lane.b32.xlu0 %v3548, 56
        %v5186 = vpop.permute.xlu0 %5185
        %5187 = vrot.lane.b32.xlu0 %v3549, 56
        %v5188 = vpop.permute.xlu0 %5187
        %5189 = vrot.lane.b32.xlu0 %v3550, 56
        %v5190 = vpop.permute.xlu0 %5189
        %5191 = vrot.lane.b32.xlu0 %v3551, 56
        %v5192 = vpop.permute.xlu0 %5191
        %5193 = vrot.lane.b32.xlu0 %v3552, 56
        %v5194 = vpop.permute.xlu0 %5193
        %5195 = vrot.lane.b32.xlu0 %v3553, 56
        %v5196 = vpop.permute.xlu0 %5195
        %5197 = vrot.lane.b32.xlu0 %v3554, 56
        %v5198 = vpop.permute.xlu0 %5197
        %5199 = vrot.lane.b32.xlu0 %v3555, 56
        %v5200 = vpop.permute.xlu0 %5199
        %5201 = vrot.lane.b32.xlu0 %v3556, 56
        %v5202 = vpop.permute.xlu0 %5201
        %5203 = vrot.lane.b32.xlu0 %v3557, 56
        %v5204 = vpop.permute.xlu0 %5203
        %5205 = vrot.lane.b32.xlu0 %v3558, 56
        %v5206 = vpop.permute.xlu0 %5205
        %5207 = vrot.lane.b32.xlu0 %v3559, 56
        %v5208 = vpop.permute.xlu0 %5207
        %5209 = vrot.lane.b32.xlu0 %v3560, 56
        %v5210 = vpop.permute.xlu0 %5209
        %5211 = vrot.lane.b32.xlu0 %v3561, 56
        %v5212 = vpop.permute.xlu0 %5211
        %5213 = vrot.lane.b32.xlu0 %v3562, 56
        %v5214 = vpop.permute.xlu0 %5213
        %5215 = vrot.lane.b32.xlu0 %v3563, 56
        %v5216 = vpop.permute.xlu0 %5215
        %5217 = vrot.lane.b32.xlu0 %v3564, 56
        %v5218 = vpop.permute.xlu0 %5217
        %5219 = vrot.lane.b32.xlu0 %v3565, 56
        %v5220 = vpop.permute.xlu0 %5219
        %5221 = vrot.lane.b32.xlu0 %v3566, 56
        %v5222 = vpop.permute.xlu0 %5221
        %5223 = vrot.lane.b32.xlu0 %v5163, 56
        %v5224 = vpop.permute.xlu0 %5223
        %5225 = vrot.lane.b32.xlu0 %v5164, 56
        %v5226 = vpop.permute.xlu0 %5225
        %5227 = vrot.lane.b32.xlu0 %v5165, 56
        %v5228 = vpop.permute.xlu0 %5227
        %5229 = vrot.lane.b32.xlu0 %v5166, 56
        %v5230 = vpop.permute.xlu0 %5229
        %vm5263 = vcmask 490944
        %5264 = vst.msk [vmem:[#allocation2] sm:$0xff] %vm5263, %v5168
        %5265 = vst.msk [vmem:[#allocation2 + $0x8] sm:$0xff] %vm5263, %v5170
        %5266 = vst.msk [vmem:[#allocation2 + $0x10] sm:$0xff] %vm5263, %v5172
        %5267 = vst.msk [vmem:[#allocation2 + $0x18] sm:$0xff] %vm5263, %v5174
        %5268 = vst.msk [vmem:[#allocation2 + $0x20] sm:$0xff] %vm5263, %v5176
        %5269 = vst.msk [vmem:[#allocation2 + $0x28] sm:$0xff] %vm5263, %v5178
        %5270 = vst.msk [vmem:[#allocation2 + $0x30] sm:$0xff] %vm5263, %v5180
        %5271 = vst.msk [vmem:[#allocation2 + $0x38] sm:$0xff] %vm5263, %v5182
        %5272 = vst.msk [vmem:[#allocation2 + $0x40] sm:$0xff] %vm5263, %v5184
        %5273 = vst.msk [vmem:[#allocation2 + $0x48] sm:$0xff] %vm5263, %v5186
        %5274 = vst.msk [vmem:[#allocation2 + $0x50] sm:$0xff] %vm5263, %v5188
        %5275 = vst.msk [vmem:[#allocation2 + $0x58] sm:$0xff] %vm5263, %v5190
        %5276 = vst.msk [vmem:[#allocation2 + $0x60] sm:$0xff] %vm5263, %v5192
        %5277 = vst.msk [vmem:[#allocation2 + $0x68] sm:$0xff] %vm5263, %v5194
        %5278 = vst.msk [vmem:[#allocation2 + $0x70] sm:$0xff] %vm5263, %v5196
        %5279 = vst.msk [vmem:[#allocation2 + $0x78] sm:$0xff] %vm5263, %v5198
        %5280 = vst.msk [vmem:[#allocation2 + $0x80] sm:$0xff] %vm5263, %v5200
        %5281 = vst.msk [vmem:[#allocation2 + $0x88] sm:$0xff] %vm5263, %v5202
        %5282 = vst.msk [vmem:[#allocation2 + $0x90] sm:$0xff] %vm5263, %v5204
        %5283 = vst.msk [vmem:[#allocation2 + $0x98] sm:$0xff] %vm5263, %v5206
        %5284 = vst.msk [vmem:[#allocation2 + $0xa0] sm:$0xff] %vm5263, %v5208
        %5285 = vst.msk [vmem:[#allocation2 + $0xa8] sm:$0xff] %vm5263, %v5210
        %5286 = vst.msk [vmem:[#allocation2 + $0xb0] sm:$0xff] %vm5263, %v5212
        %5287 = vst.msk [vmem:[#allocation2 + $0xb8] sm:$0xff] %vm5263, %v5214
        %5288 = vst.msk [vmem:[#allocation2 + $0xc0] sm:$0xff] %vm5263, %v5216
        %5289 = vst.msk [vmem:[#allocation2 + $0xc8] sm:$0xff] %vm5263, %v5218
        %5290 = vst.msk [vmem:[#allocation2 + $0xd0] sm:$0xff] %vm5263, %v5220
        %5291 = vst.msk [vmem:[#allocation2 + $0xd8] sm:$0xff] %vm5263, %v5222
        %5292 = vst.msk [vmem:[#allocation2 + $0xe0] sm:$0xff] %vm5263, %v5224
        %5293 = vst.msk [vmem:[#allocation2 + $0xe8] sm:$0xff] %vm5263, %v5226
        %5294 = vst.msk [vmem:[#allocation2 + $0xf0] sm:$0xff] %vm5263, %v5228
        %5295 = vst.msk [vmem:[#allocation2 + $0xf8] sm:$0xff] %vm5263, %v5230
        %v5297 = vunpack.c.l.b16 %v1110
        %v5298 = vpack.c.b16 %v5297, %v4875
        %5299 = vrot.lane.b32.xlu0 %v1265, 60
        %v5300 = vpop.permute.xlu0 %5299
        %5301 = vrot.lane.b32.xlu0 %v1266, 60
        %v5302 = vpop.permute.xlu0 %5301
        %5303 = vrot.lane.b32.xlu0 %v1267, 60
        %v5304 = vpop.permute.xlu0 %5303
        %5305 = vrot.lane.b32.xlu0 %v3713, 60
        %v5306 = vpop.permute.xlu0 %5305
        %5307 = vrot.lane.b32.xlu0 %v1269, 60
        %v5308 = vpop.permute.xlu0 %5307
        %5309 = vrot.lane.b32.xlu0 %v1270, 60
        %v5310 = vpop.permute.xlu0 %5309
        %5311 = vrot.lane.b32.xlu0 %v1271, 60
        %v5312 = vpop.permute.xlu0 %5311
        %5313 = vrot.lane.b32.xlu0 %v3714, 60
        %v5314 = vpop.permute.xlu0 %5313
        %5315 = vrot.lane.b32.xlu0 %v1273, 60
        %v5316 = vpop.permute.xlu0 %5315
        %5317 = vrot.lane.b32.xlu0 %v1274, 60
        %v5318 = vpop.permute.xlu0 %5317
        %5319 = vrot.lane.b32.xlu0 %v1275, 60
        %v5320 = vpop.permute.xlu0 %5319
        %5321 = vrot.lane.b32.xlu0 %v3715, 60
        %v5322 = vpop.permute.xlu0 %5321
        %5323 = vrot.lane.b32.xlu0 %v1277, 60
        %v5324 = vpop.permute.xlu0 %5323
        %5325 = vrot.lane.b32.xlu0 %v1278, 60
        %v5326 = vpop.permute.xlu0 %5325
        %5327 = vrot.lane.b32.xlu0 %v1279, 60
        %v5328 = vpop.permute.xlu0 %5327
        %5329 = vrot.lane.b32.xlu0 %v3716, 60
        %v5330 = vpop.permute.xlu0 %5329
        %5331 = vrot.lane.b32.xlu0 %v1281, 60
        %v5332 = vpop.permute.xlu0 %5331
        %5333 = vrot.lane.b32.xlu0 %v1282, 60
        %v5334 = vpop.permute.xlu0 %5333
        %5335 = vrot.lane.b32.xlu0 %v1283, 60
        %v5336 = vpop.permute.xlu0 %5335
        %5337 = vrot.lane.b32.xlu0 %v3717, 60
        %v5338 = vpop.permute.xlu0 %5337
        %5339 = vrot.lane.b32.xlu0 %v1285, 60
        %v5340 = vpop.permute.xlu0 %5339
        %5341 = vrot.lane.b32.xlu0 %v1286, 60
        %v5342 = vpop.permute.xlu0 %5341
        %5343 = vrot.lane.b32.xlu0 %v1287, 60
        %v5344 = vpop.permute.xlu0 %5343
        %5345 = vrot.lane.b32.xlu0 %v3718, 60
        %v5346 = vpop.permute.xlu0 %5345
        %5347 = vrot.lane.b32.xlu0 %v1289, 60
        %v5348 = vpop.permute.xlu0 %5347
        %5349 = vrot.lane.b32.xlu0 %v1290, 60
        %v5350 = vpop.permute.xlu0 %5349
        %5351 = vrot.lane.b32.xlu0 %v1291, 60
        %v5352 = vpop.permute.xlu0 %5351
        %5353 = vrot.lane.b32.xlu0 %v3719, 60
        %v5354 = vpop.permute.xlu0 %5353
        %5355 = vrot.lane.b32.xlu0 %v4308, 60
        %v5356 = vpop.permute.xlu0 %5355
        %5357 = vrot.lane.b32.xlu0 %v4309, 60
        %v5358 = vpop.permute.xlu0 %5357
        %5359 = vrot.lane.b32.xlu0 %v4310, 60
        %v5360 = vpop.permute.xlu0 %5359
        %5361 = vrot.lane.b32.xlu0 %v5298, 60
        %v5362 = vpop.permute.xlu0 %5361
        %vm5395 = vcmask 523744
        %5396 = vst.msk [vmem:[#allocation2] sm:$0xff] %vm5395, %v5300
        %5397 = vst.msk [vmem:[#allocation2 + $0x8] sm:$0xff] %vm5395, %v5302
        %5398 = vst.msk [vmem:[#allocation2 + $0x10] sm:$0xff] %vm5395, %v5304
        %5399 = vst.msk [vmem:[#allocation2 + $0x18] sm:$0xff] %vm5395, %v5306
        %5400 = vst.msk [vmem:[#allocation2 + $0x20] sm:$0xff] %vm5395, %v5308
        %5401 = vst.msk [vmem:[#allocation2 + $0x28] sm:$0xff] %vm5395, %v5310
        %5402 = vst.msk [vmem:[#allocation2 + $0x30] sm:$0xff] %vm5395, %v5312
        %5403 = vst.msk [vmem:[#allocation2 + $0x38] sm:$0xff] %vm5395, %v5314
        %5404 = vst.msk [vmem:[#allocation2 + $0x40] sm:$0xff] %vm5395, %v5316
        %5405 = vst.msk [vmem:[#allocation2 + $0x48] sm:$0xff] %vm5395, %v5318
        %5406 = vst.msk [vmem:[#allocation2 + $0x50] sm:$0xff] %vm5395, %v5320
        %5407 = vst.msk [vmem:[#allocation2 + $0x58] sm:$0xff] %vm5395, %v5322
        %5408 = vst.msk [vmem:[#allocation2 + $0x60] sm:$0xff] %vm5395, %v5324
        %5409 = vst.msk [vmem:[#allocation2 + $0x68] sm:$0xff] %vm5395, %v5326
        %5410 = vst.msk [vmem:[#allocation2 + $0x70] sm:$0xff] %vm5395, %v5328
        %5411 = vst.msk [vmem:[#allocation2 + $0x78] sm:$0xff] %vm5395, %v5330
        %5412 = vst.msk [vmem:[#allocation2 + $0x80] sm:$0xff] %vm5395, %v5332
        %5413 = vst.msk [vmem:[#allocation2 + $0x88] sm:$0xff] %vm5395, %v5334
        %5414 = vst.msk [vmem:[#allocation2 + $0x90] sm:$0xff] %vm5395, %v5336
        %5415 = vst.msk [vmem:[#allocation2 + $0x98] sm:$0xff] %vm5395, %v5338
        %5416 = vst.msk [vmem:[#allocation2 + $0xa0] sm:$0xff] %vm5395, %v5340
        %5417 = vst.msk [vmem:[#allocation2 + $0xa8] sm:$0xff] %vm5395, %v5342
        %5418 = vst.msk [vmem:[#allocation2 + $0xb0] sm:$0xff] %vm5395, %v5344
        %5419 = vst.msk [vmem:[#allocation2 + $0xb8] sm:$0xff] %vm5395, %v5346
        %5420 = vst.msk [vmem:[#allocation2 + $0xc0] sm:$0xff] %vm5395, %v5348
        %5421 = vst.msk [vmem:[#allocation2 + $0xc8] sm:$0xff] %vm5395, %v5350
        %5422 = vst.msk [vmem:[#allocation2 + $0xd0] sm:$0xff] %vm5395, %v5352
        %5423 = vst.msk [vmem:[#allocation2 + $0xd8] sm:$0xff] %vm5395, %v5354
        %5424 = vst.msk [vmem:[#allocation2 + $0xe0] sm:$0xff] %vm5395, %v5356
        %5425 = vst.msk [vmem:[#allocation2 + $0xe8] sm:$0xff] %vm5395, %v5358
        %5426 = vst.msk [vmem:[#allocation2 + $0xf0] sm:$0xff] %vm5395, %v5360
        %5427 = vst.msk [vmem:[#allocation2 + $0xf8] sm:$0xff] %vm5395, %v5362
        %v5429 = vshrl.u32 %v1110, 16
        %v5431 = vrot.slane %v5429, 4
        %v5432 = vshll.u32 %v1110, 16
        %v5434 = vrot.slane %v5432, 5
        %v5435 = vor.u32 %v5431, %v5434
        %v5436 = vrot.slane %v5435, 4
        %v5438 = vshll.u32 %v1111, 16
        %v5440 = vrot.slane %v5438, 5
        %v5441 = vsel %vm1359, %v5436, %v5440
        %v5442 = vunpack.c.l.b16 %v5441
        %v5443 = vpack.c.b16 %v5442, %v5023
        %5444 = vrot.lane.b32.xlu0 %v2325, 64
        %v5445 = vpop.permute.xlu0 %5444
        %5446 = vrot.lane.b32.xlu0 %v2326, 64
        %v5447 = vpop.permute.xlu0 %5446
        %5448 = vrot.lane.b32.xlu0 %v2327, 64
        %v5449 = vpop.permute.xlu0 %5448
        %5450 = vrot.lane.b32.xlu0 %v3970, 64
        %v5451 = vpop.permute.xlu0 %5450
        %5452 = vrot.lane.b32.xlu0 %v2329, 64
        %v5453 = vpop.permute.xlu0 %5452
        %5454 = vrot.lane.b32.xlu0 %v2330, 64
        %v5455 = vpop.permute.xlu0 %5454
        %5456 = vrot.lane.b32.xlu0 %v2331, 64
        %v5457 = vpop.permute.xlu0 %5456
        %5458 = vrot.lane.b32.xlu0 %v3971, 64
        %v5459 = vpop.permute.xlu0 %5458
        %5460 = vrot.lane.b32.xlu0 %v2333, 64
        %v5461 = vpop.permute.xlu0 %5460
        %5462 = vrot.lane.b32.xlu0 %v2334, 64
        %v5463 = vpop.permute.xlu0 %5462
        %5464 = vrot.lane.b32.xlu0 %v2335, 64
        %v5465 = vpop.permute.xlu0 %5464
        %5466 = vrot.lane.b32.xlu0 %v3972, 64
        %v5467 = vpop.permute.xlu0 %5466
        %5468 = vrot.lane.b32.xlu0 %v2337, 64
        %v5469 = vpop.permute.xlu0 %5468
        %5470 = vrot.lane.b32.xlu0 %v2338, 64
        %v5471 = vpop.permute.xlu0 %5470
        %5472 = vrot.lane.b32.xlu0 %v2339, 64
        %v5473 = vpop.permute.xlu0 %5472
        %5474 = vrot.lane.b32.xlu0 %v3973, 64
        %v5475 = vpop.permute.xlu0 %5474
        %5476 = vrot.lane.b32.xlu0 %v2341, 64
        %v5477 = vpop.permute.xlu0 %5476
        %5478 = vrot.lane.b32.xlu0 %v2342, 64
        %v5479 = vpop.permute.xlu0 %5478
        %5480 = vrot.lane.b32.xlu0 %v2343, 64
        %v5481 = vpop.permute.xlu0 %5480
        %5482 = vrot.lane.b32.xlu0 %v3974, 64
        %v5483 = vpop.permute.xlu0 %5482
        %5484 = vrot.lane.b32.xlu0 %v2345, 64
        %v5485 = vpop.permute.xlu0 %5484
        %5486 = vrot.lane.b32.xlu0 %v2346, 64
        %v5487 = vpop.permute.xlu0 %5486
        %5488 = vrot.lane.b32.xlu0 %v2347, 64
        %v5489 = vpop.permute.xlu0 %5488
        %5490 = vrot.lane.b32.xlu0 %v3975, 64
        %v5491 = vpop.permute.xlu0 %5490
        %5492 = vrot.lane.b32.xlu0 %v2349, 64
        %v5493 = vpop.permute.xlu0 %5492
        %5494 = vrot.lane.b32.xlu0 %v2350, 64
        %v5495 = vpop.permute.xlu0 %5494
        %5496 = vrot.lane.b32.xlu0 %v2351, 64
        %v5497 = vpop.permute.xlu0 %5496
        %5498 = vrot.lane.b32.xlu0 %v3976, 64
        %v5499 = vpop.permute.xlu0 %5498
        %5500 = vrot.lane.b32.xlu0 %v4561, 64
        %v5501 = vpop.permute.xlu0 %5500
        %5502 = vrot.lane.b32.xlu0 %v4562, 64
        %v5503 = vpop.permute.xlu0 %5502
        %5504 = vrot.lane.b32.xlu0 %v4563, 64
        %v5505 = vpop.permute.xlu0 %5504
        %5506 = vrot.lane.b32.xlu0 %v5443, 64
        %v5507 = vpop.permute.xlu0 %5506
        %vm5540 = vcmask 556544
        %5541 = vst.msk [vmem:[#allocation2] sm:$0xff] %vm5540, %v5445
        %5542 = vst.msk [vmem:[#allocation2 + $0x8] sm:$0xff] %vm5540, %v5447
        %5543 = vst.msk [vmem:[#allocation2 + $0x10] sm:$0xff] %vm5540, %v5449
        %5544 = vst.msk [vmem:[#allocation2 + $0x18] sm:$0xff] %vm5540, %v5451
        %5545 = vst.msk [vmem:[#allocation2 + $0x20] sm:$0xff] %vm5540, %v5453
        %5546 = vst.msk [vmem:[#allocation2 + $0x28] sm:$0xff] %vm5540, %v5455
        %5547 = vst.msk [vmem:[#allocation2 + $0x30] sm:$0xff] %vm5540, %v5457
        %5548 = vst.msk [vmem:[#allocation2 + $0x38] sm:$0xff] %vm5540, %v5459
        %5549 = vst.msk [vmem:[#allocation2 + $0x40] sm:$0xff] %vm5540, %v5461
        %5550 = vst.msk [vmem:[#allocation2 + $0x48] sm:$0xff] %vm5540, %v5463
        %5551 = vst.msk [vmem:[#allocation2 + $0x50] sm:$0xff] %vm5540, %v5465
        %5552 = vst.msk [vmem:[#allocation2 + $0x58] sm:$0xff] %vm5540, %v5467
        %5553 = vst.msk [vmem:[#allocation2 + $0x60] sm:$0xff] %vm5540, %v5469
        %5554 = vst.msk [vmem:[#allocation2 + $0x68] sm:$0xff] %vm5540, %v5471
        %5555 = vst.msk [vmem:[#allocation2 + $0x70] sm:$0xff] %vm5540, %v5473
        %5556 = vst.msk [vmem:[#allocation2 + $0x78] sm:$0xff] %vm5540, %v5475
        %5557 = vst.msk [vmem:[#allocation2 + $0x80] sm:$0xff] %vm5540, %v5477
        %5558 = vst.msk [vmem:[#allocation2 + $0x88] sm:$0xff] %vm5540, %v5479
        %5559 = vst.msk [vmem:[#allocation2 + $0x90] sm:$0xff] %vm5540, %v5481
        %5560 = vst.msk [vmem:[#allocation2 + $0x98] sm:$0xff] %vm5540, %v5483
        %5561 = vst.msk [vmem:[#allocation2 + $0xa0] sm:$0xff] %vm5540, %v5485
        %5562 = vst.msk [vmem:[#allocation2 + $0xa8] sm:$0xff] %vm5540, %v5487
        %5563 = vst.msk [vmem:[#allocation2 + $0xb0] sm:$0xff] %vm5540, %v5489
        %5564 = vst.msk [vmem:[#allocation2 + $0xb8] sm:$0xff] %vm5540, %v5491
        %5565 = vst.msk [vmem:[#allocation2 + $0xc0] sm:$0xff] %vm5540, %v5493
        %5566 = vst.msk [vmem:[#allocation2 + $0xc8] sm:$0xff] %vm5540, %v5495
        %5567 = vst.msk [vmem:[#allocation2 + $0xd0] sm:$0xff] %vm5540, %v5497
        %5568 = vst.msk [vmem:[#allocation2 + $0xd8] sm:$0xff] %vm5540, %v5499
        %5569 = vst.msk [vmem:[#allocation2 + $0xe0] sm:$0xff] %vm5540, %v5501
        %5570 = vst.msk [vmem:[#allocation2 + $0xe8] sm:$0xff] %vm5540, %v5503
        %5571 = vst.msk [vmem:[#allocation2 + $0xf0] sm:$0xff] %vm5540, %v5505
        %5572 = vst.msk [vmem:[#allocation2 + $0xf8] sm:$0xff] %vm5540, %v5507
        %v5574 = vrot.slane %v1110, 5
        %v5575 = vrot.slane %v5574, 4
        %v5576 = vrot.slane %v1111, 5
        %v5577 = vsel %vm2547, %v5575, %v5576
        %v5578 = vunpack.c.l.b16 %v5577
        %v5579 = vpack.c.b16 %v5578, %v5162
        %5580 = vrot.lane.b32.xlu0 %v2873, 68
        %v5581 = vpop.permute.xlu0 %5580
        %5582 = vrot.lane.b32.xlu0 %v2874, 68
        %v5583 = vpop.permute.xlu0 %5582
        %5584 = vrot.lane.b32.xlu0 %v2875, 68
        %v5585 = vpop.permute.xlu0 %5584
        %5586 = vrot.lane.b32.xlu0 %v4155, 68
        %v5587 = vpop.permute.xlu0 %5586
        %5588 = vrot.lane.b32.xlu0 %v2877, 68
        %v5589 = vpop.permute.xlu0 %5588
        %5590 = vrot.lane.b32.xlu0 %v2878, 68
        %v5591 = vpop.permute.xlu0 %5590
        %5592 = vrot.lane.b32.xlu0 %v2879, 68
        %v5593 = vpop.permute.xlu0 %5592
        %5594 = vrot.lane.b32.xlu0 %v4156, 68
        %v5595 = vpop.permute.xlu0 %5594
        %5596 = vrot.lane.b32.xlu0 %v2881, 68
        %v5597 = vpop.permute.xlu0 %5596
        %5598 = vrot.lane.b32.xlu0 %v2882, 68
        %v5599 = vpop.permute.xlu0 %5598
        %5600 = vrot.lane.b32.xlu0 %v2883, 68
        %v5601 = vpop.permute.xlu0 %5600
        %5602 = vrot.lane.b32.xlu0 %v4157, 68
        %v5603 = vpop.permute.xlu0 %5602
        %5604 = vrot.lane.b32.xlu0 %v2885, 68
        %v5605 = vpop.permute.xlu0 %5604
        %5606 = vrot.lane.b32.xlu0 %v2886, 68
        %v5607 = vpop.permute.xlu0 %5606
        %5608 = vrot.lane.b32.xlu0 %v2887, 68
        %v5609 = vpop.permute.xlu0 %5608
        %5610 = vrot.lane.b32.xlu0 %v4158, 68
        %v5611 = vpop.permute.xlu0 %5610
        %5612 = vrot.lane.b32.xlu0 %v2889, 68
        %v5613 = vpop.permute.xlu0 %5612
        %5614 = vrot.lane.b32.xlu0 %v2890, 68
        %v5615 = vpop.permute.xlu0 %5614
        %5616 = vrot.lane.b32.xlu0 %v2891, 68
        %v5617 = vpop.permute.xlu0 %5616
        %5618 = vrot.lane.b32.xlu0 %v4159, 68
        %v5619 = vpop.permute.xlu0 %5618
        %5620 = vrot.lane.b32.xlu0 %v2893, 68
        %v5621 = vpop.permute.xlu0 %5620
        %5622 = vrot.lane.b32.xlu0 %v2894, 68
        %v5623 = vpop.permute.xlu0 %5622
        %5624 = vrot.lane.b32.xlu0 %v2895, 68
        %v5625 = vpop.permute.xlu0 %5624
        %5626 = vrot.lane.b32.xlu0 %v4160, 68
        %v5627 = vpop.permute.xlu0 %5626
        %5628 = vrot.lane.b32.xlu0 %v2897, 68
        %v5629 = vpop.permute.xlu0 %5628
        %5630 = vrot.lane.b32.xlu0 %v2898, 68
        %v5631 = vpop.permute.xlu0 %5630
        %5632 = vrot.lane.b32.xlu0 %v2899, 68
        %v5633 = vpop.permute.xlu0 %5632
        %5634 = vrot.lane.b32.xlu0 %v4161, 68
        %v5635 = vpop.permute.xlu0 %5634
        %5636 = vrot.lane.b32.xlu0 %v4742, 68
        %v5637 = vpop.permute.xlu0 %5636
        %5638 = vrot.lane.b32.xlu0 %v4743, 68
        %v5639 = vpop.permute.xlu0 %5638
        %5640 = vrot.lane.b32.xlu0 %v4744, 68
        %v5641 = vpop.permute.xlu0 %5640
        %5642 = vrot.lane.b32.xlu0 %v5579, 68
        %v5643 = vpop.permute.xlu0 %5642
        %vm5676 = vcmask 589344
        %5677 = vst.msk [vmem:[#allocation2] sm:$0xff] %vm5676, %v5581
        %5678 = vst.msk [vmem:[#allocation2 + $0x8] sm:$0xff] %vm5676, %v5583
        %5679 = vst.msk [vmem:[#allocation2 + $0x10] sm:$0xff] %vm5676, %v5585
        %5680 = vst.msk [vmem:[#allocation2 + $0x18] sm:$0xff] %vm5676, %v5587
        %5681 = vst.msk [vmem:[#allocation2 + $0x20] sm:$0xff] %vm5676, %v5589
        %5682 = vst.msk [vmem:[#allocation2 + $0x28] sm:$0xff] %vm5676, %v5591
        %5683 = vst.msk [vmem:[#allocation2 + $0x30] sm:$0xff] %vm5676, %v5593
        %5684 = vst.msk [vmem:[#allocation2 + $0x38] sm:$0xff] %vm5676, %v5595
        %5685 = vst.msk [vmem:[#allocation2 + $0x40] sm:$0xff] %vm5676, %v5597
        %5686 = vst.msk [vmem:[#allocation2 + $0x48] sm:$0xff] %vm5676, %v5599
        %5687 = vst.msk [vmem:[#allocation2 + $0x50] sm:$0xff] %vm5676, %v5601
        %5688 = vst.msk [vmem:[#allocation2 + $0x58] sm:$0xff] %vm5676, %v5603
        %5689 = vst.msk [vmem:[#allocation2 + $0x60] sm:$0xff] %vm5676, %v5605
        %5690 = vst.msk [vmem:[#allocation2 + $0x68] sm:$0xff] %vm5676, %v5607
        %5691 = vst.msk [vmem:[#allocation2 + $0x70] sm:$0xff] %vm5676, %v5609
        %5692 = vst.msk [vmem:[#allocation2 + $0x78] sm:$0xff] %vm5676, %v5611
        %5693 = vst.msk [vmem:[#allocation2 + $0x80] sm:$0xff] %vm5676, %v5613
        %5694 = vst.msk [vmem:[#allocation2 + $0x88] sm:$0xff] %vm5676, %v5615
        %5695 = vst.msk [vmem:[#allocation2 + $0x90] sm:$0xff] %vm5676, %v5617
        %5696 = vst.msk [vmem:[#allocation2 + $0x98] sm:$0xff] %vm5676, %v5619
        %5697 = vst.msk [vmem:[#allocation2 + $0xa0] sm:$0xff] %vm5676, %v5621
        %5698 = vst.msk [vmem:[#allocation2 + $0xa8] sm:$0xff] %vm5676, %v5623
        %5699 = vst.msk [vmem:[#allocation2 + $0xb0] sm:$0xff] %vm5676, %v5625
        %5700 = vst.msk [vmem:[#allocation2 + $0xb8] sm:$0xff] %vm5676, %v5627
        %5701 = vst.msk [vmem:[#allocation2 + $0xc0] sm:$0xff] %vm5676, %v5629
        %5702 = vst.msk [vmem:[#allocation2 + $0xc8] sm:$0xff] %vm5676, %v5631
        %5703 = vst.msk [vmem:[#allocation2 + $0xd0] sm:$0xff] %vm5676, %v5633
        %5704 = vst.msk [vmem:[#allocation2 + $0xd8] sm:$0xff] %vm5676, %v5635
        %5705 = vst.msk [vmem:[#allocation2 + $0xe0] sm:$0xff] %vm5676, %v5637
        %5706 = vst.msk [vmem:[#allocation2 + $0xe8] sm:$0xff] %vm5676, %v5639
        %5707 = vst.msk [vmem:[#allocation2 + $0xf0] sm:$0xff] %vm5676, %v5641
        %5708 = vst.msk [vmem:[#allocation2 + $0xf8] sm:$0xff] %vm5676, %v5643
        %v5717 = vunpack.c.l.b16 %v1112
        %v5718 = vunpack.c.l.b16 %v1114
        %v5719 = vunpack.c.l.b16 %v1116
        %v5720 = vunpack.c.l.b16 %v1118
        %v5721 = vunpack.c.l.b16 %v1120
        %v5722 = vunpack.c.l.b16 %v1122
        %v5723 = vunpack.c.l.b16 %v1124
        %v5724 = vunpack.c.l.b16 %v1126
        %v5725 = vpack.c.b16 %v5718, %v5717
        %v5726 = vpack.c.b16 %v5720, %v5719
        %v5727 = vpack.c.b16 %v5722, %v5721
        %v5728 = vpack.c.b16 %v5724, %v5723
        %5729 = vrot.lane.b32.xlu0 %v1268, 72
        %v5730 = vpop.permute.xlu0 %5729
        %5731 = vrot.lane.b32.xlu0 %v1269, 72
        %v5732 = vpop.permute.xlu0 %5731
        %5733 = vrot.lane.b32.xlu0 %v1270, 72
        %v5734 = vpop.permute.xlu0 %5733
        %5735 = vrot.lane.b32.xlu0 %v1271, 72
        %v5736 = vpop.permute.xlu0 %5735
        %5737 = vrot.lane.b32.xlu0 %v1272, 72
        %v5738 = vpop.permute.xlu0 %5737
        %5739 = vrot.lane.b32.xlu0 %v1273, 72
        %v5740 = vpop.permute.xlu0 %5739
        %5741 = vrot.lane.b32.xlu0 %v1274, 72
        %v5742 = vpop.permute.xlu0 %5741
        %5743 = vrot.lane.b32.xlu0 %v1275, 72
        %v5744 = vpop.permute.xlu0 %5743
        %5745 = vrot.lane.b32.xlu0 %v1276, 72
        %v5746 = vpop.permute.xlu0 %5745
        %5747 = vrot.lane.b32.xlu0 %v1277, 72
        %v5748 = vpop.permute.xlu0 %5747
        %5749 = vrot.lane.b32.xlu0 %v1278, 72
        %v5750 = vpop.permute.xlu0 %5749
        %5751 = vrot.lane.b32.xlu0 %v1279, 72
        %v5752 = vpop.permute.xlu0 %5751
        %5753 = vrot.lane.b32.xlu0 %v1280, 72
        %v5754 = vpop.permute.xlu0 %5753
        %5755 = vrot.lane.b32.xlu0 %v1281, 72
        %v5756 = vpop.permute.xlu0 %5755
        %5757 = vrot.lane.b32.xlu0 %v1282, 72
        %v5758 = vpop.permute.xlu0 %5757
        %5759 = vrot.lane.b32.xlu0 %v1283, 72
        %v5760 = vpop.permute.xlu0 %5759
        %5761 = vrot.lane.b32.xlu0 %v1284, 72
        %v5762 = vpop.permute.xlu0 %5761
        %5763 = vrot.lane.b32.xlu0 %v1285, 72
        %v5764 = vpop.permute.xlu0 %5763
        %5765 = vrot.lane.b32.xlu0 %v1286, 72
        %v5766 = vpop.permute.xlu0 %5765
        %5767 = vrot.lane.b32.xlu0 %v1287, 72
        %v5768 = vpop.permute.xlu0 %5767
        %5769 = vrot.lane.b32.xlu0 %v1288, 72
        %v5770 = vpop.permute.xlu0 %5769
        %5771 = vrot.lane.b32.xlu0 %v1289, 72
        %v5772 = vpop.permute.xlu0 %5771
        %5773 = vrot.lane.b32.xlu0 %v1290, 72
        %v5774 = vpop.permute.xlu0 %5773
        %5775 = vrot.lane.b32.xlu0 %v1291, 72
        %v5776 = vpop.permute.xlu0 %5775
        %5777 = vrot.lane.b32.xlu0 %v4307, 72
        %v5778 = vpop.permute.xlu0 %5777
        %5779 = vrot.lane.b32.xlu0 %v4308, 72
        %v5780 = vpop.permute.xlu0 %5779
        %5781 = vrot.lane.b32.xlu0 %v4309, 72
        %v5782 = vpop.permute.xlu0 %5781
        %5783 = vrot.lane.b32.xlu0 %v4310, 72
        %v5784 = vpop.permute.xlu0 %5783
        %5785 = vrot.lane.b32.xlu0 %v5725, 72
        %v5786 = vpop.permute.xlu0 %5785
        %5787 = vrot.lane.b32.xlu0 %v5726, 72
        %v5788 = vpop.permute.xlu0 %5787
        %5789 = vrot.lane.b32.xlu0 %v5727, 72
        %v5790 = vpop.permute.xlu0 %5789
        %5791 = vrot.lane.b32.xlu0 %v5728, 72
        %v5792 = vpop.permute.xlu0 %5791
        %vm5825 = vcmask 622144
        %5826 = vst.msk [vmem:[#allocation2] sm:$0xff] %vm5825, %v5730
        %5827 = vst.msk [vmem:[#allocation2 + $0x8] sm:$0xff] %vm5825, %v5732
        %5828 = vst.msk [vmem:[#allocation2 + $0x10] sm:$0xff] %vm5825, %v5734
        %5829 = vst.msk [vmem:[#allocation2 + $0x18] sm:$0xff] %vm5825, %v5736
        %5830 = vst.msk [vmem:[#allocation2 + $0x20] sm:$0xff] %vm5825, %v5738
        %5831 = vst.msk [vmem:[#allocation2 + $0x28] sm:$0xff] %vm5825, %v5740
        %5832 = vst.msk [vmem:[#allocation2 + $0x30] sm:$0xff] %vm5825, %v5742
        %5833 = vst.msk [vmem:[#allocation2 + $0x38] sm:$0xff] %vm5825, %v5744
        %5834 = vst.msk [vmem:[#allocation2 + $0x40] sm:$0xff] %vm5825, %v5746
        %5835 = vst.msk [vmem:[#allocation2 + $0x48] sm:$0xff] %vm5825, %v5748
        %5836 = vst.msk [vmem:[#allocation2 + $0x50] sm:$0xff] %vm5825, %v5750
        %5837 = vst.msk [vmem:[#allocation2 + $0x58] sm:$0xff] %vm5825, %v5752
        %5838 = vst.msk [vmem:[#allocation2 + $0x60] sm:$0xff] %vm5825, %v5754
        %5839 = vst.msk [vmem:[#allocation2 + $0x68] sm:$0xff] %vm5825, %v5756
        %5840 = vst.msk [vmem:[#allocation2 + $0x70] sm:$0xff] %vm5825, %v5758
        %5841 = vst.msk [vmem:[#allocation2 + $0x78] sm:$0xff] %vm5825, %v5760
        %5842 = vst.msk [vmem:[#allocation2 + $0x80] sm:$0xff] %vm5825, %v5762
        %5843 = vst.msk [vmem:[#allocation2 + $0x88] sm:$0xff] %vm5825, %v5764
        %5844 = vst.msk [vmem:[#allocation2 + $0x90] sm:$0xff] %vm5825, %v5766
        %5845 = vst.msk [vmem:[#allocation2 + $0x98] sm:$0xff] %vm5825, %v5768
        %5846 = vst.msk [vmem:[#allocation2 + $0xa0] sm:$0xff] %vm5825, %v5770
        %5847 = vst.msk [vmem:[#allocation2 + $0xa8] sm:$0xff] %vm5825, %v5772
        %5848 = vst.msk [vmem:[#allocation2 + $0xb0] sm:$0xff] %vm5825, %v5774
        %5849 = vst.msk [vmem:[#allocation2 + $0xb8] sm:$0xff] %vm5825, %v5776
        %5850 = vst.msk [vmem:[#allocation2 + $0xc0] sm:$0xff] %vm5825, %v5778
        %5851 = vst.msk [vmem:[#allocation2 + $0xc8] sm:$0xff] %vm5825, %v5780
        %5852 = vst.msk [vmem:[#allocation2 + $0xd0] sm:$0xff] %vm5825, %v5782
        %5853 = vst.msk [vmem:[#allocation2 + $0xd8] sm:$0xff] %vm5825, %v5784
        %5854 = vst.msk [vmem:[#allocation2 + $0xe0] sm:$0xff] %vm5825, %v5786
        %5855 = vst.msk [vmem:[#allocation2 + $0xe8] sm:$0xff] %vm5825, %v5788
        %5856 = vst.msk [vmem:[#allocation2 + $0xf0] sm:$0xff] %vm5825, %v5790
        %5857 = vst.msk [vmem:[#allocation2 + $0xf8] sm:$0xff] %vm5825, %v5792
        %v5859 = vshrl.u32 %v1112, 16
        %v5861 = vrot.slane %v5859, 4
        %v5862 = vshll.u32 %v1112, 16
        %v5864 = vrot.slane %v5862, 5
        %v5865 = vor.u32 %v5861, %v5864
        %v5866 = vrot.slane %v5865, 4
        %v5868 = vshll.u32 %v1113, 16
        %v5870 = vrot.slane %v5868, 5
        %v5871 = vsel %vm1359, %v5866, %v5870
        %v5873 = vshrl.u32 %v1114, 16
        %v5875 = vrot.slane %v5873, 4
        %v5876 = vshll.u32 %v1114, 16
        %v5878 = vrot.slane %v5876, 5
        %v5879 = vor.u32 %v5875, %v5878
        %v5880 = vrot.slane %v5879, 4
        %v5882 = vshll.u32 %v1115, 16
        %v5884 = vrot.slane %v5882, 5
        %v5885 = vsel %vm1359, %v5880, %v5884
        %v5887 = vshrl.u32 %v1116, 16
        %v5889 = vrot.slane %v5887, 4
        %v5890 = vshll.u32 %v1116, 16
        %v5892 = vrot.slane %v5890, 5
        %v5893 = vor.u32 %v5889, %v5892
        %v5894 = vrot.slane %v5893, 4
        %v5896 = vshll.u32 %v1117, 16
        %v5898 = vrot.slane %v5896, 5
        %v5899 = vsel %vm1359, %v5894, %v5898
        %v5901 = vshrl.u32 %v1118, 16
        %v5903 = vrot.slane %v5901, 4
        %v5904 = vshll.u32 %v1118, 16
        %v5906 = vrot.slane %v5904, 5
        %v5907 = vor.u32 %v5903, %v5906
        %v5908 = vrot.slane %v5907, 4
        %v5910 = vshll.u32 %v1119, 16
        %v5912 = vrot.slane %v5910, 5
        %v5913 = vsel %vm1359, %v5908, %v5912
        %v5915 = vshrl.u32 %v1120, 16
        %v5917 = vrot.slane %v5915, 4
        %v5918 = vshll.u32 %v1120, 16
        %v5920 = vrot.slane %v5918, 5
        %v5921 = vor.u32 %v5917, %v5920
        %v5922 = vrot.slane %v5921, 4
        %v5924 = vshll.u32 %v1121, 16
        %v5926 = vrot.slane %v5924, 5
        %v5927 = vsel %vm1359, %v5922, %v5926
        %v5929 = vshrl.u32 %v1122, 16
        %v5931 = vrot.slane %v5929, 4
        %v5932 = vshll.u32 %v1122, 16
        %v5934 = vrot.slane %v5932, 5
        %v5935 = vor.u32 %v5931, %v5934
        %v5936 = vrot.slane %v5935, 4
        %v5938 = vshll.u32 %v1123, 16
        %v5940 = vrot.slane %v5938, 5
        %v5941 = vsel %vm1359, %v5936, %v5940
        %v5943 = vshrl.u32 %v1124, 16
        %v5945 = vrot.slane %v5943, 4
        %v5946 = vshll.u32 %v1124, 16
        %v5948 = vrot.slane %v5946, 5
        %v5949 = vor.u32 %v5945, %v5948
        %v5950 = vrot.slane %v5949, 4
        %v5952 = vshll.u32 %v1125, 16
        %v5954 = vrot.slane %v5952, 5
        %v5955 = vsel %vm1359, %v5950, %v5954
        %v5957 = vshrl.u32 %v1126, 16
        %v5959 = vrot.slane %v5957, 4
        %v5960 = vshll.u32 %v1126, 16
        %v5962 = vrot.slane %v5960, 5
        %v5963 = vor.u32 %v5959, %v5962
        %v5964 = vrot.slane %v5963, 4
        %v5966 = vshll.u32 %v1127, 16
        %v5968 = vrot.slane %v5966, 5
        %v5969 = vsel %vm1359, %v5964, %v5968
        %v5970 = vunpack.c.l.b16 %v5871
        %v5971 = vunpack.c.l.b16 %v5885
        %v5972 = vunpack.c.l.b16 %v5899
        %v5973 = vunpack.c.l.b16 %v5913
        %v5974 = vunpack.c.l.b16 %v5927
        %v5975 = vunpack.c.l.b16 %v5941
        %v5976 = vunpack.c.l.b16 %v5955
        %v5977 = vunpack.c.l.b16 %v5969
        %v5978 = vpack.c.b16 %v5971, %v5970
        %v5979 = vpack.c.b16 %v5973, %v5972
        %v5980 = vpack.c.b16 %v5975, %v5974
        %v5981 = vpack.c.b16 %v5977, %v5976
        %5982 = vrot.lane.b32.xlu0 %v2328, 76
        %v5983 = vpop.permute.xlu0 %5982
        %5984 = vrot.lane.b32.xlu0 %v2329, 76
        %v5985 = vpop.permute.xlu0 %5984
        %5986 = vrot.lane.b32.xlu0 %v2330, 76
        %v5987 = vpop.permute.xlu0 %5986
        %5988 = vrot.lane.b32.xlu0 %v2331, 76
        %v5989 = vpop.permute.xlu0 %5988
        %5990 = vrot.lane.b32.xlu0 %v2332, 76
        %v5991 = vpop.permute.xlu0 %5990
        %5992 = vrot.lane.b32.xlu0 %v2333, 76
        %v5993 = vpop.permute.xlu0 %5992
        %5994 = vrot.lane.b32.xlu0 %v2334, 76
        %v5995 = vpop.permute.xlu0 %5994
        %5996 = vrot.lane.b32.xlu0 %v2335, 76
        %v5997 = vpop.permute.xlu0 %5996
        %5998 = vrot.lane.b32.xlu0 %v2336, 76
        %v5999 = vpop.permute.xlu0 %5998
        %6000 = vrot.lane.b32.xlu0 %v2337, 76
        %v6001 = vpop.permute.xlu0 %6000
        %6002 = vrot.lane.b32.xlu0 %v2338, 76
        %v6003 = vpop.permute.xlu0 %6002
        %6004 = vrot.lane.b32.xlu0 %v2339, 76
        %v6005 = vpop.permute.xlu0 %6004
        %6006 = vrot.lane.b32.xlu0 %v2340, 76
        %v6007 = vpop.permute.xlu0 %6006
        %6008 = vrot.lane.b32.xlu0 %v2341, 76
        %v6009 = vpop.permute.xlu0 %6008
        %6010 = vrot.lane.b32.xlu0 %v2342, 76
        %v6011 = vpop.permute.xlu0 %6010
        %6012 = vrot.lane.b32.xlu0 %v2343, 76
        %v6013 = vpop.permute.xlu0 %6012
        %6014 = vrot.lane.b32.xlu0 %v2344, 76
        %v6015 = vpop.permute.xlu0 %6014
        %6016 = vrot.lane.b32.xlu0 %v2345, 76
        %v6017 = vpop.permute.xlu0 %6016
        %6018 = vrot.lane.b32.xlu0 %v2346, 76
        %v6019 = vpop.permute.xlu0 %6018
        %6020 = vrot.lane.b32.xlu0 %v2347, 76
        %v6021 = vpop.permute.xlu0 %6020
        %6022 = vrot.lane.b32.xlu0 %v2348, 76
        %v6023 = vpop.permute.xlu0 %6022
        %6024 = vrot.lane.b32.xlu0 %v2349, 76
        %v6025 = vpop.permute.xlu0 %6024
        %6026 = vrot.lane.b32.xlu0 %v2350, 76
        %v6027 = vpop.permute.xlu0 %6026
        %6028 = vrot.lane.b32.xlu0 %v2351, 76
        %v6029 = vpop.permute.xlu0 %6028
        %6030 = vrot.lane.b32.xlu0 %v4560, 76
        %v6031 = vpop.permute.xlu0 %6030
        %6032 = vrot.lane.b32.xlu0 %v4561, 76
        %v6033 = vpop.permute.xlu0 %6032
        %6034 = vrot.lane.b32.xlu0 %v4562, 76
        %v6035 = vpop.permute.xlu0 %6034
        %6036 = vrot.lane.b32.xlu0 %v4563, 76
        %v6037 = vpop.permute.xlu0 %6036
        %6038 = vrot.lane.b32.xlu0 %v5978, 76
        %v6039 = vpop.permute.xlu0 %6038
        %6040 = vrot.lane.b32.xlu0 %v5979, 76
        %v6041 = vpop.permute.xlu0 %6040
        %6042 = vrot.lane.b32.xlu0 %v5980, 76
        %v6043 = vpop.permute.xlu0 %6042
        %6044 = vrot.lane.b32.xlu0 %v5981, 76
        %v6045 = vpop.permute.xlu0 %6044
        %vm6078 = vcmask 654944
        %6079 = vst.msk [vmem:[#allocation2] sm:$0xff] %vm6078, %v5983
        %6080 = vst.msk [vmem:[#allocation2 + $0x8] sm:$0xff] %vm6078, %v5985
        %6081 = vst.msk [vmem:[#allocation2 + $0x10] sm:$0xff] %vm6078, %v5987
        %6082 = vst.msk [vmem:[#allocation2 + $0x18] sm:$0xff] %vm6078, %v5989
        %6083 = vst.msk [vmem:[#allocation2 + $0x20] sm:$0xff] %vm6078, %v5991
        %6084 = vst.msk [vmem:[#allocation2 + $0x28] sm:$0xff] %vm6078, %v5993
        %6085 = vst.msk [vmem:[#allocation2 + $0x30] sm:$0xff] %vm6078, %v5995
        %6086 = vst.msk [vmem:[#allocation2 + $0x38] sm:$0xff] %vm6078, %v5997
        %6087 = vst.msk [vmem:[#allocation2 + $0x40] sm:$0xff] %vm6078, %v5999
        %6088 = vst.msk [vmem:[#allocation2 + $0x48] sm:$0xff] %vm6078, %v6001
        %6089 = vst.msk [vmem:[#allocation2 + $0x50] sm:$0xff] %vm6078, %v6003
        %6090 = vst.msk [vmem:[#allocation2 + $0x58] sm:$0xff] %vm6078, %v6005
        %6091 = vst.msk [vmem:[#allocation2 + $0x60] sm:$0xff] %vm6078, %v6007
        %6092 = vst.msk [vmem:[#allocation2 + $0x68] sm:$0xff] %vm6078, %v6009
        %6093 = vst.msk [vmem:[#allocation2 + $0x70] sm:$0xff] %vm6078, %v6011
        %6094 = vst.msk [vmem:[#allocation2 + $0x78] sm:$0xff] %vm6078, %v6013
        %6095 = vst.msk [vmem:[#allocation2 + $0x80] sm:$0xff] %vm6078, %v6015
        %6096 = vst.msk [vmem:[#allocation2 + $0x88] sm:$0xff] %vm6078, %v6017
        %6097 = vst.msk [vmem:[#allocation2 + $0x90] sm:$0xff] %vm6078, %v6019
        %6098 = vst.msk [vmem:[#allocation2 + $0x98] sm:$0xff] %vm6078, %v6021
        %6099 = vst.msk [vmem:[#allocation2 + $0xa0] sm:$0xff] %vm6078, %v6023
        %6100 = vst.msk [vmem:[#allocation2 + $0xa8] sm:$0xff] %vm6078, %v6025
        %6101 = vst.msk [vmem:[#allocation2 + $0xb0] sm:$0xff] %vm6078, %v6027
        %6102 = vst.msk [vmem:[#allocation2 + $0xb8] sm:$0xff] %vm6078, %v6029
        %6103 = vst.msk [vmem:[#allocation2 + $0xc0] sm:$0xff] %vm6078, %v6031
        %6104 = vst.msk [vmem:[#allocation2 + $0xc8] sm:$0xff] %vm6078, %v6033
        %6105 = vst.msk [vmem:[#allocation2 + $0xd0] sm:$0xff] %vm6078, %v6035
        %6106 = vst.msk [vmem:[#allocation2 + $0xd8] sm:$0xff] %vm6078, %v6037
        %6107 = vst.msk [vmem:[#allocation2 + $0xe0] sm:$0xff] %vm6078, %v6039
        %6108 = vst.msk [vmem:[#allocation2 + $0xe8] sm:$0xff] %vm6078, %v6041
        %6109 = vst.msk [vmem:[#allocation2 + $0xf0] sm:$0xff] %vm6078, %v6043
        %6110 = vst.msk [vmem:[#allocation2 + $0xf8] sm:$0xff] %vm6078, %v6045
        %v6119 = vrot.slane %v1112, 5
        %v6120 = vrot.slane %v6119, 4
        %v6121 = vrot.slane %v1113, 5
        %v6122 = vsel %vm2547, %v6120, %v6121
        %v6123 = vrot.slane %v1114, 5
        %v6124 = vrot.slane %v6123, 4
        %v6125 = vrot.slane %v1115, 5
        %v6126 = vsel %vm2547, %v6124, %v6125
        %v6127 = vrot.slane %v1116, 5
        %v6128 = vrot.slane %v6127, 4
        %v6129 = vrot.slane %v1117, 5
        %v6130 = vsel %vm2547, %v6128, %v6129
        %v6131 = vrot.slane %v1118, 5
        %v6132 = vrot.slane %v6131, 4
        %v6133 = vrot.slane %v1119, 5
        %v6134 = vsel %vm2547, %v6132, %v6133
        %v6135 = vrot.slane %v1120, 5
        %v6136 = vrot.slane %v6135, 4
        %v6137 = vrot.slane %v1121, 5
        %v6138 = vsel %vm2547, %v6136, %v6137
        %v6139 = vrot.slane %v1122, 5
        %v6140 = vrot.slane %v6139, 4
        %v6141 = vrot.slane %v1123, 5
        %v6142 = vsel %vm2547, %v6140, %v6141
        %v6143 = vrot.slane %v1124, 5
        %v6144 = vrot.slane %v6143, 4
        %v6145 = vrot.slane %v1125, 5
        %v6146 = vsel %vm2547, %v6144, %v6145
        %v6147 = vrot.slane %v1126, 5
        %v6148 = vrot.slane %v6147, 4
        %v6149 = vrot.slane %v1127, 5
        %v6150 = vsel %vm2547, %v6148, %v6149
        %v6151 = vunpack.c.l.b16 %v6122
        %v6152 = vunpack.c.l.b16 %v6126
        %v6153 = vunpack.c.l.b16 %v6130
        %v6154 = vunpack.c.l.b16 %v6134
        %v6155 = vunpack.c.l.b16 %v6138
        %v6156 = vunpack.c.l.b16 %v6142
        %v6157 = vunpack.c.l.b16 %v6146
        %v6158 = vunpack.c.l.b16 %v6150
        %v6159 = vpack.c.b16 %v6152, %v6151
        %v6160 = vpack.c.b16 %v6154, %v6153
        %v6161 = vpack.c.b16 %v6156, %v6155
        %v6162 = vpack.c.b16 %v6158, %v6157
        %6163 = vrot.lane.b32.xlu0 %v2876, 80
        %v6164 = vpop.permute.xlu0 %6163
        %6165 = vrot.lane.b32.xlu0 %v2877, 80
        %v6166 = vpop.permute.xlu0 %6165
        %6167 = vrot.lane.b32.xlu0 %v2878, 80
        %v6168 = vpop.permute.xlu0 %6167
        %6169 = vrot.lane.b32.xlu0 %v2879, 80
        %v6170 = vpop.permute.xlu0 %6169
        %6171 = vrot.lane.b32.xlu0 %v2880, 80
        %v6172 = vpop.permute.xlu0 %6171
        %6173 = vrot.lane.b32.xlu0 %v2881, 80
        %v6174 = vpop.permute.xlu0 %6173
        %6175 = vrot.lane.b32.xlu0 %v2882, 80
        %v6176 = vpop.permute.xlu0 %6175
        %6177 = vrot.lane.b32.xlu0 %v2883, 80
        %v6178 = vpop.permute.xlu0 %6177
        %6179 = vrot.lane.b32.xlu0 %v2884, 80
        %v6180 = vpop.permute.xlu0 %6179
        %6181 = vrot.lane.b32.xlu0 %v2885, 80
        %v6182 = vpop.permute.xlu0 %6181
        %6183 = vrot.lane.b32.xlu0 %v2886, 80
        %v6184 = vpop.permute.xlu0 %6183
        %6185 = vrot.lane.b32.xlu0 %v2887, 80
        %v6186 = vpop.permute.xlu0 %6185
        %6187 = vrot.lane.b32.xlu0 %v2888, 80
        %v6188 = vpop.permute.xlu0 %6187
        %6189 = vrot.lane.b32.xlu0 %v2889, 80
        %v6190 = vpop.permute.xlu0 %6189
        %6191 = vrot.lane.b32.xlu0 %v2890, 80
        %v6192 = vpop.permute.xlu0 %6191
        %6193 = vrot.lane.b32.xlu0 %v2891, 80
        %v6194 = vpop.permute.xlu0 %6193
        %6195 = vrot.lane.b32.xlu0 %v2892, 80
        %v6196 = vpop.permute.xlu0 %6195
        %6197 = vrot.lane.b32.xlu0 %v2893, 80
        %v6198 = vpop.permute.xlu0 %6197
        %6199 = vrot.lane.b32.xlu0 %v2894, 80
        %v6200 = vpop.permute.xlu0 %6199
        %6201 = vrot.lane.b32.xlu0 %v2895, 80
        %v6202 = vpop.permute.xlu0 %6201
        %6203 = vrot.lane.b32.xlu0 %v2896, 80
        %v6204 = vpop.permute.xlu0 %6203
        %6205 = vrot.lane.b32.xlu0 %v2897, 80
        %v6206 = vpop.permute.xlu0 %6205
        %6207 = vrot.lane.b32.xlu0 %v2898, 80
        %v6208 = vpop.permute.xlu0 %6207
        %6209 = vrot.lane.b32.xlu0 %v2899, 80
        %v6210 = vpop.permute.xlu0 %6209
        %6211 = vrot.lane.b32.xlu0 %v4741, 80
        %v6212 = vpop.permute.xlu0 %6211
        %6213 = vrot.lane.b32.xlu0 %v4742, 80
        %v6214 = vpop.permute.xlu0 %6213
        %6215 = vrot.lane.b32.xlu0 %v4743, 80
        %v6216 = vpop.permute.xlu0 %6215
        %6217 = vrot.lane.b32.xlu0 %v4744, 80
        %v6218 = vpop.permute.xlu0 %6217
        %6219 = vrot.lane.b32.xlu0 %v6159, 80
        %v6220 = vpop.permute.xlu0 %6219
        %6221 = vrot.lane.b32.xlu0 %v6160, 80
        %v6222 = vpop.permute.xlu0 %6221
        %6223 = vrot.lane.b32.xlu0 %v6161, 80
        %v6224 = vpop.permute.xlu0 %6223
        %6225 = vrot.lane.b32.xlu0 %v6162, 80
        %v6226 = vpop.permute.xlu0 %6225
        %vm6259 = vcmask 687744
        %6260 = vst.msk [vmem:[#allocation2] sm:$0xff] %vm6259, %v6164
        %6261 = vst.msk [vmem:[#allocation2 + $0x8] sm:$0xff] %vm6259, %v6166
        %6262 = vst.msk [vmem:[#allocation2 + $0x10] sm:$0xff] %vm6259, %v6168
        %6263 = vst.msk [vmem:[#allocation2 + $0x18] sm:$0xff] %vm6259, %v6170
        %6264 = vst.msk [vmem:[#allocation2 + $0x20] sm:$0xff] %vm6259, %v6172
        %6265 = vst.msk [vmem:[#allocation2 + $0x28] sm:$0xff] %vm6259, %v6174
        %6266 = vst.msk [vmem:[#allocation2 + $0x30] sm:$0xff] %vm6259, %v6176
        %6267 = vst.msk [vmem:[#allocation2 + $0x38] sm:$0xff] %vm6259, %v6178
        %6268 = vst.msk [vmem:[#allocation2 + $0x40] sm:$0xff] %vm6259, %v6180
        %6269 = vst.msk [vmem:[#allocation2 + $0x48] sm:$0xff] %vm6259, %v6182
        %6270 = vst.msk [vmem:[#allocation2 + $0x50] sm:$0xff] %vm6259, %v6184
        %6271 = vst.msk [vmem:[#allocation2 + $0x58] sm:$0xff] %vm6259, %v6186
        %6272 = vst.msk [vmem:[#allocation2 + $0x60] sm:$0xff] %vm6259, %v6188
        %6273 = vst.msk [vmem:[#allocation2 + $0x68] sm:$0xff] %vm6259, %v6190
        %6274 = vst.msk [vmem:[#allocation2 + $0x70] sm:$0xff] %vm6259, %v6192
        %6275 = vst.msk [vmem:[#allocation2 + $0x78] sm:$0xff] %vm6259, %v6194
        %6276 = vst.msk [vmem:[#allocation2 + $0x80] sm:$0xff] %vm6259, %v6196
        %6277 = vst.msk [vmem:[#allocation2 + $0x88] sm:$0xff] %vm6259, %v6198
        %6278 = vst.msk [vmem:[#allocation2 + $0x90] sm:$0xff] %vm6259, %v6200
        %6279 = vst.msk [vmem:[#allocation2 + $0x98] sm:$0xff] %vm6259, %v6202
        %6280 = vst.msk [vmem:[#allocation2 + $0xa0] sm:$0xff] %vm6259, %v6204
        %6281 = vst.msk [vmem:[#allocation2 + $0xa8] sm:$0xff] %vm6259, %v6206
        %6282 = vst.msk [vmem:[#allocation2 + $0xb0] sm:$0xff] %vm6259, %v6208
        %6283 = vst.msk [vmem:[#allocation2 + $0xb8] sm:$0xff] %vm6259, %v6210
        %6284 = vst.msk [vmem:[#allocation2 + $0xc0] sm:$0xff] %vm6259, %v6212
        %6285 = vst.msk [vmem:[#allocation2 + $0xc8] sm:$0xff] %vm6259, %v6214
        %6286 = vst.msk [vmem:[#allocation2 + $0xd0] sm:$0xff] %vm6259, %v6216
        %6287 = vst.msk [vmem:[#allocation2 + $0xd8] sm:$0xff] %vm6259, %v6218
        %6288 = vst.msk [vmem:[#allocation2 + $0xe0] sm:$0xff] %vm6259, %v6220
        %6289 = vst.msk [vmem:[#allocation2 + $0xe8] sm:$0xff] %vm6259, %v6222
        %6290 = vst.msk [vmem:[#allocation2 + $0xf0] sm:$0xff] %vm6259, %v6224
        %6291 = vst.msk [vmem:[#allocation2 + $0xf8] sm:$0xff] %vm6259, %v6226
        %v6293 = vunpack.c.l.b16 %v1128
        %v6294 = vpack.c.b16 %v5719, %v5718
        %v6295 = vpack.c.b16 %v5721, %v5720
        %v6296 = vpack.c.b16 %v5723, %v5722
        %v6297 = vpack.c.b16 %v6293, %v5724
        %6298 = vrot.lane.b32.xlu0 %v3053, 84
        %v6299 = vpop.permute.xlu0 %6298
        %6300 = vrot.lane.b32.xlu0 %v3054, 84
        %v6301 = vpop.permute.xlu0 %6300
        %6302 = vrot.lane.b32.xlu0 %v3055, 84
        %v6303 = vpop.permute.xlu0 %6302
        %6304 = vrot.lane.b32.xlu0 %v3056, 84
        %v6305 = vpop.permute.xlu0 %6304
        %6306 = vrot.lane.b32.xlu0 %v3057, 84
        %v6307 = vpop.permute.xlu0 %6306
        %6308 = vrot.lane.b32.xlu0 %v3058, 84
        %v6309 = vpop.permute.xlu0 %6308
        %6310 = vrot.lane.b32.xlu0 %v3059, 84
        %v6311 = vpop.permute.xlu0 %6310
        %6312 = vrot.lane.b32.xlu0 %v3060, 84
        %v6313 = vpop.permute.xlu0 %6312
        %6314 = vrot.lane.b32.xlu0 %v3061, 84
        %v6315 = vpop.permute.xlu0 %6314
        %6316 = vrot.lane.b32.xlu0 %v3062, 84
        %v6317 = vpop.permute.xlu0 %6316
        %6318 = vrot.lane.b32.xlu0 %v3063, 84
        %v6319 = vpop.permute.xlu0 %6318
        %6320 = vrot.lane.b32.xlu0 %v3064, 84
        %v6321 = vpop.permute.xlu0 %6320
        %6322 = vrot.lane.b32.xlu0 %v3065, 84
        %v6323 = vpop.permute.xlu0 %6322
        %6324 = vrot.lane.b32.xlu0 %v3066, 84
        %v6325 = vpop.permute.xlu0 %6324
        %6326 = vrot.lane.b32.xlu0 %v3067, 84
        %v6327 = vpop.permute.xlu0 %6326
        %6328 = vrot.lane.b32.xlu0 %v3068, 84
        %v6329 = vpop.permute.xlu0 %6328
        %6330 = vrot.lane.b32.xlu0 %v3069, 84
        %v6331 = vpop.permute.xlu0 %6330
        %6332 = vrot.lane.b32.xlu0 %v3070, 84
        %v6333 = vpop.permute.xlu0 %6332
        %6334 = vrot.lane.b32.xlu0 %v3071, 84
        %v6335 = vpop.permute.xlu0 %6334
        %6336 = vrot.lane.b32.xlu0 %v3072, 84
        %v6337 = vpop.permute.xlu0 %6336
        %6338 = vrot.lane.b32.xlu0 %v3073, 84
        %v6339 = vpop.permute.xlu0 %6338
        %6340 = vrot.lane.b32.xlu0 %v3074, 84
        %v6341 = vpop.permute.xlu0 %6340
        %6342 = vrot.lane.b32.xlu0 %v3075, 84
        %v6343 = vpop.permute.xlu0 %6342
        %6344 = vrot.lane.b32.xlu0 %v3076, 84
        %v6345 = vpop.permute.xlu0 %6344
        %6346 = vrot.lane.b32.xlu0 %v4876, 84
        %v6347 = vpop.permute.xlu0 %6346
        %6348 = vrot.lane.b32.xlu0 %v4877, 84
        %v6349 = vpop.permute.xlu0 %6348
        %6350 = vrot.lane.b32.xlu0 %v4878, 84
        %v6351 = vpop.permute.xlu0 %6350
        %6352 = vrot.lane.b32.xlu0 %v4879, 84
        %v6353 = vpop.permute.xlu0 %6352
        %6354 = vrot.lane.b32.xlu0 %v6294, 84
        %v6355 = vpop.permute.xlu0 %6354
        %6356 = vrot.lane.b32.xlu0 %v6295, 84
        %v6357 = vpop.permute.xlu0 %6356
        %6358 = vrot.lane.b32.xlu0 %v6296, 84
        %v6359 = vpop.permute.xlu0 %6358
        %6360 = vrot.lane.b32.xlu0 %v6297, 84
        %v6361 = vpop.permute.xlu0 %6360
        %vm6394 = vcmask 720544
        %6395 = vst.msk [vmem:[#allocation2] sm:$0xff] %vm6394, %v6299
        %6396 = vst.msk [vmem:[#allocation2 + $0x8] sm:$0xff] %vm6394, %v6301
        %6397 = vst.msk [vmem:[#allocation2 + $0x10] sm:$0xff] %vm6394, %v6303
        %6398 = vst.msk [vmem:[#allocation2 + $0x18] sm:$0xff] %vm6394, %v6305
        %6399 = vst.msk [vmem:[#allocation2 + $0x20] sm:$0xff] %vm6394, %v6307
        %6400 = vst.msk [vmem:[#allocation2 + $0x28] sm:$0xff] %vm6394, %v6309
        %6401 = vst.msk [vmem:[#allocation2 + $0x30] sm:$0xff] %vm6394, %v6311
        %6402 = vst.msk [vmem:[#allocation2 + $0x38] sm:$0xff] %vm6394, %v6313
        %6403 = vst.msk [vmem:[#allocation2 + $0x40] sm:$0xff] %vm6394, %v6315
        %6404 = vst.msk [vmem:[#allocation2 + $0x48] sm:$0xff] %vm6394, %v6317
        %6405 = vst.msk [vmem:[#allocation2 + $0x50] sm:$0xff] %vm6394, %v6319
        %6406 = vst.msk [vmem:[#allocation2 + $0x58] sm:$0xff] %vm6394, %v6321
        %6407 = vst.msk [vmem:[#allocation2 + $0x60] sm:$0xff] %vm6394, %v6323
        %6408 = vst.msk [vmem:[#allocation2 + $0x68] sm:$0xff] %vm6394, %v6325
        %6409 = vst.msk [vmem:[#allocation2 + $0x70] sm:$0xff] %vm6394, %v6327
        %6410 = vst.msk [vmem:[#allocation2 + $0x78] sm:$0xff] %vm6394, %v6329
        %6411 = vst.msk [vmem:[#allocation2 + $0x80] sm:$0xff] %vm6394, %v6331
        %6412 = vst.msk [vmem:[#allocation2 + $0x88] sm:$0xff] %vm6394, %v6333
        %6413 = vst.msk [vmem:[#allocation2 + $0x90] sm:$0xff] %vm6394, %v6335
        %6414 = vst.msk [vmem:[#allocation2 + $0x98] sm:$0xff] %vm6394, %v6337
        %6415 = vst.msk [vmem:[#allocation2 + $0xa0] sm:$0xff] %vm6394, %v6339
        %6416 = vst.msk [vmem:[#allocation2 + $0xa8] sm:$0xff] %vm6394, %v6341
        %6417 = vst.msk [vmem:[#allocation2 + $0xb0] sm:$0xff] %vm6394, %v6343
        %6418 = vst.msk [vmem:[#allocation2 + $0xb8] sm:$0xff] %vm6394, %v6345
        %6419 = vst.msk [vmem:[#allocation2 + $0xc0] sm:$0xff] %vm6394, %v6347
        %6420 = vst.msk [vmem:[#allocation2 + $0xc8] sm:$0xff] %vm6394, %v6349
        %6421 = vst.msk [vmem:[#allocation2 + $0xd0] sm:$0xff] %vm6394, %v6351
        %6422 = vst.msk [vmem:[#allocation2 + $0xd8] sm:$0xff] %vm6394, %v6353
        %6423 = vst.msk [vmem:[#allocation2 + $0xe0] sm:$0xff] %vm6394, %v6355
        %6424 = vst.msk [vmem:[#allocation2 + $0xe8] sm:$0xff] %vm6394, %v6357
        %6425 = vst.msk [vmem:[#allocation2 + $0xf0] sm:$0xff] %vm6394, %v6359
        %6426 = vst.msk [vmem:[#allocation2 + $0xf8] sm:$0xff] %vm6394, %v6361
        %v6428 = vshrl.u32 %v1128, 16
        %v6430 = vrot.slane %v6428, 4
        %v6431 = vshll.u32 %v1128, 16
        %v6433 = vrot.slane %v6431, 5
        %v6434 = vor.u32 %v6430, %v6433
        %v6435 = vrot.slane %v6434, 4
        %v6437 = vshll.u32 %v1129, 16
        %v6439 = vrot.slane %v6437, 5
        %v6440 = vsel %vm1359, %v6435, %v6439
        %v6441 = vunpack.c.l.b16 %v6440
        %v6442 = vpack.c.b16 %v5972, %v5971
        %v6443 = vpack.c.b16 %v5974, %v5973
        %v6444 = vpack.c.b16 %v5976, %v5975
        %v6445 = vpack.c.b16 %v6441, %v5977
        %6446 = vrot.lane.b32.xlu0 %v3334, 88
        %v6447 = vpop.permute.xlu0 %6446
        %6448 = vrot.lane.b32.xlu0 %v3335, 88
        %v6449 = vpop.permute.xlu0 %6448
        %6450 = vrot.lane.b32.xlu0 %v3336, 88
        %v6451 = vpop.permute.xlu0 %6450
        %6452 = vrot.lane.b32.xlu0 %v3337, 88
        %v6453 = vpop.permute.xlu0 %6452
        %6454 = vrot.lane.b32.xlu0 %v3338, 88
        %v6455 = vpop.permute.xlu0 %6454
        %6456 = vrot.lane.b32.xlu0 %v3339, 88
        %v6457 = vpop.permute.xlu0 %6456
        %6458 = vrot.lane.b32.xlu0 %v3340, 88
        %v6459 = vpop.permute.xlu0 %6458
        %6460 = vrot.lane.b32.xlu0 %v3341, 88
        %v6461 = vpop.permute.xlu0 %6460
        %6462 = vrot.lane.b32.xlu0 %v3342, 88
        %v6463 = vpop.permute.xlu0 %6462
        %6464 = vrot.lane.b32.xlu0 %v3343, 88
        %v6465 = vpop.permute.xlu0 %6464
        %6466 = vrot.lane.b32.xlu0 %v3344, 88
        %v6467 = vpop.permute.xlu0 %6466
        %6468 = vrot.lane.b32.xlu0 %v3345, 88
        %v6469 = vpop.permute.xlu0 %6468
        %6470 = vrot.lane.b32.xlu0 %v3346, 88
        %v6471 = vpop.permute.xlu0 %6470
        %6472 = vrot.lane.b32.xlu0 %v3347, 88
        %v6473 = vpop.permute.xlu0 %6472
        %6474 = vrot.lane.b32.xlu0 %v3348, 88
        %v6475 = vpop.permute.xlu0 %6474
        %6476 = vrot.lane.b32.xlu0 %v3349, 88
        %v6477 = vpop.permute.xlu0 %6476
        %6478 = vrot.lane.b32.xlu0 %v3350, 88
        %v6479 = vpop.permute.xlu0 %6478
        %6480 = vrot.lane.b32.xlu0 %v3351, 88
        %v6481 = vpop.permute.xlu0 %6480
        %6482 = vrot.lane.b32.xlu0 %v3352, 88
        %v6483 = vpop.permute.xlu0 %6482
        %6484 = vrot.lane.b32.xlu0 %v3353, 88
        %v6485 = vpop.permute.xlu0 %6484
        %6486 = vrot.lane.b32.xlu0 %v3354, 88
        %v6487 = vpop.permute.xlu0 %6486
        %6488 = vrot.lane.b32.xlu0 %v3355, 88
        %v6489 = vpop.permute.xlu0 %6488
        %6490 = vrot.lane.b32.xlu0 %v3356, 88
        %v6491 = vpop.permute.xlu0 %6490
        %6492 = vrot.lane.b32.xlu0 %v3357, 88
        %v6493 = vpop.permute.xlu0 %6492
        %6494 = vrot.lane.b32.xlu0 %v5024, 88
        %v6495 = vpop.permute.xlu0 %6494
        %6496 = vrot.lane.b32.xlu0 %v5025, 88
        %v6497 = vpop.permute.xlu0 %6496
        %6498 = vrot.lane.b32.xlu0 %v5026, 88
        %v6499 = vpop.permute.xlu0 %6498
        %6500 = vrot.lane.b32.xlu0 %v5027, 88
        %v6501 = vpop.permute.xlu0 %6500
        %6502 = vrot.lane.b32.xlu0 %v6442, 88
        %v6503 = vpop.permute.xlu0 %6502
        %6504 = vrot.lane.b32.xlu0 %v6443, 88
        %v6505 = vpop.permute.xlu0 %6504
        %6506 = vrot.lane.b32.xlu0 %v6444, 88
        %v6507 = vpop.permute.xlu0 %6506
        %6508 = vrot.lane.b32.xlu0 %v6445, 88
        %v6509 = vpop.permute.xlu0 %6508
        %vm6542 = vcmask 753344
        %6543 = vst.msk [vmem:[#allocation2] sm:$0xff] %vm6542, %v6447
        %6544 = vst.msk [vmem:[#allocation2 + $0x8] sm:$0xff] %vm6542, %v6449
        %6545 = vst.msk [vmem:[#allocation2 + $0x10] sm:$0xff] %vm6542, %v6451
        %6546 = vst.msk [vmem:[#allocation2 + $0x18] sm:$0xff] %vm6542, %v6453
        %6547 = vst.msk [vmem:[#allocation2 + $0x20] sm:$0xff] %vm6542, %v6455
        %6548 = vst.msk [vmem:[#allocation2 + $0x28] sm:$0xff] %vm6542, %v6457
        %6549 = vst.msk [vmem:[#allocation2 + $0x30] sm:$0xff] %vm6542, %v6459
        %6550 = vst.msk [vmem:[#allocation2 + $0x38] sm:$0xff] %vm6542, %v6461
        %6551 = vst.msk [vmem:[#allocation2 + $0x40] sm:$0xff] %vm6542, %v6463
        %6552 = vst.msk [vmem:[#allocation2 + $0x48] sm:$0xff] %vm6542, %v6465
        %6553 = vst.msk [vmem:[#allocation2 + $0x50] sm:$0xff] %vm6542, %v6467
        %6554 = vst.msk [vmem:[#allocation2 + $0x58] sm:$0xff] %vm6542, %v6469
        %6555 = vst.msk [vmem:[#allocation2 + $0x60] sm:$0xff] %vm6542, %v6471
        %6556 = vst.msk [vmem:[#allocation2 + $0x68] sm:$0xff] %vm6542, %v6473
        %6557 = vst.msk [vmem:[#allocation2 + $0x70] sm:$0xff] %vm6542, %v6475
        %6558 = vst.msk [vmem:[#allocation2 + $0x78] sm:$0xff] %vm6542, %v6477
        %6559 = vst.msk [vmem:[#allocation2 + $0x80] sm:$0xff] %vm6542, %v6479
        %6560 = vst.msk [vmem:[#allocation2 + $0x88] sm:$0xff] %vm6542, %v6481
        %6561 = vst.msk [vmem:[#allocation2 + $0x90] sm:$0xff] %vm6542, %v6483
        %6562 = vst.msk [vmem:[#allocation2 + $0x98] sm:$0xff] %vm6542, %v6485
        %6563 = vst.msk [vmem:[#allocation2 + $0xa0] sm:$0xff] %vm6542, %v6487
        %6564 = vst.msk [vmem:[#allocation2 + $0xa8] sm:$0xff] %vm6542, %v6489
        %6565 = vst.msk [vmem:[#allocation2 + $0xb0] sm:$0xff] %vm6542, %v6491
        %6566 = vst.msk [vmem:[#allocation2 + $0xb8] sm:$0xff] %vm6542, %v6493
        %6567 = vst.msk [vmem:[#allocation2 + $0xc0] sm:$0xff] %vm6542, %v6495
        %6568 = vst.msk [vmem:[#allocation2 + $0xc8] sm:$0xff] %vm6542, %v6497
        %6569 = vst.msk [vmem:[#allocation2 + $0xd0] sm:$0xff] %vm6542, %v6499
        %6570 = vst.msk [vmem:[#allocation2 + $0xd8] sm:$0xff] %vm6542, %v6501
        %6571 = vst.msk [vmem:[#allocation2 + $0xe0] sm:$0xff] %vm6542, %v6503
        %6572 = vst.msk [vmem:[#allocation2 + $0xe8] sm:$0xff] %vm6542, %v6505
        %6573 = vst.msk [vmem:[#allocation2 + $0xf0] sm:$0xff] %vm6542, %v6507
        %6574 = vst.msk [vmem:[#allocation2 + $0xf8] sm:$0xff] %vm6542, %v6509
        %v6576 = vrot.slane %v1128, 5
        %v6577 = vrot.slane %v6576, 4
        %v6578 = vrot.slane %v1129, 5
        %v6579 = vsel %vm2547, %v6577, %v6578
        %v6580 = vunpack.c.l.b16 %v6579
        %v6581 = vpack.c.b16 %v6153, %v6152
        %v6582 = vpack.c.b16 %v6155, %v6154
        %v6583 = vpack.c.b16 %v6157, %v6156
        %v6584 = vpack.c.b16 %v6580, %v6158
        %6585 = vrot.lane.b32.xlu0 %v3543, 92
        %v6586 = vpop.permute.xlu0 %6585
        %6587 = vrot.lane.b32.xlu0 %v3544, 92
        %v6588 = vpop.permute.xlu0 %6587
        %6589 = vrot.lane.b32.xlu0 %v3545, 92
        %v6590 = vpop.permute.xlu0 %6589
        %6591 = vrot.lane.b32.xlu0 %v3546, 92
        %v6592 = vpop.permute.xlu0 %6591
        %6593 = vrot.lane.b32.xlu0 %v3547, 92
        %v6594 = vpop.permute.xlu0 %6593
        %6595 = vrot.lane.b32.xlu0 %v3548, 92
        %v6596 = vpop.permute.xlu0 %6595
        %6597 = vrot.lane.b32.xlu0 %v3549, 92
        %v6598 = vpop.permute.xlu0 %6597
        %6599 = vrot.lane.b32.xlu0 %v3550, 92
        %v6600 = vpop.permute.xlu0 %6599
        %6601 = vrot.lane.b32.xlu0 %v3551, 92
        %v6602 = vpop.permute.xlu0 %6601
        %6603 = vrot.lane.b32.xlu0 %v3552, 92
        %v6604 = vpop.permute.xlu0 %6603
        %6605 = vrot.lane.b32.xlu0 %v3553, 92
        %v6606 = vpop.permute.xlu0 %6605
        %6607 = vrot.lane.b32.xlu0 %v3554, 92
        %v6608 = vpop.permute.xlu0 %6607
        %6609 = vrot.lane.b32.xlu0 %v3555, 92
        %v6610 = vpop.permute.xlu0 %6609
        %6611 = vrot.lane.b32.xlu0 %v3556, 92
        %v6612 = vpop.permute.xlu0 %6611
        %6613 = vrot.lane.b32.xlu0 %v3557, 92
        %v6614 = vpop.permute.xlu0 %6613
        %6615 = vrot.lane.b32.xlu0 %v3558, 92
        %v6616 = vpop.permute.xlu0 %6615
        %6617 = vrot.lane.b32.xlu0 %v3559, 92
        %v6618 = vpop.permute.xlu0 %6617
        %6619 = vrot.lane.b32.xlu0 %v3560, 92
        %v6620 = vpop.permute.xlu0 %6619
        %6621 = vrot.lane.b32.xlu0 %v3561, 92
        %v6622 = vpop.permute.xlu0 %6621
        %6623 = vrot.lane.b32.xlu0 %v3562, 92
        %v6624 = vpop.permute.xlu0 %6623
        %6625 = vrot.lane.b32.xlu0 %v3563, 92
        %v6626 = vpop.permute.xlu0 %6625
        %6627 = vrot.lane.b32.xlu0 %v3564, 92
        %v6628 = vpop.permute.xlu0 %6627
        %6629 = vrot.lane.b32.xlu0 %v3565, 92
        %v6630 = vpop.permute.xlu0 %6629
        %6631 = vrot.lane.b32.xlu0 %v3566, 92
        %v6632 = vpop.permute.xlu0 %6631
        %6633 = vrot.lane.b32.xlu0 %v5163, 92
        %v6634 = vpop.permute.xlu0 %6633
        %6635 = vrot.lane.b32.xlu0 %v5164, 92
        %v6636 = vpop.permute.xlu0 %6635
        %6637 = vrot.lane.b32.xlu0 %v5165, 92
        %v6638 = vpop.permute.xlu0 %6637
        %6639 = vrot.lane.b32.xlu0 %v5166, 92
        %v6640 = vpop.permute.xlu0 %6639
        %6641 = vrot.lane.b32.xlu0 %v6581, 92
        %v6642 = vpop.permute.xlu0 %6641
        %6643 = vrot.lane.b32.xlu0 %v6582, 92
        %v6644 = vpop.permute.xlu0 %6643
        %6645 = vrot.lane.b32.xlu0 %v6583, 92
        %v6646 = vpop.permute.xlu0 %6645
        %6647 = vrot.lane.b32.xlu0 %v6584, 92
        %v6648 = vpop.permute.xlu0 %6647
        %vm6681 = vcmask 786144
        %6682 = vst.msk [vmem:[#allocation2] sm:$0xff] %vm6681, %v6586
        %6683 = vst.msk [vmem:[#allocation2 + $0x8] sm:$0xff] %vm6681, %v6588
        %6684 = vst.msk [vmem:[#allocation2 + $0x10] sm:$0xff] %vm6681, %v6590
        %6685 = vst.msk [vmem:[#allocation2 + $0x18] sm:$0xff] %vm6681, %v6592
        %6686 = vst.msk [vmem:[#allocation2 + $0x20] sm:$0xff] %vm6681, %v6594
        %6687 = vst.msk [vmem:[#allocation2 + $0x28] sm:$0xff] %vm6681, %v6596
        %6688 = vst.msk [vmem:[#allocation2 + $0x30] sm:$0xff] %vm6681, %v6598
        %6689 = vst.msk [vmem:[#allocation2 + $0x38] sm:$0xff] %vm6681, %v6600
        %6690 = vst.msk [vmem:[#allocation2 + $0x40] sm:$0xff] %vm6681, %v6602
        %6691 = vst.msk [vmem:[#allocation2 + $0x48] sm:$0xff] %vm6681, %v6604
        %6692 = vst.msk [vmem:[#allocation2 + $0x50] sm:$0xff] %vm6681, %v6606
        %6693 = vst.msk [vmem:[#allocation2 + $0x58] sm:$0xff] %vm6681, %v6608
        %6694 = vst.msk [vmem:[#allocation2 + $0x60] sm:$0xff] %vm6681, %v6610
        %6695 = vst.msk [vmem:[#allocation2 + $0x68] sm:$0xff] %vm6681, %v6612
        %6696 = vst.msk [vmem:[#allocation2 + $0x70] sm:$0xff] %vm6681, %v6614
        %6697 = vst.msk [vmem:[#allocation2 + $0x78] sm:$0xff] %vm6681, %v6616
        %6698 = vst.msk [vmem:[#allocation2 + $0x80] sm:$0xff] %vm6681, %v6618
        %6699 = vst.msk [vmem:[#allocation2 + $0x88] sm:$0xff] %vm6681, %v6620
        %6700 = vst.msk [vmem:[#allocation2 + $0x90] sm:$0xff] %vm6681, %v6622
        %6701 = vst.msk [vmem:[#allocation2 + $0x98] sm:$0xff] %vm6681, %v6624
        %6702 = vst.msk [vmem:[#allocation2 + $0xa0] sm:$0xff] %vm6681, %v6626
        %6703 = vst.msk [vmem:[#allocation2 + $0xa8] sm:$0xff] %vm6681, %v6628
        %6704 = vst.msk [vmem:[#allocation2 + $0xb0] sm:$0xff] %vm6681, %v6630
        %6705 = vst.msk [vmem:[#allocation2 + $0xb8] sm:$0xff] %vm6681, %v6632
        %6706 = vst.msk [vmem:[#allocation2 + $0xc0] sm:$0xff] %vm6681, %v6634
        %6707 = vst.msk [vmem:[#allocation2 + $0xc8] sm:$0xff] %vm6681, %v6636
        %6708 = vst.msk [vmem:[#allocation2 + $0xd0] sm:$0xff] %vm6681, %v6638
        %6709 = vst.msk [vmem:[#allocation2 + $0xd8] sm:$0xff] %vm6681, %v6640
        %6710 = vst.msk [vmem:[#allocation2 + $0xe0] sm:$0xff] %vm6681, %v6642
        %6711 = vst.msk [vmem:[#allocation2 + $0xe8] sm:$0xff] %vm6681, %v6644
        %6712 = vst.msk [vmem:[#allocation2 + $0xf0] sm:$0xff] %vm6681, %v6646
        %6713 = vst.msk [vmem:[#allocation2 + $0xf8] sm:$0xff] %vm6681, %v6648
        %v6715 = vunpack.c.l.b16 %v1130
        %v6716 = vpack.c.b16 %v6715, %v6293
        %6717 = vrot.lane.b32.xlu0 %v1269, 96
        %v6718 = vpop.permute.xlu0 %6717
        %6719 = vrot.lane.b32.xlu0 %v1270, 96
        %v6720 = vpop.permute.xlu0 %6719
        %6721 = vrot.lane.b32.xlu0 %v1271, 96
        %v6722 = vpop.permute.xlu0 %6721
        %6723 = vrot.lane.b32.xlu0 %v3714, 96
        %v6724 = vpop.permute.xlu0 %6723
        %6725 = vrot.lane.b32.xlu0 %v1273, 96
        %v6726 = vpop.permute.xlu0 %6725
        %6727 = vrot.lane.b32.xlu0 %v1274, 96
        %v6728 = vpop.permute.xlu0 %6727
        %6729 = vrot.lane.b32.xlu0 %v1275, 96
        %v6730 = vpop.permute.xlu0 %6729
        %6731 = vrot.lane.b32.xlu0 %v3715, 96
        %v6732 = vpop.permute.xlu0 %6731
        %6733 = vrot.lane.b32.xlu0 %v1277, 96
        %v6734 = vpop.permute.xlu0 %6733
        %6735 = vrot.lane.b32.xlu0 %v1278, 96
        %v6736 = vpop.permute.xlu0 %6735
        %6737 = vrot.lane.b32.xlu0 %v1279, 96
        %v6738 = vpop.permute.xlu0 %6737
        %6739 = vrot.lane.b32.xlu0 %v3716, 96
        %v6740 = vpop.permute.xlu0 %6739
        %6741 = vrot.lane.b32.xlu0 %v1281, 96
        %v6742 = vpop.permute.xlu0 %6741
        %6743 = vrot.lane.b32.xlu0 %v1282, 96
        %v6744 = vpop.permute.xlu0 %6743
        %6745 = vrot.lane.b32.xlu0 %v1283, 96
        %v6746 = vpop.permute.xlu0 %6745
        %6747 = vrot.lane.b32.xlu0 %v3717, 96
        %v6748 = vpop.permute.xlu0 %6747
        %6749 = vrot.lane.b32.xlu0 %v1285, 96
        %v6750 = vpop.permute.xlu0 %6749
        %6751 = vrot.lane.b32.xlu0 %v1286, 96
        %v6752 = vpop.permute.xlu0 %6751
        %6753 = vrot.lane.b32.xlu0 %v1287, 96
        %v6754 = vpop.permute.xlu0 %6753
        %6755 = vrot.lane.b32.xlu0 %v3718, 96
        %v6756 = vpop.permute.xlu0 %6755
        %6757 = vrot.lane.b32.xlu0 %v1289, 96
        %v6758 = vpop.permute.xlu0 %6757
        %6759 = vrot.lane.b32.xlu0 %v1290, 96
        %v6760 = vpop.permute.xlu0 %6759
        %6761 = vrot.lane.b32.xlu0 %v1291, 96
        %v6762 = vpop.permute.xlu0 %6761
        %6763 = vrot.lane.b32.xlu0 %v3719, 96
        %v6764 = vpop.permute.xlu0 %6763
        %6765 = vrot.lane.b32.xlu0 %v4308, 96
        %v6766 = vpop.permute.xlu0 %6765
        %6767 = vrot.lane.b32.xlu0 %v4309, 96
        %v6768 = vpop.permute.xlu0 %6767
        %6769 = vrot.lane.b32.xlu0 %v4310, 96
        %v6770 = vpop.permute.xlu0 %6769
        %6771 = vrot.lane.b32.xlu0 %v5298, 96
        %v6772 = vpop.permute.xlu0 %6771
        %6773 = vrot.lane.b32.xlu0 %v5726, 96
        %v6774 = vpop.permute.xlu0 %6773
        %6775 = vrot.lane.b32.xlu0 %v5727, 96
        %v6776 = vpop.permute.xlu0 %6775
        %6777 = vrot.lane.b32.xlu0 %v5728, 96
        %v6778 = vpop.permute.xlu0 %6777
        %6779 = vrot.lane.b32.xlu0 %v6716, 96
        %v6780 = vpop.permute.xlu0 %6779
        %vm6813 = vcmask 818944
        %6814 = vst.msk [vmem:[#allocation2] sm:$0xff] %vm6813, %v6718
        %6815 = vst.msk [vmem:[#allocation2 + $0x8] sm:$0xff] %vm6813, %v6720
        %6816 = vst.msk [vmem:[#allocation2 + $0x10] sm:$0xff] %vm6813, %v6722
        %6817 = vst.msk [vmem:[#allocation2 + $0x18] sm:$0xff] %vm6813, %v6724
        %6818 = vst.msk [vmem:[#allocation2 + $0x20] sm:$0xff] %vm6813, %v6726
        %6819 = vst.msk [vmem:[#allocation2 + $0x28] sm:$0xff] %vm6813, %v6728
        %6820 = vst.msk [vmem:[#allocation2 + $0x30] sm:$0xff] %vm6813, %v6730
        %6821 = vst.msk [vmem:[#allocation2 + $0x38] sm:$0xff] %vm6813, %v6732
        %6822 = vst.msk [vmem:[#allocation2 + $0x40] sm:$0xff] %vm6813, %v6734
        %6823 = vst.msk [vmem:[#allocation2 + $0x48] sm:$0xff] %vm6813, %v6736
        %6824 = vst.msk [vmem:[#allocation2 + $0x50] sm:$0xff] %vm6813, %v6738
        %6825 = vst.msk [vmem:[#allocation2 + $0x58] sm:$0xff] %vm6813, %v6740
        %6826 = vst.msk [vmem:[#allocation2 + $0x60] sm:$0xff] %vm6813, %v6742
        %6827 = vst.msk [vmem:[#allocation2 + $0x68] sm:$0xff] %vm6813, %v6744
        %6828 = vst.msk [vmem:[#allocation2 + $0x70] sm:$0xff] %vm6813, %v6746
        %6829 = vst.msk [vmem:[#allocation2 + $0x78] sm:$0xff] %vm6813, %v6748
        %6830 = vst.msk [vmem:[#allocation2 + $0x80] sm:$0xff] %vm6813, %v6750
        %6831 = vst.msk [vmem:[#allocation2 + $0x88] sm:$0xff] %vm6813, %v6752
        %6832 = vst.msk [vmem:[#allocation2 + $0x90] sm:$0xff] %vm6813, %v6754
        %6833 = vst.msk [vmem:[#allocation2 + $0x98] sm:$0xff] %vm6813, %v6756
        %6834 = vst.msk [vmem:[#allocation2 + $0xa0] sm:$0xff] %vm6813, %v6758
        %6835 = vst.msk [vmem:[#allocation2 + $0xa8] sm:$0xff] %vm6813, %v6760
        %6836 = vst.msk [vmem:[#allocation2 + $0xb0] sm:$0xff] %vm6813, %v6762
        %6837 = vst.msk [vmem:[#allocation2 + $0xb8] sm:$0xff] %vm6813, %v6764
        %6838 = vst.msk [vmem:[#allocation2 + $0xc0] sm:$0xff] %vm6813, %v6766
        %6839 = vst.msk [vmem:[#allocation2 + $0xc8] sm:$0xff] %vm6813, %v6768
        %6840 = vst.msk [vmem:[#allocation2 + $0xd0] sm:$0xff] %vm6813, %v6770
        %6841 = vst.msk [vmem:[#allocation2 + $0xd8] sm:$0xff] %vm6813, %v6772
        %6842 = vst.msk [vmem:[#allocation2 + $0xe0] sm:$0xff] %vm6813, %v6774
        %6843 = vst.msk [vmem:[#allocation2 + $0xe8] sm:$0xff] %vm6813, %v6776
        %6844 = vst.msk [vmem:[#allocation2 + $0xf0] sm:$0xff] %vm6813, %v6778
        %6845 = vst.msk [vmem:[#allocation2 + $0xf8] sm:$0xff] %vm6813, %v6780
        %v6847 = vshrl.u32 %v1130, 16
        %v6849 = vrot.slane %v6847, 4
        %v6850 = vshll.u32 %v1130, 16
        %v6852 = vrot.slane %v6850, 5
        %v6853 = vor.u32 %v6849, %v6852
        %v6854 = vrot.slane %v6853, 4
        %v6856 = vshll.u32 %v1131, 16
        %v6858 = vrot.slane %v6856, 5
        %v6859 = vsel %vm1359, %v6854, %v6858
        %v6860 = vunpack.c.l.b16 %v6859
        %v6861 = vpack.c.b16 %v6860, %v6441
        %6862 = vrot.lane.b32.xlu0 %v2329, 100
        %v6863 = vpop.permute.xlu0 %6862
        %6864 = vrot.lane.b32.xlu0 %v2330, 100
        %v6865 = vpop.permute.xlu0 %6864
        %6866 = vrot.lane.b32.xlu0 %v2331, 100
        %v6867 = vpop.permute.xlu0 %6866
        %6868 = vrot.lane.b32.xlu0 %v3971, 100
        %v6869 = vpop.permute.xlu0 %6868
        %6870 = vrot.lane.b32.xlu0 %v2333, 100
        %v6871 = vpop.permute.xlu0 %6870
        %6872 = vrot.lane.b32.xlu0 %v2334, 100
        %v6873 = vpop.permute.xlu0 %6872
        %6874 = vrot.lane.b32.xlu0 %v2335, 100
        %v6875 = vpop.permute.xlu0 %6874
        %6876 = vrot.lane.b32.xlu0 %v3972, 100
        %v6877 = vpop.permute.xlu0 %6876
        %6878 = vrot.lane.b32.xlu0 %v2337, 100
        %v6879 = vpop.permute.xlu0 %6878
        %6880 = vrot.lane.b32.xlu0 %v2338, 100
        %v6881 = vpop.permute.xlu0 %6880
        %6882 = vrot.lane.b32.xlu0 %v2339, 100
        %v6883 = vpop.permute.xlu0 %6882
        %6884 = vrot.lane.b32.xlu0 %v3973, 100
        %v6885 = vpop.permute.xlu0 %6884
        %6886 = vrot.lane.b32.xlu0 %v2341, 100
        %v6887 = vpop.permute.xlu0 %6886
        %6888 = vrot.lane.b32.xlu0 %v2342, 100
        %v6889 = vpop.permute.xlu0 %6888
        %6890 = vrot.lane.b32.xlu0 %v2343, 100
        %v6891 = vpop.permute.xlu0 %6890
        %6892 = vrot.lane.b32.xlu0 %v3974, 100
        %v6893 = vpop.permute.xlu0 %6892
        %6894 = vrot.lane.b32.xlu0 %v2345, 100
        %v6895 = vpop.permute.xlu0 %6894
        %6896 = vrot.lane.b32.xlu0 %v2346, 100
        %v6897 = vpop.permute.xlu0 %6896
        %6898 = vrot.lane.b32.xlu0 %v2347, 100
        %v6899 = vpop.permute.xlu0 %6898
        %6900 = vrot.lane.b32.xlu0 %v3975, 100
        %v6901 = vpop.permute.xlu0 %6900
        %6902 = vrot.lane.b32.xlu0 %v2349, 100
        %v6903 = vpop.permute.xlu0 %6902
        %6904 = vrot.lane.b32.xlu0 %v2350, 100
        %v6905 = vpop.permute.xlu0 %6904
        %6906 = vrot.lane.b32.xlu0 %v2351, 100
        %v6907 = vpop.permute.xlu0 %6906
        %6908 = vrot.lane.b32.xlu0 %v3976, 100
        %v6909 = vpop.permute.xlu0 %6908
        %6910 = vrot.lane.b32.xlu0 %v4561, 100
        %v6911 = vpop.permute.xlu0 %6910
        %6912 = vrot.lane.b32.xlu0 %v4562, 100
        %v6913 = vpop.permute.xlu0 %6912
        %6914 = vrot.lane.b32.xlu0 %v4563, 100
        %v6915 = vpop.permute.xlu0 %6914
        %6916 = vrot.lane.b32.xlu0 %v5443, 100
        %v6917 = vpop.permute.xlu0 %6916
        %6918 = vrot.lane.b32.xlu0 %v5979, 100
        %v6919 = vpop.permute.xlu0 %6918
        %6920 = vrot.lane.b32.xlu0 %v5980, 100
        %v6921 = vpop.permute.xlu0 %6920
        %6922 = vrot.lane.b32.xlu0 %v5981, 100
        %v6923 = vpop.permute.xlu0 %6922
        %6924 = vrot.lane.b32.xlu0 %v6861, 100
        %v6925 = vpop.permute.xlu0 %6924
        %vm6958 = vcmask 851744
        %6959 = vst.msk [vmem:[#allocation2] sm:$0xff] %vm6958, %v6863
        %6960 = vst.msk [vmem:[#allocation2 + $0x8] sm:$0xff] %vm6958, %v6865
        %6961 = vst.msk [vmem:[#allocation2 + $0x10] sm:$0xff] %vm6958, %v6867
        %6962 = vst.msk [vmem:[#allocation2 + $0x18] sm:$0xff] %vm6958, %v6869
        %6963 = vst.msk [vmem:[#allocation2 + $0x20] sm:$0xff] %vm6958, %v6871
        %6964 = vst.msk [vmem:[#allocation2 + $0x28] sm:$0xff] %vm6958, %v6873
        %6965 = vst.msk [vmem:[#allocation2 + $0x30] sm:$0xff] %vm6958, %v6875
        %6966 = vst.msk [vmem:[#allocation2 + $0x38] sm:$0xff] %vm6958, %v6877
        %6967 = vst.msk [vmem:[#allocation2 + $0x40] sm:$0xff] %vm6958, %v6879
        %6968 = vst.msk [vmem:[#allocation2 + $0x48] sm:$0xff] %vm6958, %v6881
        %6969 = vst.msk [vmem:[#allocation2 + $0x50] sm:$0xff] %vm6958, %v6883
        %6970 = vst.msk [vmem:[#allocation2 + $0x58] sm:$0xff] %vm6958, %v6885
        %6971 = vst.msk [vmem:[#allocation2 + $0x60] sm:$0xff] %vm6958, %v6887
        %6972 = vst.msk [vmem:[#allocation2 + $0x68] sm:$0xff] %vm6958, %v6889
        %6973 = vst.msk [vmem:[#allocation2 + $0x70] sm:$0xff] %vm6958, %v6891
        %6974 = vst.msk [vmem:[#allocation2 + $0x78] sm:$0xff] %vm6958, %v6893
        %6975 = vst.msk [vmem:[#allocation2 + $0x80] sm:$0xff] %vm6958, %v6895
        %6976 = vst.msk [vmem:[#allocation2 + $0x88] sm:$0xff] %vm6958, %v6897
        %6977 = vst.msk [vmem:[#allocation2 + $0x90] sm:$0xff] %vm6958, %v6899
        %6978 = vst.msk [vmem:[#allocation2 + $0x98] sm:$0xff] %vm6958, %v6901
        %6979 = vst.msk [vmem:[#allocation2 + $0xa0] sm:$0xff] %vm6958, %v6903
        %6980 = vst.msk [vmem:[#allocation2 + $0xa8] sm:$0xff] %vm6958, %v6905
        %6981 = vst.msk [vmem:[#allocation2 + $0xb0] sm:$0xff] %vm6958, %v6907
        %6982 = vst.msk [vmem:[#allocation2 + $0xb8] sm:$0xff] %vm6958, %v6909
        %6983 = vst.msk [vmem:[#allocation2 + $0xc0] sm:$0xff] %vm6958, %v6911
        %6984 = vst.msk [vmem:[#allocation2 + $0xc8] sm:$0xff] %vm6958, %v6913
        %6985 = vst.msk [vmem:[#allocation2 + $0xd0] sm:$0xff] %vm6958, %v6915
        %6986 = vst.msk [vmem:[#allocation2 + $0xd8] sm:$0xff] %vm6958, %v6917
        %6987 = vst.msk [vmem:[#allocation2 + $0xe0] sm:$0xff] %vm6958, %v6919
        %6988 = vst.msk [vmem:[#allocation2 + $0xe8] sm:$0xff] %vm6958, %v6921
        %6989 = vst.msk [vmem:[#allocation2 + $0xf0] sm:$0xff] %vm6958, %v6923
        %6990 = vst.msk [vmem:[#allocation2 + $0xf8] sm:$0xff] %vm6958, %v6925
        %v6992 = vrot.slane %v1130, 5
        %v6993 = vrot.slane %v6992, 4
        %v6994 = vrot.slane %v1131, 5
        %v6995 = vsel %vm2547, %v6993, %v6994
        %v6996 = vunpack.c.l.b16 %v6995
        %v6997 = vpack.c.b16 %v6996, %v6580
        %6998 = vrot.lane.b32.xlu0 %v2877, 104
        %v6999 = vpop.permute.xlu0 %6998
        %7000 = vrot.lane.b32.xlu0 %v2878, 104
        %v7001 = vpop.permute.xlu0 %7000
        %7002 = vrot.lane.b32.xlu0 %v2879, 104
        %v7003 = vpop.permute.xlu0 %7002
        %7004 = vrot.lane.b32.xlu0 %v4156, 104
        %v7005 = vpop.permute.xlu0 %7004
        %7006 = vrot.lane.b32.xlu0 %v2881, 104
        %v7007 = vpop.permute.xlu0 %7006
        %7008 = vrot.lane.b32.xlu0 %v2882, 104
        %v7009 = vpop.permute.xlu0 %7008
        %7010 = vrot.lane.b32.xlu0 %v2883, 104
        %v7011 = vpop.permute.xlu0 %7010
        %7012 = vrot.lane.b32.xlu0 %v4157, 104
        %v7013 = vpop.permute.xlu0 %7012
        %7014 = vrot.lane.b32.xlu0 %v2885, 104
        %v7015 = vpop.permute.xlu0 %7014
        %7016 = vrot.lane.b32.xlu0 %v2886, 104
        %v7017 = vpop.permute.xlu0 %7016
        %7018 = vrot.lane.b32.xlu0 %v2887, 104
        %v7019 = vpop.permute.xlu0 %7018
        %7020 = vrot.lane.b32.xlu0 %v4158, 104
        %v7021 = vpop.permute.xlu0 %7020
        %7022 = vrot.lane.b32.xlu0 %v2889, 104
        %v7023 = vpop.permute.xlu0 %7022
        %7024 = vrot.lane.b32.xlu0 %v2890, 104
        %v7025 = vpop.permute.xlu0 %7024
        %7026 = vrot.lane.b32.xlu0 %v2891, 104
        %v7027 = vpop.permute.xlu0 %7026
        %7028 = vrot.lane.b32.xlu0 %v4159, 104
        %v7029 = vpop.permute.xlu0 %7028
        %7030 = vrot.lane.b32.xlu0 %v2893, 104
        %v7031 = vpop.permute.xlu0 %7030
        %7032 = vrot.lane.b32.xlu0 %v2894, 104
        %v7033 = vpop.permute.xlu0 %7032
        %7034 = vrot.lane.b32.xlu0 %v2895, 104
        %v7035 = vpop.permute.xlu0 %7034
        %7036 = vrot.lane.b32.xlu0 %v4160, 104
        %v7037 = vpop.permute.xlu0 %7036
        %7038 = vrot.lane.b32.xlu0 %v2897, 104
        %v7039 = vpop.permute.xlu0 %7038
        %7040 = vrot.lane.b32.xlu0 %v2898, 104
        %v7041 = vpop.permute.xlu0 %7040
        %7042 = vrot.lane.b32.xlu0 %v2899, 104
        %v7043 = vpop.permute.xlu0 %7042
        %7044 = vrot.lane.b32.xlu0 %v4161, 104
        %v7045 = vpop.permute.xlu0 %7044
        %7046 = vrot.lane.b32.xlu0 %v4742, 104
        %v7047 = vpop.permute.xlu0 %7046
        %7048 = vrot.lane.b32.xlu0 %v4743, 104
        %v7049 = vpop.permute.xlu0 %7048
        %7050 = vrot.lane.b32.xlu0 %v4744, 104
        %v7051 = vpop.permute.xlu0 %7050
        %7052 = vrot.lane.b32.xlu0 %v5579, 104
        %v7053 = vpop.permute.xlu0 %7052
        %7054 = vrot.lane.b32.xlu0 %v6160, 104
        %v7055 = vpop.permute.xlu0 %7054
        %7056 = vrot.lane.b32.xlu0 %v6161, 104
        %v7057 = vpop.permute.xlu0 %7056
        %7058 = vrot.lane.b32.xlu0 %v6162, 104
        %v7059 = vpop.permute.xlu0 %7058
        %7060 = vrot.lane.b32.xlu0 %v6997, 104
        %v7061 = vpop.permute.xlu0 %7060
        %vm7094 = vcmask 884544
        %7095 = vst.msk [vmem:[#allocation2] sm:$0xff] %vm7094, %v6999
        %7096 = vst.msk [vmem:[#allocation2 + $0x8] sm:$0xff] %vm7094, %v7001
        %7097 = vst.msk [vmem:[#allocation2 + $0x10] sm:$0xff] %vm7094, %v7003
        %7098 = vst.msk [vmem:[#allocation2 + $0x18] sm:$0xff] %vm7094, %v7005
        %7099 = vst.msk [vmem:[#allocation2 + $0x20] sm:$0xff] %vm7094, %v7007
        %7100 = vst.msk [vmem:[#allocation2 + $0x28] sm:$0xff] %vm7094, %v7009
        %7101 = vst.msk [vmem:[#allocation2 + $0x30] sm:$0xff] %vm7094, %v7011
        %7102 = vst.msk [vmem:[#allocation2 + $0x38] sm:$0xff] %vm7094, %v7013
        %7103 = vst.msk [vmem:[#allocation2 + $0x40] sm:$0xff] %vm7094, %v7015
        %7104 = vst.msk [vmem:[#allocation2 + $0x48] sm:$0xff] %vm7094, %v7017
        %7105 = vst.msk [vmem:[#allocation2 + $0x50] sm:$0xff] %vm7094, %v7019
        %7106 = vst.msk [vmem:[#allocation2 + $0x58] sm:$0xff] %vm7094, %v7021
        %7107 = vst.msk [vmem:[#allocation2 + $0x60] sm:$0xff] %vm7094, %v7023
        %7108 = vst.msk [vmem:[#allocation2 + $0x68] sm:$0xff] %vm7094, %v7025
        %7109 = vst.msk [vmem:[#allocation2 + $0x70] sm:$0xff] %vm7094, %v7027
        %7110 = vst.msk [vmem:[#allocation2 + $0x78] sm:$0xff] %vm7094, %v7029
        %7111 = vst.msk [vmem:[#allocation2 + $0x80] sm:$0xff] %vm7094, %v7031
        %7112 = vst.msk [vmem:[#allocation2 + $0x88] sm:$0xff] %vm7094, %v7033
        %7113 = vst.msk [vmem:[#allocation2 + $0x90] sm:$0xff] %vm7094, %v7035
        %7114 = vst.msk [vmem:[#allocation2 + $0x98] sm:$0xff] %vm7094, %v7037
        %7115 = vst.msk [vmem:[#allocation2 + $0xa0] sm:$0xff] %vm7094, %v7039
        %7116 = vst.msk [vmem:[#allocation2 + $0xa8] sm:$0xff] %vm7094, %v7041
        %7117 = vst.msk [vmem:[#allocation2 + $0xb0] sm:$0xff] %vm7094, %v7043
        %7118 = vst.msk [vmem:[#allocation2 + $0xb8] sm:$0xff] %vm7094, %v7045
        %7119 = vst.msk [vmem:[#allocation2 + $0xc0] sm:$0xff] %vm7094, %v7047
        %7120 = vst.msk [vmem:[#allocation2 + $0xc8] sm:$0xff] %vm7094, %v7049
        %7121 = vst.msk [vmem:[#allocation2 + $0xd0] sm:$0xff] %vm7094, %v7051
        %7122 = vst.msk [vmem:[#allocation2 + $0xd8] sm:$0xff] %vm7094, %v7053
        %7123 = vst.msk [vmem:[#allocation2 + $0xe0] sm:$0xff] %vm7094, %v7055
        %7124 = vst.msk [vmem:[#allocation2 + $0xe8] sm:$0xff] %vm7094, %v7057
        %7125 = vst.msk [vmem:[#allocation2 + $0xf0] sm:$0xff] %vm7094, %v7059
        %7126 = vst.msk [vmem:[#allocation2 + $0xf8] sm:$0xff] %vm7094, %v7061
        %v7127 = vld [vmem:[#allocation2] sm:$0xff]
        %v7128 = vld [vmem:[#allocation2 + $0x8] sm:$0xff]
        %v7129 = vld [vmem:[#allocation2 + $0x10] sm:$0xff]
        %v7130 = vld [vmem:[#allocation2 + $0x18] sm:$0xff]
        %v7131 = vld [vmem:[#allocation2 + $0x20] sm:$0xff]
        %v7132 = vld [vmem:[#allocation2 + $0x28] sm:$0xff]
        %v7133 = vld [vmem:[#allocation2 + $0x30] sm:$0xff]
        %v7134 = vld [vmem:[#allocation2 + $0x38] sm:$0xff]
        %v7135 = vld [vmem:[#allocation2 + $0x40] sm:$0xff]
        %v7136 = vld [vmem:[#allocation2 + $0x48] sm:$0xff]
        %v7137 = vld [vmem:[#allocation2 + $0x50] sm:$0xff]
        %v7138 = vld [vmem:[#allocation2 + $0x58] sm:$0xff]
        %v7139 = vld [vmem:[#allocation2 + $0x60] sm:$0xff]
        %v7140 = vld [vmem:[#allocation2 + $0x68] sm:$0xff]
        %v7141 = vld [vmem:[#allocation2 + $0x70] sm:$0xff]
        %v7142 = vld [vmem:[#allocation2 + $0x78] sm:$0xff]
        %v7143 = vld [vmem:[#allocation2 + $0x80] sm:$0xff]
        %v7144 = vld [vmem:[#allocation2 + $0x88] sm:$0xff]
        %v7145 = vld [vmem:[#allocation2 + $0x90] sm:$0xff]
        %v7146 = vld [vmem:[#allocation2 + $0x98] sm:$0xff]
        %v7147 = vld [vmem:[#allocation2 + $0xa0] sm:$0xff]
        %v7148 = vld [vmem:[#allocation2 + $0xa8] sm:$0xff]
        %v7149 = vld [vmem:[#allocation2 + $0xb0] sm:$0xff]
        %v7150 = vld [vmem:[#allocation2 + $0xb8] sm:$0xff]
        %v7151 = vld [vmem:[#allocation2 + $0xc0] sm:$0xff]
        %v7152 = vld [vmem:[#allocation2 + $0xc8] sm:$0xff]
        %v7153 = vld [vmem:[#allocation2 + $0xd0] sm:$0xff]
        %v7154 = vld [vmem:[#allocation2 + $0xd8] sm:$0xff]
        %v7155 = vld [vmem:[#allocation2 + $0xe0] sm:$0xff]
        %v7156 = vld [vmem:[#allocation2 + $0xe8] sm:$0xff]
        %v7157 = vld [vmem:[#allocation2 + $0xf0] sm:$0xff]
        %v7158 = vld [vmem:[#allocation2 + $0xf8] sm:$0xff]
        %v7159 = vld [vmem:[%s10] sm:$0xf]
        %v7160 = vld [vmem:[%s10 + $0x4] sm:$0xf]
        %v7161 = vld [vmem:[%s10 + $0x8] sm:$0xf]
        %v7162 = vld [vmem:[%s10 + $0xc] sm:$0xf]
        %v7163 = vld [vmem:[%s10 + $0x10] sm:$0xf]
        %v7164 = vld [vmem:[%s10 + $0x14] sm:$0xf]
        %v7165 = vld [vmem:[%s10 + $0x18] sm:$0xf]
        %v7166 = vld [vmem:[%s10 + $0x1c] sm:$0xf]
        %v7167 = vld [vmem:[%s10 + $0x20] sm:$0xf]
        %v7168 = vld [vmem:[%s10 + $0x24] sm:$0xf]
        %v7169 = vld [vmem:[%s10 + $0x28] sm:$0xf]
        %v7170 = vld [vmem:[%s10 + $0x2c] sm:$0xf]
        %v7171 = vld [vmem:[%s10 + $0x30] sm:$0xf]
        %v7172 = vld [vmem:[%s10 + $0x34] sm:$0x3]
        %v7187 = vunpack.c.l.b16 %v7159
        %v7188 = vunpack.c.l.b16 %v7160
        %v7189 = vunpack.c.l.b16 %v7161
        %v7190 = vunpack.c.l.b16 %v7162
        %v7191 = vunpack.c.l.b16 %v7163
        %v7192 = vunpack.c.l.b16 %v7164
        %v7193 = vunpack.c.l.b16 %v7165
        %v7194 = vunpack.c.l.b16 %v7166
        %v7195 = vunpack.c.l.b16 %v7167
        %v7196 = vunpack.c.l.b16 %v7168
        %v7197 = vunpack.c.l.b16 %v7169
        %v7198 = vunpack.c.l.b16 %v7170
        %v7199 = vunpack.c.l.b16 %v7171
        %v7200 = vunpack.c.l.b16 %v7172
        %v7201 = vpack.c.b16 %v7188, %v7187
        %v7202 = vpack.c.b16 %v7190, %v7189
        %v7203 = vpack.c.b16 %v7192, %v7191
        %v7204 = vpack.c.b16 %v7194, %v7193
        %v7205 = vpack.c.b16 %v7196, %v7195
        %v7206 = vpack.c.b16 %v7198, %v7197
        %v7207 = vpack.c.b16 %v7200, %v7199
        %vm7214 = vcmask 883712
        %v7216 = vsel %vm7214, %v7127, 0
        %v7219 = vsel %vm7214, %v7128, 0
        %v7222 = vsel %vm7214, %v7129, 0
        %v7225 = vsel %vm7214, %v7130, 0
        %v7228 = vsel %vm7214, %v7131, 0
        %v7231 = vsel %vm7214, %v7132, 0
        %v7234 = vsel %vm7214, %v7133, 0
        %v7237 = vsel %vm7214, %v7134, 0
        %v7240 = vsel %vm7214, %v7135, 0
        %v7243 = vsel %vm7214, %v7136, 0
        %v7246 = vsel %vm7214, %v7137, 0
        %v7249 = vsel %vm7214, %v7138, 0
        %v7252 = vsel %vm7214, %v7139, 0
        %v7255 = vsel %vm7214, %v7140, 0
        %v7258 = vsel %vm7214, %v7141, 0
        %v7261 = vsel %vm7214, %v7142, 0
        %v7264 = vsel %vm7214, %v7143, 0
        %v7267 = vsel %vm7214, %v7144, 0
        %v7270 = vsel %vm7214, %v7145, 0
        %v7273 = vsel %vm7214, %v7146, 0
        %v7276 = vsel %vm7214, %v7147, 0
        %v7279 = vsel %vm7214, %v7148, 0
        %v7282 = vsel %vm7214, %v7149, 0
        %v7285 = vsel %vm7214, %v7150, 0
        %v7288 = vsel %vm7214, %v7151, 0
        %v7291 = vsel %vm7214, %v7152, 0
        %v7294 = vsel %vm7214, %v7153, 0
        %v7297 = vsel %vm7214, %v7154, 0
        %v7300 = vsel %vm7214, %v7155, 0
        %v7303 = vsel %vm7214, %v7156, 0
        %v7306 = vsel %vm7214, %v7157, 0
        %v7309 = vsel %vm7214, %v7158, 0
        %vm7311 = vcmask 1045504
        %v7313 = vsel %vm7311, %v7207, 0
        %7315 = vmatprep.subr.bf16.mxu0 0
        %7316 = vmatpush1.bf16.msra.mxu0 %v7201
        %7317 = vmatprep.subr.bf16.mxu0 0
        %7318 = vmatpush1.bf16.msra.mxu0 %v7202
        %7319 = vmatprep.subr.bf16.mxu0 0
        %7320 = vmatpush1.bf16.msra.mxu0 %v7203
        %7321 = vmatprep.subr.bf16.mxu0 0
        %7322 = vmatpush1.bf16.msra.mxu0 %v7204
        %7323 = vmatprep.subr.bf16.mxu0 0
        %7324 = vmatpush1.bf16.msra.mxu0 %v7205
        %7325 = vmatprep.subr.bf16.mxu0 0
        %7326 = vmatpush1.bf16.msra.mxu0 %v7206
        %7327 = vmatprep.subr.bf16.mxu0 0
        %7328 = vmatpush1.bf16.msra.mxu0 %v7313
        %7329 = vmatprep.subr.bf16.mxu0 0
        %7330 = vmatpush1.bf16.msra.mxu0 0
        %7331 = vmatprep.subr.bf16.mxu0 0
        %7332 = vmatpush1.bf16.msra.mxu0 0
        %7333 = vmatprep.subr.bf16.mxu0 0
        %7334 = vmatpush1.bf16.msra.mxu0 0
        %7335 = vmatprep.subr.bf16.mxu0 0
        %7336 = vmatpush1.bf16.msra.mxu0 0
        %7337 = vmatprep.subr.bf16.mxu0 0
        %7338 = vmatpush1.bf16.msra.mxu0 0
        %7339 = vmatprep.subr.bf16.mxu0 0
        %7340 = vmatpush1.bf16.msra.mxu0 0
        %7341 = vmatprep.subr.bf16.mxu0 0
        %7342 = vmatpush1.bf16.msra.mxu0 0
        %7343 = vmatprep.subr.bf16.mxu0 0
        %7344 = vmatpush1.bf16.msra.mxu0 0
        %7345 = vmatprep.subr.bf16.mxu0 0
        %7346 = vmatpush1.bf16.msra.mxu0 0
        %7347 = vmatprep.mubr.bf16.mxu0 0
        %7348 = vmatmul.mubr.bf16.gmra.mrb[0].mxu0 %v7216
        %v7349 = vpop.f32.mrb[0].mxu0
        %v7350 = vadd.f32 0.0, %v7349
        %v7351 = vpop.f32.mrb[0].mxu0
        %v7352 = vpop.f32.mrb[0].mxu0
        %v7353 = vadd.f32 0.0, %v7352
        %v7354 = vpop.f32.mrb[0].mxu0
        %7355 = vmatprep.mubr.bf16.mxu0 0
        %7356 = vmatmul.mubr.bf16.gmra.mrb[0].mxu0 %v7219
        %v7357 = vpop.f32.mrb[0].mxu0
        %v7358 = vadd.f32 0.0, %v7357
        %v7359 = vpop.f32.mrb[0].mxu0
        %v7360 = vpop.f32.mrb[0].mxu0
        %v7361 = vadd.f32 0.0, %v7360
        %v7362 = vpop.f32.mrb[0].mxu0
        %7363 = vmatprep.mubr.bf16.mxu0 0
        %7364 = vmatmul.mubr.bf16.gmra.mrb[0].mxu0 %v7222
        %v7365 = vpop.f32.mrb[0].mxu0
        %v7366 = vadd.f32 0.0, %v7365
        %v7367 = vpop.f32.mrb[0].mxu0
        %v7368 = vpop.f32.mrb[0].mxu0
        %v7369 = vadd.f32 0.0, %v7368
        %v7370 = vpop.f32.mrb[0].mxu0
        %7371 = vmatprep.mubr.bf16.mxu0 0
        %7372 = vmatmul.mubr.bf16.gmra.mrb[0].mxu0 %v7225
        %v7373 = vpop.f32.mrb[0].mxu0
        %v7374 = vadd.f32 0.0, %v7373
        %v7375 = vpop.f32.mrb[0].mxu0
        %v7376 = vpop.f32.mrb[0].mxu0
        %v7377 = vadd.f32 0.0, %v7376
        %v7378 = vpop.f32.mrb[0].mxu0
        %7379 = vmatprep.mubr.bf16.mxu0 0
        %7380 = vmatmul.mubr.bf16.gmra.mrb[0].mxu0 %v7228
        %v7381 = vpop.f32.mrb[0].mxu0
        %v7382 = vadd.f32 0.0, %v7381
        %v7383 = vpop.f32.mrb[0].mxu0
        %v7384 = vpop.f32.mrb[0].mxu0
        %v7385 = vadd.f32 0.0, %v7384
        %v7386 = vpop.f32.mrb[0].mxu0
        %7387 = vmatprep.mubr.bf16.mxu0 0
        %7388 = vmatmul.mubr.bf16.gmra.mrb[0].mxu0 %v7231
        %v7389 = vpop.f32.mrb[0].mxu0
        %v7390 = vadd.f32 0.0, %v7389
        %v7391 = vpop.f32.mrb[0].mxu0
        %v7392 = vpop.f32.mrb[0].mxu0
        %v7393 = vadd.f32 0.0, %v7392
        %v7394 = vpop.f32.mrb[0].mxu0
        %7395 = vmatprep.mubr.bf16.mxu0 0
        %7396 = vmatmul.mubr.bf16.gmra.mrb[0].mxu0 %v7234
        %v7397 = vpop.f32.mrb[0].mxu0
        %v7398 = vadd.f32 0.0, %v7397
        %v7399 = vpop.f32.mrb[0].mxu0
        %v7400 = vpop.f32.mrb[0].mxu0
        %v7401 = vadd.f32 0.0, %v7400
        %v7402 = vpop.f32.mrb[0].mxu0
        %7403 = vmatprep.mubr.bf16.mxu0 0
        %7404 = vmatmul.mubr.bf16.gmra.mrb[0].mxu0 %v7237
        %v7405 = vpop.f32.mrb[0].mxu0
        %v7406 = vadd.f32 0.0, %v7405
        %v7407 = vpop.f32.mrb[0].mxu0
        %v7408 = vpop.f32.mrb[0].mxu0
        %v7409 = vadd.f32 0.0, %v7408
        %v7410 = vpop.f32.mrb[0].mxu0
        %7411 = vmatprep.mubr.bf16.mxu0 0
        %7412 = vmatmul.mubr.bf16.gmra.mrb[0].mxu0 %v7240
        %v7413 = vpop.f32.mrb[0].mxu0
        %v7414 = vadd.f32 0.0, %v7413
        %v7415 = vpop.f32.mrb[0].mxu0
        %v7416 = vpop.f32.mrb[0].mxu0
        %v7417 = vadd.f32 0.0, %v7416
        %v7418 = vpop.f32.mrb[0].mxu0
        %7419 = vmatprep.mubr.bf16.mxu0 0
        %7420 = vmatmul.mubr.bf16.gmra.mrb[0].mxu0 %v7243
        %v7421 = vpop.f32.mrb[0].mxu0
        %v7422 = vadd.f32 0.0, %v7421
        %v7423 = vpop.f32.mrb[0].mxu0
        %v7424 = vpop.f32.mrb[0].mxu0
        %v7425 = vadd.f32 0.0, %v7424
        %v7426 = vpop.f32.mrb[0].mxu0
        %7427 = vmatprep.mubr.bf16.mxu0 0
        %7428 = vmatmul.mubr.bf16.gmra.mrb[0].mxu0 %v7246
        %v7429 = vpop.f32.mrb[0].mxu0
        %v7430 = vadd.f32 0.0, %v7429
        %v7431 = vpop.f32.mrb[0].mxu0
        %v7432 = vpop.f32.mrb[0].mxu0
        %v7433 = vadd.f32 0.0, %v7432
        %v7434 = vpop.f32.mrb[0].mxu0
        %7435 = vmatprep.mubr.bf16.mxu0 0
        %7436 = vmatmul.mubr.bf16.gmra.mrb[0].mxu0 %v7249
        %v7437 = vpop.f32.mrb[0].mxu0
        %v7438 = vadd.f32 0.0, %v7437
        %v7439 = vpop.f32.mrb[0].mxu0
        %v7440 = vpop.f32.mrb[0].mxu0
        %v7441 = vadd.f32 0.0, %v7440
        %v7442 = vpop.f32.mrb[0].mxu0
        %7443 = vmatprep.mubr.bf16.mxu0 0
        %7444 = vmatmul.mubr.bf16.gmra.mrb[0].mxu0 %v7252
        %v7445 = vpop.f32.mrb[0].mxu0
        %v7446 = vadd.f32 0.0, %v7445
        %v7447 = vpop.f32.mrb[0].mxu0
        %v7448 = vpop.f32.mrb[0].mxu0
        %v7449 = vadd.f32 0.0, %v7448
        %v7450 = vpop.f32.mrb[0].mxu0
        %7451 = vmatprep.mubr.bf16.mxu0 0
        %7452 = vmatmul.mubr.bf16.gmra.mrb[0].mxu0 %v7255
        %v7453 = vpop.f32.mrb[0].mxu0
        %v7454 = vadd.f32 0.0, %v7453
        %v7455 = vpop.f32.mrb[0].mxu0
        %v7456 = vpop.f32.mrb[0].mxu0
        %v7457 = vadd.f32 0.0, %v7456
        %v7458 = vpop.f32.mrb[0].mxu0
        %7459 = vmatprep.mubr.bf16.mxu0 0
        %7460 = vmatmul.mubr.bf16.gmra.mrb[0].mxu0 %v7258
        %v7461 = vpop.f32.mrb[0].mxu0
        %v7462 = vadd.f32 0.0, %v7461
        %v7463 = vpop.f32.mrb[0].mxu0
        %v7464 = vpop.f32.mrb[0].mxu0
        %v7465 = vadd.f32 0.0, %v7464
        %v7466 = vpop.f32.mrb[0].mxu0
        %7467 = vmatprep.mubr.bf16.mxu0 0
        %7468 = vmatmul.mubr.bf16.gmra.mrb[0].mxu0 %v7261
        %v7469 = vpop.f32.mrb[0].mxu0
        %v7470 = vadd.f32 0.0, %v7469
        %v7471 = vpop.f32.mrb[0].mxu0
        %v7472 = vpop.f32.mrb[0].mxu0
        %v7473 = vadd.f32 0.0, %v7472
        %v7474 = vpop.f32.mrb[0].mxu0
        %7475 = vmatprep.mubr.bf16.mxu0 0
        %7476 = vmatmul.mubr.bf16.gmra.mrb[0].mxu0 %v7264
        %v7477 = vpop.f32.mrb[0].mxu0
        %v7478 = vadd.f32 0.0, %v7477
        %v7479 = vpop.f32.mrb[0].mxu0
        %v7480 = vpop.f32.mrb[0].mxu0
        %v7481 = vadd.f32 0.0, %v7480
        %v7482 = vpop.f32.mrb[0].mxu0
        %7483 = vmatprep.mubr.bf16.mxu0 0
        %7484 = vmatmul.mubr.bf16.gmra.mrb[0].mxu0 %v7267
        %v7485 = vpop.f32.mrb[0].mxu0
        %v7486 = vadd.f32 0.0, %v7485
        %v7487 = vpop.f32.mrb[0].mxu0
        %v7488 = vpop.f32.mrb[0].mxu0
        %v7489 = vadd.f32 0.0, %v7488
        %v7490 = vpop.f32.mrb[0].mxu0
        %7491 = vmatprep.mubr.bf16.mxu0 0
        %7492 = vmatmul.mubr.bf16.gmra.mrb[0].mxu0 %v7270
        %v7493 = vpop.f32.mrb[0].mxu0
        %v7494 = vadd.f32 0.0, %v7493
        %v7495 = vpop.f32.mrb[0].mxu0
        %v7496 = vpop.f32.mrb[0].mxu0
        %v7497 = vadd.f32 0.0, %v7496
        %v7498 = vpop.f32.mrb[0].mxu0
        %7499 = vmatprep.mubr.bf16.mxu0 0
        %7500 = vmatmul.mubr.bf16.gmra.mrb[0].mxu0 %v7273
        %v7501 = vpop.f32.mrb[0].mxu0
        %v7502 = vadd.f32 0.0, %v7501
        %v7503 = vpop.f32.mrb[0].mxu0
        %v7504 = vpop.f32.mrb[0].mxu0
        %v7505 = vadd.f32 0.0, %v7504
        %v7506 = vpop.f32.mrb[0].mxu0
        %7507 = vmatprep.mubr.bf16.mxu0 0
        %7508 = vmatmul.mubr.bf16.gmra.mrb[0].mxu0 %v7276
        %v7509 = vpop.f32.mrb[0].mxu0
        %v7510 = vadd.f32 0.0, %v7509
        %v7511 = vpop.f32.mrb[0].mxu0
        %v7512 = vpop.f32.mrb[0].mxu0
        %v7513 = vadd.f32 0.0, %v7512
        %v7514 = vpop.f32.mrb[0].mxu0
        %7515 = vmatprep.mubr.bf16.mxu0 0
        %7516 = vmatmul.mubr.bf16.gmra.mrb[0].mxu0 %v7279
        %v7517 = vpop.f32.mrb[0].mxu0
        %v7518 = vadd.f32 0.0, %v7517
        %v7519 = vpop.f32.mrb[0].mxu0
        %v7520 = vpop.f32.mrb[0].mxu0
        %v7521 = vadd.f32 0.0, %v7520
        %v7522 = vpop.f32.mrb[0].mxu0
        %7523 = vmatprep.mubr.bf16.mxu0 0
        %7524 = vmatmul.mubr.bf16.gmra.mrb[0].mxu0 %v7282
        %v7525 = vpop.f32.mrb[0].mxu0
        %v7526 = vadd.f32 0.0, %v7525
        %v7527 = vpop.f32.mrb[0].mxu0
        %v7528 = vpop.f32.mrb[0].mxu0
        %v7529 = vadd.f32 0.0, %v7528
        %v7530 = vpop.f32.mrb[0].mxu0
        %7531 = vmatprep.mubr.bf16.mxu0 0
        %7532 = vmatmul.mubr.bf16.gmra.mrb[0].mxu0 %v7285
        %v7533 = vpop.f32.mrb[0].mxu0
        %v7534 = vadd.f32 0.0, %v7533
        %v7535 = vpop.f32.mrb[0].mxu0
        %v7536 = vpop.f32.mrb[0].mxu0
        %v7537 = vadd.f32 0.0, %v7536
        %v7538 = vpop.f32.mrb[0].mxu0
        %7539 = vmatprep.mubr.bf16.mxu0 0
        %7540 = vmatmul.mubr.bf16.gmra.mrb[0].mxu0 %v7288
        %v7541 = vpop.f32.mrb[0].mxu0
        %v7542 = vadd.f32 0.0, %v7541
        %v7543 = vpop.f32.mrb[0].mxu0
        %v7544 = vpop.f32.mrb[0].mxu0
        %v7545 = vadd.f32 0.0, %v7544
        %v7546 = vpop.f32.mrb[0].mxu0
        %7547 = vmatprep.mubr.bf16.mxu0 0
        %7548 = vmatmul.mubr.bf16.gmra.mrb[0].mxu0 %v7291
        %v7549 = vpop.f32.mrb[0].mxu0
        %v7550 = vadd.f32 0.0, %v7549
        %v7551 = vpop.f32.mrb[0].mxu0
        %v7552 = vpop.f32.mrb[0].mxu0
        %v7553 = vadd.f32 0.0, %v7552
        %v7554 = vpop.f32.mrb[0].mxu0
        %7555 = vmatprep.mubr.bf16.mxu0 0
        %7556 = vmatmul.mubr.bf16.gmra.mrb[0].mxu0 %v7294
        %v7557 = vpop.f32.mrb[0].mxu0
        %v7558 = vadd.f32 0.0, %v7557
        %v7559 = vpop.f32.mrb[0].mxu0
        %v7560 = vpop.f32.mrb[0].mxu0
        %v7561 = vadd.f32 0.0, %v7560
        %v7562 = vpop.f32.mrb[0].mxu0
        %7563 = vmatprep.mubr.bf16.mxu0 0
        %7564 = vmatmul.mubr.bf16.gmra.mrb[0].mxu0 %v7297
        %v7565 = vpop.f32.mrb[0].mxu0
        %v7566 = vadd.f32 0.0, %v7565
        %v7567 = vpop.f32.mrb[0].mxu0
        %v7568 = vpop.f32.mrb[0].mxu0
        %v7569 = vadd.f32 0.0, %v7568
        %v7570 = vpop.f32.mrb[0].mxu0
        %7571 = vmatprep.mubr.bf16.mxu0 0
        %7572 = vmatmul.mubr.bf16.gmra.mrb[0].mxu0 %v7300
        %v7573 = vpop.f32.mrb[0].mxu0
        %v7574 = vadd.f32 0.0, %v7573
        %v7575 = vpop.f32.mrb[0].mxu0
        %v7576 = vpop.f32.mrb[0].mxu0
        %v7577 = vadd.f32 0.0, %v7576
        %v7578 = vpop.f32.mrb[0].mxu0
        %7579 = vmatprep.mubr.bf16.mxu0 0
        %7580 = vmatmul.mubr.bf16.gmra.mrb[0].mxu0 %v7303
        %v7581 = vpop.f32.mrb[0].mxu0
        %v7582 = vadd.f32 0.0, %v7581
        %v7583 = vpop.f32.mrb[0].mxu0
        %v7584 = vpop.f32.mrb[0].mxu0
        %v7585 = vadd.f32 0.0, %v7584
        %v7586 = vpop.f32.mrb[0].mxu0
        %7587 = vmatprep.mubr.bf16.mxu0 0
        %7588 = vmatmul.mubr.bf16.gmra.mrb[0].mxu0 %v7306
        %v7589 = vpop.f32.mrb[0].mxu0
        %v7590 = vadd.f32 0.0, %v7589
        %v7591 = vpop.f32.mrb[0].mxu0
        %v7592 = vpop.f32.mrb[0].mxu0
        %v7593 = vadd.f32 0.0, %v7592
        %v7594 = vpop.f32.mrb[0].mxu0
        %7595 = vmatprep.mubr.bf16.mxu0 0
        %7596 = vmatmul.mubr.bf16.gmra.mrb[0].mxu0 %v7309
        %v7597 = vpop.f32.mrb[0].mxu0
        %v7598 = vadd.f32 0.0, %v7597
        %v7599 = vpop.f32.mrb[0].mxu0
        %v7600 = vpop.f32.mrb[0].mxu0
        %v7601 = vadd.f32 0.0, %v7600
        %v7602 = vpop.f32.mrb[0].mxu0
        %7603 = vdwg.mxu0
        %7604 = vst [vmem:[%s781] sm:$0xff] %v7350
        %7605 = vst [vmem:[%s781 + $0x8] sm:$0xff] %v7353
        %7606 = vst [vmem:[%s781 + $0x10] sm:$0xff] %v7358
        %7607 = vst [vmem:[%s781 + $0x18] sm:$0xff] %v7361
        %7608 = vst [vmem:[%s781 + $0x20] sm:$0xff] %v7366
        %7609 = vst [vmem:[%s781 + $0x28] sm:$0xff] %v7369
        %7610 = vst [vmem:[%s781 + $0x30] sm:$0xff] %v7374
        %7611 = vst [vmem:[%s781 + $0x38] sm:$0xff] %v7377
        %7612 = vst [vmem:[%s781 + $0x40] sm:$0xff] %v7382
        %7613 = vst [vmem:[%s781 + $0x48] sm:$0xff] %v7385
        %7614 = vst [vmem:[%s781 + $0x50] sm:$0xff] %v7390
        %7615 = vst [vmem:[%s781 + $0x58] sm:$0xff] %v7393
        %7616 = vst [vmem:[%s781 + $0x60] sm:$0xff] %v7398
        %7617 = vst [vmem:[%s781 + $0x68] sm:$0xff] %v7401
        %7618 = vst [vmem:[%s781 + $0x70] sm:$0xff] %v7406
        %7619 = vst [vmem:[%s781 + $0x78] sm:$0xff] %v7409
        %7620 = vst [vmem:[%s781 + $0x80] sm:$0xff] %v7414
        %7621 = vst [vmem:[%s781 + $0x88] sm:$0xff] %v7417
        %7622 = vst [vmem:[%s781 + $0x90] sm:$0xff] %v7422
        %7623 = vst [vmem:[%s781 + $0x98] sm:$0xff] %v7425
        %7624 = vst [vmem:[%s781 + $0xa0] sm:$0xff] %v7430
        %7625 = vst [vmem:[%s781 + $0xa8] sm:$0xff] %v7433
        %7626 = vst [vmem:[%s781 + $0xb0] sm:$0xff] %v7438
        %7627 = vst [vmem:[%s781 + $0xb8] sm:$0xff] %v7441
        %7628 = vst [vmem:[%s781 + $0xc0] sm:$0xff] %v7446
        %7629 = vst [vmem:[%s781 + $0xc8] sm:$0xff] %v7449
        %7630 = vst [vmem:[%s781 + $0xd0] sm:$0xff] %v7454
        %7631 = vst [vmem:[%s781 + $0xd8] sm:$0xff] %v7457
        %7632 = vst [vmem:[%s781 + $0xe0] sm:$0xff] %v7462
        %7633 = vst [vmem:[%s781 + $0xe8] sm:$0xff] %v7465
        %7634 = vst [vmem:[%s781 + $0xf0] sm:$0xff] %v7470
        %7635 = vst [vmem:[%s781 + $0xf8] sm:$0xff] %v7473
        %7636 = vst [vmem:[%s781 + $0x100] sm:$0xff] %v7478
        %7637 = vst [vmem:[%s781 + $0x108] sm:$0xff] %v7481
        %7638 = vst [vmem:[%s781 + $0x110] sm:$0xff] %v7486
        %7639 = vst [vmem:[%s781 + $0x118] sm:$0xff] %v7489
        %7640 = vst [vmem:[%s781 + $0x120] sm:$0xff] %v7494
        %7641 = vst [vmem:[%s781 + $0x128] sm:$0xff] %v7497
        %7642 = vst [vmem:[%s781 + $0x130] sm:$0xff] %v7502
        %7643 = vst [vmem:[%s781 + $0x138] sm:$0xff] %v7505
        %7644 = vst [vmem:[%s781 + $0x140] sm:$0xff] %v7510
        %7645 = vst [vmem:[%s781 + $0x148] sm:$0xff] %v7513
        %7646 = vst [vmem:[%s781 + $0x150] sm:$0xff] %v7518
        %7647 = vst [vmem:[%s781 + $0x158] sm:$0xff] %v7521
        %7648 = vst [vmem:[%s781 + $0x160] sm:$0xff] %v7526
        %7649 = vst [vmem:[%s781 + $0x168] sm:$0xff] %v7529
        %7650 = vst [vmem:[%s781 + $0x170] sm:$0xff] %v7534
        %7651 = vst [vmem:[%s781 + $0x178] sm:$0xff] %v7537
        %7652 = vst [vmem:[%s781 + $0x180] sm:$0xff] %v7542
        %7653 = vst [vmem:[%s781 + $0x188] sm:$0xff] %v7545
        %7654 = vst [vmem:[%s781 + $0x190] sm:$0xff] %v7550
        %7655 = vst [vmem:[%s781 + $0x198] sm:$0xff] %v7553
        %7656 = vst [vmem:[%s781 + $0x1a0] sm:$0xff] %v7558
        %7657 = vst [vmem:[%s781 + $0x1a8] sm:$0xff] %v7561
        %7658 = vst [vmem:[%s781 + $0x1b0] sm:$0xff] %v7566
        %7659 = vst [vmem:[%s781 + $0x1b8] sm:$0xff] %v7569
        %7660 = vst [vmem:[%s781 + $0x1c0] sm:$0xff] %v7574
        %7661 = vst [vmem:[%s781 + $0x1c8] sm:$0xff] %v7577
        %7662 = vst [vmem:[%s781 + $0x1d0] sm:$0xff] %v7582
        %7663 = vst [vmem:[%s781 + $0x1d8] sm:$0xff] %v7585
        %7664 = vst [vmem:[%s781 + $0x1e0] sm:$0xff] %v7590
        %7665 = vst [vmem:[%s781 + $0x1e8] sm:$0xff] %v7593
        %7666 = vst [vmem:[%s781 + $0x1f0] sm:$0xff] %v7598
        %7667 = vst [vmem:[%s781 + $0x1f8] sm:$0xff] %v7601
        %v7668 = vld [vmem:[%s788] sm:$0x1]
        %v7669 = vadd.f32 %v7350, %v7353
        %v7670 = vadd.f32 %v7669, %v7358
        %v7671 = vadd.f32 %v7670, %v7361
        %v7672 = vadd.f32 %v7671, %v7366
        %v7673 = vadd.f32 %v7672, %v7369
        %v7674 = vadd.f32 %v7673, %v7374
        %v7675 = vadd.f32 %v7674, %v7377
        %v7676 = vadd.f32 %v7675, %v7382
        %v7677 = vadd.f32 %v7676, %v7385
        %v7678 = vadd.f32 %v7677, %v7390
        %v7679 = vadd.f32 %v7678, %v7393
        %v7680 = vadd.f32 %v7679, %v7398
        %v7681 = vadd.f32 %v7680, %v7401
        %v7682 = vadd.f32 %v7681, %v7406
        %v7683 = vadd.f32 %v7682, %v7409
        %v7684 = vadd.f32 %v7683, %v7414
        %v7685 = vadd.f32 %v7684, %v7417
        %v7686 = vadd.f32 %v7685, %v7422
        %v7687 = vadd.f32 %v7686, %v7425
        %v7688 = vadd.f32 %v7687, %v7430
        %v7689 = vadd.f32 %v7688, %v7433
        %v7690 = vadd.f32 %v7689, %v7438
        %v7691 = vadd.f32 %v7690, %v7441
        %v7692 = vadd.f32 %v7691, %v7446
        %v7693 = vadd.f32 %v7692, %v7449
        %v7694 = vadd.f32 %v7693, %v7454
        %v7695 = vadd.f32 %v7694, %v7457
        %v7696 = vadd.f32 %v7695, %v7462
        %v7697 = vadd.f32 %v7696, %v7465
        %v7698 = vadd.f32 %v7697, %v7470
        %v7699 = vadd.f32 %v7698, %v7473
        %v7700 = vadd.f32 %v7699, %v7478
        %v7701 = vadd.f32 %v7700, %v7481
        %v7702 = vadd.f32 %v7701, %v7486
        %v7703 = vadd.f32 %v7702, %v7489
        %v7704 = vadd.f32 %v7703, %v7494
        %v7705 = vadd.f32 %v7704, %v7497
        %v7706 = vadd.f32 %v7705, %v7502
        %v7707 = vadd.f32 %v7706, %v7505
        %v7708 = vadd.f32 %v7707, %v7510
        %v7709 = vadd.f32 %v7708, %v7513
        %v7710 = vadd.f32 %v7709, %v7518
        %v7711 = vadd.f32 %v7710, %v7521
        %v7712 = vadd.f32 %v7711, %v7526
        %v7713 = vadd.f32 %v7712, %v7529
        %v7714 = vadd.f32 %v7713, %v7534
        %v7715 = vadd.f32 %v7714, %v7537
        %v7716 = vadd.f32 %v7715, %v7542
        %v7717 = vadd.f32 %v7716, %v7545
        %v7718 = vadd.f32 %v7717, %v7550
        %v7719 = vadd.f32 %v7718, %v7553
        %v7720 = vadd.f32 %v7719, %v7558
        %v7721 = vadd.f32 %v7720, %v7561
        %v7722 = vadd.f32 %v7721, %v7566
        %v7723 = vadd.f32 %v7722, %v7569
        %v7724 = vadd.f32 %v7723, %v7574
        %v7725 = vadd.f32 %v7724, %v7577
        %v7726 = vadd.f32 %v7725, %v7582
        %v7727 = vadd.f32 %v7726, %v7585
        %v7728 = vadd.f32 %v7727, %v7590
        %v7729 = vadd.f32 %v7728, %v7593
        %v7730 = vadd.f32 %v7729, %v7598
        %v7731 = vadd.f32 %v7730, %v7601
        %v7732 = vrot.slane %v7731, 4
        %v7733 = vadd.f32 %v7731, %v7732
        %v7734 = vrot.slane %v7733, 2
        %v7735 = vadd.f32 %v7733, %v7734
        %v7736 = vrot.slane %v7735, 1
        %v7737 = vadd.f32 %v7735, %v7736
        %v7738 = vadd.f32 %v7668, %v7737
        %7739 = vst [vmem:[%s788] sm:$0x1] %v7738
        %v7740 = vld [vmem:[%s795] sm:$0x1]
        %v7741 = vmul.f32 %v7350, %v7350
        %v7742 = vmul.f32 %v7353, %v7353
        %v7743 = vmul.f32 %v7358, %v7358
        %v7744 = vmul.f32 %v7361, %v7361
        %v7745 = vmul.f32 %v7366, %v7366
        %v7746 = vmul.f32 %v7369, %v7369
        %v7747 = vmul.f32 %v7374, %v7374
        %v7748 = vmul.f32 %v7377, %v7377
        %v7749 = vmul.f32 %v7382, %v7382
        %v7750 = vmul.f32 %v7385, %v7385
        %v7751 = vmul.f32 %v7390, %v7390
        %v7752 = vmul.f32 %v7393, %v7393
        %v7753 = vmul.f32 %v7398, %v7398
        %v7754 = vmul.f32 %v7401, %v7401
        %v7755 = vmul.f32 %v7406, %v7406
        %v7756 = vmul.f32 %v7409, %v7409
        %v7757 = vmul.f32 %v7414, %v7414
        %v7758 = vmul.f32 %v7417, %v7417
        %v7759 = vmul.f32 %v7422, %v7422
        %v7760 = vmul.f32 %v7425, %v7425
        %v7761 = vmul.f32 %v7430, %v7430
        %v7762 = vmul.f32 %v7433, %v7433
        %v7763 = vmul.f32 %v7438, %v7438
        %v7764 = vmul.f32 %v7441, %v7441
        %v7765 = vmul.f32 %v7446, %v7446
        %v7766 = vmul.f32 %v7449, %v7449
        %v7767 = vmul.f32 %v7454, %v7454
        %v7768 = vmul.f32 %v7457, %v7457
        %v7769 = vmul.f32 %v7462, %v7462
        %v7770 = vmul.f32 %v7465, %v7465
        %v7771 = vmul.f32 %v7470, %v7470
        %v7772 = vmul.f32 %v7473, %v7473
        %v7773 = vmul.f32 %v7478, %v7478
        %v7774 = vmul.f32 %v7481, %v7481
        %v7775 = vmul.f32 %v7486, %v7486
        %v7776 = vmul.f32 %v7489, %v7489
        %v7777 = vmul.f32 %v7494, %v7494
        %v7778 = vmul.f32 %v7497, %v7497
        %v7779 = vmul.f32 %v7502, %v7502
        %v7780 = vmul.f32 %v7505, %v7505
        %v7781 = vmul.f32 %v7510, %v7510
        %v7782 = vmul.f32 %v7513, %v7513
        %v7783 = vmul.f32 %v7518, %v7518
        %v7784 = vmul.f32 %v7521, %v7521
        %v7785 = vmul.f32 %v7526, %v7526
        %v7786 = vmul.f32 %v7529, %v7529
        %v7787 = vmul.f32 %v7534, %v7534
        %v7788 = vmul.f32 %v7537, %v7537
        %v7789 = vmul.f32 %v7542, %v7542
        %v7790 = vmul.f32 %v7545, %v7545
        %v7791 = vmul.f32 %v7550, %v7550
        %v7792 = vmul.f32 %v7553, %v7553
        %v7793 = vmul.f32 %v7558, %v7558
        %v7794 = vmul.f32 %v7561, %v7561
        %v7795 = vmul.f32 %v7566, %v7566
        %v7796 = vmul.f32 %v7569, %v7569
        %v7797 = vmul.f32 %v7574, %v7574
        %v7798 = vmul.f32 %v7577, %v7577
        %v7799 = vmul.f32 %v7582, %v7582
        %v7800 = vmul.f32 %v7585, %v7585
        %v7801 = vmul.f32 %v7590, %v7590
        %v7802 = vmul.f32 %v7593, %v7593
        %v7803 = vmul.f32 %v7598, %v7598
        %v7804 = vmul.f32 %v7601, %v7601
        %v7805 = vadd.f32 %v7741, %v7742
        %v7806 = vadd.f32 %v7805, %v7743
        %v7807 = vadd.f32 %v7806, %v7744
        %v7808 = vadd.f32 %v7807, %v7745
        %v7809 = vadd.f32 %v7808, %v7746
        %v7810 = vadd.f32 %v7809, %v7747
        %v7811 = vadd.f32 %v7810, %v7748
        %v7812 = vadd.f32 %v7811, %v7749
        %v7813 = vadd.f32 %v7812, %v7750
        %v7814 = vadd.f32 %v7813, %v7751
        %v7815 = vadd.f32 %v7814, %v7752
        %v7816 = vadd.f32 %v7815, %v7753
        %v7817 = vadd.f32 %v7816, %v7754
        %v7818 = vadd.f32 %v7817, %v7755
        %v7819 = vadd.f32 %v7818, %v7756
        %v7820 = vadd.f32 %v7819, %v7757
        %v7821 = vadd.f32 %v7820, %v7758
        %v7822 = vadd.f32 %v7821, %v7759
        %v7823 = vadd.f32 %v7822, %v7760
        %v7824 = vadd.f32 %v7823, %v7761
        %v7825 = vadd.f32 %v7824, %v7762
        %v7826 = vadd.f32 %v7825, %v7763
        %v7827 = vadd.f32 %v7826, %v7764
        %v7828 = vadd.f32 %v7827, %v7765
        %v7829 = vadd.f32 %v7828, %v7766
        %v7830 = vadd.f32 %v7829, %v7767
        %v7831 = vadd.f32 %v7830, %v7768
        %v7832 = vadd.f32 %v7831, %v7769
        %v7833 = vadd.f32 %v7832, %v7770
        %v7834 = vadd.f32 %v7833, %v7771
        %v7835 = vadd.f32 %v7834, %v7772
        %v7836 = vadd.f32 %v7835, %v7773
        %v7837 = vadd.f32 %v7836, %v7774
        %v7838 = vadd.f32 %v7837, %v7775
        %v7839 = vadd.f32 %v7838, %v7776
        %v7840 = vadd.f32 %v7839, %v7777
        %v7841 = vadd.f32 %v7840, %v7778
        %v7842 = vadd.f32 %v7841, %v7779
        %v7843 = vadd.f32 %v7842, %v7780
        %v7844 = vadd.f32 %v7843, %v7781
        %v7845 = vadd.f32 %v7844, %v7782
        %v7846 = vadd.f32 %v7845, %v7783
        %v7847 = vadd.f32 %v7846, %v7784
        %v7848 = vadd.f32 %v7847, %v7785
        %v7849 = vadd.f32 %v7848, %v7786
        %v7850 = vadd.f32 %v7849, %v7787
        %v7851 = vadd.f32 %v7850, %v7788
        %v7852 = vadd.f32 %v7851, %v7789
        %v7853 = vadd.f32 %v7852, %v7790
        %v7854 = vadd.f32 %v7853, %v7791
        %v7855 = vadd.f32 %v7854, %v7792
        %v7856 = vadd.f32 %v7855, %v7793
        %v7857 = vadd.f32 %v7856, %v7794
        %v7858 = vadd.f32 %v7857, %v7795
        %v7859 = vadd.f32 %v7858, %v7796
        %v7860 = vadd.f32 %v7859, %v7797
        %v7861 = vadd.f32 %v7860, %v7798
        %v7862 = vadd.f32 %v7861, %v7799
        %v7863 = vadd.f32 %v7862, %v7800
        %v7864 = vadd.f32 %v7863, %v7801
        %v7865 = vadd.f32 %v7864, %v7802
        %v7866 = vadd.f32 %v7865, %v7803
        %v7867 = vadd.f32 %v7866, %v7804
        %v7868 = vrot.slane %v7867, 4
        %v7869 = vadd.f32 %v7867, %v7868
        %v7870 = vrot.slane %v7869, 2
        %v7871 = vadd.f32 %v7869, %v7870
        %v7872 = vrot.slane %v7871, 1
        %v7873 = vadd.f32 %v7871, %v7872
        %v7874 = vadd.f32 %v7740, %v7873
        %7875 = vst [vmem:[%s795] sm:$0x1] %v7874
        %s7876 = sand.u32 %s392, 1
        %s7877 = scalar_lea.sflag [#allocation4], %s7876
        %s7878 = sand.u32 %s392, 1
        %s7879 = smul.addr %s7878, 512
        %s7880 = scalar_lea.vmem [#allocation3], %s7879
        %s7881 = sand.u32 %s31, 1
        %s7882 = scalar_lea.sflag [#allocation6], %s7881
        %s7883 = sand.u32 %s418, 1
        %s7884 = smul.addr %s7883, 8
        %s7885 = scalar_lea.vmem [#allocation5], %s7884
        %s7886 = sand.u32 %s31, 1
        %s7887 = scalar_lea.sflag [#allocation6], %s7886
        %s7888 = sand.u32 %s444, 1
        %s7889 = smul.addr %s7888, 8
        %s7890 = scalar_lea.vmem [#allocation7], %s7889
        // Predicated region
        $region69: #{tpu_custom_call.1} parent=63 // pred_check
          %p7891 = pneg %p402
        $region70: #{tpu_custom_call.1} parent=63 // pred_check_branch
          %7893 = sbr.rel (%p7891) target = $region72
        $region71: #{tpu_custom_call.1} parent=63 // pred_region
          %s7894 = smul.u32 64, %s36
          %s7896 = ssub.s32 8192, 8192
          %7897 = vsyncadd %s7877, %s7896
          %s7898 = smul.addr %s35, 64
          %s7899 = sadd.s32 %s7894, %s7898
          %s7900 = smul.addr %s7899, 128
          %s7901 = scalar_lea.hbm %s11, %s7900
          %s7902 = sshll.u32 %s7880, 4
          %s7903 = int_to_ptr.vmem [resolvable:$true] %s7902
          %7908 = dma.vmem_to_hbm [thread:$0]  %s7903, 8192, %s7901, %s7877, 128, 128, 8
        $region72: #{tpu_custom_call.1} parent=63 // pred_fallthru
          _
        // Predicated region
        $region73: #{tpu_custom_call.1} parent=63 // pred_check
          %p7909 = pneg %p428
        $region74: #{tpu_custom_call.1} parent=63 // pred_check_branch
          %7911 = sbr.rel (%p7909) target = $region76
        $region75: #{tpu_custom_call.1} parent=63 // pred_region
          %s7913 = ssub.s32 128, 128
          %7914 = vsyncadd %s7882, %s7913
          %s7915 = smul.addr %s35, 128
          %s7916 = scalar_lea.hbm %s12, %s7915
          %s7918 = sshll.u32 %s7885, 4
          %s7919 = int_to_ptr.vmem [resolvable:$true] %s7918
          %7921 = dma.vmem_to_hbm [thread:$0]  %s7919, 128, %s7916, %s7882
        $region76: #{tpu_custom_call.1} parent=63 // pred_fallthru
          _
        // Predicated region
        $region77: #{tpu_custom_call.1} parent=63 // pred_check
          %p7922 = pneg %p454
        $region78: #{tpu_custom_call.1} parent=63 // pred_check_branch
          %7924 = sbr.rel (%p7922) target = $region80
        $region79: #{tpu_custom_call.1} parent=63 // pred_region
          %s7926 = ssub.s32 128, 128
          %7927 = vsyncadd %s7887, %s7926
          %s7928 = smul.addr %s35, 128
          %s7929 = scalar_lea.hbm %s13, %s7928
          %s7931 = sshll.u32 %s7890, 4
          %s7932 = int_to_ptr.vmem [resolvable:$true] %s7931
          %7934 = dma.vmem_to_hbm [thread:$0]  %s7932, 128, %s7929, %s7887
        $region80: #{tpu_custom_call.1} parent=63 // pred_fallthru
          _
      $region64: #{tpu_custom_call.1} parent=5 // pred_fallthru
        _
      %p7935 = scmp.le.s32.totalorder 2, %s26
      // Predicated region
      $region81: #{tpu_custom_call.1} parent=5 // pred_check
        %p7936 = pneg %p7935
      $region82: #{tpu_custom_call.1} parent=5 // pred_check_branch
        %7938 = sbr.rel (%p7936) target = $region84
      $region83: #{tpu_custom_call.1} parent=5 // pred_region
        %s7939 = ssub.s32 %s26, 2
        // Predicated region
        $region85: #{tpu_custom_call.1} parent=83 // pred_check
          %p7940 = pneg %p408
        $region86: #{tpu_custom_call.1} parent=83 // pred_check_branch
          %7942 = sbr.rel (%p7940) target = $region88
        $region87: #{tpu_custom_call.1} parent=83 // pred_region
          %s7943 = sand.u32 %s393, 1
          %s7944 = scalar_lea.sflag [#allocation4], %s7943
          %s7945 = sand.u32 %s393, 1
          %s7946 = smul.addr %s7945, 512
          %s7947 = scalar_lea.vmem [#allocation3], %s7946
          %7948 = dma.done %s7944, 8192
        $region88: #{tpu_custom_call.1} parent=83 // pred_fallthru
          _
        // Predicated region
        $region89: #{tpu_custom_call.1} parent=83 // pred_check
          %p7949 = pneg %p434
        $region90: #{tpu_custom_call.1} parent=83 // pred_check_branch
          %7951 = sbr.rel (%p7949) target = $region92
        $region91: #{tpu_custom_call.1} parent=83 // pred_region
          %s7952 = sand.u32 %s32, 1
          %s7953 = scalar_lea.sflag [#allocation6], %s7952
          %s7954 = sand.u32 %s419, 1
          %s7955 = smul.addr %s7954, 8
          %s7956 = scalar_lea.vmem [#allocation5], %s7955
          %7957 = dma.done %s7953, 128
        $region92: #{tpu_custom_call.1} parent=83 // pred_fallthru
          _
        // Predicated region
        $region93: #{tpu_custom_call.1} parent=83 // pred_check
          %p7958 = pneg %p460
        $region94: #{tpu_custom_call.1} parent=83 // pred_check_branch
          %7960 = sbr.rel (%p7958) target = $region96
        $region95: #{tpu_custom_call.1} parent=83 // pred_region
          %s7961 = sand.u32 %s32, 1
          %s7962 = scalar_lea.sflag [#allocation6], %s7961
          %s7963 = sand.u32 %s445, 1
          %s7964 = smul.addr %s7963, 8
          %s7965 = scalar_lea.vmem [#allocation7], %s7964
          %7966 = dma.done %s7962, 128
        $region96: #{tpu_custom_call.1} parent=83 // pred_fallthru
          _
      $region84: #{tpu_custom_call.1} parent=5 // pred_fallthru
        _
    $region6: #{tpu_custom_call.1} parent=1 // loop_footer
      %s30 = sadd.s32 1, %s26
    $region7: #{tpu_custom_call.1} parent=1 // loop_footer_branch
      %25 = sbr.rel target = $region3
    $region8: #{tpu_custom_call.1} parent=1 // loop_exit
      _
    %7967 = vsyncpa [#allocation4], 1
    %s7968 = scalar_lea.sflag [#allocation4], 1
    %7969 = vsyncpa %s7968, 1
    %7970 = vsyncpa [#allocation6], 1
    %s7971 = scalar_lea.sflag [#allocation6], 1
    %7972 = vsyncpa %s7971, 1

</llo_original>
